<compile_context>
chip_gen: v7x
topology: tpu7x:2x2x1
jax: 0.10.0
libtpu: 0.0.40
codegen_flags: <defaults>
</compile_context>

<pallas_src>
import functools

import jax
import jax.numpy as jnp
from jax.experimental import pallas as pl
from jax.experimental.pallas import tpu as pltpu

# Scoped-VMEM limit: above v5e's 16 MiB default, comfortably inside v7x's 64 MiB physical.
_VMEM_LIMIT_BYTES = 32 * 1024 * 1024


# ----------------------------------------------------------------------------- #
# Small helpers used inside the kernels (all run in f32 on the VPU)
# ----------------------------------------------------------------------------- #
def _apply_act(y, act):
    if act == "relu6":
        return jnp.clip(y, 0.0, 6.0)
    if act == "hswish":
        return y * jnp.clip(y + 3.0, 0.0, 6.0) * (1.0 / 6.0)
    return y  # identity (head output convs)


def _dw3x3_same(y, w, b, act, pad_ref):
    """Depthwise 3x3, stride 1, 'same' zero padding, fused bias + activation.

    y:       (H, W, C) f32 value (already resident on-chip)
    w:       (3, 3, C) f32
    b:       (1, C)    f32
    pad_ref: VMEM scratch of shape (H+2, W+2, C) f32 — padding is built in-kernel,
             so the wrapper never materializes a padded copy in HBM.
    """
    H, W, C = y.shape
    pad_ref[...] = jnp.zeros_like(pad_ref)          # zero halo
    pad_ref[1:H + 1, 1:W + 1, :] = y                # interior
    acc = jnp.zeros((H, W, C), jnp.float32)
    for di in range(3):                             # 9-tap unrolled MAC (VPU)
        for dj in range(3):
            acc = acc + pad_ref[di:di + H, dj:dj + W, :] * w[di, dj, :]
    return _apply_act(acc + b, act)


def _matmul_bias_act(x, w_ref, b_ref, act):
    """(M, Cin) @ (Cin, Cout) on the MXU: bf16 operands, f32 accumulation, fused bias+act."""
    y = jnp.dot(x.astype(jnp.bfloat16), w_ref[...],
                preferred_element_type=jnp.float32)
    return _apply_act(y + b_ref[...], act)


# ----------------------------------------------------------------------------- #
# Fused kernel 1: stem 1x1 (Cin=3, VPU FMA) + dw3x3 + pw1x1   -> feat1
# ----------------------------------------------------------------------------- #
def _stage1_kernel(x_ref, sw_ref, sb_ref, dww_ref, dwb_ref, pww_ref, pwb_ref,
                   o_ref, pad_ref, *, H, W):
    # stem pointwise conv with Cin=3: three broadcast FMAs on the VPU (skip the MXU)
    sw = sw_ref[...]                                             # (3, C1) f32
    x0 = x_ref[0, :, :, 0:1].astype(jnp.float32)                 # (H, W, 1)
    x1 = x_ref[0, :, :, 1:2].astype(jnp.float32)
    x2 = x_ref[0, :, :, 2:3].astype(jnp.float32)
    y = x0 * sw[0, :] + x1 * sw[1, :] + x2 * sw[2, :]            # (H, W, C1)
    y = _apply_act(y + sb_ref[...], "hswish")

    # depthwise 3x3 (relu6) — stays in VMEM
    z = _dw3x3_same(y, dww_ref[...], dwb_ref[...], "relu6", pad_ref)

    # pointwise 1x1 (hswish) on the MXU
    C1 = z.shape[-1]
    out = _matmul_bias_act(z.reshape(H * W, C1), pww_ref, pwb_ref, "hswish")
    o_ref[0] = out.reshape(H, W, -1).astype(o_ref.dtype)


# ----------------------------------------------------------------------------- #
# Fused kernel 2: pw1x1 + dw3x3 (extra feature level)          -> feat2
# ----------------------------------------------------------------------------- #
def _stage2_kernel(x_ref, pww_ref, pwb_ref, dww_ref, dwb_ref, o_ref, pad_ref, *, H, W):
    x = x_ref[0]                                                 # (H, W, Cin) bf16
    Cin = x.shape[-1]
    y = _matmul_bias_act(x.reshape(H * W, Cin), pww_ref, pwb_ref, "hswish")
    y = y.reshape(H, W, -1)                                      # (H, W, C3) f32
    z = _dw3x3_same(y, dww_ref[...], dwb_ref[...], "relu6", pad_ref)
    o_ref[0] = z.astype(o_ref.dtype)


# ----------------------------------------------------------------------------- #
# Fused kernel 3: SSDLite head for one feature level
#   reg branch (dw3x3 + 1x1) and cls branch (dw3x3 + 1x1) share one kernel, so the
#   feature map is read from HBM once and launches are halved.
# ----------------------------------------------------------------------------- #
def _head_kernel(f_ref, rdww_ref, rdwb_ref, rpww_ref, rpwb_ref,
                 cdww_ref, cdwb_ref, cpww_ref, cpwb_ref,
                 reg_ref, cls_ref, pad_ref, *, H, W):
    feat = f_ref[0].astype(jnp.float32)                          # (H, W, C)
    C = feat.shape[-1]

    r = _dw3x3_same(feat, rdww_ref[...], rdwb_ref[...], "relu6", pad_ref)
    ro = _matmul_bias_act(r.reshape(H * W, C), rpww_ref, rpwb_ref, None)
    reg_ref[0] = ro.reshape(H, W, -1).astype(reg_ref.dtype)

    c = _dw3x3_same(feat, cdww_ref[...], cdwb_ref[...], "relu6", pad_ref)
    co = _matmul_bias_act(c.reshape(H * W, C), cpww_ref, cpwb_ref, None)
    cls_ref[0] = co.reshape(H, W, -1).astype(cls_ref.dtype)


# ----------------------------------------------------------------------------- #
# pallas_call wrappers
# ----------------------------------------------------------------------------- #
def _img_spec(H, W, C):
    return pl.BlockSpec((1, H, W, C), lambda n: (n, 0, 0, 0))


def _full_spec(shape):
    zeros = (0,) * len(shape)
    return pl.BlockSpec(shape, lambda n: zeros)


def _compiler_params():
    return pltpu.CompilerParams(dimension_semantics=("parallel",),
                                vmem_limit_bytes=_VMEM_LIMIT_BYTES)


def backbone_stage1(x, p):
    """images (N, H, W, 3) f32 -> feat1 (N, H, W, C2) bf16.  stem-pw + dw + pw fused."""
    N, H, W, _ = x.shape
    C1 = p["stem_pw_w"].shape[1]
    C2 = p["b1_pw_w"].shape[1]
    # TODO(synk): at real resolutions (320x320) tile over rows with a 2-row halo
    #             (manual DMA) instead of one full image block per grid step.
    return pl.pallas_call(
        functools.partial(_stage1_kernel, H=H, W=W),
        out_shape=jax.ShapeDtypeStruct((N, H, W, C2), jnp.bfloat16),
        grid=(N,),
        in_specs=[
            _img_spec(H, W, 3),
            _full_spec((3, C1)), _full_spec((1, C1)),
            _full_spec((3, 3, C1)), _full_spec((1, C1)),
            _full_spec((C1, C2)), _full_spec((1, C2)),
        ],
        out_specs=_img_spec(H, W, C2),
        scratch_shapes=[pltpu.VMEM((H + 2, W + 2, C1), jnp.float32)],
        compiler_params=_compiler_params(),
    )(x,
      p["stem_pw_w"], p["stem_pw_b"].reshape(1, C1),
      p["b1_dw_w"], p["b1_dw_b"].reshape(1, C1),
      p["b1_pw_w"].astype(jnp.bfloat16), p["b1_pw_b"].reshape(1, C2))


def backbone_stage2(x2, p):
    """x2 (N, H/2, W/2, C2) bf16 -> feat2 (N, H/2, W/2, C3) bf16.  pw + dw fused."""
    N, H, W, Cin = x2.shape
    C3 = p["b2_pw_w"].shape[1]
    return pl.pallas_call(
        functools.partial(_stage2_kernel, H=H, W=W),
        out_shape=jax.ShapeDtypeStruct((N, H, W, C3), jnp.bfloat16),
        grid=(N,),
        in_specs=[
            _img_spec(H, W, Cin),
            _full_spec((Cin, C3)), _full_spec((1, C3)),
            _full_spec((3, 3, C3)), _full_spec((1, C3)),
        ],
        out_specs=_img_spec(H, W, C3),
        scratch_shapes=[pltpu.VMEM((H + 2, W + 2, C3), jnp.float32)],
        compiler_params=_compiler_params(),
    )(x2,
      p["b2_pw_w"].astype(jnp.bfloat16), p["b2_pw_b"].reshape(1, C3),
      p["b2_dw_w"], p["b2_dw_b"].reshape(1, C3))


def ssd_head(feat, p, prefix, A, K):
    """One SSDLite head level: fused reg(dw+pw) and cls(dw+pw) in a single kernel."""
    N, H, W, C = feat.shape
    Creg, Ccls = A * 4, A * K
    reg, cls = pl.pallas_call(
        functools.partial(_head_kernel, H=H, W=W),
        out_shape=(jax.ShapeDtypeStruct((N, H, W, Creg), jnp.float32),
                   jax.ShapeDtypeStruct((N, H, W, Ccls), jnp.float32)),
        grid=(N,),
        in_specs=[
            _img_spec(H, W, C),
            _full_spec((3, 3, C)), _full_spec((1, C)),
            _full_spec((C, Creg)), _full_spec((1, Creg)),
            _full_spec((3, 3, C)), _full_spec((1, C)),
            _full_spec((C, Ccls)), _full_spec((1, Ccls)),
        ],
        out_specs=(_img_spec(H, W, Creg), _img_spec(H, W, Ccls)),
        scratch_shapes=[pltpu.VMEM((H + 2, W + 2, C), jnp.float32)],
        compiler_params=_compiler_params(),
    )(feat,
      p[f"{prefix}_reg_dw_w"], p[f"{prefix}_reg_dw_b"].reshape(1, C),
      p[f"{prefix}_reg_pw_w"].astype(jnp.bfloat16), p[f"{prefix}_reg_pw_b"].reshape(1, Creg),
      p[f"{prefix}_cls_dw_w"], p[f"{prefix}_cls_dw_b"].reshape(1, C),
      p[f"{prefix}_cls_pw_w"].astype(jnp.bfloat16), p[f"{prefix}_cls_pw_b"].reshape(1, Ccls))
    # [N,H,W,A*k] -> [N, H*W*A, k]   (same ordering as torchvision SSDHead)
    return reg.reshape(N, H * W * A, 4), cls.reshape(N, H * W * A, K)


# ----------------------------------------------------------------------------- #
# Parameter initialization (deterministic, in-script)
# ----------------------------------------------------------------------------- #
def _init_params(key, num_classes, anchors_per_loc):
    C_IN, C1, C2, C3 = 3, 16, 32, 64
    A = anchors_per_loc
    names_shapes = {
        "stem_pw_w": (C_IN, C1), "stem_pw_b": (C1,),
        "b1_dw_w": (3, 3, C1), "b1_dw_b": (C1,),
        "b1_pw_w": (C1, C2), "b1_pw_b": (C2,),
        "b2_pw_w": (C2, C3), "b2_pw_b": (C3,),
        "b2_dw_w": (3, 3, C3), "b2_dw_b": (C3,),
        "h1_reg_dw_w": (3, 3, C2), "h1_reg_dw_b": (C2,),
        "h1_reg_pw_w": (C2, A * 4), "h1_reg_pw_b": (A * 4,),
        "h1_cls_dw_w": (3, 3, C2), "h1_cls_dw_b": (C2,),
        "h1_cls_pw_w": (C2, A * num_classes), "h1_cls_pw_b": (A * num_classes,),
        "h2_reg_dw_w": (3, 3, C3), "h2_reg_dw_b": (C3,),
        "h2_reg_pw_w": (C3, A * 4), "h2_reg_pw_b": (A * 4,),
        "h2_cls_dw_w": (3, 3, C3), "h2_cls_dw_b": (C3,),
        "h2_cls_pw_w": (C3, A * num_classes), "h2_cls_pw_b": (A * num_classes,),
    }
    params = {}
    for i, (name, shape) in enumerate(sorted(names_shapes.items())):
        k = jax.random.fold_in(key, i)
        params[name] = 0.05 * jax.random.normal(k, shape, jnp.float32)
    return params


# ----------------------------------------------------------------------------- #
# SSDLite forward (inference path of SSDHead: raw regression + class logits)
# ----------------------------------------------------------------------------- #
def ssdlite_forward(params, images_nchw, num_classes, anchors_per_loc):
    A = anchors_per_loc
    x = jnp.transpose(images_nchw, (0, 2, 3, 1))       # NCHW -> NHWC (channels on lanes)

    feat1 = backbone_stage1(x, params)                 # [N, H,  W,  32] bf16

    # TODO(synk): fold this stride-2 subsample into the stage-2 kernel's read
    #             (strided in-kernel load / index_map) instead of a wrapper XLA slice.
    x2 = feat1[:, ::2, ::2, :]
    feat2 = backbone_stage2(x2, params)                # [N, H/2, W/2, 64] bf16

    r1, c1 = ssd_head(feat1, params, "h1", A, num_classes)
    r2, c2 = ssd_head(feat2, params, "h2", A, num_classes)

    bbox_regression = jnp.concatenate([r1, r2], axis=1)   # [N, total_anchors, 4]
    cls_logits = jnp.concatenate([c1, c2], axis=1)        # [N, total_anchors, K]

    # TODO(synk): anchor generation, box decoding, score thresholding and NMS
    #             (torchvision SSD.postprocess_detections) are not expressible as a
    #             clean Pallas kernel; returning raw head outputs instead.
    return {"bbox_regression": bbox_regression, "cls_logits": cls_logits}


# ----------------------------------------------------------------------------- #
if __name__ == "__main__":
    NUM_CLASSES = 4
    ANCHORS_PER_LOC = 6
    N, C, H, W = 2, 3, 16, 16

    key = jax.random.PRNGKey(0)
    k_img, k_par = jax.random.split(key)
    images = jax.random.uniform(k_img, (N, C, H, W), jnp.float32)   # NCHW (torch conv.)
    params = _init_params(k_par, NUM_CLASSES, ANCHORS_PER_LOC)

    fwd = jax.jit(functools.partial(ssdlite_forward,
                                    num_classes=NUM_CLASSES,
                                    anchors_per_loc=ANCHORS_PER_LOC))
    out = fwd(params, images)
    jax.block_until_ready(out)

    total_anchors = H * W * ANCHORS_PER_LOC + (H // 2) * (W // 2) * ANCHORS_PER_LOC
    assert out["bbox_regression"].shape == (N, total_anchors, 4)
    assert out["cls_logits"].shape == (N, total_anchors, NUM_CLASSES)
    assert jnp.all(jnp.isfinite(out["bbox_regression"]))
    assert jnp.all(jnp.isfinite(out["cls_logits"]))
    print("KERNEL_OK")
</pallas_src>

<mosaic_0001>
module attributes {stable_mosaic.version = 11 : i64} {
  func.func @_stage2_kernel(%arg0: i32, %arg1: memref<1x8x8x32xbf16, #tpu.memory_space<vmem>>, %arg2: memref<32x64xbf16, #tpu.memory_space<vmem>>, %arg3: memref<1x64xf32, #tpu.memory_space<vmem>>, %arg4: memref<3x3x64xf32, #tpu.memory_space<vmem>>, %arg5: memref<1x64xf32, #tpu.memory_space<vmem>>, %arg6: memref<1x8x8x64xbf16, #tpu.memory_space<vmem>>, %arg7: memref<10x10x64xf32, #tpu.memory_space<vmem>>) attributes {dimension_semantics = [#tpu.dimension_semantics<parallel>], iteration_bounds = array<i64: 2>, scalar_prefetch = 0 : i64, scratch_operands = 1 : i64, tpu.core_type = #tpu.core_type<tc>, window_params = [{transform_indices = @transform_0, window_bounds = array<i64: 1, 8, 8, 32>}, {pipeline_mode = #tpu.pipeline_mode<synchronous>, transform_indices = @transform_1, window_bounds = array<i64: 32, 64>}, {pipeline_mode = #tpu.pipeline_mode<synchronous>, transform_indices = @transform_2, window_bounds = array<i64: 1, 64>}, {pipeline_mode = #tpu.pipeline_mode<synchronous>, transform_indices = @transform_3, window_bounds = array<i64: 3, 3, 64>}, {pipeline_mode = #tpu.pipeline_mode<synchronous>, transform_indices = @transform_4, window_bounds = array<i64: 1, 64>}, {transform_indices = @transform_5, window_bounds = array<i64: 1, 8, 8, 64>}]} {
    %c0 = arith.constant 0 : index
    %c0_0 = arith.constant 0 : index
    %c0_1 = arith.constant 0 : index
    %c0_2 = arith.constant 0 : index
    %0 = vector.load %arg1[%c0, %c0_0, %c0_1, %c0_2] : memref<1x8x8x32xbf16, #tpu.memory_space<vmem>>, vector<1x8x8x32xbf16>
    %1 = vector.shape_cast %0 : vector<1x8x8x32xbf16> to vector<8x8x32xbf16>
    %2 = vector.shape_cast %1 : vector<8x8x32xbf16> to vector<64x32xbf16>
    %c0_3 = arith.constant 0 : index
    %c0_4 = arith.constant 0 : index
    %3 = vector.load %arg2[%c0_3, %c0_4] : memref<32x64xbf16, #tpu.memory_space<vmem>>, vector<32x64xbf16>
    %cst = arith.constant dense<0.000000e+00> : vector<64x64xf32>
    %4 = tpu.matmul %2, %3, %cst {dimension_numbers = #tpu.dot_dimension_numbers<[1], [0], [0], [1], [0, 0, 1, 1], [], []>} : vector<64x32xbf16>, vector<32x64xbf16>, vector<64x64xf32> -> vector<64x64xf32>
    %c0_5 = arith.constant 0 : index
    %c0_6 = arith.constant 0 : index
    %5 = vector.load %arg3[%c0_5, %c0_6] : memref<1x64xf32, #tpu.memory_space<vmem>>, vector<1x64xf32>
    %6 = vector.broadcast %5 : vector<1x64xf32> to vector<64x64xf32>
    %7 = arith.addf %4, %6 : vector<64x64xf32>
    %cst_7 = arith.constant 3.000000e+00 : f32
    %8 = vector.broadcast %cst_7 : f32 to vector<64x64xf32>
    %9 = arith.addf %7, %8 : vector<64x64xf32>
    %cst_8 = arith.constant 0.000000e+00 : f32
    %cst_9 = arith.constant 6.000000e+00 : f32
    %10 = vector.broadcast %cst_8 : f32 to vector<64x64xf32>
    %11 = arith.maximumf %10, %9 : vector<64x64xf32>
    %12 = vector.broadcast %cst_9 : f32 to vector<64x64xf32>
    %13 = arith.minimumf %12, %11 : vector<64x64xf32>
    %14 = arith.mulf %7, %13 : vector<64x64xf32>
    %cst_10 = arith.constant 0.166666672 : f32
    %15 = vector.broadcast %cst_10 : f32 to vector<64x64xf32>
    %16 = arith.mulf %14, %15 : vector<64x64xf32>
    %17 = vector.shape_cast %16 : vector<64x64xf32> to vector<8x8x64xf32>
    %c0_11 = arith.constant 0 : index
    %c0_12 = arith.constant 0 : index
    %c0_13 = arith.constant 0 : index
    %18 = vector.load %arg4[%c0_11, %c0_12, %c0_13] : memref<3x3x64xf32, #tpu.memory_space<vmem>>, vector<3x3x64xf32>
    %c0_14 = arith.constant 0 : index
    %c0_15 = arith.constant 0 : index
    %19 = vector.load %arg5[%c0_14, %c0_15] : memref<1x64xf32, #tpu.memory_space<vmem>>, vector<1x64xf32>
    %cst_16 = arith.constant 0.000000e+00 : f32
    %20 = vector.broadcast %cst_16 : f32 to vector<10x10x64xf32>
    %c0_17 = arith.constant 0 : index
    %c0_18 = arith.constant 0 : index
    %c0_19 = arith.constant 0 : index
    %21 = vector.load %arg7[%c0_17, %c0_18, %c0_19] : memref<10x10x64xf32, #tpu.memory_space<vmem>>, vector<10x10x64xf32>
    tpu.vector_store %arg7[%c0_17, %c0_18, %c0_19], %20 {strides = array<i32>} : memref<10x10x64xf32, #tpu.memory_space<vmem>>, vector<10x10x64xf32>,
    %c1 = arith.constant 1 : index
    %c1_20 = arith.constant 1 : index
    %c0_21 = arith.constant 0 : index
    %22 = vector.load %arg7[%c1, %c1_20, %c0_21] : memref<10x10x64xf32, #tpu.memory_space<vmem>>, vector<8x8x64xf32>
    tpu.vector_store %arg7[%c1, %c1_20, %c0_21], %17 {strides = array<i32>} : memref<10x10x64xf32, #tpu.memory_space<vmem>>, vector<8x8x64xf32>,
    %cst_22 = arith.constant 0.000000e+00 : f32
    %23 = vector.broadcast %cst_22 : f32 to vector<8x8x64xf32>
    %c0_23 = arith.constant 0 : index
    %c0_24 = arith.constant 0 : index
    %c0_25 = arith.constant 0 : index
    %24 = vector.load %arg7[%c0_23, %c0_24, %c0_25] : memref<10x10x64xf32, #tpu.memory_space<vmem>>, vector<8x8x64xf32>
    %25 = vector.extract_strided_slice %18 {offsets = [0, 0, 0], sizes = [1, 1, 64], strides = [1, 1, 1]} : vector<3x3x64xf32> to vector<1x1x64xf32>
    %26 = vector.shape_cast %25 : vector<1x1x64xf32> to vector<64xf32>
    %27 = vector.shape_cast %26 : vector<64xf32> to vector<1x1x64xf32>
    %28 = vector.broadcast %27 : vector<1x1x64xf32> to vector<8x8x64xf32>
    %29 = arith.mulf %24, %28 : vector<8x8x64xf32>
    %30 = arith.addf %23, %29 : vector<8x8x64xf32>
    %c0_26 = arith.constant 0 : index
    %c1_27 = arith.constant 1 : index
    %c0_28 = arith.constant 0 : index
    %31 = vector.load %arg7[%c0_26, %c1_27, %c0_28] : memref<10x10x64xf32, #tpu.memory_space<vmem>>, vector<8x8x64xf32>
    %32 = vector.extract_strided_slice %18 {offsets = [0, 1, 0], sizes = [1, 1, 64], strides = [1, 1, 1]} : vector<3x3x64xf32> to vector<1x1x64xf32>
    %33 = vector.shape_cast %32 : vector<1x1x64xf32> to vector<64xf32>
    %34 = vector.shape_cast %33 : vector<64xf32> to vector<1x1x64xf32>
    %35 = vector.broadcast %34 : vector<1x1x64xf32> to vector<8x8x64xf32>
    %36 = arith.mulf %31, %35 : vector<8x8x64xf32>
    %37 = arith.addf %30, %36 : vector<8x8x64xf32>
    %c0_29 = arith.constant 0 : index
    %c2 = arith.constant 2 : index
    %c0_30 = arith.constant 0 : index
    %38 = vector.load %arg7[%c0_29, %c2, %c0_30] : memref<10x10x64xf32, #tpu.memory_space<vmem>>, vector<8x8x64xf32>
    %39 = vector.extract_strided_slice %18 {offsets = [0, 2, 0], sizes = [1, 1, 64], strides = [1, 1, 1]} : vector<3x3x64xf32> to vector<1x1x64xf32>
    %40 = vector.shape_cast %39 : vector<1x1x64xf32> to vector<64xf32>
    %41 = vector.shape_cast %40 : vector<64xf32> to vector<1x1x64xf32>
    %42 = vector.broadcast %41 : vector<1x1x64xf32> to vector<8x8x64xf32>
    %43 = arith.mulf %38, %42 : vector<8x8x64xf32>
    %44 = arith.addf %37, %43 : vector<8x8x64xf32>
    %c1_31 = arith.constant 1 : index
    %c0_32 = arith.constant 0 : index
    %c0_33 = arith.constant 0 : index
    %45 = vector.load %arg7[%c1_31, %c0_32, %c0_33] : memref<10x10x64xf32, #tpu.memory_space<vmem>>, vector<8x8x64xf32>
    %46 = vector.extract_strided_slice %18 {offsets = [1, 0, 0], sizes = [1, 1, 64], strides = [1, 1, 1]} : vector<3x3x64xf32> to vector<1x1x64xf32>
    %47 = vector.shape_cast %46 : vector<1x1x64xf32> to vector<64xf32>
    %48 = vector.shape_cast %47 : vector<64xf32> to vector<1x1x64xf32>
    %49 = vector.broadcast %48 : vector<1x1x64xf32> to vector<8x8x64xf32>
    %50 = arith.mulf %45, %49 : vector<8x8x64xf32>
    %51 = arith.addf %44, %50 : vector<8x8x64xf32>
    %c1_34 = arith.constant 1 : index
    %c1_35 = arith.constant 1 : index
    %c0_36 = arith.constant 0 : index
    %52 = vector.load %arg7[%c1_34, %c1_35, %c0_36] : memref<10x10x64xf32, #tpu.memory_space<vmem>>, vector<8x8x64xf32>
    %53 = vector.extract_strided_slice %18 {offsets = [1, 1, 0], sizes = [1, 1, 64], strides = [1, 1, 1]} : vector<3x3x64xf32> to vector<1x1x64xf32>
    %54 = vector.shape_cast %53 : vector<1x1x64xf32> to vector<64xf32>
    %55 = vector.shape_cast %54 : vector<64xf32> to vector<1x1x64xf32>
    %56 = vector.broadcast %55 : vector<1x1x64xf32> to vector<8x8x64xf32>
    %57 = arith.mulf %52, %56 : vector<8x8x64xf32>
    %58 = arith.addf %51, %57 : vector<8x8x64xf32>
    %c1_37 = arith.constant 1 : index
    %c2_38 = arith.constant 2 : index
    %c0_39 = arith.constant 0 : index
    %59 = vector.load %arg7[%c1_37, %c2_38, %c0_39] : memref<10x10x64xf32, #tpu.memory_space<vmem>>, vector<8x8x64xf32>
    %60 = vector.extract_strided_slice %18 {offsets = [1, 2, 0], sizes = [1, 1, 64], strides = [1, 1, 1]} : vector<3x3x64xf32> to vector<1x1x64xf32>
    %61 = vector.shape_cast %60 : vector<1x1x64xf32> to vector<64xf32>
    %62 = vector.shape_cast %61 : vector<64xf32> to vector<1x1x64xf32>
    %63 = vector.broadcast %62 : vector<1x1x64xf32> to vector<8x8x64xf32>
    %64 = arith.mulf %59, %63 : vector<8x8x64xf32>
    %65 = arith.addf %58, %64 : vector<8x8x64xf32>
    %c2_40 = arith.constant 2 : index
    %c0_41 = arith.constant 0 : index
    %c0_42 = arith.constant 0 : index
    %66 = vector.load %arg7[%c2_40, %c0_41, %c0_42] : memref<10x10x64xf32, #tpu.memory_space<vmem>>, vector<8x8x64xf32>
    %67 = vector.extract_strided_slice %18 {offsets = [2, 0, 0], sizes = [1, 1, 64], strides = [1, 1, 1]} : vector<3x3x64xf32> to vector<1x1x64xf32>
    %68 = vector.shape_cast %67 : vector<1x1x64xf32> to vector<64xf32>
    %69 = vector.shape_cast %68 : vector<64xf32> to vector<1x1x64xf32>
    %70 = vector.broadcast %69 : vector<1x1x64xf32> to vector<8x8x64xf32>
    %71 = arith.mulf %66, %70 : vector<8x8x64xf32>
    %72 = arith.addf %65, %71 : vector<8x8x64xf32>
    %c2_43 = arith.constant 2 : index
    %c1_44 = arith.constant 1 : index
    %c0_45 = arith.constant 0 : index
    %73 = vector.load %arg7[%c2_43, %c1_44, %c0_45] : memref<10x10x64xf32, #tpu.memory_space<vmem>>, vector<8x8x64xf32>
    %74 = vector.extract_strided_slice %18 {offsets = [2, 1, 0], sizes = [1, 1, 64], strides = [1, 1, 1]} : vector<3x3x64xf32> to vector<1x1x64xf32>
    %75 = vector.shape_cast %74 : vector<1x1x64xf32> to vector<64xf32>
    %76 = vector.shape_cast %75 : vector<64xf32> to vector<1x1x64xf32>
    %77 = vector.broadcast %76 : vector<1x1x64xf32> to vector<8x8x64xf32>
    %78 = arith.mulf %73, %77 : vector<8x8x64xf32>
    %79 = arith.addf %72, %78 : vector<8x8x64xf32>
    %c2_46 = arith.constant 2 : index
    %c2_47 = arith.constant 2 : index
    %c0_48 = arith.constant 0 : index
    %80 = vector.load %arg7[%c2_46, %c2_47, %c0_48] : memref<10x10x64xf32, #tpu.memory_space<vmem>>, vector<8x8x64xf32>
    %81 = vector.extract_strided_slice %18 {offsets = [2, 2, 0], sizes = [1, 1, 64], strides = [1, 1, 1]} : vector<3x3x64xf32> to vector<1x1x64xf32>
    %82 = vector.shape_cast %81 : vector<1x1x64xf32> to vector<64xf32>
    %83 = vector.shape_cast %82 : vector<64xf32> to vector<1x1x64xf32>
    %84 = vector.broadcast %83 : vector<1x1x64xf32> to vector<8x8x64xf32>
    %85 = arith.mulf %80, %84 : vector<8x8x64xf32>
    %86 = arith.addf %79, %85 : vector<8x8x64xf32>
    %87 = vector.shape_cast %19 : vector<1x64xf32> to vector<1x1x64xf32>
    %88 = vector.broadcast %87 : vector<1x1x64xf32> to vector<8x8x64xf32>
    %89 = arith.addf %86, %88 : vector<8x8x64xf32>
    %cst_49 = arith.constant 0.000000e+00 : f32
    %cst_50 = arith.constant 6.000000e+00 : f32
    %90 = vector.broadcast %cst_49 : f32 to vector<8x8x64xf32>
    %91 = arith.maximumf %90, %89 : vector<8x8x64xf32>
    %92 = vector.broadcast %cst_50 : f32 to vector<8x8x64xf32>
    %93 = arith.minimumf %92, %91 : vector<8x8x64xf32>
    %94 = arith.truncf %93 : vector<8x8x64xf32> to vector<8x8x64xbf16>
    %c0_51 = arith.constant 0 : index
    %c0_52 = arith.constant 0 : index
    %c0_53 = arith.constant 0 : index
    %c0_54 = arith.constant 0 : index
    %95 = vector.load %arg6[%c0_51, %c0_52, %c0_53, %c0_54] : memref<1x8x8x64xbf16, #tpu.memory_space<vmem>>, vector<1x8x8x64xbf16>
    %96 = vector.shape_cast %95 : vector<1x8x8x64xbf16> to vector<8x8x64xbf16>
    %97 = vector.shape_cast %94 : vector<8x8x64xbf16> to vector<1x8x8x64xbf16>
    tpu.vector_store %arg6[%c0_51, %c0_52, %c0_53, %c0_54], %97 {strides = array<i32>} : memref<1x8x8x64xbf16, #tpu.memory_space<vmem>>, vector<1x8x8x64xbf16>,
    return
  }
  func.func @transform_0(%arg0: i32) -> (i32, i32, i32, i32) {
    %c0_i32 = arith.constant 0 : i32
    %c0_i32_0 = arith.constant 0 : i32
    %c0_i32_1 = arith.constant 0 : i32
    %c0_i32_2 = arith.constant 0 : i32
    return %arg0, %c0_i32, %c0_i32_0, %c0_i32_1 : i32, i32, i32, i32
  }
  func.func @transform_1(%arg0: i32) -> (i32, i32) {
    %c0_i32 = arith.constant 0 : i32
    %c0_i32_0 = arith.constant 0 : i32
    %c0_i32_1 = arith.constant 0 : i32
    return %c0_i32, %c0_i32_0 : i32, i32
  }
  func.func @transform_2(%arg0: i32) -> (i32, i32) {
    %c0_i32 = arith.constant 0 : i32
    %c0_i32_0 = arith.constant 0 : i32
    %c0_i32_1 = arith.constant 0 : i32
    return %c0_i32, %c0_i32_0 : i32, i32
  }
  func.func @transform_3(%arg0: i32) -> (i32, i32, i32) {
    %c0_i32 = arith.constant 0 : i32
    %c0_i32_0 = arith.constant 0 : i32
    %c0_i32_1 = arith.constant 0 : i32
    %c0_i32_2 = arith.constant 0 : i32
    return %c0_i32, %c0_i32_0, %c0_i32_1 : i32, i32, i32
  }
  func.func @transform_4(%arg0: i32) -> (i32, i32) {
    %c0_i32 = arith.constant 0 : i32
    %c0_i32_0 = arith.constant 0 : i32
    %c0_i32_1 = arith.constant 0 : i32
    return %c0_i32, %c0_i32_0 : i32, i32
  }
  func.func @transform_5(%arg0: i32) -> (i32, i32, i32, i32) {
    %c0_i32 = arith.constant 0 : i32
    %c0_i32_0 = arith.constant 0 : i32
    %c0_i32_1 = arith.constant 0 : i32
    %c0_i32_2 = arith.constant 0 : i32
    return %arg0, %c0_i32, %c0_i32_0, %c0_i32_1 : i32, i32, i32, i32
  }
}

module attributes {stable_mosaic.version = 11 : i64} {
  func.func @_stage1_kernel(%arg0: i32, %arg1: memref<1x16x16x3xf32, #tpu.memory_space<vmem>>, %arg2: memref<3x16xf32, #tpu.memory_space<vmem>>, %arg3: memref<1x16xf32, #tpu.memory_space<vmem>>, %arg4: memref<3x3x16xf32, #tpu.memory_space<vmem>>, %arg5: memref<1x16xf32, #tpu.memory_space<vmem>>, %arg6: memref<16x32xbf16, #tpu.memory_space<vmem>>, %arg7: memref<1x32xf32, #tpu.memory_space<vmem>>, %arg8: memref<1x16x16x32xbf16, #tpu.memory_space<vmem>>, %arg9: memref<18x18x16xf32, #tpu.memory_space<vmem>>) attributes {dimension_semantics = [#tpu.dimension_semantics<parallel>], iteration_bounds = array<i64: 2>, scalar_prefetch = 0 : i64, scratch_operands = 1 : i64, tpu.core_type = #tpu.core_type<tc>, window_params = [{transform_indices = @transform_0, window_bounds = array<i64: 1, 16, 16, 3>}, {pipeline_mode = #tpu.pipeline_mode<synchronous>, transform_indices = @transform_1, window_bounds = array<i64: 3, 16>}, {pipeline_mode = #tpu.pipeline_mode<synchronous>, transform_indices = @transform_2, window_bounds = array<i64: 1, 16>}, {pipeline_mode = #tpu.pipeline_mode<synchronous>, transform_indices = @transform_3, window_bounds = array<i64: 3, 3, 16>}, {pipeline_mode = #tpu.pipeline_mode<synchronous>, transform_indices = @transform_4, window_bounds = array<i64: 1, 16>}, {pipeline_mode = #tpu.pipeline_mode<synchronous>, transform_indices = @transform_5, window_bounds = array<i64: 16, 32>}, {pipeline_mode = #tpu.pipeline_mode<synchronous>, transform_indices = @transform_6, window_bounds = array<i64: 1, 32>}, {transform_indices = @transform_7, window_bounds = array<i64: 1, 16, 16, 32>}]} {
    %c0 = arith.constant 0 : index
    %c0_0 = arith.constant 0 : index
    %0 = vector.load %arg2[%c0, %c0_0] : memref<3x16xf32, #tpu.memory_space<vmem>>, vector<3x16xf32>
    %c0_1 = arith.constant 0 : index
    %c0_2 = arith.constant 0 : index
    %c0_3 = arith.constant 0 : index
    %c0_4 = arith.constant 0 : index
    %1 = vector.load %arg1[%c0_1, %c0_2, %c0_3, %c0_4] : memref<1x16x16x3xf32, #tpu.memory_space<vmem>>, vector<1x16x16x1xf32>
    %2 = vector.shape_cast %1 : vector<1x16x16x1xf32> to vector<16x16x1xf32>
    %c0_5 = arith.constant 0 : index
    %c0_6 = arith.constant 0 : index
    %c0_7 = arith.constant 0 : index
    %c1 = arith.constant 1 : index
    %3 = vector.load %arg1[%c0_5, %c0_6, %c0_7, %c1] : memref<1x16x16x3xf32, #tpu.memory_space<vmem>>, vector<1x16x16x1xf32>
    %4 = vector.shape_cast %3 : vector<1x16x16x1xf32> to vector<16x16x1xf32>
    %c0_8 = arith.constant 0 : index
    %c0_9 = arith.constant 0 : index
    %c0_10 = arith.constant 0 : index
    %c2 = arith.constant 2 : index
    %5 = vector.load %arg1[%c0_8, %c0_9, %c0_10, %c2] : memref<1x16x16x3xf32, #tpu.memory_space<vmem>>, vector<1x16x16x1xf32>
    %6 = vector.shape_cast %5 : vector<1x16x16x1xf32> to vector<16x16x1xf32>
    %7 = vector.extract_strided_slice %0 {offsets = [0, 0], sizes = [1, 16], strides = [1, 1]} : vector<3x16xf32> to vector<1x16xf32>
    %8 = vector.shape_cast %7 : vector<1x16xf32> to vector<16xf32>
    %9 = vector.shape_cast %8 : vector<16xf32> to vector<1x1x16xf32>
    %10 = vector.broadcast %2 : vector<16x16x1xf32> to vector<16x16x16xf32>
    %11 = vector.broadcast %9 : vector<1x1x16xf32> to vector<16x16x16xf32>
    %12 = arith.mulf %10, %11 : vector<16x16x16xf32>
    %13 = vector.extract_strided_slice %0 {offsets = [1, 0], sizes = [1, 16], strides = [1, 1]} : vector<3x16xf32> to vector<1x16xf32>
    %14 = vector.shape_cast %13 : vector<1x16xf32> to vector<16xf32>
    %15 = vector.shape_cast %14 : vector<16xf32> to vector<1x1x16xf32>
    %16 = vector.broadcast %4 : vector<16x16x1xf32> to vector<16x16x16xf32>
    %17 = vector.broadcast %15 : vector<1x1x16xf32> to vector<16x16x16xf32>
    %18 = arith.mulf %16, %17 : vector<16x16x16xf32>
    %19 = arith.addf %12, %18 : vector<16x16x16xf32>
    %20 = vector.extract_strided_slice %0 {offsets = [2, 0], sizes = [1, 16], strides = [1, 1]} : vector<3x16xf32> to vector<1x16xf32>
    %21 = vector.shape_cast %20 : vector<1x16xf32> to vector<16xf32>
    %22 = vector.shape_cast %21 : vector<16xf32> to vector<1x1x16xf32>
    %23 = vector.broadcast %6 : vector<16x16x1xf32> to vector<16x16x16xf32>
    %24 = vector.broadcast %22 : vector<1x1x16xf32> to vector<16x16x16xf32>
    %25 = arith.mulf %23, %24 : vector<16x16x16xf32>
    %26 = arith.addf %19, %25 : vector<16x16x16xf32>
    %c0_11 = arith.constant 0 : index
    %c0_12 = arith.constant 0 : index
    %27 = vector.load %arg3[%c0_11, %c0_12] : memref<1x16xf32, #tpu.memory_space<vmem>>, vector<1x16xf32>
    %28 = vector.shape_cast %27 : vector<1x16xf32> to vector<1x1x16xf32>
    %29 = vector.broadcast %28 : vector<1x1x16xf32> to vector<16x16x16xf32>
    %30 = arith.addf %26, %29 : vector<16x16x16xf32>
    %cst = arith.constant 3.000000e+00 : f32
    %31 = vector.broadcast %cst : f32 to vector<16x16x16xf32>
    %32 = arith.addf %30, %31 : vector<16x16x16xf32>
    %cst_13 = arith.constant 0.000000e+00 : f32
    %cst_14 = arith.constant 6.000000e+00 : f32
    %33 = vector.broadcast %cst_13 : f32 to vector<16x16x16xf32>
    %34 = arith.maximumf %33, %32 : vector<16x16x16xf32>
    %35 = vector.broadcast %cst_14 : f32 to vector<16x16x16xf32>
    %36 = arith.minimumf %35, %34 : vector<16x16x16xf32>
    %37 = arith.mulf %30, %36 : vector<16x16x16xf32>
    %cst_15 = arith.constant 0.166666672 : f32
    %38 = vector.broadcast %cst_15 : f32 to vector<16x16x16xf32>
    %39 = arith.mulf %37, %38 : vector<16x16x16xf32>
    %c0_16 = arith.constant 0 : index
    %c0_17 = arith.constant 0 : index
    %c0_18 = arith.constant 0 : index
    %40 = vector.load %arg4[%c0_16, %c0_17, %c0_18] : memref<3x3x16xf32, #tpu.memory_space<vmem>>, vector<3x3x16xf32>
    %c0_19 = arith.constant 0 : index
    %c0_20 = arith.constant 0 : index
    %41 = vector.load %arg5[%c0_19, %c0_20] : memref<1x16xf32, #tpu.memory_space<vmem>>, vector<1x16xf32>
    %cst_21 = arith.constant 0.000000e+00 : f32
    %42 = vector.broadcast %cst_21 : f32 to vector<18x18x16xf32>
    %c0_22 = arith.constant 0 : index
    %c0_23 = arith.constant 0 : index
    %c0_24 = arith.constant 0 : index
    %43 = vector.load %arg9[%c0_22, %c0_23, %c0_24] : memref<18x18x16xf32, #tpu.memory_space<vmem>>, vector<18x18x16xf32>
    tpu.vector_store %arg9[%c0_22, %c0_23, %c0_24], %42 {strides = array<i32>} : memref<18x18x16xf32, #tpu.memory_space<vmem>>, vector<18x18x16xf32>,
    %c1_25 = arith.constant 1 : index
    %c1_26 = arith.constant 1 : index
    %c0_27 = arith.constant 0 : index
    %44 = vector.load %arg9[%c1_25, %c1_26, %c0_27] : memref<18x18x16xf32, #tpu.memory_space<vmem>>, vector<16x16x16xf32>
    tpu.vector_store %arg9[%c1_25, %c1_26, %c0_27], %39 {strides = array<i32>} : memref<18x18x16xf32, #tpu.memory_space<vmem>>, vector<16x16x16xf32>,
    %cst_28 = arith.constant 0.000000e+00 : f32
    %45 = vector.broadcast %cst_28 : f32 to vector<16x16x16xf32>
    %c0_29 = arith.constant 0 : index
    %c0_30 = arith.constant 0 : index
    %c0_31 = arith.constant 0 : index
    %46 = vector.load %arg9[%c0_29, %c0_30, %c0_31] : memref<18x18x16xf32, #tpu.memory_space<vmem>>, vector<16x16x16xf32>
    %47 = vector.extract_strided_slice %40 {offsets = [0, 0, 0], sizes = [1, 1, 16], strides = [1, 1, 1]} : vector<3x3x16xf32> to vector<1x1x16xf32>
    %48 = vector.shape_cast %47 : vector<1x1x16xf32> to vector<16xf32>
    %49 = vector.shape_cast %48 : vector<16xf32> to vector<1x1x16xf32>
    %50 = vector.broadcast %49 : vector<1x1x16xf32> to vector<16x16x16xf32>
    %51 = arith.mulf %46, %50 : vector<16x16x16xf32>
    %52 = arith.addf %45, %51 : vector<16x16x16xf32>
    %c0_32 = arith.constant 0 : index
    %c1_33 = arith.constant 1 : index
    %c0_34 = arith.constant 0 : index
    %53 = vector.load %arg9[%c0_32, %c1_33, %c0_34] : memref<18x18x16xf32, #tpu.memory_space<vmem>>, vector<16x16x16xf32>
    %54 = vector.extract_strided_slice %40 {offsets = [0, 1, 0], sizes = [1, 1, 16], strides = [1, 1, 1]} : vector<3x3x16xf32> to vector<1x1x16xf32>
    %55 = vector.shape_cast %54 : vector<1x1x16xf32> to vector<16xf32>
    %56 = vector.shape_cast %55 : vector<16xf32> to vector<1x1x16xf32>
    %57 = vector.broadcast %56 : vector<1x1x16xf32> to vector<16x16x16xf32>
    %58 = arith.mulf %53, %57 : vector<16x16x16xf32>
    %59 = arith.addf %52, %58 : vector<16x16x16xf32>
    %c0_35 = arith.constant 0 : index
    %c2_36 = arith.constant 2 : index
    %c0_37 = arith.constant 0 : index
    %60 = vector.load %arg9[%c0_35, %c2_36, %c0_37] : memref<18x18x16xf32, #tpu.memory_space<vmem>>, vector<16x16x16xf32>
    %61 = vector.extract_strided_slice %40 {offsets = [0, 2, 0], sizes = [1, 1, 16], strides = [1, 1, 1]} : vector<3x3x16xf32> to vector<1x1x16xf32>
    %62 = vector.shape_cast %61 : vector<1x1x16xf32> to vector<16xf32>
    %63 = vector.shape_cast %62 : vector<16xf32> to vector<1x1x16xf32>
    %64 = vector.broadcast %63 : vector<1x1x16xf32> to vector<16x16x16xf32>
    %65 = arith.mulf %60, %64 : vector<16x16x16xf32>
    %66 = arith.addf %59, %65 : vector<16x16x16xf32>
    %c1_38 = arith.constant 1 : index
    %c0_39 = arith.constant 0 : index
    %c0_40 = arith.constant 0 : index
    %67 = vector.load %arg9[%c1_38, %c0_39, %c0_40] : memref<18x18x16xf32, #tpu.memory_space<vmem>>, vector<16x16x16xf32>
    %68 = vector.extract_strided_slice %40 {offsets = [1, 0, 0], sizes = [1, 1, 16], strides = [1, 1, 1]} : vector<3x3x16xf32> to vector<1x1x16xf32>
    %69 = vector.shape_cast %68 : vector<1x1x16xf32> to vector<16xf32>
    %70 = vector.shape_cast %69 : vector<16xf32> to vector<1x1x16xf32>
    %71 = vector.broadcast %70 : vector<1x1x16xf32> to vector<16x16x16xf32>
    %72 = arith.mulf %67, %71 : vector<16x16x16xf32>
    %73 = arith.addf %66, %72 : vector<16x16x16xf32>
    %c1_41 = arith.constant 1 : index
    %c1_42 = arith.constant 1 : index
    %c0_43 = arith.constant 0 : index
    %74 = vector.load %arg9[%c1_41, %c1_42, %c0_43] : memref<18x18x16xf32, #tpu.memory_space<vmem>>, vector<16x16x16xf32>
    %75 = vector.extract_strided_slice %40 {offsets = [1, 1, 0], sizes = [1, 1, 16], strides = [1, 1, 1]} : vector<3x3x16xf32> to vector<1x1x16xf32>
    %76 = vector.shape_cast %75 : vector<1x1x16xf32> to vector<16xf32>
    %77 = vector.shape_cast %76 : vector<16xf32> to vector<1x1x16xf32>
    %78 = vector.broadcast %77 : vector<1x1x16xf32> to vector<16x16x16xf32>
    %79 = arith.mulf %74, %78 : vector<16x16x16xf32>
    %80 = arith.addf %73, %79 : vector<16x16x16xf32>
    %c1_44 = arith.constant 1 : index
    %c2_45 = arith.constant 2 : index
    %c0_46 = arith.constant 0 : index
    %81 = vector.load %arg9[%c1_44, %c2_45, %c0_46] : memref<18x18x16xf32, #tpu.memory_space<vmem>>, vector<16x16x16xf32>
    %82 = vector.extract_strided_slice %40 {offsets = [1, 2, 0], sizes = [1, 1, 16], strides = [1, 1, 1]} : vector<3x3x16xf32> to vector<1x1x16xf32>
    %83 = vector.shape_cast %82 : vector<1x1x16xf32> to vector<16xf32>
    %84 = vector.shape_cast %83 : vector<16xf32> to vector<1x1x16xf32>
    %85 = vector.broadcast %84 : vector<1x1x16xf32> to vector<16x16x16xf32>
    %86 = arith.mulf %81, %85 : vector<16x16x16xf32>
    %87 = arith.addf %80, %86 : vector<16x16x16xf32>
    %c2_47 = arith.constant 2 : index
    %c0_48 = arith.constant 0 : index
    %c0_49 = arith.constant 0 : index
    %88 = vector.load %arg9[%c2_47, %c0_48, %c0_49] : memref<18x18x16xf32, #tpu.memory_space<vmem>>, vector<16x16x16xf32>
    %89 = vector.extract_strided_slice %40 {offsets = [2, 0, 0], sizes = [1, 1, 16], strides = [1, 1, 1]} : vector<3x3x16xf32> to vector<1x1x16xf32>
    %90 = vector.shape_cast %89 : vector<1x1x16xf32> to vector<16xf32>
    %91 = vector.shape_cast %90 : vector<16xf32> to vector<1x1x16xf32>
    %92 = vector.broadcast %91 : vector<1x1x16xf32> to vector<16x16x16xf32>
    %93 = arith.mulf %88, %92 : vector<16x16x16xf32>
    %94 = arith.addf %87, %93 : vector<16x16x16xf32>
    %c2_50 = arith.constant 2 : index
    %c1_51 = arith.constant 1 : index
    %c0_52 = arith.constant 0 : index
    %95 = vector.load %arg9[%c2_50, %c1_51, %c0_52] : memref<18x18x16xf32, #tpu.memory_space<vmem>>, vector<16x16x16xf32>
    %96 = vector.extract_strided_slice %40 {offsets = [2, 1, 0], sizes = [1, 1, 16], strides = [1, 1, 1]} : vector<3x3x16xf32> to vector<1x1x16xf32>
    %97 = vector.shape_cast %96 : vector<1x1x16xf32> to vector<16xf32>
    %98 = vector.shape_cast %97 : vector<16xf32> to vector<1x1x16xf32>
    %99 = vector.broadcast %98 : vector<1x1x16xf32> to vector<16x16x16xf32>
    %100 = arith.mulf %95, %99 : vector<16x16x16xf32>
    %101 = arith.addf %94, %100 : vector<16x16x16xf32>
    %c2_53 = arith.constant 2 : index
    %c2_54 = arith.constant 2 : index
    %c0_55 = arith.constant 0 : index
    %102 = vector.load %arg9[%c2_53, %c2_54, %c0_55] : memref<18x18x16xf32, #tpu.memory_space<vmem>>, vector<16x16x16xf32>
    %103 = vector.extract_strided_slice %40 {offsets = [2, 2, 0], sizes = [1, 1, 16], strides = [1, 1, 1]} : vector<3x3x16xf32> to vector<1x1x16xf32>
    %104 = vector.shape_cast %103 : vector<1x1x16xf32> to vector<16xf32>
    %105 = vector.shape_cast %104 : vector<16xf32> to vector<1x1x16xf32>
    %106 = vector.broadcast %105 : vector<1x1x16xf32> to vector<16x16x16xf32>
    %107 = arith.mulf %102, %106 : vector<16x16x16xf32>
    %108 = arith.addf %101, %107 : vector<16x16x16xf32>
    %109 = vector.shape_cast %41 : vector<1x16xf32> to vector<1x1x16xf32>
    %110 = vector.broadcast %109 : vector<1x1x16xf32> to vector<16x16x16xf32>
    %111 = arith.addf %108, %110 : vector<16x16x16xf32>
    %cst_56 = arith.constant 0.000000e+00 : f32
    %cst_57 = arith.constant 6.000000e+00 : f32
    %112 = vector.broadcast %cst_56 : f32 to vector<16x16x16xf32>
    %113 = arith.maximumf %112, %111 : vector<16x16x16xf32>
    %114 = vector.broadcast %cst_57 : f32 to vector<16x16x16xf32>
    %115 = arith.minimumf %114, %113 : vector<16x16x16xf32>
    %116 = vector.shape_cast %115 : vector<16x16x16xf32> to vector<256x16xf32>
    %117 = arith.truncf %116 : vector<256x16xf32> to vector<256x16xbf16>
    %c0_58 = arith.constant 0 : index
    %c0_59 = arith.constant 0 : index
    %118 = vector.load %arg6[%c0_58, %c0_59] : memref<16x32xbf16, #tpu.memory_space<vmem>>, vector<16x32xbf16>
    %cst_60 = arith.constant dense<0.000000e+00> : vector<256x32xf32>
    %119 = tpu.matmul %117, %118, %cst_60 {dimension_numbers = #tpu.dot_dimension_numbers<[1], [0], [0], [1], [0, 0, 1, 1], [], []>} : vector<256x16xbf16>, vector<16x32xbf16>, vector<256x32xf32> -> vector<256x32xf32>
    %c0_61 = arith.constant 0 : index
    %c0_62 = arith.constant 0 : index
    %120 = vector.load %arg7[%c0_61, %c0_62] : memref<1x32xf32, #tpu.memory_space<vmem>>, vector<1x32xf32>
    %121 = vector.broadcast %120 : vector<1x32xf32> to vector<256x32xf32>
    %122 = arith.addf %119, %121 : vector<256x32xf32>
    %cst_63 = arith.constant 3.000000e+00 : f32
    %123 = vector.broadcast %cst_63 : f32 to vector<256x32xf32>
    %124 = arith.addf %122, %123 : vector<256x32xf32>
    %cst_64 = arith.constant 0.000000e+00 : f32
    %cst_65 = arith.constant 6.000000e+00 : f32
    %125 = vector.broadcast %cst_64 : f32 to vector<256x32xf32>
    %126 = arith.maximumf %125, %124 : vector<256x32xf32>
    %127 = vector.broadcast %cst_65 : f32 to vector<256x32xf32>
    %128 = arith.minimumf %127, %126 : vector<256x32xf32>
    %129 = arith.mulf %122, %128 : vector<256x32xf32>
    %cst_66 = arith.constant 0.166666672 : f32
    %130 = vector.broadcast %cst_66 : f32 to vector<256x32xf32>
    %131 = arith.mulf %129, %130 : vector<256x32xf32>
    %132 = vector.shape_cast %131 : vector<256x32xf32> to vector<16x16x32xf32>
    %133 = arith.truncf %132 : vector<16x16x32xf32> to vector<16x16x32xbf16>
    %c0_67 = arith.constant 0 : index
    %c0_68 = arith.constant 0 : index
    %c0_69 = arith.constant 0 : index
    %c0_70 = arith.constant 0 : index
    %134 = vector.load %arg8[%c0_67, %c0_68, %c0_69, %c0_70] : memref<1x16x16x32xbf16, #tpu.memory_space<vmem>>, vector<1x16x16x32xbf16>
    %135 = vector.shape_cast %134 : vector<1x16x16x32xbf16> to vector<16x16x32xbf16>
    %136 = vector.shape_cast %133 : vector<16x16x32xbf16> to vector<1x16x16x32xbf16>
    tpu.vector_store %arg8[%c0_67, %c0_68, %c0_69, %c0_70], %136 {strides = array<i32>} : memref<1x16x16x32xbf16, #tpu.memory_space<vmem>>, vector<1x16x16x32xbf16>,
    return
  }
  func.func @transform_0(%arg0: i32) -> (i32, i32, i32, i32) {
    %c0_i32 = arith.constant 0 : i32
    %c0_i32_0 = arith.constant 0 : i32
    %c0_i32_1 = arith.constant 0 : i32
    %c0_i32_2 = arith.constant 0 : i32
    return %arg0, %c0_i32, %c0_i32_0, %c0_i32_1 : i32, i32, i32, i32
  }
  func.func @transform_1(%arg0: i32) -> (i32, i32) {
    %c0_i32 = arith.constant 0 : i32
    %c0_i32_0 = arith.constant 0 : i32
    %c0_i32_1 = arith.constant 0 : i32
    return %c0_i32, %c0_i32_0 : i32, i32
  }
  func.func @transform_2(%arg0: i32) -> (i32, i32) {
    %c0_i32 = arith.constant 0 : i32
    %c0_i32_0 = arith.constant 0 : i32
    %c0_i32_1 = arith.constant 0 : i32
    return %c0_i32, %c0_i32_0 : i32, i32
  }
  func.func @transform_3(%arg0: i32) -> (i32, i32, i32) {
    %c0_i32 = arith.constant 0 : i32
    %c0_i32_0 = arith.constant 0 : i32
    %c0_i32_1 = arith.constant 0 : i32
    %c0_i32_2 = arith.constant 0 : i32
    return %c0_i32, %c0_i32_0, %c0_i32_1 : i32, i32, i32
  }
  func.func @transform_4(%arg0: i32) -> (i32, i32) {
    %c0_i32 = arith.constant 0 : i32
    %c0_i32_0 = arith.constant 0 : i32
    %c0_i32_1 = arith.constant 0 : i32
    return %c0_i32, %c0_i32_0 : i32, i32
  }
  func.func @transform_5(%arg0: i32) -> (i32, i32) {
    %c0_i32 = arith.constant 0 : i32
    %c0_i32_0 = arith.constant 0 : i32
    %c0_i32_1 = arith.constant 0 : i32
    return %c0_i32, %c0_i32_0 : i32, i32
  }
  func.func @transform_6(%arg0: i32) -> (i32, i32) {
    %c0_i32 = arith.constant 0 : i32
    %c0_i32_0 = arith.constant 0 : i32
    %c0_i32_1 = arith.constant 0 : i32
    return %c0_i32, %c0_i32_0 : i32, i32
  }
  func.func @transform_7(%arg0: i32) -> (i32, i32, i32, i32) {
    %c0_i32 = arith.constant 0 : i32
    %c0_i32_0 = arith.constant 0 : i32
    %c0_i32_1 = arith.constant 0 : i32
    %c0_i32_2 = arith.constant 0 : i32
    return %arg0, %c0_i32, %c0_i32_0, %c0_i32_1 : i32, i32, i32, i32
  }
}

module attributes {stable_mosaic.version = 11 : i64} {
  func.func @_head_kernel(%arg0: i32, %arg1: memref<1x8x8x64xbf16, #tpu.memory_space<vmem>>, %arg2: memref<3x3x64xf32, #tpu.memory_space<vmem>>, %arg3: memref<1x64xf32, #tpu.memory_space<vmem>>, %arg4: memref<64x24xbf16, #tpu.memory_space<vmem>>, %arg5: memref<1x24xf32, #tpu.memory_space<vmem>>, %arg6: memref<3x3x64xf32, #tpu.memory_space<vmem>>, %arg7: memref<1x64xf32, #tpu.memory_space<vmem>>, %arg8: memref<64x24xbf16, #tpu.memory_space<vmem>>, %arg9: memref<1x24xf32, #tpu.memory_space<vmem>>, %arg10: memref<1x8x8x24xf32, #tpu.memory_space<vmem>>, %arg11: memref<1x8x8x24xf32, #tpu.memory_space<vmem>>, %arg12: memref<10x10x64xf32, #tpu.memory_space<vmem>>) attributes {dimension_semantics = [#tpu.dimension_semantics<parallel>], iteration_bounds = array<i64: 2>, scalar_prefetch = 0 : i64, scratch_operands = 1 : i64, tpu.core_type = #tpu.core_type<tc>, window_params = [{transform_indices = @transform_0, window_bounds = array<i64: 1, 8, 8, 64>}, {pipeline_mode = #tpu.pipeline_mode<synchronous>, transform_indices = @transform_1, window_bounds = array<i64: 3, 3, 64>}, {pipeline_mode = #tpu.pipeline_mode<synchronous>, transform_indices = @transform_2, window_bounds = array<i64: 1, 64>}, {pipeline_mode = #tpu.pipeline_mode<synchronous>, transform_indices = @transform_3, window_bounds = array<i64: 64, 24>}, {pipeline_mode = #tpu.pipeline_mode<synchronous>, transform_indices = @transform_4, window_bounds = array<i64: 1, 24>}, {pipeline_mode = #tpu.pipeline_mode<synchronous>, transform_indices = @transform_5, window_bounds = array<i64: 3, 3, 64>}, {pipeline_mode = #tpu.pipeline_mode<synchronous>, transform_indices = @transform_6, window_bounds = array<i64: 1, 64>}, {pipeline_mode = #tpu.pipeline_mode<synchronous>, transform_indices = @transform_7, window_bounds = array<i64: 64, 24>}, {pipeline_mode = #tpu.pipeline_mode<synchronous>, transform_indices = @transform_8, window_bounds = array<i64: 1, 24>}, {transform_indices = @transform_9, window_bounds = array<i64: 1, 8, 8, 24>}, {transform_indices = @transform_10, window_bounds = array<i64: 1, 8, 8, 24>}]} {
    %c0 = arith.constant 0 : index
    %c0_0 = arith.constant 0 : index
    %c0_1 = arith.constant 0 : index
    %c0_2 = arith.constant 0 : index
    %0 = vector.load %arg1[%c0, %c0_0, %c0_1, %c0_2] : memref<1x8x8x64xbf16, #tpu.memory_space<vmem>>, vector<1x8x8x64xbf16>
    %1 = vector.shape_cast %0 : vector<1x8x8x64xbf16> to vector<8x8x64xbf16>
    %2 = arith.extf %1 : vector<8x8x64xbf16> to vector<8x8x64xf32>
    %c0_3 = arith.constant 0 : index
    %c0_4 = arith.constant 0 : index
    %c0_5 = arith.constant 0 : index
    %3 = vector.load %arg2[%c0_3, %c0_4, %c0_5] : memref<3x3x64xf32, #tpu.memory_space<vmem>>, vector<3x3x64xf32>
    %c0_6 = arith.constant 0 : index
    %c0_7 = arith.constant 0 : index
    %4 = vector.load %arg3[%c0_6, %c0_7] : memref<1x64xf32, #tpu.memory_space<vmem>>, vector<1x64xf32>
    %cst = arith.constant 0.000000e+00 : f32
    %5 = vector.broadcast %cst : f32 to vector<10x10x64xf32>
    %c0_8 = arith.constant 0 : index
    %c0_9 = arith.constant 0 : index
    %c0_10 = arith.constant 0 : index
    %6 = vector.load %arg12[%c0_8, %c0_9, %c0_10] : memref<10x10x64xf32, #tpu.memory_space<vmem>>, vector<10x10x64xf32>
    tpu.vector_store %arg12[%c0_8, %c0_9, %c0_10], %5 {strides = array<i32>} : memref<10x10x64xf32, #tpu.memory_space<vmem>>, vector<10x10x64xf32>,
    %c1 = arith.constant 1 : index
    %c1_11 = arith.constant 1 : index
    %c0_12 = arith.constant 0 : index
    %7 = vector.load %arg12[%c1, %c1_11, %c0_12] : memref<10x10x64xf32, #tpu.memory_space<vmem>>, vector<8x8x64xf32>
    tpu.vector_store %arg12[%c1, %c1_11, %c0_12], %2 {strides = array<i32>} : memref<10x10x64xf32, #tpu.memory_space<vmem>>, vector<8x8x64xf32>,
    %cst_13 = arith.constant 0.000000e+00 : f32
    %8 = vector.broadcast %cst_13 : f32 to vector<8x8x64xf32>
    %c0_14 = arith.constant 0 : index
    %c0_15 = arith.constant 0 : index
    %c0_16 = arith.constant 0 : index
    %9 = vector.load %arg12[%c0_14, %c0_15, %c0_16] : memref<10x10x64xf32, #tpu.memory_space<vmem>>, vector<8x8x64xf32>
    %10 = vector.extract_strided_slice %3 {offsets = [0, 0, 0], sizes = [1, 1, 64], strides = [1, 1, 1]} : vector<3x3x64xf32> to vector<1x1x64xf32>
    %11 = vector.shape_cast %10 : vector<1x1x64xf32> to vector<64xf32>
    %12 = vector.shape_cast %11 : vector<64xf32> to vector<1x1x64xf32>
    %13 = vector.broadcast %12 : vector<1x1x64xf32> to vector<8x8x64xf32>
    %14 = arith.mulf %9, %13 : vector<8x8x64xf32>
    %15 = arith.addf %8, %14 : vector<8x8x64xf32>
    %c0_17 = arith.constant 0 : index
    %c1_18 = arith.constant 1 : index
    %c0_19 = arith.constant 0 : index
    %16 = vector.load %arg12[%c0_17, %c1_18, %c0_19] : memref<10x10x64xf32, #tpu.memory_space<vmem>>, vector<8x8x64xf32>
    %17 = vector.extract_strided_slice %3 {offsets = [0, 1, 0], sizes = [1, 1, 64], strides = [1, 1, 1]} : vector<3x3x64xf32> to vector<1x1x64xf32>
    %18 = vector.shape_cast %17 : vector<1x1x64xf32> to vector<64xf32>
    %19 = vector.shape_cast %18 : vector<64xf32> to vector<1x1x64xf32>
    %20 = vector.broadcast %19 : vector<1x1x64xf32> to vector<8x8x64xf32>
    %21 = arith.mulf %16, %20 : vector<8x8x64xf32>
    %22 = arith.addf %15, %21 : vector<8x8x64xf32>
    %c0_20 = arith.constant 0 : index
    %c2 = arith.constant 2 : index
    %c0_21 = arith.constant 0 : index
    %23 = vector.load %arg12[%c0_20, %c2, %c0_21] : memref<10x10x64xf32, #tpu.memory_space<vmem>>, vector<8x8x64xf32>
    %24 = vector.extract_strided_slice %3 {offsets = [0, 2, 0], sizes = [1, 1, 64], strides = [1, 1, 1]} : vector<3x3x64xf32> to vector<1x1x64xf32>
    %25 = vector.shape_cast %24 : vector<1x1x64xf32> to vector<64xf32>
    %26 = vector.shape_cast %25 : vector<64xf32> to vector<1x1x64xf32>
    %27 = vector.broadcast %26 : vector<1x1x64xf32> to vector<8x8x64xf32>
    %28 = arith.mulf %23, %27 : vector<8x8x64xf32>
    %29 = arith.addf %22, %28 : vector<8x8x64xf32>
    %c1_22 = arith.constant 1 : index
    %c0_23 = arith.constant 0 : index
    %c0_24 = arith.constant 0 : index
    %30 = vector.load %arg12[%c1_22, %c0_23, %c0_24] : memref<10x10x64xf32, #tpu.memory_space<vmem>>, vector<8x8x64xf32>
    %31 = vector.extract_strided_slice %3 {offsets = [1, 0, 0], sizes = [1, 1, 64], strides = [1, 1, 1]} : vector<3x3x64xf32> to vector<1x1x64xf32>
    %32 = vector.shape_cast %31 : vector<1x1x64xf32> to vector<64xf32>
    %33 = vector.shape_cast %32 : vector<64xf32> to vector<1x1x64xf32>
    %34 = vector.broadcast %33 : vector<1x1x64xf32> to vector<8x8x64xf32>
    %35 = arith.mulf %30, %34 : vector<8x8x64xf32>
    %36 = arith.addf %29, %35 : vector<8x8x64xf32>
    %c1_25 = arith.constant 1 : index
    %c1_26 = arith.constant 1 : index
    %c0_27 = arith.constant 0 : index
    %37 = vector.load %arg12[%c1_25, %c1_26, %c0_27] : memref<10x10x64xf32, #tpu.memory_space<vmem>>, vector<8x8x64xf32>
    %38 = vector.extract_strided_slice %3 {offsets = [1, 1, 0], sizes = [1, 1, 64], strides = [1, 1, 1]} : vector<3x3x64xf32> to vector<1x1x64xf32>
    %39 = vector.shape_cast %38 : vector<1x1x64xf32> to vector<64xf32>
    %40 = vector.shape_cast %39 : vector<64xf32> to vector<1x1x64xf32>
    %41 = vector.broadcast %40 : vector<1x1x64xf32> to vector<8x8x64xf32>
    %42 = arith.mulf %37, %41 : vector<8x8x64xf32>
    %43 = arith.addf %36, %42 : vector<8x8x64xf32>
    %c1_28 = arith.constant 1 : index
    %c2_29 = arith.constant 2 : index
    %c0_30 = arith.constant 0 : index
    %44 = vector.load %arg12[%c1_28, %c2_29, %c0_30] : memref<10x10x64xf32, #tpu.memory_space<vmem>>, vector<8x8x64xf32>
    %45 = vector.extract_strided_slice %3 {offsets = [1, 2, 0], sizes = [1, 1, 64], strides = [1, 1, 1]} : vector<3x3x64xf32> to vector<1x1x64xf32>
    %46 = vector.shape_cast %45 : vector<1x1x64xf32> to vector<64xf32>
    %47 = vector.shape_cast %46 : vector<64xf32> to vector<1x1x64xf32>
    %48 = vector.broadcast %47 : vector<1x1x64xf32> to vector<8x8x64xf32>
    %49 = arith.mulf %44, %48 : vector<8x8x64xf32>
    %50 = arith.addf %43, %49 : vector<8x8x64xf32>
    %c2_31 = arith.constant 2 : index
    %c0_32 = arith.constant 0 : index
    %c0_33 = arith.constant 0 : index
    %51 = vector.load %arg12[%c2_31, %c0_32, %c0_33] : memref<10x10x64xf32, #tpu.memory_space<vmem>>, vector<8x8x64xf32>
    %52 = vector.extract_strided_slice %3 {offsets = [2, 0, 0], sizes = [1, 1, 64], strides = [1, 1, 1]} : vector<3x3x64xf32> to vector<1x1x64xf32>
    %53 = vector.shape_cast %52 : vector<1x1x64xf32> to vector<64xf32>
    %54 = vector.shape_cast %53 : vector<64xf32> to vector<1x1x64xf32>
    %55 = vector.broadcast %54 : vector<1x1x64xf32> to vector<8x8x64xf32>
    %56 = arith.mulf %51, %55 : vector<8x8x64xf32>
    %57 = arith.addf %50, %56 : vector<8x8x64xf32>
    %c2_34 = arith.constant 2 : index
    %c1_35 = arith.constant 1 : index
    %c0_36 = arith.constant 0 : index
    %58 = vector.load %arg12[%c2_34, %c1_35, %c0_36] : memref<10x10x64xf32, #tpu.memory_space<vmem>>, vector<8x8x64xf32>
    %59 = vector.extract_strided_slice %3 {offsets = [2, 1, 0], sizes = [1, 1, 64], strides = [1, 1, 1]} : vector<3x3x64xf32> to vector<1x1x64xf32>
    %60 = vector.shape_cast %59 : vector<1x1x64xf32> to vector<64xf32>
    %61 = vector.shape_cast %60 : vector<64xf32> to vector<1x1x64xf32>
    %62 = vector.broadcast %61 : vector<1x1x64xf32> to vector<8x8x64xf32>
    %63 = arith.mulf %58, %62 : vector<8x8x64xf32>
    %64 = arith.addf %57, %63 : vector<8x8x64xf32>
    %c2_37 = arith.constant 2 : index
    %c2_38 = arith.constant 2 : index
    %c0_39 = arith.constant 0 : index
    %65 = vector.load %arg12[%c2_37, %c2_38, %c0_39] : memref<10x10x64xf32, #tpu.memory_space<vmem>>, vector<8x8x64xf32>
    %66 = vector.extract_strided_slice %3 {offsets = [2, 2, 0], sizes = [1, 1, 64], strides = [1, 1, 1]} : vector<3x3x64xf32> to vector<1x1x64xf32>
    %67 = vector.shape_cast %66 : vector<1x1x64xf32> to vector<64xf32>
    %68 = vector.shape_cast %67 : vector<64xf32> to vector<1x1x64xf32>
    %69 = vector.broadcast %68 : vector<1x1x64xf32> to vector<8x8x64xf32>
    %70 = arith.mulf %65, %69 : vector<8x8x64xf32>
    %71 = arith.addf %64, %70 : vector<8x8x64xf32>
    %72 = vector.shape_cast %4 : vector<1x64xf32> to vector<1x1x64xf32>
    %73 = vector.broadcast %72 : vector<1x1x64xf32> to vector<8x8x64xf32>
    %74 = arith.addf %71, %73 : vector<8x8x64xf32>
    %cst_40 = arith.constant 0.000000e+00 : f32
    %cst_41 = arith.constant 6.000000e+00 : f32
    %75 = vector.broadcast %cst_40 : f32 to vector<8x8x64xf32>
    %76 = arith.maximumf %75, %74 : vector<8x8x64xf32>
    %77 = vector.broadcast %cst_41 : f32 to vector<8x8x64xf32>
    %78 = arith.minimumf %77, %76 : vector<8x8x64xf32>
    %79 = vector.shape_cast %78 : vector<8x8x64xf32> to vector<64x64xf32>
    %80 = arith.truncf %79 : vector<64x64xf32> to vector<64x64xbf16>
    %c0_42 = arith.constant 0 : index
    %c0_43 = arith.constant 0 : index
    %81 = vector.load %arg4[%c0_42, %c0_43] : memref<64x24xbf16, #tpu.memory_space<vmem>>, vector<64x24xbf16>
    %cst_44 = arith.constant dense<0.000000e+00> : vector<64x24xf32>
    %82 = tpu.matmul %80, %81, %cst_44 {dimension_numbers = #tpu.dot_dimension_numbers<[1], [0], [0], [1], [0, 0, 1, 1], [], []>} : vector<64x64xbf16>, vector<64x24xbf16>, vector<64x24xf32> -> vector<64x24xf32>
    %c0_45 = arith.constant 0 : index
    %c0_46 = arith.constant 0 : index
    %83 = vector.load %arg5[%c0_45, %c0_46] : memref<1x24xf32, #tpu.memory_space<vmem>>, vector<1x24xf32>
    %84 = vector.broadcast %83 : vector<1x24xf32> to vector<64x24xf32>
    %85 = arith.addf %82, %84 : vector<64x24xf32>
    %86 = vector.shape_cast %85 : vector<64x24xf32> to vector<8x8x24xf32>
    %c0_47 = arith.constant 0 : index
    %c0_48 = arith.constant 0 : index
    %c0_49 = arith.constant 0 : index
    %c0_50 = arith.constant 0 : index
    %87 = vector.load %arg10[%c0_47, %c0_48, %c0_49, %c0_50] : memref<1x8x8x24xf32, #tpu.memory_space<vmem>>, vector<1x8x8x24xf32>
    %88 = vector.shape_cast %87 : vector<1x8x8x24xf32> to vector<8x8x24xf32>
    %89 = vector.shape_cast %86 : vector<8x8x24xf32> to vector<1x8x8x24xf32>
    tpu.vector_store %arg10[%c0_47, %c0_48, %c0_49, %c0_50], %89 {strides = array<i32>} : memref<1x8x8x24xf32, #tpu.memory_space<vmem>>, vector<1x8x8x24xf32>,
    %c0_51 = arith.constant 0 : index
    %c0_52 = arith.constant 0 : index
    %c0_53 = arith.constant 0 : index
    %90 = vector.load %arg6[%c0_51, %c0_52, %c0_53] : memref<3x3x64xf32, #tpu.memory_space<vmem>>, vector<3x3x64xf32>
    %c0_54 = arith.constant 0 : index
    %c0_55 = arith.constant 0 : index
    %91 = vector.load %arg7[%c0_54, %c0_55] : memref<1x64xf32, #tpu.memory_space<vmem>>, vector<1x64xf32>
    %cst_56 = arith.constant 0.000000e+00 : f32
    %92 = vector.broadcast %cst_56 : f32 to vector<10x10x64xf32>
    %c0_57 = arith.constant 0 : index
    %c0_58 = arith.constant 0 : index
    %c0_59 = arith.constant 0 : index
    %93 = vector.load %arg12[%c0_57, %c0_58, %c0_59] : memref<10x10x64xf32, #tpu.memory_space<vmem>>, vector<10x10x64xf32>
    tpu.vector_store %arg12[%c0_57, %c0_58, %c0_59], %92 {strides = array<i32>} : memref<10x10x64xf32, #tpu.memory_space<vmem>>, vector<10x10x64xf32>,
    %c1_60 = arith.constant 1 : index
    %c1_61 = arith.constant 1 : index
    %c0_62 = arith.constant 0 : index
    %94 = vector.load %arg12[%c1_60, %c1_61, %c0_62] : memref<10x10x64xf32, #tpu.memory_space<vmem>>, vector<8x8x64xf32>
    tpu.vector_store %arg12[%c1_60, %c1_61, %c0_62], %2 {strides = array<i32>} : memref<10x10x64xf32, #tpu.memory_space<vmem>>, vector<8x8x64xf32>,
    %cst_63 = arith.constant 0.000000e+00 : f32
    %95 = vector.broadcast %cst_63 : f32 to vector<8x8x64xf32>
    %c0_64 = arith.constant 0 : index
    %c0_65 = arith.constant 0 : index
    %c0_66 = arith.constant 0 : index
    %96 = vector.load %arg12[%c0_64, %c0_65, %c0_66] : memref<10x10x64xf32, #tpu.memory_space<vmem>>, vector<8x8x64xf32>
    %97 = vector.extract_strided_slice %90 {offsets = [0, 0, 0], sizes = [1, 1, 64], strides = [1, 1, 1]} : vector<3x3x64xf32> to vector<1x1x64xf32>
    %98 = vector.shape_cast %97 : vector<1x1x64xf32> to vector<64xf32>
    %99 = vector.shape_cast %98 : vector<64xf32> to vector<1x1x64xf32>
    %100 = vector.broadcast %99 : vector<1x1x64xf32> to vector<8x8x64xf32>
    %101 = arith.mulf %96, %100 : vector<8x8x64xf32>
    %102 = arith.addf %95, %101 : vector<8x8x64xf32>
    %c0_67 = arith.constant 0 : index
    %c1_68 = arith.constant 1 : index
    %c0_69 = arith.constant 0 : index
    %103 = vector.load %arg12[%c0_67, %c1_68, %c0_69] : memref<10x10x64xf32, #tpu.memory_space<vmem>>, vector<8x8x64xf32>
    %104 = vector.extract_strided_slice %90 {offsets = [0, 1, 0], sizes = [1, 1, 64], strides = [1, 1, 1]} : vector<3x3x64xf32> to vector<1x1x64xf32>
    %105 = vector.shape_cast %104 : vector<1x1x64xf32> to vector<64xf32>
    %106 = vector.shape_cast %105 : vector<64xf32> to vector<1x1x64xf32>
    %107 = vector.broadcast %106 : vector<1x1x64xf32> to vector<8x8x64xf32>
    %108 = arith.mulf %103, %107 : vector<8x8x64xf32>
    %109 = arith.addf %102, %108 : vector<8x8x64xf32>
    %c0_70 = arith.constant 0 : index
    %c2_71 = arith.constant 2 : index
    %c0_72 = arith.constant 0 : index
    %110 = vector.load %arg12[%c0_70, %c2_71, %c0_72] : memref<10x10x64xf32, #tpu.memory_space<vmem>>, vector<8x8x64xf32>
    %111 = vector.extract_strided_slice %90 {offsets = [0, 2, 0], sizes = [1, 1, 64], strides = [1, 1, 1]} : vector<3x3x64xf32> to vector<1x1x64xf32>
    %112 = vector.shape_cast %111 : vector<1x1x64xf32> to vector<64xf32>
    %113 = vector.shape_cast %112 : vector<64xf32> to vector<1x1x64xf32>
    %114 = vector.broadcast %113 : vector<1x1x64xf32> to vector<8x8x64xf32>
    %115 = arith.mulf %110, %114 : vector<8x8x64xf32>
    %116 = arith.addf %109, %115 : vector<8x8x64xf32>
    %c1_73 = arith.constant 1 : index
    %c0_74 = arith.constant 0 : index
    %c0_75 = arith.constant 0 : index
    %117 = vector.load %arg12[%c1_73, %c0_74, %c0_75] : memref<10x10x64xf32, #tpu.memory_space<vmem>>, vector<8x8x64xf32>
    %118 = vector.extract_strided_slice %90 {offsets = [1, 0, 0], sizes = [1, 1, 64], strides = [1, 1, 1]} : vector<3x3x64xf32> to vector<1x1x64xf32>
    %119 = vector.shape_cast %118 : vector<1x1x64xf32> to vector<64xf32>
    %120 = vector.shape_cast %119 : vector<64xf32> to vector<1x1x64xf32>
    %121 = vector.broadcast %120 : vector<1x1x64xf32> to vector<8x8x64xf32>
    %122 = arith.mulf %117, %121 : vector<8x8x64xf32>
    %123 = arith.addf %116, %122 : vector<8x8x64xf32>
    %c1_76 = arith.constant 1 : index
    %c1_77 = arith.constant 1 : index
    %c0_78 = arith.constant 0 : index
    %124 = vector.load %arg12[%c1_76, %c1_77, %c0_78] : memref<10x10x64xf32, #tpu.memory_space<vmem>>, vector<8x8x64xf32>
    %125 = vector.extract_strided_slice %90 {offsets = [1, 1, 0], sizes = [1, 1, 64], strides = [1, 1, 1]} : vector<3x3x64xf32> to vector<1x1x64xf32>
    %126 = vector.shape_cast %125 : vector<1x1x64xf32> to vector<64xf32>
    %127 = vector.shape_cast %126 : vector<64xf32> to vector<1x1x64xf32>
    %128 = vector.broadcast %127 : vector<1x1x64xf32> to vector<8x8x64xf32>
    %129 = arith.mulf %124, %128 : vector<8x8x64xf32>
    %130 = arith.addf %123, %129 : vector<8x8x64xf32>
    %c1_79 = arith.constant 1 : index
    %c2_80 = arith.constant 2 : index
    %c0_81 = arith.constant 0 : index
    %131 = vector.load %arg12[%c1_79, %c2_80, %c0_81] : memref<10x10x64xf32, #tpu.memory_space<vmem>>, vector<8x8x64xf32>
    %132 = vector.extract_strided_slice %90 {offsets = [1, 2, 0], sizes = [1, 1, 64], strides = [1, 1, 1]} : vector<3x3x64xf32> to vector<1x1x64xf32>
    %133 = vector.shape_cast %132 : vector<1x1x64xf32> to vector<64xf32>
    %134 = vector.shape_cast %133 : vector<64xf32> to vector<1x1x64xf32>
    %135 = vector.broadcast %134 : vector<1x1x64xf32> to vector<8x8x64xf32>
    %136 = arith.mulf %131, %135 : vector<8x8x64xf32>
    %137 = arith.addf %130, %136 : vector<8x8x64xf32>
    %c2_82 = arith.constant 2 : index
    %c0_83 = arith.constant 0 : index
    %c0_84 = arith.constant 0 : index
    %138 = vector.load %arg12[%c2_82, %c0_83, %c0_84] : memref<10x10x64xf32, #tpu.memory_space<vmem>>, vector<8x8x64xf32>
    %139 = vector.extract_strided_slice %90 {offsets = [2, 0, 0], sizes = [1, 1, 64], strides = [1, 1, 1]} : vector<3x3x64xf32> to vector<1x1x64xf32>
    %140 = vector.shape_cast %139 : vector<1x1x64xf32> to vector<64xf32>
    %141 = vector.shape_cast %140 : vector<64xf32> to vector<1x1x64xf32>
    %142 = vector.broadcast %141 : vector<1x1x64xf32> to vector<8x8x64xf32>
    %143 = arith.mulf %138, %142 : vector<8x8x64xf32>
    %144 = arith.addf %137, %143 : vector<8x8x64xf32>
    %c2_85 = arith.constant 2 : index
    %c1_86 = arith.constant 1 : index
    %c0_87 = arith.constant 0 : index
    %145 = vector.load %arg12[%c2_85, %c1_86, %c0_87] : memref<10x10x64xf32, #tpu.memory_space<vmem>>, vector<8x8x64xf32>
    %146 = vector.extract_strided_slice %90 {offsets = [2, 1, 0], sizes = [1, 1, 64], strides = [1, 1, 1]} : vector<3x3x64xf32> to vector<1x1x64xf32>
    %147 = vector.shape_cast %146 : vector<1x1x64xf32> to vector<64xf32>
    %148 = vector.shape_cast %147 : vector<64xf32> to vector<1x1x64xf32>
    %149 = vector.broadcast %148 : vector<1x1x64xf32> to vector<8x8x64xf32>
    %150 = arith.mulf %145, %149 : vector<8x8x64xf32>
    %151 = arith.addf %144, %150 : vector<8x8x64xf32>
    %c2_88 = arith.constant 2 : index
    %c2_89 = arith.constant 2 : index
    %c0_90 = arith.constant 0 : index
    %152 = vector.load %arg12[%c2_88, %c2_89, %c0_90] : memref<10x10x64xf32, #tpu.memory_space<vmem>>, vector<8x8x64xf32>
    %153 = vector.extract_strided_slice %90 {offsets = [2, 2, 0], sizes = [1, 1, 64], strides = [1, 1, 1]} : vector<3x3x64xf32> to vector<1x1x64xf32>
    %154 = vector.shape_cast %153 : vector<1x1x64xf32> to vector<64xf32>
    %155 = vector.shape_cast %154 : vector<64xf32> to vector<1x1x64xf32>
    %156 = vector.broadcast %155 : vector<1x1x64xf32> to vector<8x8x64xf32>
    %157 = arith.mulf %152, %156 : vector<8x8x64xf32>
    %158 = arith.addf %151, %157 : vector<8x8x64xf32>
    %159 = vector.shape_cast %91 : vector<1x64xf32> to vector<1x1x64xf32>
    %160 = vector.broadcast %159 : vector<1x1x64xf32> to vector<8x8x64xf32>
    %161 = arith.addf %158, %160 : vector<8x8x64xf32>
    %cst_91 = arith.constant 0.000000e+00 : f32
    %cst_92 = arith.constant 6.000000e+00 : f32
    %162 = vector.broadcast %cst_91 : f32 to vector<8x8x64xf32>
    %163 = arith.maximumf %162, %161 : vector<8x8x64xf32>
    %164 = vector.broadcast %cst_92 : f32 to vector<8x8x64xf32>
    %165 = arith.minimumf %164, %163 : vector<8x8x64xf32>
    %166 = vector.shape_cast %165 : vector<8x8x64xf32> to vector<64x64xf32>
    %167 = arith.truncf %166 : vector<64x64xf32> to vector<64x64xbf16>
    %c0_93 = arith.constant 0 : index
    %c0_94 = arith.constant 0 : index
    %168 = vector.load %arg8[%c0_93, %c0_94] : memref<64x24xbf16, #tpu.memory_space<vmem>>, vector<64x24xbf16>
    %cst_95 = arith.constant dense<0.000000e+00> : vector<64x24xf32>
    %169 = tpu.matmul %167, %168, %cst_95 {dimension_numbers = #tpu.dot_dimension_numbers<[1], [0], [0], [1], [0, 0, 1, 1], [], []>} : vector<64x64xbf16>, vector<64x24xbf16>, vector<64x24xf32> -> vector<64x24xf32>
    %c0_96 = arith.constant 0 : index
    %c0_97 = arith.constant 0 : index
    %170 = vector.load %arg9[%c0_96, %c0_97] : memref<1x24xf32, #tpu.memory_space<vmem>>, vector<1x24xf32>
    %171 = vector.broadcast %170 : vector<1x24xf32> to vector<64x24xf32>
    %172 = arith.addf %169, %171 : vector<64x24xf32>
    %173 = vector.shape_cast %172 : vector<64x24xf32> to vector<8x8x24xf32>
    %c0_98 = arith.constant 0 : index
    %c0_99 = arith.constant 0 : index
    %c0_100 = arith.constant 0 : index
    %c0_101 = arith.constant 0 : index
    %174 = vector.load %arg11[%c0_98, %c0_99, %c0_100, %c0_101] : memref<1x8x8x24xf32, #tpu.memory_space<vmem>>, vector<1x8x8x24xf32>
    %175 = vector.shape_cast %174 : vector<1x8x8x24xf32> to vector<8x8x24xf32>
    %176 = vector.shape_cast %173 : vector<8x8x24xf32> to vector<1x8x8x24xf32>
    tpu.vector_store %arg11[%c0_98, %c0_99, %c0_100, %c0_101], %176 {strides = array<i32>} : memref<1x8x8x24xf32, #tpu.memory_space<vmem>>, vector<1x8x8x24xf32>,
    return
  }
  func.func @transform_0(%arg0: i32) -> (i32, i32, i32, i32) {
    %c0_i32 = arith.constant 0 : i32
    %c0_i32_0 = arith.constant 0 : i32
    %c0_i32_1 = arith.constant 0 : i32
    %c0_i32_2 = arith.constant 0 : i32
    return %arg0, %c0_i32, %c0_i32_0, %c0_i32_1 : i32, i32, i32, i32
  }
  func.func @transform_1(%arg0: i32) -> (i32, i32, i32) {
    %c0_i32 = arith.constant 0 : i32
    %c0_i32_0 = arith.constant 0 : i32
    %c0_i32_1 = arith.constant 0 : i32
    %c0_i32_2 = arith.constant 0 : i32
    return %c0_i32, %c0_i32_0, %c0_i32_1 : i32, i32, i32
  }
  func.func @transform_2(%arg0: i32) -> (i32, i32) {
    %c0_i32 = arith.constant 0 : i32
    %c0_i32_0 = arith.constant 0 : i32
    %c0_i32_1 = arith.constant 0 : i32
    return %c0_i32, %c0_i32_0 : i32, i32
  }
  func.func @transform_3(%arg0: i32) -> (i32, i32) {
    %c0_i32 = arith.constant 0 : i32
    %c0_i32_0 = arith.constant 0 : i32
    %c0_i32_1 = arith.constant 0 : i32
    return %c0_i32, %c0_i32_0 : i32, i32
  }
  func.func @transform_4(%arg0: i32) -> (i32, i32) {
    %c0_i32 = arith.constant 0 : i32
    %c0_i32_0 = arith.constant 0 : i32
    %c0_i32_1 = arith.constant 0 : i32
    return %c0_i32, %c0_i32_0 : i32, i32
  }
  func.func @transform_5(%arg0: i32) -> (i32, i32, i32) {
    %c0_i32 = arith.constant 0 : i32
    %c0_i32_0 = arith.constant 0 : i32
    %c0_i32_1 = arith.constant 0 : i32
    %c0_i32_2 = arith.constant 0 : i32
    return %c0_i32, %c0_i32_0, %c0_i32_1 : i32, i32, i32
  }
  func.func @transform_6(%arg0: i32) -> (i32, i32) {
    %c0_i32 = arith.constant 0 : i32
    %c0_i32_0 = arith.constant 0 : i32
    %c0_i32_1 = arith.constant 0 : i32
    return %c0_i32, %c0_i32_0 : i32, i32
  }
  func.func @transform_7(%arg0: i32) -> (i32, i32) {
    %c0_i32 = arith.constant 0 : i32
    %c0_i32_0 = arith.constant 0 : i32
    %c0_i32_1 = arith.constant 0 : i32
    return %c0_i32, %c0_i32_0 : i32, i32
  }
  func.func @transform_8(%arg0: i32) -> (i32, i32) {
    %c0_i32 = arith.constant 0 : i32
    %c0_i32_0 = arith.constant 0 : i32
    %c0_i32_1 = arith.constant 0 : i32
    return %c0_i32, %c0_i32_0 : i32, i32
  }
  func.func @transform_9(%arg0: i32) -> (i32, i32, i32, i32) {
    %c0_i32 = arith.constant 0 : i32
    %c0_i32_0 = arith.constant 0 : i32
    %c0_i32_1 = arith.constant 0 : i32
    %c0_i32_2 = arith.constant 0 : i32
    return %arg0, %c0_i32, %c0_i32_0, %c0_i32_1 : i32, i32, i32, i32
  }
  func.func @transform_10(%arg0: i32) -> (i32, i32, i32, i32) {
    %c0_i32 = arith.constant 0 : i32
    %c0_i32_0 = arith.constant 0 : i32
    %c0_i32_1 = arith.constant 0 : i32
    %c0_i32_2 = arith.constant 0 : i32
    return %arg0, %c0_i32, %c0_i32_0, %c0_i32_1 : i32, i32, i32, i32
  }
}

module attributes {stable_mosaic.version = 11 : i64} {
  func.func @_head_kernel(%arg0: i32, %arg1: memref<1x16x16x32xbf16, #tpu.memory_space<vmem>>, %arg2: memref<3x3x32xf32, #tpu.memory_space<vmem>>, %arg3: memref<1x32xf32, #tpu.memory_space<vmem>>, %arg4: memref<32x24xbf16, #tpu.memory_space<vmem>>, %arg5: memref<1x24xf32, #tpu.memory_space<vmem>>, %arg6: memref<3x3x32xf32, #tpu.memory_space<vmem>>, %arg7: memref<1x32xf32, #tpu.memory_space<vmem>>, %arg8: memref<32x24xbf16, #tpu.memory_space<vmem>>, %arg9: memref<1x24xf32, #tpu.memory_space<vmem>>, %arg10: memref<1x16x16x24xf32, #tpu.memory_space<vmem>>, %arg11: memref<1x16x16x24xf32, #tpu.memory_space<vmem>>, %arg12: memref<18x18x32xf32, #tpu.memory_space<vmem>>) attributes {dimension_semantics = [#tpu.dimension_semantics<parallel>], iteration_bounds = array<i64: 2>, scalar_prefetch = 0 : i64, scratch_operands = 1 : i64, tpu.core_type = #tpu.core_type<tc>, window_params = [{transform_indices = @transform_0, window_bounds = array<i64: 1, 16, 16, 32>}, {pipeline_mode = #tpu.pipeline_mode<synchronous>, transform_indices = @transform_1, window_bounds = array<i64: 3, 3, 32>}, {pipeline_mode = #tpu.pipeline_mode<synchronous>, transform_indices = @transform_2, window_bounds = array<i64: 1, 32>}, {pipeline_mode = #tpu.pipeline_mode<synchronous>, transform_indices = @transform_3, window_bounds = array<i64: 32, 24>}, {pipeline_mode = #tpu.pipeline_mode<synchronous>, transform_indices = @transform_4, window_bounds = array<i64: 1, 24>}, {pipeline_mode = #tpu.pipeline_mode<synchronous>, transform_indices = @transform_5, window_bounds = array<i64: 3, 3, 32>}, {pipeline_mode = #tpu.pipeline_mode<synchronous>, transform_indices = @transform_6, window_bounds = array<i64: 1, 32>}, {pipeline_mode = #tpu.pipeline_mode<synchronous>, transform_indices = @transform_7, window_bounds = array<i64: 32, 24>}, {pipeline_mode = #tpu.pipeline_mode<synchronous>, transform_indices = @transform_8, window_bounds = array<i64: 1, 24>}, {transform_indices = @transform_9, window_bounds = array<i64: 1, 16, 16, 24>}, {transform_indices = @transform_10, window_bounds = array<i64: 1, 16, 16, 24>}]} {
    %c0 = arith.constant 0 : index
    %c0_0 = arith.constant 0 : index
    %c0_1 = arith.constant 0 : index
    %c0_2 = arith.constant 0 : index
    %0 = vector.load %arg1[%c0, %c0_0, %c0_1, %c0_2] : memref<1x16x16x32xbf16, #tpu.memory_space<vmem>>, vector<1x16x16x32xbf16>
    %1 = vector.shape_cast %0 : vector<1x16x16x32xbf16> to vector<16x16x32xbf16>
    %2 = arith.extf %1 : vector<16x16x32xbf16> to vector<16x16x32xf32>
    %c0_3 = arith.constant 0 : index
    %c0_4 = arith.constant 0 : index
    %c0_5 = arith.constant 0 : index
    %3 = vector.load %arg2[%c0_3, %c0_4, %c0_5] : memref<3x3x32xf32, #tpu.memory_space<vmem>>, vector<3x3x32xf32>
    %c0_6 = arith.constant 0 : index
    %c0_7 = arith.constant 0 : index
    %4 = vector.load %arg3[%c0_6, %c0_7] : memref<1x32xf32, #tpu.memory_space<vmem>>, vector<1x32xf32>
    %cst = arith.constant 0.000000e+00 : f32
    %5 = vector.broadcast %cst : f32 to vector<18x18x32xf32>
    %c0_8 = arith.constant 0 : index
    %c0_9 = arith.constant 0 : index
    %c0_10 = arith.constant 0 : index
    %6 = vector.load %arg12[%c0_8, %c0_9, %c0_10] : memref<18x18x32xf32, #tpu.memory_space<vmem>>, vector<18x18x32xf32>
    tpu.vector_store %arg12[%c0_8, %c0_9, %c0_10], %5 {strides = array<i32>} : memref<18x18x32xf32, #tpu.memory_space<vmem>>, vector<18x18x32xf32>,
    %c1 = arith.constant 1 : index
    %c1_11 = arith.constant 1 : index
    %c0_12 = arith.constant 0 : index
    %7 = vector.load %arg12[%c1, %c1_11, %c0_12] : memref<18x18x32xf32, #tpu.memory_space<vmem>>, vector<16x16x32xf32>
    tpu.vector_store %arg12[%c1, %c1_11, %c0_12], %2 {strides = array<i32>} : memref<18x18x32xf32, #tpu.memory_space<vmem>>, vector<16x16x32xf32>,
    %cst_13 = arith.constant 0.000000e+00 : f32
    %8 = vector.broadcast %cst_13 : f32 to vector<16x16x32xf32>
    %c0_14 = arith.constant 0 : index
    %c0_15 = arith.constant 0 : index
    %c0_16 = arith.constant 0 : index
    %9 = vector.load %arg12[%c0_14, %c0_15, %c0_16] : memref<18x18x32xf32, #tpu.memory_space<vmem>>, vector<16x16x32xf32>
    %10 = vector.extract_strided_slice %3 {offsets = [0, 0, 0], sizes = [1, 1, 32], strides = [1, 1, 1]} : vector<3x3x32xf32> to vector<1x1x32xf32>
    %11 = vector.shape_cast %10 : vector<1x1x32xf32> to vector<32xf32>
    %12 = vector.shape_cast %11 : vector<32xf32> to vector<1x1x32xf32>
    %13 = vector.broadcast %12 : vector<1x1x32xf32> to vector<16x16x32xf32>
    %14 = arith.mulf %9, %13 : vector<16x16x32xf32>
    %15 = arith.addf %8, %14 : vector<16x16x32xf32>
    %c0_17 = arith.constant 0 : index
    %c1_18 = arith.constant 1 : index
    %c0_19 = arith.constant 0 : index
    %16 = vector.load %arg12[%c0_17, %c1_18, %c0_19] : memref<18x18x32xf32, #tpu.memory_space<vmem>>, vector<16x16x32xf32>
    %17 = vector.extract_strided_slice %3 {offsets = [0, 1, 0], sizes = [1, 1, 32], strides = [1, 1, 1]} : vector<3x3x32xf32> to vector<1x1x32xf32>
    %18 = vector.shape_cast %17 : vector<1x1x32xf32> to vector<32xf32>
    %19 = vector.shape_cast %18 : vector<32xf32> to vector<1x1x32xf32>
    %20 = vector.broadcast %19 : vector<1x1x32xf32> to vector<16x16x32xf32>
    %21 = arith.mulf %16, %20 : vector<16x16x32xf32>
    %22 = arith.addf %15, %21 : vector<16x16x32xf32>
    %c0_20 = arith.constant 0 : index
    %c2 = arith.constant 2 : index
    %c0_21 = arith.constant 0 : index
    %23 = vector.load %arg12[%c0_20, %c2, %c0_21] : memref<18x18x32xf32, #tpu.memory_space<vmem>>, vector<16x16x32xf32>
    %24 = vector.extract_strided_slice %3 {offsets = [0, 2, 0], sizes = [1, 1, 32], strides = [1, 1, 1]} : vector<3x3x32xf32> to vector<1x1x32xf32>
    %25 = vector.shape_cast %24 : vector<1x1x32xf32> to vector<32xf32>
    %26 = vector.shape_cast %25 : vector<32xf32> to vector<1x1x32xf32>
    %27 = vector.broadcast %26 : vector<1x1x32xf32> to vector<16x16x32xf32>
    %28 = arith.mulf %23, %27 : vector<16x16x32xf32>
    %29 = arith.addf %22, %28 : vector<16x16x32xf32>
    %c1_22 = arith.constant 1 : index
    %c0_23 = arith.constant 0 : index
    %c0_24 = arith.constant 0 : index
    %30 = vector.load %arg12[%c1_22, %c0_23, %c0_24] : memref<18x18x32xf32, #tpu.memory_space<vmem>>, vector<16x16x32xf32>
    %31 = vector.extract_strided_slice %3 {offsets = [1, 0, 0], sizes = [1, 1, 32], strides = [1, 1, 1]} : vector<3x3x32xf32> to vector<1x1x32xf32>
    %32 = vector.shape_cast %31 : vector<1x1x32xf32> to vector<32xf32>
    %33 = vector.shape_cast %32 : vector<32xf32> to vector<1x1x32xf32>
    %34 = vector.broadcast %33 : vector<1x1x32xf32> to vector<16x16x32xf32>
    %35 = arith.mulf %30, %34 : vector<16x16x32xf32>
    %36 = arith.addf %29, %35 : vector<16x16x32xf32>
    %c1_25 = arith.constant 1 : index
    %c1_26 = arith.constant 1 : index
    %c0_27 = arith.constant 0 : index
    %37 = vector.load %arg12[%c1_25, %c1_26, %c0_27] : memref<18x18x32xf32, #tpu.memory_space<vmem>>, vector<16x16x32xf32>
    %38 = vector.extract_strided_slice %3 {offsets = [1, 1, 0], sizes = [1, 1, 32], strides = [1, 1, 1]} : vector<3x3x32xf32> to vector<1x1x32xf32>
    %39 = vector.shape_cast %38 : vector<1x1x32xf32> to vector<32xf32>
    %40 = vector.shape_cast %39 : vector<32xf32> to vector<1x1x32xf32>
    %41 = vector.broadcast %40 : vector<1x1x32xf32> to vector<16x16x32xf32>
    %42 = arith.mulf %37, %41 : vector<16x16x32xf32>
    %43 = arith.addf %36, %42 : vector<16x16x32xf32>
    %c1_28 = arith.constant 1 : index
    %c2_29 = arith.constant 2 : index
    %c0_30 = arith.constant 0 : index
    %44 = vector.load %arg12[%c1_28, %c2_29, %c0_30] : memref<18x18x32xf32, #tpu.memory_space<vmem>>, vector<16x16x32xf32>
    %45 = vector.extract_strided_slice %3 {offsets = [1, 2, 0], sizes = [1, 1, 32], strides = [1, 1, 1]} : vector<3x3x32xf32> to vector<1x1x32xf32>
    %46 = vector.shape_cast %45 : vector<1x1x32xf32> to vector<32xf32>
    %47 = vector.shape_cast %46 : vector<32xf32> to vector<1x1x32xf32>
    %48 = vector.broadcast %47 : vector<1x1x32xf32> to vector<16x16x32xf32>
    %49 = arith.mulf %44, %48 : vector<16x16x32xf32>
    %50 = arith.addf %43, %49 : vector<16x16x32xf32>
    %c2_31 = arith.constant 2 : index
    %c0_32 = arith.constant 0 : index
    %c0_33 = arith.constant 0 : index
    %51 = vector.load %arg12[%c2_31, %c0_32, %c0_33] : memref<18x18x32xf32, #tpu.memory_space<vmem>>, vector<16x16x32xf32>
    %52 = vector.extract_strided_slice %3 {offsets = [2, 0, 0], sizes = [1, 1, 32], strides = [1, 1, 1]} : vector<3x3x32xf32> to vector<1x1x32xf32>
    %53 = vector.shape_cast %52 : vector<1x1x32xf32> to vector<32xf32>
    %54 = vector.shape_cast %53 : vector<32xf32> to vector<1x1x32xf32>
    %55 = vector.broadcast %54 : vector<1x1x32xf32> to vector<16x16x32xf32>
    %56 = arith.mulf %51, %55 : vector<16x16x32xf32>
    %57 = arith.addf %50, %56 : vector<16x16x32xf32>
    %c2_34 = arith.constant 2 : index
    %c1_35 = arith.constant 1 : index
    %c0_36 = arith.constant 0 : index
    %58 = vector.load %arg12[%c2_34, %c1_35, %c0_36] : memref<18x18x32xf32, #tpu.memory_space<vmem>>, vector<16x16x32xf32>
    %59 = vector.extract_strided_slice %3 {offsets = [2, 1, 0], sizes = [1, 1, 32], strides = [1, 1, 1]} : vector<3x3x32xf32> to vector<1x1x32xf32>
    %60 = vector.shape_cast %59 : vector<1x1x32xf32> to vector<32xf32>
    %61 = vector.shape_cast %60 : vector<32xf32> to vector<1x1x32xf32>
    %62 = vector.broadcast %61 : vector<1x1x32xf32> to vector<16x16x32xf32>
    %63 = arith.mulf %58, %62 : vector<16x16x32xf32>
    %64 = arith.addf %57, %63 : vector<16x16x32xf32>
    %c2_37 = arith.constant 2 : index
    %c2_38 = arith.constant 2 : index
    %c0_39 = arith.constant 0 : index
    %65 = vector.load %arg12[%c2_37, %c2_38, %c0_39] : memref<18x18x32xf32, #tpu.memory_space<vmem>>, vector<16x16x32xf32>
    %66 = vector.extract_strided_slice %3 {offsets = [2, 2, 0], sizes = [1, 1, 32], strides = [1, 1, 1]} : vector<3x3x32xf32> to vector<1x1x32xf32>
    %67 = vector.shape_cast %66 : vector<1x1x32xf32> to vector<32xf32>
    %68 = vector.shape_cast %67 : vector<32xf32> to vector<1x1x32xf32>
    %69 = vector.broadcast %68 : vector<1x1x32xf32> to vector<16x16x32xf32>
    %70 = arith.mulf %65, %69 : vector<16x16x32xf32>
    %71 = arith.addf %64, %70 : vector<16x16x32xf32>
    %72 = vector.shape_cast %4 : vector<1x32xf32> to vector<1x1x32xf32>
    %73 = vector.broadcast %72 : vector<1x1x32xf32> to vector<16x16x32xf32>
    %74 = arith.addf %71, %73 : vector<16x16x32xf32>
    %cst_40 = arith.constant 0.000000e+00 : f32
    %cst_41 = arith.constant 6.000000e+00 : f32
    %75 = vector.broadcast %cst_40 : f32 to vector<16x16x32xf32>
    %76 = arith.maximumf %75, %74 : vector<16x16x32xf32>
    %77 = vector.broadcast %cst_41 : f32 to vector<16x16x32xf32>
    %78 = arith.minimumf %77, %76 : vector<16x16x32xf32>
    %79 = vector.shape_cast %78 : vector<16x16x32xf32> to vector<256x32xf32>
    %80 = arith.truncf %79 : vector<256x32xf32> to vector<256x32xbf16>
    %c0_42 = arith.constant 0 : index
    %c0_43 = arith.constant 0 : index
    %81 = vector.load %arg4[%c0_42, %c0_43] : memref<32x24xbf16, #tpu.memory_space<vmem>>, vector<32x24xbf16>
    %cst_44 = arith.constant dense<0.000000e+00> : vector<256x24xf32>
    %82 = tpu.matmul %80, %81, %cst_44 {dimension_numbers = #tpu.dot_dimension_numbers<[1], [0], [0], [1], [0, 0, 1, 1], [], []>} : vector<256x32xbf16>, vector<32x24xbf16>, vector<256x24xf32> -> vector<256x24xf32>
    %c0_45 = arith.constant 0 : index
    %c0_46 = arith.constant 0 : index
    %83 = vector.load %arg5[%c0_45, %c0_46] : memref<1x24xf32, #tpu.memory_space<vmem>>, vector<1x24xf32>
    %84 = vector.broadcast %83 : vector<1x24xf32> to vector<256x24xf32>
    %85 = arith.addf %82, %84 : vector<256x24xf32>
    %86 = vector.shape_cast %85 : vector<256x24xf32> to vector<16x16x24xf32>
    %c0_47 = arith.constant 0 : index
    %c0_48 = arith.constant 0 : index
    %c0_49 = arith.constant 0 : index
    %c0_50 = arith.constant 0 : index
    %87 = vector.load %arg10[%c0_47, %c0_48, %c0_49, %c0_50] : memref<1x16x16x24xf32, #tpu.memory_space<vmem>>, vector<1x16x16x24xf32>
    %88 = vector.shape_cast %87 : vector<1x16x16x24xf32> to vector<16x16x24xf32>
    %89 = vector.shape_cast %86 : vector<16x16x24xf32> to vector<1x16x16x24xf32>
    tpu.vector_store %arg10[%c0_47, %c0_48, %c0_49, %c0_50], %89 {strides = array<i32>} : memref<1x16x16x24xf32, #tpu.memory_space<vmem>>, vector<1x16x16x24xf32>,
    %c0_51 = arith.constant 0 : index
    %c0_52 = arith.constant 0 : index
    %c0_53 = arith.constant 0 : index
    %90 = vector.load %arg6[%c0_51, %c0_52, %c0_53] : memref<3x3x32xf32, #tpu.memory_space<vmem>>, vector<3x3x32xf32>
    %c0_54 = arith.constant 0 : index
    %c0_55 = arith.constant 0 : index
    %91 = vector.load %arg7[%c0_54, %c0_55] : memref<1x32xf32, #tpu.memory_space<vmem>>, vector<1x32xf32>
    %cst_56 = arith.constant 0.000000e+00 : f32
    %92 = vector.broadcast %cst_56 : f32 to vector<18x18x32xf32>
    %c0_57 = arith.constant 0 : index
    %c0_58 = arith.constant 0 : index
    %c0_59 = arith.constant 0 : index
    %93 = vector.load %arg12[%c0_57, %c0_58, %c0_59] : memref<18x18x32xf32, #tpu.memory_space<vmem>>, vector<18x18x32xf32>
    tpu.vector_store %arg12[%c0_57, %c0_58, %c0_59], %92 {strides = array<i32>} : memref<18x18x32xf32, #tpu.memory_space<vmem>>, vector<18x18x32xf32>,
    %c1_60 = arith.constant 1 : index
    %c1_61 = arith.constant 1 : index
    %c0_62 = arith.constant 0 : index
    %94 = vector.load %arg12[%c1_60, %c1_61, %c0_62] : memref<18x18x32xf32, #tpu.memory_space<vmem>>, vector<16x16x32xf32>
    tpu.vector_store %arg12[%c1_60, %c1_61, %c0_62], %2 {strides = array<i32>} : memref<18x18x32xf32, #tpu.memory_space<vmem>>, vector<16x16x32xf32>,
    %cst_63 = arith.constant 0.000000e+00 : f32
    %95 = vector.broadcast %cst_63 : f32 to vector<16x16x32xf32>
    %c0_64 = arith.constant 0 : index
    %c0_65 = arith.constant 0 : index
    %c0_66 = arith.constant 0 : index
    %96 = vector.load %arg12[%c0_64, %c0_65, %c0_66] : memref<18x18x32xf32, #tpu.memory_space<vmem>>, vector<16x16x32xf32>
    %97 = vector.extract_strided_slice %90 {offsets = [0, 0, 0], sizes = [1, 1, 32], strides = [1, 1, 1]} : vector<3x3x32xf32> to vector<1x1x32xf32>
    %98 = vector.shape_cast %97 : vector<1x1x32xf32> to vector<32xf32>
    %99 = vector.shape_cast %98 : vector<32xf32> to vector<1x1x32xf32>
    %100 = vector.broadcast %99 : vector<1x1x32xf32> to vector<16x16x32xf32>
    %101 = arith.mulf %96, %100 : vector<16x16x32xf32>
    %102 = arith.addf %95, %101 : vector<16x16x32xf32>
    %c0_67 = arith.constant 0 : index
    %c1_68 = arith.constant 1 : index
    %c0_69 = arith.constant 0 : index
    %103 = vector.load %arg12[%c0_67, %c1_68, %c0_69] : memref<18x18x32xf32, #tpu.memory_space<vmem>>, vector<16x16x32xf32>
    %104 = vector.extract_strided_slice %90 {offsets = [0, 1, 0], sizes = [1, 1, 32], strides = [1, 1, 1]} : vector<3x3x32xf32> to vector<1x1x32xf32>
    %105 = vector.shape_cast %104 : vector<1x1x32xf32> to vector<32xf32>
    %106 = vector.shape_cast %105 : vector<32xf32> to vector<1x1x32xf32>
    %107 = vector.broadcast %106 : vector<1x1x32xf32> to vector<16x16x32xf32>
    %108 = arith.mulf %103, %107 : vector<16x16x32xf32>
    %109 = arith.addf %102, %108 : vector<16x16x32xf32>
    %c0_70 = arith.constant 0 : index
    %c2_71 = arith.constant 2 : index
    %c0_72 = arith.constant 0 : index
    %110 = vector.load %arg12[%c0_70, %c2_71, %c0_72] : memref<18x18x32xf32, #tpu.memory_space<vmem>>, vector<16x16x32xf32>
    %111 = vector.extract_strided_slice %90 {offsets = [0, 2, 0], sizes = [1, 1, 32], strides = [1, 1, 1]} : vector<3x3x32xf32> to vector<1x1x32xf32>
    %112 = vector.shape_cast %111 : vector<1x1x32xf32> to vector<32xf32>
    %113 = vector.shape_cast %112 : vector<32xf32> to vector<1x1x32xf32>
    %114 = vector.broadcast %113 : vector<1x1x32xf32> to vector<16x16x32xf32>
    %115 = arith.mulf %110, %114 : vector<16x16x32xf32>
    %116 = arith.addf %109, %115 : vector<16x16x32xf32>
    %c1_73 = arith.constant 1 : index
    %c0_74 = arith.constant 0 : index
    %c0_75 = arith.constant 0 : index
    %117 = vector.load %arg12[%c1_73, %c0_74, %c0_75] : memref<18x18x32xf32, #tpu.memory_space<vmem>>, vector<16x16x32xf32>
    %118 = vector.extract_strided_slice %90 {offsets = [1, 0, 0], sizes = [1, 1, 32], strides = [1, 1, 1]} : vector<3x3x32xf32> to vector<1x1x32xf32>
    %119 = vector.shape_cast %118 : vector<1x1x32xf32> to vector<32xf32>
    %120 = vector.shape_cast %119 : vector<32xf32> to vector<1x1x32xf32>
    %121 = vector.broadcast %120 : vector<1x1x32xf32> to vector<16x16x32xf32>
    %122 = arith.mulf %117, %121 : vector<16x16x32xf32>
    %123 = arith.addf %116, %122 : vector<16x16x32xf32>
    %c1_76 = arith.constant 1 : index
    %c1_77 = arith.constant 1 : index
    %c0_78 = arith.constant 0 : index
    %124 = vector.load %arg12[%c1_76, %c1_77, %c0_78] : memref<18x18x32xf32, #tpu.memory_space<vmem>>, vector<16x16x32xf32>
    %125 = vector.extract_strided_slice %90 {offsets = [1, 1, 0], sizes = [1, 1, 32], strides = [1, 1, 1]} : vector<3x3x32xf32> to vector<1x1x32xf32>
    %126 = vector.shape_cast %125 : vector<1x1x32xf32> to vector<32xf32>
    %127 = vector.shape_cast %126 : vector<32xf32> to vector<1x1x32xf32>
    %128 = vector.broadcast %127 : vector<1x1x32xf32> to vector<16x16x32xf32>
    %129 = arith.mulf %124, %128 : vector<16x16x32xf32>
    %130 = arith.addf %123, %129 : vector<16x16x32xf32>
    %c1_79 = arith.constant 1 : index
    %c2_80 = arith.constant 2 : index
    %c0_81 = arith.constant 0 : index
    %131 = vector.load %arg12[%c1_79, %c2_80, %c0_81] : memref<18x18x32xf32, #tpu.memory_space<vmem>>, vector<16x16x32xf32>
    %132 = vector.extract_strided_slice %90 {offsets = [1, 2, 0], sizes = [1, 1, 32], strides = [1, 1, 1]} : vector<3x3x32xf32> to vector<1x1x32xf32>
    %133 = vector.shape_cast %132 : vector<1x1x32xf32> to vector<32xf32>
    %134 = vector.shape_cast %133 : vector<32xf32> to vector<1x1x32xf32>
    %135 = vector.broadcast %134 : vector<1x1x32xf32> to vector<16x16x32xf32>
    %136 = arith.mulf %131, %135 : vector<16x16x32xf32>
    %137 = arith.addf %130, %136 : vector<16x16x32xf32>
    %c2_82 = arith.constant 2 : index
    %c0_83 = arith.constant 0 : index
    %c0_84 = arith.constant 0 : index
    %138 = vector.load %arg12[%c2_82, %c0_83, %c0_84] : memref<18x18x32xf32, #tpu.memory_space<vmem>>, vector<16x16x32xf32>
    %139 = vector.extract_strided_slice %90 {offsets = [2, 0, 0], sizes = [1, 1, 32], strides = [1, 1, 1]} : vector<3x3x32xf32> to vector<1x1x32xf32>
    %140 = vector.shape_cast %139 : vector<1x1x32xf32> to vector<32xf32>
    %141 = vector.shape_cast %140 : vector<32xf32> to vector<1x1x32xf32>
    %142 = vector.broadcast %141 : vector<1x1x32xf32> to vector<16x16x32xf32>
    %143 = arith.mulf %138, %142 : vector<16x16x32xf32>
    %144 = arith.addf %137, %143 : vector<16x16x32xf32>
    %c2_85 = arith.constant 2 : index
    %c1_86 = arith.constant 1 : index
    %c0_87 = arith.constant 0 : index
    %145 = vector.load %arg12[%c2_85, %c1_86, %c0_87] : memref<18x18x32xf32, #tpu.memory_space<vmem>>, vector<16x16x32xf32>
    %146 = vector.extract_strided_slice %90 {offsets = [2, 1, 0], sizes = [1, 1, 32], strides = [1, 1, 1]} : vector<3x3x32xf32> to vector<1x1x32xf32>
    %147 = vector.shape_cast %146 : vector<1x1x32xf32> to vector<32xf32>
    %148 = vector.shape_cast %147 : vector<32xf32> to vector<1x1x32xf32>
    %149 = vector.broadcast %148 : vector<1x1x32xf32> to vector<16x16x32xf32>
    %150 = arith.mulf %145, %149 : vector<16x16x32xf32>
    %151 = arith.addf %144, %150 : vector<16x16x32xf32>
    %c2_88 = arith.constant 2 : index
    %c2_89 = arith.constant 2 : index
    %c0_90 = arith.constant 0 : index
    %152 = vector.load %arg12[%c2_88, %c2_89, %c0_90] : memref<18x18x32xf32, #tpu.memory_space<vmem>>, vector<16x16x32xf32>
    %153 = vector.extract_strided_slice %90 {offsets = [2, 2, 0], sizes = [1, 1, 32], strides = [1, 1, 1]} : vector<3x3x32xf32> to vector<1x1x32xf32>
    %154 = vector.shape_cast %153 : vector<1x1x32xf32> to vector<32xf32>
    %155 = vector.shape_cast %154 : vector<32xf32> to vector<1x1x32xf32>
    %156 = vector.broadcast %155 : vector<1x1x32xf32> to vector<16x16x32xf32>
    %157 = arith.mulf %152, %156 : vector<16x16x32xf32>
    %158 = arith.addf %151, %157 : vector<16x16x32xf32>
    %159 = vector.shape_cast %91 : vector<1x32xf32> to vector<1x1x32xf32>
    %160 = vector.broadcast %159 : vector<1x1x32xf32> to vector<16x16x32xf32>
    %161 = arith.addf %158, %160 : vector<16x16x32xf32>
    %cst_91 = arith.constant 0.000000e+00 : f32
    %cst_92 = arith.constant 6.000000e+00 : f32
    %162 = vector.broadcast %cst_91 : f32 to vector<16x16x32xf32>
    %163 = arith.maximumf %162, %161 : vector<16x16x32xf32>
    %164 = vector.broadcast %cst_92 : f32 to vector<16x16x32xf32>
    %165 = arith.minimumf %164, %163 : vector<16x16x32xf32>
    %166 = vector.shape_cast %165 : vector<16x16x32xf32> to vector<256x32xf32>
    %167 = arith.truncf %166 : vector<256x32xf32> to vector<256x32xbf16>
    %c0_93 = arith.constant 0 : index
    %c0_94 = arith.constant 0 : index
    %168 = vector.load %arg8[%c0_93, %c0_94] : memref<32x24xbf16, #tpu.memory_space<vmem>>, vector<32x24xbf16>
    %cst_95 = arith.constant dense<0.000000e+00> : vector<256x24xf32>
    %169 = tpu.matmul %167, %168, %cst_95 {dimension_numbers = #tpu.dot_dimension_numbers<[1], [0], [0], [1], [0, 0, 1, 1], [], []>} : vector<256x32xbf16>, vector<32x24xbf16>, vector<256x24xf32> -> vector<256x24xf32>
    %c0_96 = arith.constant 0 : index
    %c0_97 = arith.constant 0 : index
    %170 = vector.load %arg9[%c0_96, %c0_97] : memref<1x24xf32, #tpu.memory_space<vmem>>, vector<1x24xf32>
    %171 = vector.broadcast %170 : vector<1x24xf32> to vector<256x24xf32>
    %172 = arith.addf %169, %171 : vector<256x24xf32>
    %173 = vector.shape_cast %172 : vector<256x24xf32> to vector<16x16x24xf32>
    %c0_98 = arith.constant 0 : index
    %c0_99 = arith.constant 0 : index
    %c0_100 = arith.constant 0 : index
    %c0_101 = arith.constant 0 : index
    %174 = vector.load %arg11[%c0_98, %c0_99, %c0_100, %c0_101] : memref<1x16x16x24xf32, #tpu.memory_space<vmem>>, vector<1x16x16x24xf32>
    %175 = vector.shape_cast %174 : vector<1x16x16x24xf32> to vector<16x16x24xf32>
    %176 = vector.shape_cast %173 : vector<16x16x24xf32> to vector<1x16x16x24xf32>
    tpu.vector_store %arg11[%c0_98, %c0_99, %c0_100, %c0_101], %176 {strides = array<i32>} : memref<1x16x16x24xf32, #tpu.memory_space<vmem>>, vector<1x16x16x24xf32>,
    return
  }
  func.func @transform_0(%arg0: i32) -> (i32, i32, i32, i32) {
    %c0_i32 = arith.constant 0 : i32
    %c0_i32_0 = arith.constant 0 : i32
    %c0_i32_1 = arith.constant 0 : i32
    %c0_i32_2 = arith.constant 0 : i32
    return %arg0, %c0_i32, %c0_i32_0, %c0_i32_1 : i32, i32, i32, i32
  }
  func.func @transform_1(%arg0: i32) -> (i32, i32, i32) {
    %c0_i32 = arith.constant 0 : i32
    %c0_i32_0 = arith.constant 0 : i32
    %c0_i32_1 = arith.constant 0 : i32
    %c0_i32_2 = arith.constant 0 : i32
    return %c0_i32, %c0_i32_0, %c0_i32_1 : i32, i32, i32
  }
  func.func @transform_2(%arg0: i32) -> (i32, i32) {
    %c0_i32 = arith.constant 0 : i32
    %c0_i32_0 = arith.constant 0 : i32
    %c0_i32_1 = arith.constant 0 : i32
    return %c0_i32, %c0_i32_0 : i32, i32
  }
  func.func @transform_3(%arg0: i32) -> (i32, i32) {
    %c0_i32 = arith.constant 0 : i32
    %c0_i32_0 = arith.constant 0 : i32
    %c0_i32_1 = arith.constant 0 : i32
    return %c0_i32, %c0_i32_0 : i32, i32
  }
  func.func @transform_4(%arg0: i32) -> (i32, i32) {
    %c0_i32 = arith.constant 0 : i32
    %c0_i32_0 = arith.constant 0 : i32
    %c0_i32_1 = arith.constant 0 : i32
    return %c0_i32, %c0_i32_0 : i32, i32
  }
  func.func @transform_5(%arg0: i32) -> (i32, i32, i32) {
    %c0_i32 = arith.constant 0 : i32
    %c0_i32_0 = arith.constant 0 : i32
    %c0_i32_1 = arith.constant 0 : i32
    %c0_i32_2 = arith.constant 0 : i32
    return %c0_i32, %c0_i32_0, %c0_i32_1 : i32, i32, i32
  }
  func.func @transform_6(%arg0: i32) -> (i32, i32) {
    %c0_i32 = arith.constant 0 : i32
    %c0_i32_0 = arith.constant 0 : i32
    %c0_i32_1 = arith.constant 0 : i32
    return %c0_i32, %c0_i32_0 : i32, i32
  }
  func.func @transform_7(%arg0: i32) -> (i32, i32) {
    %c0_i32 = arith.constant 0 : i32
    %c0_i32_0 = arith.constant 0 : i32
    %c0_i32_1 = arith.constant 0 : i32
    return %c0_i32, %c0_i32_0 : i32, i32
  }
  func.func @transform_8(%arg0: i32) -> (i32, i32) {
    %c0_i32 = arith.constant 0 : i32
    %c0_i32_0 = arith.constant 0 : i32
    %c0_i32_1 = arith.constant 0 : i32
    return %c0_i32, %c0_i32_0 : i32, i32
  }
  func.func @transform_9(%arg0: i32) -> (i32, i32, i32, i32) {
    %c0_i32 = arith.constant 0 : i32
    %c0_i32_0 = arith.constant 0 : i32
    %c0_i32_1 = arith.constant 0 : i32
    %c0_i32_2 = arith.constant 0 : i32
    return %arg0, %c0_i32, %c0_i32_0, %c0_i32_1 : i32, i32, i32, i32
  }
  func.func @transform_10(%arg0: i32) -> (i32, i32, i32, i32) {
    %c0_i32 = arith.constant 0 : i32
    %c0_i32_0 = arith.constant 0 : i32
    %c0_i32_1 = arith.constant 0 : i32
    %c0_i32_2 = arith.constant 0 : i32
    return %arg0, %c0_i32, %c0_i32_0, %c0_i32_1 : i32, i32, i32, i32
  }
}

</mosaic_0001>

<llo_original>
// kernel: ssdlite_forward.5
$region0: #{ssdlite_forward.5}
  #allocation0 [shape = 'u32[]', space=smem, size = 0x4, offset = 0x4, fixed_abs, tag = 'smem constant byte address 0x4 - core index']
  #allocation1 [shape = 'u32[144,128]{1,0:T(1,128)}', space=vmem, size = 0x12000, scoped, tag = 'internal scratch']
  #allocation2 [shape = 'f32[10,10,64]{2,1,0:T(8,128)}', space=vmem, size = 0x14000, scoped, tag = 'scratch operand']
  %s0 = inlined_call_operand.vmem [shape: bf16[2,8,8,32], index: 0, kind: input, shape index: {}]
  %s1 = inlined_call_operand.vmem [shape: bf16[32,64], index: 1, kind: input, shape index: {}]
  %s2 = inlined_call_operand.hbm [shape: f32[1,64], index: 2, kind: input, shape index: {}]
  %s3 = inlined_call_operand.hbm [shape: f32[3,3,64], index: 3, kind: input, shape index: {}]
  %s4 = inlined_call_operand.hbm [shape: f32[1,64], index: 4, kind: input, shape index: {}]
  %s5 = inlined_call_operand.vmem [shape: bf16[2,8,8,64], index: 5, kind: output, shape index: {}]
  %s6 = sld [smem:[#allocation0]]
  $region65: #{ssdlite_forward.5} parent=0
    _
  %s8 = ssub.s32 1, %s6
  %s9 = scalar_select 0, %s8, %s6
  $region1: #{ssdlite_forward.5} parent=0
    #allocation3 [shape = 'u8[512]{0}', space=vmem, size = 0x400, scoped, tag = 'input window, operand 2, single buffered']
    #allocation4 [shape = 's32[2]{0}', space=sflag, size = 0x8, scoped, tag = 'scoped memory for ssdlite_forward.5']
    #allocation5 [shape = 'u8[6144]{0}', space=vmem, size = 0x1800, scoped, tag = 'input window, operand 3, single buffered']
    #allocation6 [shape = 's32[1]{0}', space=sflag, size = 0x4, scoped, tag = 'scoped memory for ssdlite_forward.5']
    #allocation7 [shape = 'u8[512]{0}', space=vmem, size = 0x400, scoped, tag = 'input window, operand 4, single buffered']
    %10 = vsyncpa [#allocation4], 0
    %11 = vsyncpa [#allocation6], 0
    loop: start=0, step=1, limit=4
    $region2: #{ssdlite_forward.5} parent=1 // loop_pre_header
      _
    $region3: #{ssdlite_forward.5} parent=1 // loop_header
      %s13 = sphi 0, %s17
      %p14 = scmp.ge.s32.totalorder %s13, 4
      %s23 = sphi 0, %s25
      %s26 = sphi 0, %s23
      %s27 = sphi 0, %s26
      %s43 = sphi 0, %s27
      %s47 = sphi 0, %s47
      %s49 = sphi 0, %s47
      %s50 = sphi 0, %s49
      %s64 = sphi 0, %s50
      %s68 = sphi 0, %s68
      %s70 = sphi 0, %s68
      %s71 = sphi 0, %s70
      %s85 = sphi 0, %s71
      %s89 = sphi 0, %s89
      %s91 = sphi 0, %s89
      %s92 = sphi 0, %s91
      %s106 = sphi 0, %s92
      %s110 = sphi 0, %s110
      %s112 = sphi 0, %s110
      %s113 = sphi 0, %s112
      %s127 = sphi 0, %s113
      %s133 = sphi 0, %s135
      %s136 = sphi 0, %s133
      %s137 = sphi 0, %s136
      %s153 = sphi 0, %s137
    $region4: #{ssdlite_forward.5} parent=1 // loop_header_branch
      %16 = sbr.rel (%p14) target = $region8
    $region5: #{ssdlite_forward.5} parent=1 // loop_body
      %s18 = ssub.s32 %s13, 1
      %s19 = ssub.s32 %s13, 2
      %s20 = sadd.s32 %s13, 1
      %s21 = ssub.s32 %s13, %s20
      %p22 = scmp.eq.s32.totalorder %s21, 0
      %s24 = sadd.s32 %s23, 1
      %s25 = scalar_select %p22, %s23, %s24
      %p28 = pneg %p22
      %p29 = scmp.eq.s32.totalorder %s13, 1
      %p30 = por %p28, %p29
      %p31 = scmp.ne.s32.totalorder %s23, %s26
      %p32 = scmp.eq.s32.totalorder %s13, 0
      %p33 = por %p31, %p32
      %p34 = scmp.ne.s32.totalorder %s23, %s26
      %p35 = scmp.eq.s32.totalorder %s18, 1
      %p36 = por %p34, %p35
      %p37 = scmp.ne.s32.totalorder %s26, %s27
      %p38 = scmp.eq.s32.totalorder %s18, 0
      %p39 = por %p37, %p38
      %p40 = scmp.ne.s32.totalorder %s26, %s27
      %p41 = scmp.eq.s32.totalorder %s19, 1
      %p42 = por %p40, %p41
      %p44 = scmp.ne.s32.totalorder %s27, %s43
      %p45 = scmp.eq.s32.totalorder %s19, 0
      %p46 = por %p44, %p45
      %s48 = sadd.s32 %s47, 1
      %p51 = scmp.eq.s32.totalorder %s13, 1
      %p52 = scmp.ne.s32.totalorder %s47, %s49
      %p53 = scmp.eq.s32.totalorder %s13, 0
      %p54 = por %p52, %p53
      %p55 = scmp.ne.s32.totalorder %s47, %s49
      %p56 = scmp.eq.s32.totalorder %s18, 1
      %p57 = por %p55, %p56
      %p58 = scmp.ne.s32.totalorder %s49, %s50
      %p59 = scmp.eq.s32.totalorder %s18, 0
      %p60 = por %p58, %p59
      %p61 = scmp.ne.s32.totalorder %s49, %s50
      %p62 = scmp.eq.s32.totalorder %s19, 1
      %p63 = por %p61, %p62
      %p65 = scmp.ne.s32.totalorder %s50, %s64
      %p66 = scmp.eq.s32.totalorder %s19, 0
      %p67 = por %p65, %p66
      %s69 = sadd.s32 %s68, 1
      %p72 = scmp.eq.s32.totalorder %s13, 1
      %p73 = scmp.ne.s32.totalorder %s68, %s70
      %p74 = scmp.eq.s32.totalorder %s13, 0
      %p75 = por %p73, %p74
      %p76 = scmp.ne.s32.totalorder %s68, %s70
      %p77 = scmp.eq.s32.totalorder %s18, 1
      %p78 = por %p76, %p77
      %p79 = scmp.ne.s32.totalorder %s70, %s71
      %p80 = scmp.eq.s32.totalorder %s18, 0
      %p81 = por %p79, %p80
      %p82 = scmp.ne.s32.totalorder %s70, %s71
      %p83 = scmp.eq.s32.totalorder %s19, 1
      %p84 = por %p82, %p83
      %p86 = scmp.ne.s32.totalorder %s71, %s85
      %p87 = scmp.eq.s32.totalorder %s19, 0
      %p88 = por %p86, %p87
      %s90 = sadd.s32 %s89, 1
      %p93 = scmp.eq.s32.totalorder %s13, 1
      %p94 = scmp.ne.s32.totalorder %s89, %s91
      %p95 = scmp.eq.s32.totalorder %s13, 0
      %p96 = por %p94, %p95
      %p97 = scmp.ne.s32.totalorder %s89, %s91
      %p98 = scmp.eq.s32.totalorder %s18, 1
      %p99 = por %p97, %p98
      %p100 = scmp.ne.s32.totalorder %s91, %s92
      %p101 = scmp.eq.s32.totalorder %s18, 0
      %p102 = por %p100, %p101
      %p103 = scmp.ne.s32.totalorder %s91, %s92
      %p104 = scmp.eq.s32.totalorder %s19, 1
      %p105 = por %p103, %p104
      %p107 = scmp.ne.s32.totalorder %s92, %s106
      %p108 = scmp.eq.s32.totalorder %s19, 0
      %p109 = por %p107, %p108
      %s111 = sadd.s32 %s110, 1
      %p114 = scmp.eq.s32.totalorder %s13, 1
      %p115 = scmp.ne.s32.totalorder %s110, %s112
      %p116 = scmp.eq.s32.totalorder %s13, 0
      %p117 = por %p115, %p116
      %p118 = scmp.ne.s32.totalorder %s110, %s112
      %p119 = scmp.eq.s32.totalorder %s18, 1
      %p120 = por %p118, %p119
      %p121 = scmp.ne.s32.totalorder %s112, %s113
      %p122 = scmp.eq.s32.totalorder %s18, 0
      %p123 = por %p121, %p122
      %p124 = scmp.ne.s32.totalorder %s112, %s113
      %p125 = scmp.eq.s32.totalorder %s19, 1
      %p126 = por %p124, %p125
      %p128 = scmp.ne.s32.totalorder %s113, %s127
      %p129 = scmp.eq.s32.totalorder %s19, 0
      %p130 = por %p128, %p129
      %s131 = ssub.s32 %s13, %s20
      %p132 = scmp.eq.s32.totalorder %s131, 0
      %s134 = sadd.s32 %s133, 1
      %s135 = scalar_select %p132, %s133, %s134
      %p138 = pneg %p132
      %p139 = scmp.eq.s32.totalorder %s13, 1
      %p140 = por %p138, %p139
      %p141 = scmp.ne.s32.totalorder %s133, %s136
      %p142 = scmp.eq.s32.totalorder %s13, 0
      %p143 = por %p141, %p142
      %p144 = scmp.ne.s32.totalorder %s133, %s136
      %p145 = scmp.eq.s32.totalorder %s18, 1
      %p146 = por %p144, %p145
      %p147 = scmp.ne.s32.totalorder %s136, %s137
      %p148 = scmp.eq.s32.totalorder %s18, 0
      %p149 = por %p147, %p148
      %p150 = scmp.ne.s32.totalorder %s136, %s137
      %p151 = scmp.eq.s32.totalorder %s19, 1
      %p152 = por %p150, %p151
      %p154 = scmp.ne.s32.totalorder %s137, %s153
      %p155 = scmp.eq.s32.totalorder %s19, 0
      %p156 = por %p154, %p155
      %p157 = scmp.le.s32.totalorder 1, %s13
      %p158 = scmp.lt.s32.totalorder %s13, 3
      %p159 = pnand %p157, %p158
      %p160 = pneg %p159
      // Predicated region
      $region9: #{ssdlite_forward.5} parent=5 // pred_check
        _
      $region10: #{ssdlite_forward.5} parent=5 // pred_check_branch
        %162 = sbr.rel (%p159) target = $region12
      $region11: #{ssdlite_forward.5} parent=5 // pred_region
        %s163 = ssub.s32 %s13, 1
        // Predicated region
        $region13: #{ssdlite_forward.5} parent=11 // pred_check
          %p164 = pneg %p60
        $region14: #{ssdlite_forward.5} parent=11 // pred_check_branch
          %166 = sbr.rel (%p164) target = $region16
        $region15: #{ssdlite_forward.5} parent=11 // pred_region
          _
        $region16: #{ssdlite_forward.5} parent=11 // pred_fallthru
          _
        // Predicated region
        $region17: #{ssdlite_forward.5} parent=11 // pred_check
          %p167 = pneg %p81
        $region18: #{ssdlite_forward.5} parent=11 // pred_check_branch
          %169 = sbr.rel (%p167) target = $region20
        $region19: #{ssdlite_forward.5} parent=11 // pred_region
          %s171 = ssub.s32 16, 16
          %172 = vsyncadd [#allocation4], %s171
          %s174 = sshll.u32 [#allocation3], 4
          %s175 = int_to_ptr.vmem [resolvable:$true] %s174
          %177 = dma.hbm_to_vmem [thread:$0]  %s2, 16, %s175, [#allocation4]
        $region20: #{ssdlite_forward.5} parent=11 // pred_fallthru
          _
        // Predicated region
        $region21: #{ssdlite_forward.5} parent=11 // pred_check
          %p178 = pneg %p102
        $region22: #{ssdlite_forward.5} parent=11 // pred_check_branch
          %180 = sbr.rel (%p178) target = $region24
        $region23: #{ssdlite_forward.5} parent=11 // pred_region
          %s182 = ssub.s32 192, 192
          %183 = vsyncadd [#allocation6], %s182
          %s184 = sshll.u32 [#allocation5], 4
          %s185 = int_to_ptr.vmem [resolvable:$true] %s184
          %190 = dma.hbm_to_vmem [thread:$0]  %s3, 192, %s185, [#allocation6], 64, 64, 4
        $region24: #{ssdlite_forward.5} parent=11 // pred_fallthru
          _
        // Predicated region
        $region25: #{ssdlite_forward.5} parent=11 // pred_check
          %p191 = pneg %p123
        $region26: #{ssdlite_forward.5} parent=11 // pred_check_branch
          %193 = sbr.rel (%p191) target = $region28
        $region27: #{ssdlite_forward.5} parent=11 // pred_region
          %s195 = ssub.s32 16, 16
          %196 = vsyncadd [#allocation6], %s195
          %s198 = sshll.u32 [#allocation7], 4
          %s199 = int_to_ptr.vmem [resolvable:$true] %s198
          %201 = dma.hbm_to_vmem [thread:$0]  %s4, 16, %s199, [#allocation6]
        $region28: #{ssdlite_forward.5} parent=11 // pred_fallthru
          _
      $region12: #{ssdlite_forward.5} parent=5 // pred_fallthru
        _
      %p202 = scmp.lt.s32.totalorder %s13, 2
      // Predicated region
      $region29: #{ssdlite_forward.5} parent=5 // pred_check
        %p203 = pneg %p202
      $region30: #{ssdlite_forward.5} parent=5 // pred_check_branch
        %205 = sbr.rel (%p203) target = $region32
      $region31: #{ssdlite_forward.5} parent=5 // pred_region
        // Predicated region
        $region33: #{ssdlite_forward.5} parent=31 // pred_check
          %p206 = pneg %p33
        $region34: #{ssdlite_forward.5} parent=31 // pred_check_branch
          %208 = sbr.rel (%p206) target = $region36
        $region35: #{ssdlite_forward.5} parent=31 // pred_region
          %p209 = scmp.lt.s32.totalorder %s13, 1
          %s210 = scalar_select %p209, %s13, 1
          %s211 = smul.addr %s210, 8
          %s212 = smul.addr %s211, 4
          %s213 = scalar_lea.vmem %s0, %s212
        $region36: #{ssdlite_forward.5} parent=31 // pred_fallthru
          _
      $region32: #{ssdlite_forward.5} parent=5 // pred_fallthru
        _
      %p214 = scmp.le.s32.totalorder 1, %s13
      %p215 = scmp.lt.s32.totalorder %s13, 3
      %p216 = pnand %p214, %p215
      %p217 = pneg %p216
      // Predicated region
      $region37: #{ssdlite_forward.5} parent=5 // pred_check
        _
      $region38: #{ssdlite_forward.5} parent=5 // pred_check_branch
        %219 = sbr.rel (%p216) target = $region40
      $region39: #{ssdlite_forward.5} parent=5 // pred_region
        %s220 = ssub.s32 %s13, 1
        // Predicated region
        $region41: #{ssdlite_forward.5} parent=39 // pred_check
          %p221 = pneg %p81
        $region42: #{ssdlite_forward.5} parent=39 // pred_check_branch
          %223 = sbr.rel (%p221) target = $region44
        $region43: #{ssdlite_forward.5} parent=39 // pred_region
          %224 = dma.done [#allocation4], 16
        $region44: #{ssdlite_forward.5} parent=39 // pred_fallthru
          _
        // Predicated region
        $region45: #{ssdlite_forward.5} parent=39 // pred_check
          %p225 = pneg %p102
        $region46: #{ssdlite_forward.5} parent=39 // pred_check_branch
          %227 = sbr.rel (%p225) target = $region48
        $region47: #{ssdlite_forward.5} parent=39 // pred_region
          %228 = dma.done [#allocation6], 192
        $region48: #{ssdlite_forward.5} parent=39 // pred_fallthru
          _
        // Predicated region
        $region49: #{ssdlite_forward.5} parent=39 // pred_check
          %p229 = pneg %p123
        $region50: #{ssdlite_forward.5} parent=39 // pred_check_branch
          %231 = sbr.rel (%p229) target = $region52
        $region51: #{ssdlite_forward.5} parent=39 // pred_region
          %232 = dma.done [#allocation6], 16
        $region52: #{ssdlite_forward.5} parent=39 // pred_fallthru
          _
        %p233 = scmp.lt.s32.totalorder %s18, 1
        %s234 = scalar_select %p233, %s18, 1
        %s235 = smul.addr %s234, 8
        %s236 = smul.addr %s235, 4
        %s237 = scalar_lea.vmem %s0, %s236
        %p238 = pneg %p39
        %p239 = pneg %p36
        %p240 = pneg %p60
        %p241 = pneg %p57
        %p242 = pneg %p81
        %p243 = pneg %p78
        %p244 = pneg %p102
        %p245 = pneg %p99
        %p246 = pneg %p123
        %p247 = pneg %p120
        %p248 = pneg %p149
        %p249 = pneg %p146
        %p250 = scmp.lt.s32.totalorder %s18, 1
        %s251 = scalar_select %p250, %s18, 1
        %s252 = smul.addr %s251, 8
        %s253 = smul.addr %s252, 4
        %s254 = scalar_lea.vmem %s5, %s253
        %p255 = scmp.lt.s32.totalorder %s18, 1
        %s256 = scalar_select %p255, %s18, 1
        %s257 = smul.addr %s256, 8
        %s258 = smul.addr %s257, 4
        %s259 = scalar_lea.vmem %s0, %s258
        %p260 = scmp.lt.s32.totalorder %s18, 1
        %s261 = scalar_select %p260, %s18, 1
        %s262 = smul.addr %s261, 8
        %s263 = smul.addr %s262, 4
        %s264 = scalar_lea.vmem %s5, %s263
        %v266 = vld [vmem:[%s259] sm:$0xf]
        %v267 = vld [vmem:[%s259 + $0x4] sm:$0xf]
        %v268 = vld [vmem:[%s259 + $0x8] sm:$0xf]
        %v269 = vld [vmem:[%s259 + $0xc] sm:$0xf]
        %v270 = vld [vmem:[%s259 + $0x10] sm:$0xf]
        %v271 = vld [vmem:[%s259 + $0x14] sm:$0xf]
        %v272 = vld [vmem:[%s259 + $0x18] sm:$0xf]
        %v273 = vld [vmem:[%s259 + $0x1c] sm:$0xf]
        %v274 = vld [vmem:[%s1] sm:$0xf]
        %v275 = vld [vmem:[%s1 + $0x4] sm:$0xf]
        %v276 = vld [vmem:[%s1 + $0x8] sm:$0xf]
        %v277 = vld [vmem:[%s1 + $0xc] sm:$0xf]
        %v278 = vld [vmem:[#allocation3] sm:$0x1]
        %v280 = vlaneseq
        %v281 = vshrl.u32 %v280, 7
        %v282 = vsub.s32 0, %v281
        %v283 = vrot.slane %v278, %v282
        %v293 = vunpack.c.l.b16 %v266
        %v294 = vunpack.c.l.b16 %v267
        %v295 = vunpack.c.l.b16 %v268
        %v296 = vunpack.c.l.b16 %v269
        %v297 = vunpack.c.l.b16 %v270
        %v298 = vunpack.c.l.b16 %v271
        %v299 = vunpack.c.l.b16 %v272
        %v300 = vunpack.c.l.b16 %v273
        %v301 = vpack.c.b16 %v294, %v293
        %v302 = vpack.c.b16 %v296, %v295
        %v303 = vpack.c.b16 %v298, %v297
        %v304 = vpack.c.b16 %v300, %v299
        %v309 = vunpack.c.l.b16 %v274
        %v310 = vunpack.c.l.b16 %v275
        %v311 = vunpack.c.l.b16 %v276
        %v312 = vunpack.c.l.b16 %v277
        %v313 = vpack.c.b16 %v310, %v309
        %v314 = vpack.c.b16 %v312, %v311
        %vm317 = vcmask 261120
        %v319 = vsel %vm317, %v301, 0
        %v322 = vsel %vm317, %v302, 0
        %v325 = vsel %vm317, %v303, 0
        %v328 = vsel %vm317, %v304, 0
        %330 = vmatprep.subr.bf16.mxu0 0
        %331 = vmatpush1.bf16.msra.mxu0 %v313
        %332 = vmatprep.subr.bf16.mxu0 0
        %333 = vmatpush1.bf16.msra.mxu0 %v314
        %334 = vmatprep.subr.bf16.mxu0 0
        %335 = vmatpush1.bf16.msra.mxu0 0
        %336 = vmatprep.subr.bf16.mxu0 0
        %337 = vmatpush1.bf16.msra.mxu0 0
        %338 = vmatprep.subr.bf16.mxu0 0
        %339 = vmatpush1.bf16.msra.mxu0 0
        %340 = vmatprep.subr.bf16.mxu0 0
        %341 = vmatpush1.bf16.msra.mxu0 0
        %342 = vmatprep.subr.bf16.mxu0 0
        %343 = vmatpush1.bf16.msra.mxu0 0
        %344 = vmatprep.subr.bf16.mxu0 0
        %345 = vmatpush1.bf16.msra.mxu0 0
        %346 = vmatprep.subr.bf16.mxu0 0
        %347 = vmatpush1.bf16.msra.mxu0 0
        %348 = vmatprep.subr.bf16.mxu0 0
        %349 = vmatpush1.bf16.msra.mxu0 0
        %350 = vmatprep.subr.bf16.mxu0 0
        %351 = vmatpush1.bf16.msra.mxu0 0
        %352 = vmatprep.subr.bf16.mxu0 0
        %353 = vmatpush1.bf16.msra.mxu0 0
        %354 = vmatprep.subr.bf16.mxu0 0
        %355 = vmatpush1.bf16.msra.mxu0 0
        %356 = vmatprep.subr.bf16.mxu0 0
        %357 = vmatpush1.bf16.msra.mxu0 0
        %358 = vmatprep.subr.bf16.mxu0 0
        %359 = vmatpush1.bf16.msra.mxu0 0
        %360 = vmatprep.subr.bf16.mxu0 0
        %361 = vmatpush1.bf16.msra.mxu0 0
        %362 = vmatprep.mubr.bf16.mxu0 0
        %363 = vmatmul.mubr.bf16.gmra.mrb[0].mxu0 %v319
        %v364 = vpop.f32.mrb[0].mxu0
        %v365 = vadd.f32 %v283, %v364
        %v366 = vpop.f32.mrb[0].mxu0
        %v367 = vpop.f32.mrb[0].mxu0
        %v368 = vadd.f32 %v283, %v367
        %v369 = vpop.f32.mrb[0].mxu0
        %370 = vmatprep.mubr.bf16.mxu0 0
        %371 = vmatmul.mubr.bf16.gmra.mrb[0].mxu0 %v322
        %v372 = vpop.f32.mrb[0].mxu0
        %v373 = vadd.f32 %v283, %v372
        %v374 = vpop.f32.mrb[0].mxu0
        %v375 = vpop.f32.mrb[0].mxu0
        %v376 = vadd.f32 %v283, %v375
        %v377 = vpop.f32.mrb[0].mxu0
        %378 = vmatprep.mubr.bf16.mxu0 0
        %379 = vmatmul.mubr.bf16.gmra.mrb[0].mxu0 %v325
        %v380 = vpop.f32.mrb[0].mxu0
        %v381 = vadd.f32 %v283, %v380
        %v382 = vpop.f32.mrb[0].mxu0
        %v383 = vpop.f32.mrb[0].mxu0
        %v384 = vadd.f32 %v283, %v383
        %v385 = vpop.f32.mrb[0].mxu0
        %386 = vmatprep.mubr.bf16.mxu0 0
        %387 = vmatmul.mubr.bf16.gmra.mrb[0].mxu0 %v328
        %v388 = vpop.f32.mrb[0].mxu0
        %v389 = vadd.f32 %v283, %v388
        %v390 = vpop.f32.mrb[0].mxu0
        %v391 = vpop.f32.mrb[0].mxu0
        %v392 = vadd.f32 %v283, %v391
        %v393 = vpop.f32.mrb[0].mxu0
        %394 = vdwg.mxu0
        %v395 = vadd.f32 %v365, 3.0
        %v396 = vadd.f32 %v368, 3.0
        %v397 = vadd.f32 %v373, 3.0
        %v398 = vadd.f32 %v376, 3.0
        %v399 = vadd.f32 %v381, 3.0
        %v400 = vadd.f32 %v384, 3.0
        %v401 = vadd.f32 %v389, 3.0
        %v402 = vadd.f32 %v392, 3.0
        %v403 = vmax.f32 %v395, 0.0
        %v404 = vmax.f32 %v396, 0.0
        %v405 = vmax.f32 %v397, 0.0
        %v406 = vmax.f32 %v398, 0.0
        %v407 = vmax.f32 %v399, 0.0
        %v408 = vmax.f32 %v400, 0.0
        %v409 = vmax.f32 %v401, 0.0
        %v410 = vmax.f32 %v402, 0.0
        %v411 = vmin.f32 %v403, 6.0
        %v412 = vmin.f32 %v404, 6.0
        %v413 = vmin.f32 %v405, 6.0
        %v414 = vmin.f32 %v406, 6.0
        %v415 = vmin.f32 %v407, 6.0
        %v416 = vmin.f32 %v408, 6.0
        %v417 = vmin.f32 %v409, 6.0
        %v418 = vmin.f32 %v410, 6.0
        %v419 = vmul.f32 %v365, %v411
        %v420 = vmul.f32 %v368, %v412
        %v421 = vmul.f32 %v373, %v413
        %v422 = vmul.f32 %v376, %v414
        %v423 = vmul.f32 %v381, %v415
        %v424 = vmul.f32 %v384, %v416
        %v425 = vmul.f32 %v389, %v417
        %v426 = vmul.f32 %v392, %v418
        %v427 = vmul.f32 %v419, 0.16666667
        %v428 = vmul.f32 %v420, 0.16666667
        %v429 = vmul.f32 %v421, 0.16666667
        %v430 = vmul.f32 %v422, 0.16666667
        %v431 = vmul.f32 %v423, 0.16666667
        %v432 = vmul.f32 %v424, 0.16666667
        %v433 = vmul.f32 %v425, 0.16666667
        %v434 = vmul.f32 %v426, 0.16666667
        %v435 = vld [vmem:[#allocation5] sm:$0x7]
        %v436 = vld [vmem:[#allocation5 + $0x4] sm:$0x7]
        %v437 = vld [vmem:[#allocation5 + $0x8] sm:$0x7]
        %v438 = vld [vmem:[#allocation7] sm:$0x1]
        %vm439 = vcmask 523264
        %440 = vst.msk [vmem:[#allocation2] sm:$0xff] %vm439, 0.0
        %vm441 = vcmask 517120
        %442 = vst.msk [vmem:[#allocation2 + $0x8] sm:$0x3] %vm441, 0.0
        %443 = vst.msk [vmem:[#allocation2 + $0x10] sm:$0xff] %vm439, 0.0
        %444 = vst.msk [vmem:[#allocation2 + $0x18] sm:$0x3] %vm441, 0.0
        %445 = vst.msk [vmem:[#allocation2 + $0x20] sm:$0xff] %vm439, 0.0
        %446 = vst.msk [vmem:[#allocation2 + $0x28] sm:$0x3] %vm441, 0.0
        %447 = vst.msk [vmem:[#allocation2 + $0x30] sm:$0xff] %vm439, 0.0
        %448 = vst.msk [vmem:[#allocation2 + $0x38] sm:$0x3] %vm441, 0.0
        %449 = vst.msk [vmem:[#allocation2 + $0x40] sm:$0xff] %vm439, 0.0
        %450 = vst.msk [vmem:[#allocation2 + $0x48] sm:$0x3] %vm441, 0.0
        %451 = vst.msk [vmem:[#allocation2 + $0x50] sm:$0xff] %vm439, 0.0
        %452 = vst.msk [vmem:[#allocation2 + $0x58] sm:$0x3] %vm441, 0.0
        %453 = vst.msk [vmem:[#allocation2 + $0x60] sm:$0xff] %vm439, 0.0
        %454 = vst.msk [vmem:[#allocation2 + $0x68] sm:$0x3] %vm441, 0.0
        %455 = vst.msk [vmem:[#allocation2 + $0x70] sm:$0xff] %vm439, 0.0
        %456 = vst.msk [vmem:[#allocation2 + $0x78] sm:$0x3] %vm441, 0.0
        %457 = vst.msk [vmem:[#allocation2 + $0x80] sm:$0xff] %vm439, 0.0
        %458 = vst.msk [vmem:[#allocation2 + $0x88] sm:$0x3] %vm441, 0.0
        %459 = vst.msk [vmem:[#allocation2 + $0x90] sm:$0xff] %vm439, 0.0
        %460 = vst.msk [vmem:[#allocation2 + $0x98] sm:$0x3] %vm441, 0.0
        %s461 = scalar_lea.vmem [#allocation2], 16
        %462 = vst.msk [vmem:[%s461 + $0x1] sm:$0xff] %vm439, %v427
        %463 = vst.msk [vmem:[%s461 + $0x11] sm:$0xff] %vm439, %v428
        %464 = vst.msk [vmem:[%s461 + $0x21] sm:$0xff] %vm439, %v429
        %465 = vst.msk [vmem:[%s461 + $0x31] sm:$0xff] %vm439, %v430
        %466 = vst.msk [vmem:[%s461 + $0x41] sm:$0xff] %vm439, %v431
        %467 = vst.msk [vmem:[%s461 + $0x51] sm:$0xff] %vm439, %v432
        %468 = vst.msk [vmem:[%s461 + $0x61] sm:$0xff] %vm439, %v433
        %469 = vst.msk [vmem:[%s461 + $0x71] sm:$0xff] %vm439, %v434
        %v470 = vld [vmem:[#allocation2] sm:$0xff]
        %v471 = vld [vmem:[#allocation2 + $0x10] sm:$0xff]
        %v472 = vld [vmem:[#allocation2 + $0x20] sm:$0xff]
        %v473 = vld [vmem:[#allocation2 + $0x30] sm:$0xff]
        %v474 = vld [vmem:[#allocation2 + $0x40] sm:$0xff]
        %v475 = vld [vmem:[#allocation2 + $0x50] sm:$0xff]
        %v476 = vld [vmem:[#allocation2 + $0x60] sm:$0xff]
        %v477 = vld [vmem:[#allocation2 + $0x70] sm:$0xff]
        %v478 = vlaneseq
        %v479 = vshrl.u32 %v478, 7
        %v480 = vsub.s32 0, %v479
        %v481 = vrot.slane %v435, %v480
        %v482 = vmul.f32 %v470, %v481
        %v483 = vmul.f32 %v471, %v481
        %v484 = vmul.f32 %v472, %v481
        %v485 = vmul.f32 %v473, %v481
        %v486 = vmul.f32 %v474, %v481
        %v487 = vmul.f32 %v475, %v481
        %v488 = vmul.f32 %v476, %v481
        %v489 = vmul.f32 %v477, %v481
        %v490 = vadd.f32 %v482, 0.0
        %v491 = vadd.f32 %v483, 0.0
        %v492 = vadd.f32 %v484, 0.0
        %v493 = vadd.f32 %v485, 0.0
        %v494 = vadd.f32 %v486, 0.0
        %v495 = vadd.f32 %v487, 0.0
        %v496 = vadd.f32 %v488, 0.0
        %v497 = vadd.f32 %v489, 0.0
        %v498 = vld [vmem:[#allocation2 + $0x1] sm:$0xff]
        %v499 = vld [vmem:[#allocation2 + $0x11] sm:$0xff]
        %v500 = vld [vmem:[#allocation2 + $0x21] sm:$0xff]
        %v501 = vld [vmem:[#allocation2 + $0x31] sm:$0xff]
        %v502 = vld [vmem:[#allocation2 + $0x41] sm:$0xff]
        %v503 = vld [vmem:[#allocation2 + $0x51] sm:$0xff]
        %v504 = vld [vmem:[#allocation2 + $0x61] sm:$0xff]
        %v505 = vld [vmem:[#allocation2 + $0x71] sm:$0xff]
        %v506 = vlaneseq
        %v507 = vshrl.u32 %v506, 7
        %v508 = vsub.s32 1, %v507
        %v509 = vrot.slane %v435, %v508
        %v510 = vmul.f32 %v498, %v509
        %v511 = vmul.f32 %v499, %v509
        %v512 = vmul.f32 %v500, %v509
        %v513 = vmul.f32 %v501, %v509
        %v514 = vmul.f32 %v502, %v509
        %v515 = vmul.f32 %v503, %v509
        %v516 = vmul.f32 %v504, %v509
        %v517 = vmul.f32 %v505, %v509
        %v518 = vadd.f32 %v490, %v510
        %v519 = vadd.f32 %v491, %v511
        %v520 = vadd.f32 %v492, %v512
        %v521 = vadd.f32 %v493, %v513
        %v522 = vadd.f32 %v494, %v514
        %v523 = vadd.f32 %v495, %v515
        %v524 = vadd.f32 %v496, %v516
        %v525 = vadd.f32 %v497, %v517
        %v526 = vld [vmem:[#allocation2 + $0x2] sm:$0xff]
        %v527 = vld [vmem:[#allocation2 + $0x12] sm:$0xff]
        %v528 = vld [vmem:[#allocation2 + $0x22] sm:$0xff]
        %v529 = vld [vmem:[#allocation2 + $0x32] sm:$0xff]
        %v530 = vld [vmem:[#allocation2 + $0x42] sm:$0xff]
        %v531 = vld [vmem:[#allocation2 + $0x52] sm:$0xff]
        %v532 = vld [vmem:[#allocation2 + $0x62] sm:$0xff]
        %v533 = vld [vmem:[#allocation2 + $0x72] sm:$0xff]
        %v534 = vlaneseq
        %v535 = vshrl.u32 %v534, 7
        %v536 = vsub.s32 2, %v535
        %v537 = vrot.slane %v435, %v536
        %v538 = vmul.f32 %v526, %v537
        %v539 = vmul.f32 %v527, %v537
        %v540 = vmul.f32 %v528, %v537
        %v541 = vmul.f32 %v529, %v537
        %v542 = vmul.f32 %v530, %v537
        %v543 = vmul.f32 %v531, %v537
        %v544 = vmul.f32 %v532, %v537
        %v545 = vmul.f32 %v533, %v537
        %v546 = vadd.f32 %v518, %v538
        %v547 = vadd.f32 %v519, %v539
        %v548 = vadd.f32 %v520, %v540
        %v549 = vadd.f32 %v521, %v541
        %v550 = vadd.f32 %v522, %v542
        %v551 = vadd.f32 %v523, %v543
        %v552 = vadd.f32 %v524, %v544
        %v553 = vadd.f32 %v525, %v545
        %v554 = vld [vmem:[%s461] sm:$0xff]
        %v555 = vld [vmem:[%s461 + $0x10] sm:$0xff]
        %v556 = vld [vmem:[%s461 + $0x20] sm:$0xff]
        %v557 = vld [vmem:[%s461 + $0x30] sm:$0xff]
        %v558 = vld [vmem:[%s461 + $0x40] sm:$0xff]
        %v559 = vld [vmem:[%s461 + $0x50] sm:$0xff]
        %v560 = vld [vmem:[%s461 + $0x60] sm:$0xff]
        %v561 = vld [vmem:[%s461 + $0x70] sm:$0xff]
        %v562 = vlaneseq
        %v563 = vshrl.u32 %v562, 7
        %v564 = vsub.s32 0, %v563
        %v565 = vrot.slane %v436, %v564
        %v566 = vmul.f32 %v554, %v565
        %v567 = vmul.f32 %v555, %v565
        %v568 = vmul.f32 %v556, %v565
        %v569 = vmul.f32 %v557, %v565
        %v570 = vmul.f32 %v558, %v565
        %v571 = vmul.f32 %v559, %v565
        %v572 = vmul.f32 %v560, %v565
        %v573 = vmul.f32 %v561, %v565
        %v574 = vadd.f32 %v546, %v566
        %v575 = vadd.f32 %v547, %v567
        %v576 = vadd.f32 %v548, %v568
        %v577 = vadd.f32 %v549, %v569
        %v578 = vadd.f32 %v550, %v570
        %v579 = vadd.f32 %v551, %v571
        %v580 = vadd.f32 %v552, %v572
        %v581 = vadd.f32 %v553, %v573
        %v582 = vld [vmem:[%s461 + $0x1] sm:$0xff]
        %v583 = vld [vmem:[%s461 + $0x11] sm:$0xff]
        %v584 = vld [vmem:[%s461 + $0x21] sm:$0xff]
        %v585 = vld [vmem:[%s461 + $0x31] sm:$0xff]
        %v586 = vld [vmem:[%s461 + $0x41] sm:$0xff]
        %v587 = vld [vmem:[%s461 + $0x51] sm:$0xff]
        %v588 = vld [vmem:[%s461 + $0x61] sm:$0xff]
        %v589 = vld [vmem:[%s461 + $0x71] sm:$0xff]
        %v590 = vlaneseq
        %v591 = vshrl.u32 %v590, 7
        %v592 = vsub.s32 1, %v591
        %v593 = vrot.slane %v436, %v592
        %v594 = vmul.f32 %v582, %v593
        %v595 = vmul.f32 %v583, %v593
        %v596 = vmul.f32 %v584, %v593
        %v597 = vmul.f32 %v585, %v593
        %v598 = vmul.f32 %v586, %v593
        %v599 = vmul.f32 %v587, %v593
        %v600 = vmul.f32 %v588, %v593
        %v601 = vmul.f32 %v589, %v593
        %v602 = vadd.f32 %v574, %v594
        %v603 = vadd.f32 %v575, %v595
        %v604 = vadd.f32 %v576, %v596
        %v605 = vadd.f32 %v577, %v597
        %v606 = vadd.f32 %v578, %v598
        %v607 = vadd.f32 %v579, %v599
        %v608 = vadd.f32 %v580, %v600
        %v609 = vadd.f32 %v581, %v601
        %v610 = vld [vmem:[%s461 + $0x2] sm:$0xff]
        %v611 = vld [vmem:[%s461 + $0x12] sm:$0xff]
        %v612 = vld [vmem:[%s461 + $0x22] sm:$0xff]
        %v613 = vld [vmem:[%s461 + $0x32] sm:$0xff]
        %v614 = vld [vmem:[%s461 + $0x42] sm:$0xff]
        %v615 = vld [vmem:[%s461 + $0x52] sm:$0xff]
        %v616 = vld [vmem:[%s461 + $0x62] sm:$0xff]
        %v617 = vld [vmem:[%s461 + $0x72] sm:$0xff]
        %v618 = vlaneseq
        %v619 = vshrl.u32 %v618, 7
        %v620 = vsub.s32 2, %v619
        %v621 = vrot.slane %v436, %v620
        %v622 = vmul.f32 %v610, %v621
        %v623 = vmul.f32 %v611, %v621
        %v624 = vmul.f32 %v612, %v621
        %v625 = vmul.f32 %v613, %v621
        %v626 = vmul.f32 %v614, %v621
        %v627 = vmul.f32 %v615, %v621
        %v628 = vmul.f32 %v616, %v621
        %v629 = vmul.f32 %v617, %v621
        %v630 = vadd.f32 %v602, %v622
        %v631 = vadd.f32 %v603, %v623
        %v632 = vadd.f32 %v604, %v624
        %v633 = vadd.f32 %v605, %v625
        %v634 = vadd.f32 %v606, %v626
        %v635 = vadd.f32 %v607, %v627
        %v636 = vadd.f32 %v608, %v628
        %v637 = vadd.f32 %v609, %v629
        %s638 = scalar_lea.vmem [#allocation2], 32
        %v639 = vld [vmem:[%s638] sm:$0xff]
        %v640 = vld [vmem:[%s638 + $0x10] sm:$0xff]
        %v641 = vld [vmem:[%s638 + $0x20] sm:$0xff]
        %v642 = vld [vmem:[%s638 + $0x30] sm:$0xff]
        %v643 = vld [vmem:[%s638 + $0x40] sm:$0xff]
        %v644 = vld [vmem:[%s638 + $0x50] sm:$0xff]
        %v645 = vld [vmem:[%s638 + $0x60] sm:$0xff]
        %v646 = vld [vmem:[%s638 + $0x70] sm:$0xff]
        %v647 = vlaneseq
        %v648 = vshrl.u32 %v647, 7
        %v649 = vsub.s32 0, %v648
        %v650 = vrot.slane %v437, %v649
        %v651 = vmul.f32 %v639, %v650
        %v652 = vmul.f32 %v640, %v650
        %v653 = vmul.f32 %v641, %v650
        %v654 = vmul.f32 %v642, %v650
        %v655 = vmul.f32 %v643, %v650
        %v656 = vmul.f32 %v644, %v650
        %v657 = vmul.f32 %v645, %v650
        %v658 = vmul.f32 %v646, %v650
        %v659 = vadd.f32 %v630, %v651
        %v660 = vadd.f32 %v631, %v652
        %v661 = vadd.f32 %v632, %v653
        %v662 = vadd.f32 %v633, %v654
        %v663 = vadd.f32 %v634, %v655
        %v664 = vadd.f32 %v635, %v656
        %v665 = vadd.f32 %v636, %v657
        %v666 = vadd.f32 %v637, %v658
        %v667 = vld [vmem:[%s638 + $0x1] sm:$0xff]
        %v668 = vld [vmem:[%s638 + $0x11] sm:$0xff]
        %v669 = vld [vmem:[%s638 + $0x21] sm:$0xff]
        %v670 = vld [vmem:[%s638 + $0x31] sm:$0xff]
        %v671 = vld [vmem:[%s638 + $0x41] sm:$0xff]
        %v672 = vld [vmem:[%s638 + $0x51] sm:$0xff]
        %v673 = vld [vmem:[%s638 + $0x61] sm:$0xff]
        %v674 = vld [vmem:[%s638 + $0x71] sm:$0xff]
        %v675 = vlaneseq
        %v676 = vshrl.u32 %v675, 7
        %v677 = vsub.s32 1, %v676
        %v678 = vrot.slane %v437, %v677
        %v679 = vmul.f32 %v667, %v678
        %v680 = vmul.f32 %v668, %v678
        %v681 = vmul.f32 %v669, %v678
        %v682 = vmul.f32 %v670, %v678
        %v683 = vmul.f32 %v671, %v678
        %v684 = vmul.f32 %v672, %v678
        %v685 = vmul.f32 %v673, %v678
        %v686 = vmul.f32 %v674, %v678
        %v687 = vadd.f32 %v659, %v679
        %v688 = vadd.f32 %v660, %v680
        %v689 = vadd.f32 %v661, %v681
        %v690 = vadd.f32 %v662, %v682
        %v691 = vadd.f32 %v663, %v683
        %v692 = vadd.f32 %v664, %v684
        %v693 = vadd.f32 %v665, %v685
        %v694 = vadd.f32 %v666, %v686
        %v695 = vld [vmem:[%s638 + $0x2] sm:$0xff]
        %v696 = vld [vmem:[%s638 + $0x12] sm:$0xff]
        %v697 = vld [vmem:[%s638 + $0x22] sm:$0xff]
        %v698 = vld [vmem:[%s638 + $0x32] sm:$0xff]
        %v699 = vld [vmem:[%s638 + $0x42] sm:$0xff]
        %v700 = vld [vmem:[%s638 + $0x52] sm:$0xff]
        %v701 = vld [vmem:[%s638 + $0x62] sm:$0xff]
        %v702 = vld [vmem:[%s638 + $0x72] sm:$0xff]
        %v703 = vlaneseq
        %v704 = vshrl.u32 %v703, 7
        %v705 = vsub.s32 2, %v704
        %v706 = vrot.slane %v437, %v705
        %v707 = vmul.f32 %v695, %v706
        %v708 = vmul.f32 %v696, %v706
        %v709 = vmul.f32 %v697, %v706
        %v710 = vmul.f32 %v698, %v706
        %v711 = vmul.f32 %v699, %v706
        %v712 = vmul.f32 %v700, %v706
        %v713 = vmul.f32 %v701, %v706
        %v714 = vmul.f32 %v702, %v706
        %v715 = vadd.f32 %v687, %v707
        %v716 = vadd.f32 %v688, %v708
        %v717 = vadd.f32 %v689, %v709
        %v718 = vadd.f32 %v690, %v710
        %v719 = vadd.f32 %v691, %v711
        %v720 = vadd.f32 %v692, %v712
        %v721 = vadd.f32 %v693, %v713
        %v722 = vadd.f32 %v694, %v714
        %v724 = vlaneseq
        %v725 = vshrl.u32 %v724, 7
        %v726 = vsub.s32 0, %v725
        %v727 = vrot.slane %v438, %v726
        %v729 = vadd.f32 %v715, %v727
        %v730 = vadd.f32 %v716, %v727
        %v731 = vadd.f32 %v717, %v727
        %v732 = vadd.f32 %v718, %v727
        %v733 = vadd.f32 %v719, %v727
        %v734 = vadd.f32 %v720, %v727
        %v735 = vadd.f32 %v721, %v727
        %v736 = vadd.f32 %v722, %v727
        %v737 = vmax.f32 %v729, 0.0
        %v738 = vmax.f32 %v730, 0.0
        %v739 = vmax.f32 %v731, 0.0
        %v740 = vmax.f32 %v732, 0.0
        %v741 = vmax.f32 %v733, 0.0
        %v742 = vmax.f32 %v734, 0.0
        %v743 = vmax.f32 %v735, 0.0
        %v744 = vmax.f32 %v736, 0.0
        %v745 = vmin.f32 %v737, 6.0
        %v746 = vmin.f32 %v738, 6.0
        %v747 = vmin.f32 %v739, 6.0
        %v748 = vmin.f32 %v740, 6.0
        %v749 = vmin.f32 %v741, 6.0
        %v750 = vmin.f32 %v742, 6.0
        %v751 = vmin.f32 %v743, 6.0
        %v752 = vmin.f32 %v744, 6.0
        %v753 = vpack.c.bf16 %v745, %v745
        %v754 = vpack.c.bf16 %v746, %v746
        %v755 = vpack.c.bf16 %v747, %v747
        %v756 = vpack.c.bf16 %v748, %v748
        %v757 = vpack.c.bf16 %v749, %v749
        %v758 = vpack.c.bf16 %v750, %v750
        %v759 = vpack.c.bf16 %v751, %v751
        %v760 = vpack.c.bf16 %v752, %v752
        %vm761 = vcmask 519168
        %762 = vst.msk [vmem:[%s264] sm:$0xf] %vm761, %v753
        %763 = vst.msk [vmem:[%s264 + $0x4] sm:$0xf] %vm761, %v754
        %764 = vst.msk [vmem:[%s264 + $0x8] sm:$0xf] %vm761, %v755
        %765 = vst.msk [vmem:[%s264 + $0xc] sm:$0xf] %vm761, %v756
        %766 = vst.msk [vmem:[%s264 + $0x10] sm:$0xf] %vm761, %v757
        %767 = vst.msk [vmem:[%s264 + $0x14] sm:$0xf] %vm761, %v758
        %768 = vst.msk [vmem:[%s264 + $0x18] sm:$0xf] %vm761, %v759
        %769 = vst.msk [vmem:[%s264 + $0x1c] sm:$0xf] %vm761, %v760
        %p770 = scmp.lt.s32.totalorder %s18, 1
        %s771 = scalar_select %p770, %s18, 1
        %s772 = smul.addr %s771, 8
        %s773 = smul.addr %s772, 4
        %s774 = scalar_lea.vmem %s5, %s773
        // Predicated region
        $region53: #{ssdlite_forward.5} parent=39 // pred_check
          %p775 = pneg %p146
        $region54: #{ssdlite_forward.5} parent=39 // pred_check_branch
          %777 = sbr.rel (%p775) target = $region56
        $region55: #{ssdlite_forward.5} parent=39 // pred_region
          _
        $region56: #{ssdlite_forward.5} parent=39 // pred_fallthru
          _
      $region40: #{ssdlite_forward.5} parent=5 // pred_fallthru
        _
      %p778 = scmp.le.s32.totalorder 2, %s13
      // Predicated region
      $region57: #{ssdlite_forward.5} parent=5 // pred_check
        %p779 = pneg %p778
      $region58: #{ssdlite_forward.5} parent=5 // pred_check_branch
        %781 = sbr.rel (%p779) target = $region60
      $region59: #{ssdlite_forward.5} parent=5 // pred_region
        %s782 = ssub.s32 %s13, 2
        // Predicated region
        $region61: #{ssdlite_forward.5} parent=59 // pred_check
          %p783 = pneg %p152
        $region62: #{ssdlite_forward.5} parent=59 // pred_check_branch
          %785 = sbr.rel (%p783) target = $region64
        $region63: #{ssdlite_forward.5} parent=59 // pred_region
          %p786 = scmp.lt.s32.totalorder %s19, 1
          %s787 = scalar_select %p786, %s19, 1
          %s788 = smul.addr %s787, 8
          %s789 = smul.addr %s788, 4
          %s790 = scalar_lea.vmem %s5, %s789
        $region64: #{ssdlite_forward.5} parent=59 // pred_fallthru
          _
      $region60: #{ssdlite_forward.5} parent=5 // pred_fallthru
        _
    $region6: #{ssdlite_forward.5} parent=1 // loop_footer
      %s17 = sadd.s32 1, %s13
    $region7: #{ssdlite_forward.5} parent=1 // loop_footer_branch
      %12 = sbr.rel target = $region3
    $region8: #{ssdlite_forward.5} parent=1 // loop_exit
      _
    %791 = vsyncpa [#allocation4], 1
    %s792 = scalar_lea.sflag [#allocation4], 1
    %793 = vsyncpa %s792, 1
    %794 = vsyncpa [#allocation6], 1

// kernel: ssdlite_forward.7
$region0: #{ssdlite_forward.7}
  #allocation0 [shape = 'u32[]', space=smem, size = 0x4, offset = 0x4, fixed_abs, tag = 'smem constant byte address 0x4 - core index']
  #allocation1 [shape = 'u32[144,128]{1,0:T(1,128)}', space=vmem, size = 0x12000, scoped, tag = 'internal scratch']
  #allocation2 [shape = 'f32[10,10,64]{2,1,0:T(8,128)}', space=vmem, size = 0x14000, scoped, tag = 'scratch operand']
  %s0 = inlined_call_operand.vmem [shape: bf16[2,8,8,64], index: 0, kind: input, shape index: {}]
  %s1 = inlined_call_operand.hbm [shape: f32[3,3,64], index: 1, kind: input, shape index: {}]
  %s2 = inlined_call_operand.hbm [shape: f32[1,64], index: 2, kind: input, shape index: {}]
  %s3 = inlined_call_operand.vmem [shape: bf16[64,24], index: 3, kind: input, shape index: {}]
  %s4 = inlined_call_operand.hbm [shape: f32[1,24], index: 4, kind: input, shape index: {}]
  %s5 = inlined_call_operand.hbm [shape: f32[3,3,64], index: 5, kind: input, shape index: {}]
  %s6 = inlined_call_operand.hbm [shape: f32[1,64], index: 6, kind: input, shape index: {}]
  %s7 = inlined_call_operand.vmem [shape: bf16[64,24], index: 7, kind: input, shape index: {}]
  %s8 = inlined_call_operand.hbm [shape: f32[1,24], index: 8, kind: input, shape index: {}]
  %s9 = inlined_call_operand.vmem [shape: f32[2,8,8,24], index: 9, kind: output, shape index: {0}]
  %s10 = inlined_call_operand.vmem [shape: f32[2,8,8,24], index: 10, kind: output, shape index: {1}]
  %11 = xla_tuple %s9, %s10
  %s12 = sld [smem:[#allocation0]]
  $region101: #{ssdlite_forward.7} parent=0
    _
  %s14 = ssub.s32 1, %s12
  %s15 = scalar_select 0, %s14, %s12
  $region1: #{ssdlite_forward.7} parent=0
    #allocation3 [shape = 'u8[6144]{0}', space=vmem, size = 0x1800, scoped, tag = 'input window, operand 1, single buffered']
    #allocation4 [shape = 's32[2]{0}', space=sflag, size = 0x8, scoped, tag = 'scoped memory for ssdlite_forward.7']
    #allocation5 [shape = 'u8[512]{0}', space=vmem, size = 0x400, scoped, tag = 'input window, operand 2, single buffered']
    #allocation6 [shape = 's32[1]{0}', space=sflag, size = 0x4, scoped, tag = 'scoped memory for ssdlite_forward.7']
    #allocation7 [shape = 'u8[512]{0}', space=vmem, size = 0x400, scoped, tag = 'input window, operand 4, single buffered']
    #allocation8 [shape = 'u8[6144]{0}', space=vmem, size = 0x1800, scoped, tag = 'input window, operand 5, single buffered']
    #allocation9 [shape = 's32[1]{0}', space=sflag, size = 0x4, scoped, tag = 'scoped memory for ssdlite_forward.7']
    #allocation10 [shape = 'u8[512]{0}', space=vmem, size = 0x400, scoped, tag = 'input window, operand 6, single buffered']
    #allocation11 [shape = 'u8[512]{0}', space=vmem, size = 0x400, scoped, tag = 'input window, operand 8, single buffered']
    #allocation12 [shape = 's32[1]{0}', space=sflag, size = 0x4, scoped, tag = 'scoped memory for ssdlite_forward.7']
    %16 = vsyncpa [#allocation4], 0
    %17 = vsyncpa [#allocation6], 0
    %18 = vsyncpa [#allocation9], 0
    %19 = vsyncpa [#allocation12], 0
    loop: start=0, step=1, limit=4
    $region2: #{ssdlite_forward.7} parent=1 // loop_pre_header
      _
    $region3: #{ssdlite_forward.7} parent=1 // loop_header
      %s21 = sphi 0, %s25
      %p22 = scmp.ge.s32.totalorder %s21, 4
      %s31 = sphi 0, %s33
      %s34 = sphi 0, %s31
      %s35 = sphi 0, %s34
      %s51 = sphi 0, %s35
      %s55 = sphi 0, %s55
      %s57 = sphi 0, %s55
      %s58 = sphi 0, %s57
      %s72 = sphi 0, %s58
      %s76 = sphi 0, %s76
      %s78 = sphi 0, %s76
      %s79 = sphi 0, %s78
      %s93 = sphi 0, %s79
      %s97 = sphi 0, %s97
      %s99 = sphi 0, %s97
      %s100 = sphi 0, %s99
      %s114 = sphi 0, %s100
      %s118 = sphi 0, %s118
      %s120 = sphi 0, %s118
      %s121 = sphi 0, %s120
      %s135 = sphi 0, %s121
      %s139 = sphi 0, %s139
      %s141 = sphi 0, %s139
      %s142 = sphi 0, %s141
      %s156 = sphi 0, %s142
      %s160 = sphi 0, %s160
      %s162 = sphi 0, %s160
      %s163 = sphi 0, %s162
      %s177 = sphi 0, %s163
      %s181 = sphi 0, %s181
      %s183 = sphi 0, %s181
      %s184 = sphi 0, %s183
      %s198 = sphi 0, %s184
      %s202 = sphi 0, %s202
      %s204 = sphi 0, %s202
      %s205 = sphi 0, %s204
      %s219 = sphi 0, %s205
      %s225 = sphi 0, %s227
      %s228 = sphi 0, %s225
      %s229 = sphi 0, %s228
      %s245 = sphi 0, %s229
      %s251 = sphi 0, %s253
      %s254 = sphi 0, %s251
      %s255 = sphi 0, %s254
      %s271 = sphi 0, %s255
    $region4: #{ssdlite_forward.7} parent=1 // loop_header_branch
      %24 = sbr.rel (%p22) target = $region8
    $region5: #{ssdlite_forward.7} parent=1 // loop_body
      %s26 = ssub.s32 %s21, 1
      %s27 = ssub.s32 %s21, 2
      %s28 = sadd.s32 %s21, 1
      %s29 = ssub.s32 %s21, %s28
      %p30 = scmp.eq.s32.totalorder %s29, 0
      %s32 = sadd.s32 %s31, 1
      %s33 = scalar_select %p30, %s31, %s32
      %p36 = pneg %p30
      %p37 = scmp.eq.s32.totalorder %s21, 1
      %p38 = por %p36, %p37
      %p39 = scmp.ne.s32.totalorder %s31, %s34
      %p40 = scmp.eq.s32.totalorder %s21, 0
      %p41 = por %p39, %p40
      %p42 = scmp.ne.s32.totalorder %s31, %s34
      %p43 = scmp.eq.s32.totalorder %s26, 1
      %p44 = por %p42, %p43
      %p45 = scmp.ne.s32.totalorder %s34, %s35
      %p46 = scmp.eq.s32.totalorder %s26, 0
      %p47 = por %p45, %p46
      %p48 = scmp.ne.s32.totalorder %s34, %s35
      %p49 = scmp.eq.s32.totalorder %s27, 1
      %p50 = por %p48, %p49
      %p52 = scmp.ne.s32.totalorder %s35, %s51
      %p53 = scmp.eq.s32.totalorder %s27, 0
      %p54 = por %p52, %p53
      %s56 = sadd.s32 %s55, 1
      %p59 = scmp.eq.s32.totalorder %s21, 1
      %p60 = scmp.ne.s32.totalorder %s55, %s57
      %p61 = scmp.eq.s32.totalorder %s21, 0
      %p62 = por %p60, %p61
      %p63 = scmp.ne.s32.totalorder %s55, %s57
      %p64 = scmp.eq.s32.totalorder %s26, 1
      %p65 = por %p63, %p64
      %p66 = scmp.ne.s32.totalorder %s57, %s58
      %p67 = scmp.eq.s32.totalorder %s26, 0
      %p68 = por %p66, %p67
      %p69 = scmp.ne.s32.totalorder %s57, %s58
      %p70 = scmp.eq.s32.totalorder %s27, 1
      %p71 = por %p69, %p70
      %p73 = scmp.ne.s32.totalorder %s58, %s72
      %p74 = scmp.eq.s32.totalorder %s27, 0
      %p75 = por %p73, %p74
      %s77 = sadd.s32 %s76, 1
      %p80 = scmp.eq.s32.totalorder %s21, 1
      %p81 = scmp.ne.s32.totalorder %s76, %s78
      %p82 = scmp.eq.s32.totalorder %s21, 0
      %p83 = por %p81, %p82
      %p84 = scmp.ne.s32.totalorder %s76, %s78
      %p85 = scmp.eq.s32.totalorder %s26, 1
      %p86 = por %p84, %p85
      %p87 = scmp.ne.s32.totalorder %s78, %s79
      %p88 = scmp.eq.s32.totalorder %s26, 0
      %p89 = por %p87, %p88
      %p90 = scmp.ne.s32.totalorder %s78, %s79
      %p91 = scmp.eq.s32.totalorder %s27, 1
      %p92 = por %p90, %p91
      %p94 = scmp.ne.s32.totalorder %s79, %s93
      %p95 = scmp.eq.s32.totalorder %s27, 0
      %p96 = por %p94, %p95
      %s98 = sadd.s32 %s97, 1
      %p101 = scmp.eq.s32.totalorder %s21, 1
      %p102 = scmp.ne.s32.totalorder %s97, %s99
      %p103 = scmp.eq.s32.totalorder %s21, 0
      %p104 = por %p102, %p103
      %p105 = scmp.ne.s32.totalorder %s97, %s99
      %p106 = scmp.eq.s32.totalorder %s26, 1
      %p107 = por %p105, %p106
      %p108 = scmp.ne.s32.totalorder %s99, %s100
      %p109 = scmp.eq.s32.totalorder %s26, 0
      %p110 = por %p108, %p109
      %p111 = scmp.ne.s32.totalorder %s99, %s100
      %p112 = scmp.eq.s32.totalorder %s27, 1
      %p113 = por %p111, %p112
      %p115 = scmp.ne.s32.totalorder %s100, %s114
      %p116 = scmp.eq.s32.totalorder %s27, 0
      %p117 = por %p115, %p116
      %s119 = sadd.s32 %s118, 1
      %p122 = scmp.eq.s32.totalorder %s21, 1
      %p123 = scmp.ne.s32.totalorder %s118, %s120
      %p124 = scmp.eq.s32.totalorder %s21, 0
      %p125 = por %p123, %p124
      %p126 = scmp.ne.s32.totalorder %s118, %s120
      %p127 = scmp.eq.s32.totalorder %s26, 1
      %p128 = por %p126, %p127
      %p129 = scmp.ne.s32.totalorder %s120, %s121
      %p130 = scmp.eq.s32.totalorder %s26, 0
      %p131 = por %p129, %p130
      %p132 = scmp.ne.s32.totalorder %s120, %s121
      %p133 = scmp.eq.s32.totalorder %s27, 1
      %p134 = por %p132, %p133
      %p136 = scmp.ne.s32.totalorder %s121, %s135
      %p137 = scmp.eq.s32.totalorder %s27, 0
      %p138 = por %p136, %p137
      %s140 = sadd.s32 %s139, 1
      %p143 = scmp.eq.s32.totalorder %s21, 1
      %p144 = scmp.ne.s32.totalorder %s139, %s141
      %p145 = scmp.eq.s32.totalorder %s21, 0
      %p146 = por %p144, %p145
      %p147 = scmp.ne.s32.totalorder %s139, %s141
      %p148 = scmp.eq.s32.totalorder %s26, 1
      %p149 = por %p147, %p148
      %p150 = scmp.ne.s32.totalorder %s141, %s142
      %p151 = scmp.eq.s32.totalorder %s26, 0
      %p152 = por %p150, %p151
      %p153 = scmp.ne.s32.totalorder %s141, %s142
      %p154 = scmp.eq.s32.totalorder %s27, 1
      %p155 = por %p153, %p154
      %p157 = scmp.ne.s32.totalorder %s142, %s156
      %p158 = scmp.eq.s32.totalorder %s27, 0
      %p159 = por %p157, %p158
      %s161 = sadd.s32 %s160, 1
      %p164 = scmp.eq.s32.totalorder %s21, 1
      %p165 = scmp.ne.s32.totalorder %s160, %s162
      %p166 = scmp.eq.s32.totalorder %s21, 0
      %p167 = por %p165, %p166
      %p168 = scmp.ne.s32.totalorder %s160, %s162
      %p169 = scmp.eq.s32.totalorder %s26, 1
      %p170 = por %p168, %p169
      %p171 = scmp.ne.s32.totalorder %s162, %s163
      %p172 = scmp.eq.s32.totalorder %s26, 0
      %p173 = por %p171, %p172
      %p174 = scmp.ne.s32.totalorder %s162, %s163
      %p175 = scmp.eq.s32.totalorder %s27, 1
      %p176 = por %p174, %p175
      %p178 = scmp.ne.s32.totalorder %s163, %s177
      %p179 = scmp.eq.s32.totalorder %s27, 0
      %p180 = por %p178, %p179
      %s182 = sadd.s32 %s181, 1
      %p185 = scmp.eq.s32.totalorder %s21, 1
      %p186 = scmp.ne.s32.totalorder %s181, %s183
      %p187 = scmp.eq.s32.totalorder %s21, 0
      %p188 = por %p186, %p187
      %p189 = scmp.ne.s32.totalorder %s181, %s183
      %p190 = scmp.eq.s32.totalorder %s26, 1
      %p191 = por %p189, %p190
      %p192 = scmp.ne.s32.totalorder %s183, %s184
      %p193 = scmp.eq.s32.totalorder %s26, 0
      %p194 = por %p192, %p193
      %p195 = scmp.ne.s32.totalorder %s183, %s184
      %p196 = scmp.eq.s32.totalorder %s27, 1
      %p197 = por %p195, %p196
      %p199 = scmp.ne.s32.totalorder %s184, %s198
      %p200 = scmp.eq.s32.totalorder %s27, 0
      %p201 = por %p199, %p200
      %s203 = sadd.s32 %s202, 1
      %p206 = scmp.eq.s32.totalorder %s21, 1
      %p207 = scmp.ne.s32.totalorder %s202, %s204
      %p208 = scmp.eq.s32.totalorder %s21, 0
      %p209 = por %p207, %p208
      %p210 = scmp.ne.s32.totalorder %s202, %s204
      %p211 = scmp.eq.s32.totalorder %s26, 1
      %p212 = por %p210, %p211
      %p213 = scmp.ne.s32.totalorder %s204, %s205
      %p214 = scmp.eq.s32.totalorder %s26, 0
      %p215 = por %p213, %p214
      %p216 = scmp.ne.s32.totalorder %s204, %s205
      %p217 = scmp.eq.s32.totalorder %s27, 1
      %p218 = por %p216, %p217
      %p220 = scmp.ne.s32.totalorder %s205, %s219
      %p221 = scmp.eq.s32.totalorder %s27, 0
      %p222 = por %p220, %p221
      %s223 = ssub.s32 %s21, %s28
      %p224 = scmp.eq.s32.totalorder %s223, 0
      %s226 = sadd.s32 %s225, 1
      %s227 = scalar_select %p224, %s225, %s226
      %p230 = pneg %p224
      %p231 = scmp.eq.s32.totalorder %s21, 1
      %p232 = por %p230, %p231
      %p233 = scmp.ne.s32.totalorder %s225, %s228
      %p234 = scmp.eq.s32.totalorder %s21, 0
      %p235 = por %p233, %p234
      %p236 = scmp.ne.s32.totalorder %s225, %s228
      %p237 = scmp.eq.s32.totalorder %s26, 1
      %p238 = por %p236, %p237
      %p239 = scmp.ne.s32.totalorder %s228, %s229
      %p240 = scmp.eq.s32.totalorder %s26, 0
      %p241 = por %p239, %p240
      %p242 = scmp.ne.s32.totalorder %s228, %s229
      %p243 = scmp.eq.s32.totalorder %s27, 1
      %p244 = por %p242, %p243
      %p246 = scmp.ne.s32.totalorder %s229, %s245
      %p247 = scmp.eq.s32.totalorder %s27, 0
      %p248 = por %p246, %p247
      %s249 = ssub.s32 %s21, %s28
      %p250 = scmp.eq.s32.totalorder %s249, 0
      %s252 = sadd.s32 %s251, 1
      %s253 = scalar_select %p250, %s251, %s252
      %p256 = pneg %p250
      %p257 = scmp.eq.s32.totalorder %s21, 1
      %p258 = por %p256, %p257
      %p259 = scmp.ne.s32.totalorder %s251, %s254
      %p260 = scmp.eq.s32.totalorder %s21, 0
      %p261 = por %p259, %p260
      %p262 = scmp.ne.s32.totalorder %s251, %s254
      %p263 = scmp.eq.s32.totalorder %s26, 1
      %p264 = por %p262, %p263
      %p265 = scmp.ne.s32.totalorder %s254, %s255
      %p266 = scmp.eq.s32.totalorder %s26, 0
      %p267 = por %p265, %p266
      %p268 = scmp.ne.s32.totalorder %s254, %s255
      %p269 = scmp.eq.s32.totalorder %s27, 1
      %p270 = por %p268, %p269
      %p272 = scmp.ne.s32.totalorder %s255, %s271
      %p273 = scmp.eq.s32.totalorder %s27, 0
      %p274 = por %p272, %p273
      %p275 = scmp.le.s32.totalorder 1, %s21
      %p276 = scmp.lt.s32.totalorder %s21, 3
      %p277 = pnand %p275, %p276
      %p278 = pneg %p277
      // Predicated region
      $region9: #{ssdlite_forward.7} parent=5 // pred_check
        _
      $region10: #{ssdlite_forward.7} parent=5 // pred_check_branch
        %280 = sbr.rel (%p277) target = $region12
      $region11: #{ssdlite_forward.7} parent=5 // pred_region
        %s281 = ssub.s32 %s21, 1
        // Predicated region
        $region13: #{ssdlite_forward.7} parent=11 // pred_check
          %p282 = pneg %p68
        $region14: #{ssdlite_forward.7} parent=11 // pred_check_branch
          %284 = sbr.rel (%p282) target = $region16
        $region15: #{ssdlite_forward.7} parent=11 // pred_region
          %s286 = ssub.s32 192, 192
          %287 = vsyncadd [#allocation4], %s286
          %s288 = sshll.u32 [#allocation3], 4
          %s289 = int_to_ptr.vmem [resolvable:$true] %s288
          %294 = dma.hbm_to_vmem [thread:$0]  %s1, 192, %s289, [#allocation4], 64, 64, 4
        $region16: #{ssdlite_forward.7} parent=11 // pred_fallthru
          _
        // Predicated region
        $region17: #{ssdlite_forward.7} parent=11 // pred_check
          %p295 = pneg %p89
        $region18: #{ssdlite_forward.7} parent=11 // pred_check_branch
          %297 = sbr.rel (%p295) target = $region20
        $region19: #{ssdlite_forward.7} parent=11 // pred_region
          %s299 = ssub.s32 16, 16
          %300 = vsyncadd [#allocation6], %s299
          %s302 = sshll.u32 [#allocation5], 4
          %s303 = int_to_ptr.vmem [resolvable:$true] %s302
          %305 = dma.hbm_to_vmem [thread:$0]  %s2, 16, %s303, [#allocation6]
        $region20: #{ssdlite_forward.7} parent=11 // pred_fallthru
          _
        // Predicated region
        $region21: #{ssdlite_forward.7} parent=11 // pred_check
          %p306 = pneg %p110
        $region22: #{ssdlite_forward.7} parent=11 // pred_check_branch
          %308 = sbr.rel (%p306) target = $region24
        $region23: #{ssdlite_forward.7} parent=11 // pred_region
          _
        $region24: #{ssdlite_forward.7} parent=11 // pred_fallthru
          _
        // Predicated region
        $region25: #{ssdlite_forward.7} parent=11 // pred_check
          %p309 = pneg %p131
        $region26: #{ssdlite_forward.7} parent=11 // pred_check_branch
          %311 = sbr.rel (%p309) target = $region28
        $region27: #{ssdlite_forward.7} parent=11 // pred_region
          %s313 = ssub.s32 16, 16
          %314 = vsyncadd [#allocation6], %s313
          %s316 = sshll.u32 [#allocation7], 4
          %s317 = int_to_ptr.vmem [resolvable:$true] %s316
          %319 = dma.hbm_to_vmem [thread:$0]  %s4, 16, %s317, [#allocation6]
        $region28: #{ssdlite_forward.7} parent=11 // pred_fallthru
          _
        // Predicated region
        $region29: #{ssdlite_forward.7} parent=11 // pred_check
          %p320 = pneg %p152
        $region30: #{ssdlite_forward.7} parent=11 // pred_check_branch
          %322 = sbr.rel (%p320) target = $region32
        $region31: #{ssdlite_forward.7} parent=11 // pred_region
          %s324 = ssub.s32 192, 192
          %325 = vsyncadd [#allocation9], %s324
          %s326 = sshll.u32 [#allocation8], 4
          %s327 = int_to_ptr.vmem [resolvable:$true] %s326
          %332 = dma.hbm_to_vmem [thread:$0]  %s5, 192, %s327, [#allocation9], 64, 64, 4
        $region32: #{ssdlite_forward.7} parent=11 // pred_fallthru
          _
        // Predicated region
        $region33: #{ssdlite_forward.7} parent=11 // pred_check
          %p333 = pneg %p173
        $region34: #{ssdlite_forward.7} parent=11 // pred_check_branch
          %335 = sbr.rel (%p333) target = $region36
        $region35: #{ssdlite_forward.7} parent=11 // pred_region
          %s337 = ssub.s32 16, 16
          %338 = vsyncadd [#allocation9], %s337
          %s340 = sshll.u32 [#allocation10], 4
          %s341 = int_to_ptr.vmem [resolvable:$true] %s340
          %343 = dma.hbm_to_vmem [thread:$0]  %s6, 16, %s341, [#allocation9]
        $region36: #{ssdlite_forward.7} parent=11 // pred_fallthru
          _
        // Predicated region
        $region37: #{ssdlite_forward.7} parent=11 // pred_check
          %p344 = pneg %p194
        $region38: #{ssdlite_forward.7} parent=11 // pred_check_branch
          %346 = sbr.rel (%p344) target = $region40
        $region39: #{ssdlite_forward.7} parent=11 // pred_region
          _
        $region40: #{ssdlite_forward.7} parent=11 // pred_fallthru
          _
        // Predicated region
        $region41: #{ssdlite_forward.7} parent=11 // pred_check
          %p347 = pneg %p215
        $region42: #{ssdlite_forward.7} parent=11 // pred_check_branch
          %349 = sbr.rel (%p347) target = $region44
        $region43: #{ssdlite_forward.7} parent=11 // pred_region
          %s351 = ssub.s32 16, 16
          %352 = vsyncadd [#allocation12], %s351
          %s354 = sshll.u32 [#allocation11], 4
          %s355 = int_to_ptr.vmem [resolvable:$true] %s354
          %357 = dma.hbm_to_vmem [thread:$0]  %s8, 16, %s355, [#allocation12]
        $region44: #{ssdlite_forward.7} parent=11 // pred_fallthru
          _
      $region12: #{ssdlite_forward.7} parent=5 // pred_fallthru
        _
      %p358 = scmp.lt.s32.totalorder %s21, 2
      // Predicated region
      $region45: #{ssdlite_forward.7} parent=5 // pred_check
        %p359 = pneg %p358
      $region46: #{ssdlite_forward.7} parent=5 // pred_check_branch
        %361 = sbr.rel (%p359) target = $region48
      $region47: #{ssdlite_forward.7} parent=5 // pred_region
        // Predicated region
        $region49: #{ssdlite_forward.7} parent=47 // pred_check
          %p362 = pneg %p41
        $region50: #{ssdlite_forward.7} parent=47 // pred_check_branch
          %364 = sbr.rel (%p362) target = $region52
        $region51: #{ssdlite_forward.7} parent=47 // pred_region
          %p365 = scmp.lt.s32.totalorder %s21, 1
          %s366 = scalar_select %p365, %s21, 1
          %s367 = smul.addr %s366, 8
          %s368 = smul.addr %s367, 4
          %s369 = scalar_lea.vmem %s0, %s368
        $region52: #{ssdlite_forward.7} parent=47 // pred_fallthru
          _
      $region48: #{ssdlite_forward.7} parent=5 // pred_fallthru
        _
      %p370 = scmp.le.s32.totalorder 1, %s21
      %p371 = scmp.lt.s32.totalorder %s21, 3
      %p372 = pnand %p370, %p371
      %p373 = pneg %p372
      // Predicated region
      $region53: #{ssdlite_forward.7} parent=5 // pred_check
        _
      $region54: #{ssdlite_forward.7} parent=5 // pred_check_branch
        %375 = sbr.rel (%p372) target = $region56
      $region55: #{ssdlite_forward.7} parent=5 // pred_region
        %s376 = ssub.s32 %s21, 1
        // Predicated region
        $region57: #{ssdlite_forward.7} parent=55 // pred_check
          %p377 = pneg %p68
        $region58: #{ssdlite_forward.7} parent=55 // pred_check_branch
          %379 = sbr.rel (%p377) target = $region60
        $region59: #{ssdlite_forward.7} parent=55 // pred_region
          %380 = dma.done [#allocation4], 192
        $region60: #{ssdlite_forward.7} parent=55 // pred_fallthru
          _
        // Predicated region
        $region61: #{ssdlite_forward.7} parent=55 // pred_check
          %p381 = pneg %p89
        $region62: #{ssdlite_forward.7} parent=55 // pred_check_branch
          %383 = sbr.rel (%p381) target = $region64
        $region63: #{ssdlite_forward.7} parent=55 // pred_region
          %384 = dma.done [#allocation6], 16
        $region64: #{ssdlite_forward.7} parent=55 // pred_fallthru
          _
        // Predicated region
        $region65: #{ssdlite_forward.7} parent=55 // pred_check
          %p385 = pneg %p131
        $region66: #{ssdlite_forward.7} parent=55 // pred_check_branch
          %387 = sbr.rel (%p385) target = $region68
        $region67: #{ssdlite_forward.7} parent=55 // pred_region
          %388 = dma.done [#allocation6], 16
        $region68: #{ssdlite_forward.7} parent=55 // pred_fallthru
          _
        // Predicated region
        $region69: #{ssdlite_forward.7} parent=55 // pred_check
          %p389 = pneg %p152
        $region70: #{ssdlite_forward.7} parent=55 // pred_check_branch
          %391 = sbr.rel (%p389) target = $region72
        $region71: #{ssdlite_forward.7} parent=55 // pred_region
          %392 = dma.done [#allocation9], 192
        $region72: #{ssdlite_forward.7} parent=55 // pred_fallthru
          _
        // Predicated region
        $region73: #{ssdlite_forward.7} parent=55 // pred_check
          %p393 = pneg %p173
        $region74: #{ssdlite_forward.7} parent=55 // pred_check_branch
          %395 = sbr.rel (%p393) target = $region76
        $region75: #{ssdlite_forward.7} parent=55 // pred_region
          %396 = dma.done [#allocation9], 16
        $region76: #{ssdlite_forward.7} parent=55 // pred_fallthru
          _
        // Predicated region
        $region77: #{ssdlite_forward.7} parent=55 // pred_check
          %p397 = pneg %p215
        $region78: #{ssdlite_forward.7} parent=55 // pred_check_branch
          %399 = sbr.rel (%p397) target = $region80
        $region79: #{ssdlite_forward.7} parent=55 // pred_region
          %400 = dma.done [#allocation12], 16
        $region80: #{ssdlite_forward.7} parent=55 // pred_fallthru
          _
        %p401 = scmp.lt.s32.totalorder %s26, 1
        %s402 = scalar_select %p401, %s26, 1
        %s403 = smul.addr %s402, 8
        %s404 = smul.addr %s403, 4
        %s405 = scalar_lea.vmem %s0, %s404
        %p406 = pneg %p47
        %p407 = pneg %p44
        %p408 = pneg %p68
        %p409 = pneg %p65
        %p410 = pneg %p89
        %p411 = pneg %p86
        %p412 = pneg %p110
        %p413 = pneg %p107
        %p414 = pneg %p131
        %p415 = pneg %p128
        %p416 = pneg %p152
        %p417 = pneg %p149
        %p418 = pneg %p173
        %p419 = pneg %p170
        %p420 = pneg %p194
        %p421 = pneg %p191
        %p422 = pneg %p215
        %p423 = pneg %p212
        %p424 = pneg %p241
        %p425 = pneg %p238
        %p426 = scmp.lt.s32.totalorder %s26, 1
        %s427 = scalar_select %p426, %s26, 1
        %s428 = smul.addr %s427, 8
        %s429 = smul.addr %s428, 8
        %s430 = scalar_lea.vmem %s9, %s429
        %p431 = pneg %p267
        %p432 = pneg %p264
        %p433 = scmp.lt.s32.totalorder %s26, 1
        %s434 = scalar_select %p433, %s26, 1
        %s435 = smul.addr %s434, 8
        %s436 = smul.addr %s435, 8
        %s437 = scalar_lea.vmem %s10, %s436
        %p438 = scmp.lt.s32.totalorder %s26, 1
        %s439 = scalar_select %p438, %s26, 1
        %s440 = smul.addr %s439, 8
        %s441 = smul.addr %s440, 4
        %s442 = scalar_lea.vmem %s0, %s441
        %p443 = scmp.lt.s32.totalorder %s26, 1
        %s444 = scalar_select %p443, %s26, 1
        %s445 = smul.addr %s444, 8
        %s446 = smul.addr %s445, 8
        %s447 = scalar_lea.vmem %s9, %s446
        %p448 = scmp.lt.s32.totalorder %s26, 1
        %s449 = scalar_select %p448, %s26, 1
        %s450 = smul.addr %s449, 8
        %s451 = smul.addr %s450, 8
        %s452 = scalar_lea.vmem %s10, %s451
        %v454 = vld [vmem:[%s442] sm:$0xf]
        %v455 = vld [vmem:[%s442 + $0x4] sm:$0xf]
        %v456 = vld [vmem:[%s442 + $0x8] sm:$0xf]
        %v457 = vld [vmem:[%s442 + $0xc] sm:$0xf]
        %v458 = vld [vmem:[%s442 + $0x10] sm:$0xf]
        %v459 = vld [vmem:[%s442 + $0x14] sm:$0xf]
        %v460 = vld [vmem:[%s442 + $0x18] sm:$0xf]
        %v461 = vld [vmem:[%s442 + $0x1c] sm:$0xf]
        %v462 = vunpack.c.l.bf16 %v454
        %v463 = vunpack.c.l.bf16 %v455
        %v464 = vunpack.c.l.bf16 %v456
        %v465 = vunpack.c.l.bf16 %v457
        %v466 = vunpack.c.l.bf16 %v458
        %v467 = vunpack.c.l.bf16 %v459
        %v468 = vunpack.c.l.bf16 %v460
        %v469 = vunpack.c.l.bf16 %v461
        %v470 = vld [vmem:[#allocation3] sm:$0x7]
        %v471 = vld [vmem:[#allocation3 + $0x4] sm:$0x7]
        %v472 = vld [vmem:[#allocation3 + $0x8] sm:$0x7]
        %v473 = vld [vmem:[#allocation5] sm:$0x1]
        %vm474 = vcmask 523264
        %475 = vst.msk [vmem:[#allocation2] sm:$0xff] %vm474, 0.0
        %vm476 = vcmask 517120
        %477 = vst.msk [vmem:[#allocation2 + $0x8] sm:$0x3] %vm476, 0.0
        %478 = vst.msk [vmem:[#allocation2 + $0x10] sm:$0xff] %vm474, 0.0
        %479 = vst.msk [vmem:[#allocation2 + $0x18] sm:$0x3] %vm476, 0.0
        %480 = vst.msk [vmem:[#allocation2 + $0x20] sm:$0xff] %vm474, 0.0
        %481 = vst.msk [vmem:[#allocation2 + $0x28] sm:$0x3] %vm476, 0.0
        %482 = vst.msk [vmem:[#allocation2 + $0x30] sm:$0xff] %vm474, 0.0
        %483 = vst.msk [vmem:[#allocation2 + $0x38] sm:$0x3] %vm476, 0.0
        %484 = vst.msk [vmem:[#allocation2 + $0x40] sm:$0xff] %vm474, 0.0
        %485 = vst.msk [vmem:[#allocation2 + $0x48] sm:$0x3] %vm476, 0.0
        %486 = vst.msk [vmem:[#allocation2 + $0x50] sm:$0xff] %vm474, 0.0
        %487 = vst.msk [vmem:[#allocation2 + $0x58] sm:$0x3] %vm476, 0.0
        %488 = vst.msk [vmem:[#allocation2 + $0x60] sm:$0xff] %vm474, 0.0
        %489 = vst.msk [vmem:[#allocation2 + $0x68] sm:$0x3] %vm476, 0.0
        %490 = vst.msk [vmem:[#allocation2 + $0x70] sm:$0xff] %vm474, 0.0
        %491 = vst.msk [vmem:[#allocation2 + $0x78] sm:$0x3] %vm476, 0.0
        %492 = vst.msk [vmem:[#allocation2 + $0x80] sm:$0xff] %vm474, 0.0
        %493 = vst.msk [vmem:[#allocation2 + $0x88] sm:$0x3] %vm476, 0.0
        %494 = vst.msk [vmem:[#allocation2 + $0x90] sm:$0xff] %vm474, 0.0
        %495 = vst.msk [vmem:[#allocation2 + $0x98] sm:$0x3] %vm476, 0.0
        %s496 = scalar_lea.vmem [#allocation2], 16
        %497 = vst.msk [vmem:[%s496 + $0x1] sm:$0xff] %vm474, %v462
        %498 = vst.msk [vmem:[%s496 + $0x11] sm:$0xff] %vm474, %v463
        %499 = vst.msk [vmem:[%s496 + $0x21] sm:$0xff] %vm474, %v464
        %500 = vst.msk [vmem:[%s496 + $0x31] sm:$0xff] %vm474, %v465
        %501 = vst.msk [vmem:[%s496 + $0x41] sm:$0xff] %vm474, %v466
        %502 = vst.msk [vmem:[%s496 + $0x51] sm:$0xff] %vm474, %v467
        %503 = vst.msk [vmem:[%s496 + $0x61] sm:$0xff] %vm474, %v468
        %504 = vst.msk [vmem:[%s496 + $0x71] sm:$0xff] %vm474, %v469
        %v505 = vld [vmem:[#allocation2] sm:$0xff]
        %v506 = vld [vmem:[#allocation2 + $0x10] sm:$0xff]
        %v507 = vld [vmem:[#allocation2 + $0x20] sm:$0xff]
        %v508 = vld [vmem:[#allocation2 + $0x30] sm:$0xff]
        %v509 = vld [vmem:[#allocation2 + $0x40] sm:$0xff]
        %v510 = vld [vmem:[#allocation2 + $0x50] sm:$0xff]
        %v511 = vld [vmem:[#allocation2 + $0x60] sm:$0xff]
        %v512 = vld [vmem:[#allocation2 + $0x70] sm:$0xff]
        %v513 = vlaneseq
        %v514 = vshrl.u32 %v513, 7
        %v515 = vsub.s32 0, %v514
        %v516 = vrot.slane %v470, %v515
        %v517 = vmul.f32 %v505, %v516
        %v518 = vmul.f32 %v506, %v516
        %v519 = vmul.f32 %v507, %v516
        %v520 = vmul.f32 %v508, %v516
        %v521 = vmul.f32 %v509, %v516
        %v522 = vmul.f32 %v510, %v516
        %v523 = vmul.f32 %v511, %v516
        %v524 = vmul.f32 %v512, %v516
        %v525 = vadd.f32 %v517, 0.0
        %v526 = vadd.f32 %v518, 0.0
        %v527 = vadd.f32 %v519, 0.0
        %v528 = vadd.f32 %v520, 0.0
        %v529 = vadd.f32 %v521, 0.0
        %v530 = vadd.f32 %v522, 0.0
        %v531 = vadd.f32 %v523, 0.0
        %v532 = vadd.f32 %v524, 0.0
        %v533 = vld [vmem:[#allocation2 + $0x1] sm:$0xff]
        %v534 = vld [vmem:[#allocation2 + $0x11] sm:$0xff]
        %v535 = vld [vmem:[#allocation2 + $0x21] sm:$0xff]
        %v536 = vld [vmem:[#allocation2 + $0x31] sm:$0xff]
        %v537 = vld [vmem:[#allocation2 + $0x41] sm:$0xff]
        %v538 = vld [vmem:[#allocation2 + $0x51] sm:$0xff]
        %v539 = vld [vmem:[#allocation2 + $0x61] sm:$0xff]
        %v540 = vld [vmem:[#allocation2 + $0x71] sm:$0xff]
        %v541 = vlaneseq
        %v542 = vshrl.u32 %v541, 7
        %v543 = vsub.s32 1, %v542
        %v544 = vrot.slane %v470, %v543
        %v545 = vmul.f32 %v533, %v544
        %v546 = vmul.f32 %v534, %v544
        %v547 = vmul.f32 %v535, %v544
        %v548 = vmul.f32 %v536, %v544
        %v549 = vmul.f32 %v537, %v544
        %v550 = vmul.f32 %v538, %v544
        %v551 = vmul.f32 %v539, %v544
        %v552 = vmul.f32 %v540, %v544
        %v553 = vadd.f32 %v525, %v545
        %v554 = vadd.f32 %v526, %v546
        %v555 = vadd.f32 %v527, %v547
        %v556 = vadd.f32 %v528, %v548
        %v557 = vadd.f32 %v529, %v549
        %v558 = vadd.f32 %v530, %v550
        %v559 = vadd.f32 %v531, %v551
        %v560 = vadd.f32 %v532, %v552
        %v561 = vld [vmem:[#allocation2 + $0x2] sm:$0xff]
        %v562 = vld [vmem:[#allocation2 + $0x12] sm:$0xff]
        %v563 = vld [vmem:[#allocation2 + $0x22] sm:$0xff]
        %v564 = vld [vmem:[#allocation2 + $0x32] sm:$0xff]
        %v565 = vld [vmem:[#allocation2 + $0x42] sm:$0xff]
        %v566 = vld [vmem:[#allocation2 + $0x52] sm:$0xff]
        %v567 = vld [vmem:[#allocation2 + $0x62] sm:$0xff]
        %v568 = vld [vmem:[#allocation2 + $0x72] sm:$0xff]
        %v569 = vlaneseq
        %v570 = vshrl.u32 %v569, 7
        %v571 = vsub.s32 2, %v570
        %v572 = vrot.slane %v470, %v571
        %v573 = vmul.f32 %v561, %v572
        %v574 = vmul.f32 %v562, %v572
        %v575 = vmul.f32 %v563, %v572
        %v576 = vmul.f32 %v564, %v572
        %v577 = vmul.f32 %v565, %v572
        %v578 = vmul.f32 %v566, %v572
        %v579 = vmul.f32 %v567, %v572
        %v580 = vmul.f32 %v568, %v572
        %v581 = vadd.f32 %v553, %v573
        %v582 = vadd.f32 %v554, %v574
        %v583 = vadd.f32 %v555, %v575
        %v584 = vadd.f32 %v556, %v576
        %v585 = vadd.f32 %v557, %v577
        %v586 = vadd.f32 %v558, %v578
        %v587 = vadd.f32 %v559, %v579
        %v588 = vadd.f32 %v560, %v580
        %v589 = vld [vmem:[%s496] sm:$0xff]
        %v590 = vld [vmem:[%s496 + $0x10] sm:$0xff]
        %v591 = vld [vmem:[%s496 + $0x20] sm:$0xff]
        %v592 = vld [vmem:[%s496 + $0x30] sm:$0xff]
        %v593 = vld [vmem:[%s496 + $0x40] sm:$0xff]
        %v594 = vld [vmem:[%s496 + $0x50] sm:$0xff]
        %v595 = vld [vmem:[%s496 + $0x60] sm:$0xff]
        %v596 = vld [vmem:[%s496 + $0x70] sm:$0xff]
        %v597 = vlaneseq
        %v598 = vshrl.u32 %v597, 7
        %v599 = vsub.s32 0, %v598
        %v600 = vrot.slane %v471, %v599
        %v601 = vmul.f32 %v589, %v600
        %v602 = vmul.f32 %v590, %v600
        %v603 = vmul.f32 %v591, %v600
        %v604 = vmul.f32 %v592, %v600
        %v605 = vmul.f32 %v593, %v600
        %v606 = vmul.f32 %v594, %v600
        %v607 = vmul.f32 %v595, %v600
        %v608 = vmul.f32 %v596, %v600
        %v609 = vadd.f32 %v581, %v601
        %v610 = vadd.f32 %v582, %v602
        %v611 = vadd.f32 %v583, %v603
        %v612 = vadd.f32 %v584, %v604
        %v613 = vadd.f32 %v585, %v605
        %v614 = vadd.f32 %v586, %v606
        %v615 = vadd.f32 %v587, %v607
        %v616 = vadd.f32 %v588, %v608
        %v617 = vld [vmem:[%s496 + $0x1] sm:$0xff]
        %v618 = vld [vmem:[%s496 + $0x11] sm:$0xff]
        %v619 = vld [vmem:[%s496 + $0x21] sm:$0xff]
        %v620 = vld [vmem:[%s496 + $0x31] sm:$0xff]
        %v621 = vld [vmem:[%s496 + $0x41] sm:$0xff]
        %v622 = vld [vmem:[%s496 + $0x51] sm:$0xff]
        %v623 = vld [vmem:[%s496 + $0x61] sm:$0xff]
        %v624 = vld [vmem:[%s496 + $0x71] sm:$0xff]
        %v625 = vlaneseq
        %v626 = vshrl.u32 %v625, 7
        %v627 = vsub.s32 1, %v626
        %v628 = vrot.slane %v471, %v627
        %v629 = vmul.f32 %v617, %v628
        %v630 = vmul.f32 %v618, %v628
        %v631 = vmul.f32 %v619, %v628
        %v632 = vmul.f32 %v620, %v628
        %v633 = vmul.f32 %v621, %v628
        %v634 = vmul.f32 %v622, %v628
        %v635 = vmul.f32 %v623, %v628
        %v636 = vmul.f32 %v624, %v628
        %v637 = vadd.f32 %v609, %v629
        %v638 = vadd.f32 %v610, %v630
        %v639 = vadd.f32 %v611, %v631
        %v640 = vadd.f32 %v612, %v632
        %v641 = vadd.f32 %v613, %v633
        %v642 = vadd.f32 %v614, %v634
        %v643 = vadd.f32 %v615, %v635
        %v644 = vadd.f32 %v616, %v636
        %v645 = vld [vmem:[%s496 + $0x2] sm:$0xff]
        %v646 = vld [vmem:[%s496 + $0x12] sm:$0xff]
        %v647 = vld [vmem:[%s496 + $0x22] sm:$0xff]
        %v648 = vld [vmem:[%s496 + $0x32] sm:$0xff]
        %v649 = vld [vmem:[%s496 + $0x42] sm:$0xff]
        %v650 = vld [vmem:[%s496 + $0x52] sm:$0xff]
        %v651 = vld [vmem:[%s496 + $0x62] sm:$0xff]
        %v652 = vld [vmem:[%s496 + $0x72] sm:$0xff]
        %v653 = vlaneseq
        %v654 = vshrl.u32 %v653, 7
        %v655 = vsub.s32 2, %v654
        %v656 = vrot.slane %v471, %v655
        %v657 = vmul.f32 %v645, %v656
        %v658 = vmul.f32 %v646, %v656
        %v659 = vmul.f32 %v647, %v656
        %v660 = vmul.f32 %v648, %v656
        %v661 = vmul.f32 %v649, %v656
        %v662 = vmul.f32 %v650, %v656
        %v663 = vmul.f32 %v651, %v656
        %v664 = vmul.f32 %v652, %v656
        %v665 = vadd.f32 %v637, %v657
        %v666 = vadd.f32 %v638, %v658
        %v667 = vadd.f32 %v639, %v659
        %v668 = vadd.f32 %v640, %v660
        %v669 = vadd.f32 %v641, %v661
        %v670 = vadd.f32 %v642, %v662
        %v671 = vadd.f32 %v643, %v663
        %v672 = vadd.f32 %v644, %v664
        %s673 = scalar_lea.vmem [#allocation2], 32
        %v674 = vld [vmem:[%s673] sm:$0xff]
        %v675 = vld [vmem:[%s673 + $0x10] sm:$0xff]
        %v676 = vld [vmem:[%s673 + $0x20] sm:$0xff]
        %v677 = vld [vmem:[%s673 + $0x30] sm:$0xff]
        %v678 = vld [vmem:[%s673 + $0x40] sm:$0xff]
        %v679 = vld [vmem:[%s673 + $0x50] sm:$0xff]
        %v680 = vld [vmem:[%s673 + $0x60] sm:$0xff]
        %v681 = vld [vmem:[%s673 + $0x70] sm:$0xff]
        %v682 = vlaneseq
        %v683 = vshrl.u32 %v682, 7
        %v684 = vsub.s32 0, %v683
        %v685 = vrot.slane %v472, %v684
        %v686 = vmul.f32 %v674, %v685
        %v687 = vmul.f32 %v675, %v685
        %v688 = vmul.f32 %v676, %v685
        %v689 = vmul.f32 %v677, %v685
        %v690 = vmul.f32 %v678, %v685
        %v691 = vmul.f32 %v679, %v685
        %v692 = vmul.f32 %v680, %v685
        %v693 = vmul.f32 %v681, %v685
        %v694 = vadd.f32 %v665, %v686
        %v695 = vadd.f32 %v666, %v687
        %v696 = vadd.f32 %v667, %v688
        %v697 = vadd.f32 %v668, %v689
        %v698 = vadd.f32 %v669, %v690
        %v699 = vadd.f32 %v670, %v691
        %v700 = vadd.f32 %v671, %v692
        %v701 = vadd.f32 %v672, %v693
        %v702 = vld [vmem:[%s673 + $0x1] sm:$0xff]
        %v703 = vld [vmem:[%s673 + $0x11] sm:$0xff]
        %v704 = vld [vmem:[%s673 + $0x21] sm:$0xff]
        %v705 = vld [vmem:[%s673 + $0x31] sm:$0xff]
        %v706 = vld [vmem:[%s673 + $0x41] sm:$0xff]
        %v707 = vld [vmem:[%s673 + $0x51] sm:$0xff]
        %v708 = vld [vmem:[%s673 + $0x61] sm:$0xff]
        %v709 = vld [vmem:[%s673 + $0x71] sm:$0xff]
        %v710 = vlaneseq
        %v711 = vshrl.u32 %v710, 7
        %v712 = vsub.s32 1, %v711
        %v713 = vrot.slane %v472, %v712
        %v714 = vmul.f32 %v702, %v713
        %v715 = vmul.f32 %v703, %v713
        %v716 = vmul.f32 %v704, %v713
        %v717 = vmul.f32 %v705, %v713
        %v718 = vmul.f32 %v706, %v713
        %v719 = vmul.f32 %v707, %v713
        %v720 = vmul.f32 %v708, %v713
        %v721 = vmul.f32 %v709, %v713
        %v722 = vadd.f32 %v694, %v714
        %v723 = vadd.f32 %v695, %v715
        %v724 = vadd.f32 %v696, %v716
        %v725 = vadd.f32 %v697, %v717
        %v726 = vadd.f32 %v698, %v718
        %v727 = vadd.f32 %v699, %v719
        %v728 = vadd.f32 %v700, %v720
        %v729 = vadd.f32 %v701, %v721
        %v730 = vld [vmem:[%s673 + $0x2] sm:$0xff]
        %v731 = vld [vmem:[%s673 + $0x12] sm:$0xff]
        %v732 = vld [vmem:[%s673 + $0x22] sm:$0xff]
        %v733 = vld [vmem:[%s673 + $0x32] sm:$0xff]
        %v734 = vld [vmem:[%s673 + $0x42] sm:$0xff]
        %v735 = vld [vmem:[%s673 + $0x52] sm:$0xff]
        %v736 = vld [vmem:[%s673 + $0x62] sm:$0xff]
        %v737 = vld [vmem:[%s673 + $0x72] sm:$0xff]
        %v738 = vlaneseq
        %v739 = vshrl.u32 %v738, 7
        %v740 = vsub.s32 2, %v739
        %v741 = vrot.slane %v472, %v740
        %v742 = vmul.f32 %v730, %v741
        %v743 = vmul.f32 %v731, %v741
        %v744 = vmul.f32 %v732, %v741
        %v745 = vmul.f32 %v733, %v741
        %v746 = vmul.f32 %v734, %v741
        %v747 = vmul.f32 %v735, %v741
        %v748 = vmul.f32 %v736, %v741
        %v749 = vmul.f32 %v737, %v741
        %v750 = vadd.f32 %v722, %v742
        %v751 = vadd.f32 %v723, %v743
        %v752 = vadd.f32 %v724, %v744
        %v753 = vadd.f32 %v725, %v745
        %v754 = vadd.f32 %v726, %v746
        %v755 = vadd.f32 %v727, %v747
        %v756 = vadd.f32 %v728, %v748
        %v757 = vadd.f32 %v729, %v749
        %v759 = vlaneseq
        %v760 = vshrl.u32 %v759, 7
        %v761 = vsub.s32 0, %v760
        %v762 = vrot.slane %v473, %v761
        %v764 = vadd.f32 %v750, %v762
        %v765 = vadd.f32 %v751, %v762
        %v766 = vadd.f32 %v752, %v762
        %v767 = vadd.f32 %v753, %v762
        %v768 = vadd.f32 %v754, %v762
        %v769 = vadd.f32 %v755, %v762
        %v770 = vadd.f32 %v756, %v762
        %v771 = vadd.f32 %v757, %v762
        %v772 = vmax.f32 %v764, 0.0
        %v773 = vmax.f32 %v765, 0.0
        %v774 = vmax.f32 %v766, 0.0
        %v775 = vmax.f32 %v767, 0.0
        %v776 = vmax.f32 %v768, 0.0
        %v777 = vmax.f32 %v769, 0.0
        %v778 = vmax.f32 %v770, 0.0
        %v779 = vmax.f32 %v771, 0.0
        %v780 = vmin.f32 %v772, 6.0
        %v781 = vmin.f32 %v773, 6.0
        %v782 = vmin.f32 %v774, 6.0
        %v783 = vmin.f32 %v775, 6.0
        %v784 = vmin.f32 %v776, 6.0
        %v785 = vmin.f32 %v777, 6.0
        %v786 = vmin.f32 %v778, 6.0
        %v787 = vmin.f32 %v779, 6.0
        %v788 = vpack.c.bf16 %v781, %v780
        %v789 = vpack.c.bf16 %v783, %v782
        %v790 = vpack.c.bf16 %v785, %v784
        %v791 = vpack.c.bf16 %v787, %v786
        %v792 = vld [vmem:[%s3] sm:$0xf]
        %v793 = vld [vmem:[%s3 + $0x4] sm:$0xf]
        %v794 = vld [vmem:[%s3 + $0x8] sm:$0xf]
        %v795 = vld [vmem:[%s3 + $0xc] sm:$0xf]
        %v796 = vld [vmem:[%s3 + $0x10] sm:$0xf]
        %v797 = vld [vmem:[%s3 + $0x14] sm:$0xf]
        %v798 = vld [vmem:[%s3 + $0x18] sm:$0xf]
        %v799 = vld [vmem:[%s3 + $0x1c] sm:$0xf]
        %v800 = vld [vmem:[#allocation7] sm:$0x1]
        %v802 = vlaneseq
        %v803 = vshrl.u32 %v802, 7
        %v804 = vsub.s32 0, %v803
        %v805 = vrot.slane %v800, %v804
        %v815 = vunpack.c.l.b16 %v792
        %v816 = vunpack.c.l.b16 %v793
        %v817 = vunpack.c.l.b16 %v794
        %v818 = vunpack.c.l.b16 %v795
        %v819 = vunpack.c.l.b16 %v796
        %v820 = vunpack.c.l.b16 %v797
        %v821 = vunpack.c.l.b16 %v798
        %v822 = vunpack.c.l.b16 %v799
        %v823 = vpack.c.b16 %v816, %v815
        %v824 = vpack.c.b16 %v818, %v817
        %v825 = vpack.c.b16 %v820, %v819
        %v826 = vpack.c.b16 %v822, %v821
        %v832 = vsel %vm474, %v788, 0
        %v835 = vsel %vm474, %v789, 0
        %v838 = vsel %vm474, %v790, 0
        %v841 = vsel %vm474, %v791, 0
        %843 = vmatprep.subr.bf16.mxu0 0
        %844 = vmatpush1.bf16.msra.mxu0 %v823
        %845 = vmatprep.subr.bf16.mxu0 0
        %846 = vmatpush1.bf16.msra.mxu0 %v824
        %847 = vmatprep.subr.bf16.mxu0 0
        %848 = vmatpush1.bf16.msra.mxu0 %v825
        %849 = vmatprep.subr.bf16.mxu0 0
        %850 = vmatpush1.bf16.msra.mxu0 %v826
        %851 = vmatprep.subr.bf16.mxu0 0
        %852 = vmatpush1.bf16.msra.mxu0 0
        %853 = vmatprep.subr.bf16.mxu0 0
        %854 = vmatpush1.bf16.msra.mxu0 0
        %855 = vmatprep.subr.bf16.mxu0 0
        %856 = vmatpush1.bf16.msra.mxu0 0
        %857 = vmatprep.subr.bf16.mxu0 0
        %858 = vmatpush1.bf16.msra.mxu0 0
        %859 = vmatprep.subr.bf16.mxu0 0
        %860 = vmatpush1.bf16.msra.mxu0 0
        %861 = vmatprep.subr.bf16.mxu0 0
        %862 = vmatpush1.bf16.msra.mxu0 0
        %863 = vmatprep.subr.bf16.mxu0 0
        %864 = vmatpush1.bf16.msra.mxu0 0
        %865 = vmatprep.subr.bf16.mxu0 0
        %866 = vmatpush1.bf16.msra.mxu0 0
        %867 = vmatprep.subr.bf16.mxu0 0
        %868 = vmatpush1.bf16.msra.mxu0 0
        %869 = vmatprep.subr.bf16.mxu0 0
        %870 = vmatpush1.bf16.msra.mxu0 0
        %871 = vmatprep.subr.bf16.mxu0 0
        %872 = vmatpush1.bf16.msra.mxu0 0
        %873 = vmatprep.subr.bf16.mxu0 0
        %874 = vmatpush1.bf16.msra.mxu0 0
        %875 = vmatprep.mubr.bf16.mxu0 0
        %876 = vmatmul.mubr.bf16.gmra.mrb[0].mxu0 %v832
        %v877 = vpop.f32.mrb[0].mxu0
        %v878 = vadd.f32 %v805, %v877
        %v879 = vpop.f32.mrb[0].mxu0
        %v880 = vpop.f32.mrb[0].mxu0
        %v881 = vadd.f32 %v805, %v880
        %v882 = vpop.f32.mrb[0].mxu0
        %883 = vmatprep.mubr.bf16.mxu0 0
        %884 = vmatmul.mubr.bf16.gmra.mrb[0].mxu0 %v835
        %v885 = vpop.f32.mrb[0].mxu0
        %v886 = vadd.f32 %v805, %v885
        %v887 = vpop.f32.mrb[0].mxu0
        %v888 = vpop.f32.mrb[0].mxu0
        %v889 = vadd.f32 %v805, %v888
        %v890 = vpop.f32.mrb[0].mxu0
        %891 = vmatprep.mubr.bf16.mxu0 0
        %892 = vmatmul.mubr.bf16.gmra.mrb[0].mxu0 %v838
        %v893 = vpop.f32.mrb[0].mxu0
        %v894 = vadd.f32 %v805, %v893
        %v895 = vpop.f32.mrb[0].mxu0
        %v896 = vpop.f32.mrb[0].mxu0
        %v897 = vadd.f32 %v805, %v896
        %v898 = vpop.f32.mrb[0].mxu0
        %899 = vmatprep.mubr.bf16.mxu0 0
        %900 = vmatmul.mubr.bf16.gmra.mrb[0].mxu0 %v841
        %v901 = vpop.f32.mrb[0].mxu0
        %v902 = vadd.f32 %v805, %v901
        %v903 = vpop.f32.mrb[0].mxu0
        %v904 = vpop.f32.mrb[0].mxu0
        %v905 = vadd.f32 %v805, %v904
        %v906 = vpop.f32.mrb[0].mxu0
        %907 = vdwg.mxu0
        %vm908 = vcmask 195584
        %909 = vst.msk [vmem:[%s447] sm:$0xff] %vm908, %v878
        %910 = vst.msk [vmem:[%s447 + $0x8] sm:$0xff] %vm908, %v881
        %911 = vst.msk [vmem:[%s447 + $0x10] sm:$0xff] %vm908, %v886
        %912 = vst.msk [vmem:[%s447 + $0x18] sm:$0xff] %vm908, %v889
        %913 = vst.msk [vmem:[%s447 + $0x20] sm:$0xff] %vm908, %v894
        %914 = vst.msk [vmem:[%s447 + $0x28] sm:$0xff] %vm908, %v897
        %915 = vst.msk [vmem:[%s447 + $0x30] sm:$0xff] %vm908, %v902
        %916 = vst.msk [vmem:[%s447 + $0x38] sm:$0xff] %vm908, %v905
        %v917 = vld [vmem:[#allocation8] sm:$0x7]
        %v918 = vld [vmem:[#allocation8 + $0x4] sm:$0x7]
        %v919 = vld [vmem:[#allocation8 + $0x8] sm:$0x7]
        %v920 = vld [vmem:[#allocation10] sm:$0x1]
        %921 = vst.msk [vmem:[#allocation2] sm:$0xff] %vm474, 0.0
        %922 = vst.msk [vmem:[#allocation2 + $0x8] sm:$0x3] %vm476, 0.0
        %923 = vst.msk [vmem:[#allocation2 + $0x10] sm:$0xff] %vm474, 0.0
        %924 = vst.msk [vmem:[#allocation2 + $0x18] sm:$0x3] %vm476, 0.0
        %925 = vst.msk [vmem:[#allocation2 + $0x20] sm:$0xff] %vm474, 0.0
        %926 = vst.msk [vmem:[#allocation2 + $0x28] sm:$0x3] %vm476, 0.0
        %927 = vst.msk [vmem:[#allocation2 + $0x30] sm:$0xff] %vm474, 0.0
        %928 = vst.msk [vmem:[#allocation2 + $0x38] sm:$0x3] %vm476, 0.0
        %929 = vst.msk [vmem:[#allocation2 + $0x40] sm:$0xff] %vm474, 0.0
        %930 = vst.msk [vmem:[#allocation2 + $0x48] sm:$0x3] %vm476, 0.0
        %931 = vst.msk [vmem:[#allocation2 + $0x50] sm:$0xff] %vm474, 0.0
        %932 = vst.msk [vmem:[#allocation2 + $0x58] sm:$0x3] %vm476, 0.0
        %933 = vst.msk [vmem:[#allocation2 + $0x60] sm:$0xff] %vm474, 0.0
        %934 = vst.msk [vmem:[#allocation2 + $0x68] sm:$0x3] %vm476, 0.0
        %935 = vst.msk [vmem:[#allocation2 + $0x70] sm:$0xff] %vm474, 0.0
        %936 = vst.msk [vmem:[#allocation2 + $0x78] sm:$0x3] %vm476, 0.0
        %937 = vst.msk [vmem:[#allocation2 + $0x80] sm:$0xff] %vm474, 0.0
        %938 = vst.msk [vmem:[#allocation2 + $0x88] sm:$0x3] %vm476, 0.0
        %939 = vst.msk [vmem:[#allocation2 + $0x90] sm:$0xff] %vm474, 0.0
        %940 = vst.msk [vmem:[#allocation2 + $0x98] sm:$0x3] %vm476, 0.0
        %941 = vst.msk [vmem:[%s496 + $0x1] sm:$0xff] %vm474, %v462
        %942 = vst.msk [vmem:[%s496 + $0x11] sm:$0xff] %vm474, %v463
        %943 = vst.msk [vmem:[%s496 + $0x21] sm:$0xff] %vm474, %v464
        %944 = vst.msk [vmem:[%s496 + $0x31] sm:$0xff] %vm474, %v465
        %945 = vst.msk [vmem:[%s496 + $0x41] sm:$0xff] %vm474, %v466
        %946 = vst.msk [vmem:[%s496 + $0x51] sm:$0xff] %vm474, %v467
        %947 = vst.msk [vmem:[%s496 + $0x61] sm:$0xff] %vm474, %v468
        %948 = vst.msk [vmem:[%s496 + $0x71] sm:$0xff] %vm474, %v469
        %v949 = vld [vmem:[#allocation2] sm:$0xff]
        %v950 = vld [vmem:[#allocation2 + $0x10] sm:$0xff]
        %v951 = vld [vmem:[#allocation2 + $0x20] sm:$0xff]
        %v952 = vld [vmem:[#allocation2 + $0x30] sm:$0xff]
        %v953 = vld [vmem:[#allocation2 + $0x40] sm:$0xff]
        %v954 = vld [vmem:[#allocation2 + $0x50] sm:$0xff]
        %v955 = vld [vmem:[#allocation2 + $0x60] sm:$0xff]
        %v956 = vld [vmem:[#allocation2 + $0x70] sm:$0xff]
        %v957 = vlaneseq
        %v958 = vshrl.u32 %v957, 7
        %v959 = vsub.s32 0, %v958
        %v960 = vrot.slane %v917, %v959
        %v961 = vmul.f32 %v949, %v960
        %v962 = vmul.f32 %v950, %v960
        %v963 = vmul.f32 %v951, %v960
        %v964 = vmul.f32 %v952, %v960
        %v965 = vmul.f32 %v953, %v960
        %v966 = vmul.f32 %v954, %v960
        %v967 = vmul.f32 %v955, %v960
        %v968 = vmul.f32 %v956, %v960
        %v969 = vadd.f32 %v961, 0.0
        %v970 = vadd.f32 %v962, 0.0
        %v971 = vadd.f32 %v963, 0.0
        %v972 = vadd.f32 %v964, 0.0
        %v973 = vadd.f32 %v965, 0.0
        %v974 = vadd.f32 %v966, 0.0
        %v975 = vadd.f32 %v967, 0.0
        %v976 = vadd.f32 %v968, 0.0
        %v977 = vld [vmem:[#allocation2 + $0x1] sm:$0xff]
        %v978 = vld [vmem:[#allocation2 + $0x11] sm:$0xff]
        %v979 = vld [vmem:[#allocation2 + $0x21] sm:$0xff]
        %v980 = vld [vmem:[#allocation2 + $0x31] sm:$0xff]
        %v981 = vld [vmem:[#allocation2 + $0x41] sm:$0xff]
        %v982 = vld [vmem:[#allocation2 + $0x51] sm:$0xff]
        %v983 = vld [vmem:[#allocation2 + $0x61] sm:$0xff]
        %v984 = vld [vmem:[#allocation2 + $0x71] sm:$0xff]
        %v985 = vlaneseq
        %v986 = vshrl.u32 %v985, 7
        %v987 = vsub.s32 1, %v986
        %v988 = vrot.slane %v917, %v987
        %v989 = vmul.f32 %v977, %v988
        %v990 = vmul.f32 %v978, %v988
        %v991 = vmul.f32 %v979, %v988
        %v992 = vmul.f32 %v980, %v988
        %v993 = vmul.f32 %v981, %v988
        %v994 = vmul.f32 %v982, %v988
        %v995 = vmul.f32 %v983, %v988
        %v996 = vmul.f32 %v984, %v988
        %v997 = vadd.f32 %v969, %v989
        %v998 = vadd.f32 %v970, %v990
        %v999 = vadd.f32 %v971, %v991
        %v1000 = vadd.f32 %v972, %v992
        %v1001 = vadd.f32 %v973, %v993
        %v1002 = vadd.f32 %v974, %v994
        %v1003 = vadd.f32 %v975, %v995
        %v1004 = vadd.f32 %v976, %v996
        %v1005 = vld [vmem:[#allocation2 + $0x2] sm:$0xff]
        %v1006 = vld [vmem:[#allocation2 + $0x12] sm:$0xff]
        %v1007 = vld [vmem:[#allocation2 + $0x22] sm:$0xff]
        %v1008 = vld [vmem:[#allocation2 + $0x32] sm:$0xff]
        %v1009 = vld [vmem:[#allocation2 + $0x42] sm:$0xff]
        %v1010 = vld [vmem:[#allocation2 + $0x52] sm:$0xff]
        %v1011 = vld [vmem:[#allocation2 + $0x62] sm:$0xff]
        %v1012 = vld [vmem:[#allocation2 + $0x72] sm:$0xff]
        %v1013 = vlaneseq
        %v1014 = vshrl.u32 %v1013, 7
        %v1015 = vsub.s32 2, %v1014
        %v1016 = vrot.slane %v917, %v1015
        %v1017 = vmul.f32 %v1005, %v1016
        %v1018 = vmul.f32 %v1006, %v1016
        %v1019 = vmul.f32 %v1007, %v1016
        %v1020 = vmul.f32 %v1008, %v1016
        %v1021 = vmul.f32 %v1009, %v1016
        %v1022 = vmul.f32 %v1010, %v1016
        %v1023 = vmul.f32 %v1011, %v1016
        %v1024 = vmul.f32 %v1012, %v1016
        %v1025 = vadd.f32 %v997, %v1017
        %v1026 = vadd.f32 %v998, %v1018
        %v1027 = vadd.f32 %v999, %v1019
        %v1028 = vadd.f32 %v1000, %v1020
        %v1029 = vadd.f32 %v1001, %v1021
        %v1030 = vadd.f32 %v1002, %v1022
        %v1031 = vadd.f32 %v1003, %v1023
        %v1032 = vadd.f32 %v1004, %v1024
        %v1033 = vld [vmem:[%s496] sm:$0xff]
        %v1034 = vld [vmem:[%s496 + $0x10] sm:$0xff]
        %v1035 = vld [vmem:[%s496 + $0x20] sm:$0xff]
        %v1036 = vld [vmem:[%s496 + $0x30] sm:$0xff]
        %v1037 = vld [vmem:[%s496 + $0x40] sm:$0xff]
        %v1038 = vld [vmem:[%s496 + $0x50] sm:$0xff]
        %v1039 = vld [vmem:[%s496 + $0x60] sm:$0xff]
        %v1040 = vld [vmem:[%s496 + $0x70] sm:$0xff]
        %v1041 = vlaneseq
        %v1042 = vshrl.u32 %v1041, 7
        %v1043 = vsub.s32 0, %v1042
        %v1044 = vrot.slane %v918, %v1043
        %v1045 = vmul.f32 %v1033, %v1044
        %v1046 = vmul.f32 %v1034, %v1044
        %v1047 = vmul.f32 %v1035, %v1044
        %v1048 = vmul.f32 %v1036, %v1044
        %v1049 = vmul.f32 %v1037, %v1044
        %v1050 = vmul.f32 %v1038, %v1044
        %v1051 = vmul.f32 %v1039, %v1044
        %v1052 = vmul.f32 %v1040, %v1044
        %v1053 = vadd.f32 %v1025, %v1045
        %v1054 = vadd.f32 %v1026, %v1046
        %v1055 = vadd.f32 %v1027, %v1047
        %v1056 = vadd.f32 %v1028, %v1048
        %v1057 = vadd.f32 %v1029, %v1049
        %v1058 = vadd.f32 %v1030, %v1050
        %v1059 = vadd.f32 %v1031, %v1051
        %v1060 = vadd.f32 %v1032, %v1052
        %v1061 = vld [vmem:[%s496 + $0x1] sm:$0xff]
        %v1062 = vld [vmem:[%s496 + $0x11] sm:$0xff]
        %v1063 = vld [vmem:[%s496 + $0x21] sm:$0xff]
        %v1064 = vld [vmem:[%s496 + $0x31] sm:$0xff]
        %v1065 = vld [vmem:[%s496 + $0x41] sm:$0xff]
        %v1066 = vld [vmem:[%s496 + $0x51] sm:$0xff]
        %v1067 = vld [vmem:[%s496 + $0x61] sm:$0xff]
        %v1068 = vld [vmem:[%s496 + $0x71] sm:$0xff]
        %v1069 = vlaneseq
        %v1070 = vshrl.u32 %v1069, 7
        %v1071 = vsub.s32 1, %v1070
        %v1072 = vrot.slane %v918, %v1071
        %v1073 = vmul.f32 %v1061, %v1072
        %v1074 = vmul.f32 %v1062, %v1072
        %v1075 = vmul.f32 %v1063, %v1072
        %v1076 = vmul.f32 %v1064, %v1072
        %v1077 = vmul.f32 %v1065, %v1072
        %v1078 = vmul.f32 %v1066, %v1072
        %v1079 = vmul.f32 %v1067, %v1072
        %v1080 = vmul.f32 %v1068, %v1072
        %v1081 = vadd.f32 %v1053, %v1073
        %v1082 = vadd.f32 %v1054, %v1074
        %v1083 = vadd.f32 %v1055, %v1075
        %v1084 = vadd.f32 %v1056, %v1076
        %v1085 = vadd.f32 %v1057, %v1077
        %v1086 = vadd.f32 %v1058, %v1078
        %v1087 = vadd.f32 %v1059, %v1079
        %v1088 = vadd.f32 %v1060, %v1080
        %v1089 = vld [vmem:[%s496 + $0x2] sm:$0xff]
        %v1090 = vld [vmem:[%s496 + $0x12] sm:$0xff]
        %v1091 = vld [vmem:[%s496 + $0x22] sm:$0xff]
        %v1092 = vld [vmem:[%s496 + $0x32] sm:$0xff]
        %v1093 = vld [vmem:[%s496 + $0x42] sm:$0xff]
        %v1094 = vld [vmem:[%s496 + $0x52] sm:$0xff]
        %v1095 = vld [vmem:[%s496 + $0x62] sm:$0xff]
        %v1096 = vld [vmem:[%s496 + $0x72] sm:$0xff]
        %v1097 = vlaneseq
        %v1098 = vshrl.u32 %v1097, 7
        %v1099 = vsub.s32 2, %v1098
        %v1100 = vrot.slane %v918, %v1099
        %v1101 = vmul.f32 %v1089, %v1100
        %v1102 = vmul.f32 %v1090, %v1100
        %v1103 = vmul.f32 %v1091, %v1100
        %v1104 = vmul.f32 %v1092, %v1100
        %v1105 = vmul.f32 %v1093, %v1100
        %v1106 = vmul.f32 %v1094, %v1100
        %v1107 = vmul.f32 %v1095, %v1100
        %v1108 = vmul.f32 %v1096, %v1100
        %v1109 = vadd.f32 %v1081, %v1101
        %v1110 = vadd.f32 %v1082, %v1102
        %v1111 = vadd.f32 %v1083, %v1103
        %v1112 = vadd.f32 %v1084, %v1104
        %v1113 = vadd.f32 %v1085, %v1105
        %v1114 = vadd.f32 %v1086, %v1106
        %v1115 = vadd.f32 %v1087, %v1107
        %v1116 = vadd.f32 %v1088, %v1108
        %v1117 = vld [vmem:[%s673] sm:$0xff]
        %v1118 = vld [vmem:[%s673 + $0x10] sm:$0xff]
        %v1119 = vld [vmem:[%s673 + $0x20] sm:$0xff]
        %v1120 = vld [vmem:[%s673 + $0x30] sm:$0xff]
        %v1121 = vld [vmem:[%s673 + $0x40] sm:$0xff]
        %v1122 = vld [vmem:[%s673 + $0x50] sm:$0xff]
        %v1123 = vld [vmem:[%s673 + $0x60] sm:$0xff]
        %v1124 = vld [vmem:[%s673 + $0x70] sm:$0xff]
        %v1125 = vlaneseq
        %v1126 = vshrl.u32 %v1125, 7
        %v1127 = vsub.s32 0, %v1126
        %v1128 = vrot.slane %v919, %v1127
        %v1129 = vmul.f32 %v1117, %v1128
        %v1130 = vmul.f32 %v1118, %v1128
        %v1131 = vmul.f32 %v1119, %v1128
        %v1132 = vmul.f32 %v1120, %v1128
        %v1133 = vmul.f32 %v1121, %v1128
        %v1134 = vmul.f32 %v1122, %v1128
        %v1135 = vmul.f32 %v1123, %v1128
        %v1136 = vmul.f32 %v1124, %v1128
        %v1137 = vadd.f32 %v1109, %v1129
        %v1138 = vadd.f32 %v1110, %v1130
        %v1139 = vadd.f32 %v1111, %v1131
        %v1140 = vadd.f32 %v1112, %v1132
        %v1141 = vadd.f32 %v1113, %v1133
        %v1142 = vadd.f32 %v1114, %v1134
        %v1143 = vadd.f32 %v1115, %v1135
        %v1144 = vadd.f32 %v1116, %v1136
        %v1145 = vld [vmem:[%s673 + $0x1] sm:$0xff]
        %v1146 = vld [vmem:[%s673 + $0x11] sm:$0xff]
        %v1147 = vld [vmem:[%s673 + $0x21] sm:$0xff]
        %v1148 = vld [vmem:[%s673 + $0x31] sm:$0xff]
        %v1149 = vld [vmem:[%s673 + $0x41] sm:$0xff]
        %v1150 = vld [vmem:[%s673 + $0x51] sm:$0xff]
        %v1151 = vld [vmem:[%s673 + $0x61] sm:$0xff]
        %v1152 = vld [vmem:[%s673 + $0x71] sm:$0xff]
        %v1153 = vlaneseq
        %v1154 = vshrl.u32 %v1153, 7
        %v1155 = vsub.s32 1, %v1154
        %v1156 = vrot.slane %v919, %v1155
        %v1157 = vmul.f32 %v1145, %v1156
        %v1158 = vmul.f32 %v1146, %v1156
        %v1159 = vmul.f32 %v1147, %v1156
        %v1160 = vmul.f32 %v1148, %v1156
        %v1161 = vmul.f32 %v1149, %v1156
        %v1162 = vmul.f32 %v1150, %v1156
        %v1163 = vmul.f32 %v1151, %v1156
        %v1164 = vmul.f32 %v1152, %v1156
        %v1165 = vadd.f32 %v1137, %v1157
        %v1166 = vadd.f32 %v1138, %v1158
        %v1167 = vadd.f32 %v1139, %v1159
        %v1168 = vadd.f32 %v1140, %v1160
        %v1169 = vadd.f32 %v1141, %v1161
        %v1170 = vadd.f32 %v1142, %v1162
        %v1171 = vadd.f32 %v1143, %v1163
        %v1172 = vadd.f32 %v1144, %v1164
        %v1173 = vld [vmem:[%s673 + $0x2] sm:$0xff]
        %v1174 = vld [vmem:[%s673 + $0x12] sm:$0xff]
        %v1175 = vld [vmem:[%s673 + $0x22] sm:$0xff]
        %v1176 = vld [vmem:[%s673 + $0x32] sm:$0xff]
        %v1177 = vld [vmem:[%s673 + $0x42] sm:$0xff]
        %v1178 = vld [vmem:[%s673 + $0x52] sm:$0xff]
        %v1179 = vld [vmem:[%s673 + $0x62] sm:$0xff]
        %v1180 = vld [vmem:[%s673 + $0x72] sm:$0xff]
        %v1181 = vlaneseq
        %v1182 = vshrl.u32 %v1181, 7
        %v1183 = vsub.s32 2, %v1182
        %v1184 = vrot.slane %v919, %v1183
        %v1185 = vmul.f32 %v1173, %v1184
        %v1186 = vmul.f32 %v1174, %v1184
        %v1187 = vmul.f32 %v1175, %v1184
        %v1188 = vmul.f32 %v1176, %v1184
        %v1189 = vmul.f32 %v1177, %v1184
        %v1190 = vmul.f32 %v1178, %v1184
        %v1191 = vmul.f32 %v1179, %v1184
        %v1192 = vmul.f32 %v1180, %v1184
        %v1193 = vadd.f32 %v1165, %v1185
        %v1194 = vadd.f32 %v1166, %v1186
        %v1195 = vadd.f32 %v1167, %v1187
        %v1196 = vadd.f32 %v1168, %v1188
        %v1197 = vadd.f32 %v1169, %v1189
        %v1198 = vadd.f32 %v1170, %v1190
        %v1199 = vadd.f32 %v1171, %v1191
        %v1200 = vadd.f32 %v1172, %v1192
        %v1202 = vlaneseq
        %v1203 = vshrl.u32 %v1202, 7
        %v1204 = vsub.s32 0, %v1203
        %v1205 = vrot.slane %v920, %v1204
        %v1207 = vadd.f32 %v1193, %v1205
        %v1208 = vadd.f32 %v1194, %v1205
        %v1209 = vadd.f32 %v1195, %v1205
        %v1210 = vadd.f32 %v1196, %v1205
        %v1211 = vadd.f32 %v1197, %v1205
        %v1212 = vadd.f32 %v1198, %v1205
        %v1213 = vadd.f32 %v1199, %v1205
        %v1214 = vadd.f32 %v1200, %v1205
        %v1215 = vmax.f32 %v1207, 0.0
        %v1216 = vmax.f32 %v1208, 0.0
        %v1217 = vmax.f32 %v1209, 0.0
        %v1218 = vmax.f32 %v1210, 0.0
        %v1219 = vmax.f32 %v1211, 0.0
        %v1220 = vmax.f32 %v1212, 0.0
        %v1221 = vmax.f32 %v1213, 0.0
        %v1222 = vmax.f32 %v1214, 0.0
        %v1223 = vmin.f32 %v1215, 6.0
        %v1224 = vmin.f32 %v1216, 6.0
        %v1225 = vmin.f32 %v1217, 6.0
        %v1226 = vmin.f32 %v1218, 6.0
        %v1227 = vmin.f32 %v1219, 6.0
        %v1228 = vmin.f32 %v1220, 6.0
        %v1229 = vmin.f32 %v1221, 6.0
        %v1230 = vmin.f32 %v1222, 6.0
        %v1231 = vpack.c.bf16 %v1224, %v1223
        %v1232 = vpack.c.bf16 %v1226, %v1225
        %v1233 = vpack.c.bf16 %v1228, %v1227
        %v1234 = vpack.c.bf16 %v1230, %v1229
        %v1235 = vld [vmem:[%s7] sm:$0xf]
        %v1236 = vld [vmem:[%s7 + $0x4] sm:$0xf]
        %v1237 = vld [vmem:[%s7 + $0x8] sm:$0xf]
        %v1238 = vld [vmem:[%s7 + $0xc] sm:$0xf]
        %v1239 = vld [vmem:[%s7 + $0x10] sm:$0xf]
        %v1240 = vld [vmem:[%s7 + $0x14] sm:$0xf]
        %v1241 = vld [vmem:[%s7 + $0x18] sm:$0xf]
        %v1242 = vld [vmem:[%s7 + $0x1c] sm:$0xf]
        %v1243 = vld [vmem:[#allocation11] sm:$0x1]
        %v1245 = vlaneseq
        %v1246 = vshrl.u32 %v1245, 7
        %v1247 = vsub.s32 0, %v1246
        %v1248 = vrot.slane %v1243, %v1247
        %v1258 = vunpack.c.l.b16 %v1235
        %v1259 = vunpack.c.l.b16 %v1236
        %v1260 = vunpack.c.l.b16 %v1237
        %v1261 = vunpack.c.l.b16 %v1238
        %v1262 = vunpack.c.l.b16 %v1239
        %v1263 = vunpack.c.l.b16 %v1240
        %v1264 = vunpack.c.l.b16 %v1241
        %v1265 = vunpack.c.l.b16 %v1242
        %v1266 = vpack.c.b16 %v1259, %v1258
        %v1267 = vpack.c.b16 %v1261, %v1260
        %v1268 = vpack.c.b16 %v1263, %v1262
        %v1269 = vpack.c.b16 %v1265, %v1264
        %v1275 = vsel %vm474, %v1231, 0
        %v1278 = vsel %vm474, %v1232, 0
        %v1281 = vsel %vm474, %v1233, 0
        %v1284 = vsel %vm474, %v1234, 0
        %1286 = vmatprep.subr.bf16.mxu0 0
        %1287 = vmatpush1.bf16.msra.mxu0 %v1266
        %1288 = vmatprep.subr.bf16.mxu0 0
        %1289 = vmatpush1.bf16.msra.mxu0 %v1267
        %1290 = vmatprep.subr.bf16.mxu0 0
        %1291 = vmatpush1.bf16.msra.mxu0 %v1268
        %1292 = vmatprep.subr.bf16.mxu0 0
        %1293 = vmatpush1.bf16.msra.mxu0 %v1269
        %1294 = vmatprep.subr.bf16.mxu0 0
        %1295 = vmatpush1.bf16.msra.mxu0 0
        %1296 = vmatprep.subr.bf16.mxu0 0
        %1297 = vmatpush1.bf16.msra.mxu0 0
        %1298 = vmatprep.subr.bf16.mxu0 0
        %1299 = vmatpush1.bf16.msra.mxu0 0
        %1300 = vmatprep.subr.bf16.mxu0 0
        %1301 = vmatpush1.bf16.msra.mxu0 0
        %1302 = vmatprep.subr.bf16.mxu0 0
        %1303 = vmatpush1.bf16.msra.mxu0 0
        %1304 = vmatprep.subr.bf16.mxu0 0
        %1305 = vmatpush1.bf16.msra.mxu0 0
        %1306 = vmatprep.subr.bf16.mxu0 0
        %1307 = vmatpush1.bf16.msra.mxu0 0
        %1308 = vmatprep.subr.bf16.mxu0 0
        %1309 = vmatpush1.bf16.msra.mxu0 0
        %1310 = vmatprep.subr.bf16.mxu0 0
        %1311 = vmatpush1.bf16.msra.mxu0 0
        %1312 = vmatprep.subr.bf16.mxu0 0
        %1313 = vmatpush1.bf16.msra.mxu0 0
        %1314 = vmatprep.subr.bf16.mxu0 0
        %1315 = vmatpush1.bf16.msra.mxu0 0
        %1316 = vmatprep.subr.bf16.mxu0 0
        %1317 = vmatpush1.bf16.msra.mxu0 0
        %1318 = vmatprep.mubr.bf16.mxu0 0
        %1319 = vmatmul.mubr.bf16.gmra.mrb[0].mxu0 %v1275
        %v1320 = vpop.f32.mrb[0].mxu0
        %v1321 = vadd.f32 %v1248, %v1320
        %v1322 = vpop.f32.mrb[0].mxu0
        %v1323 = vpop.f32.mrb[0].mxu0
        %v1324 = vadd.f32 %v1248, %v1323
        %v1325 = vpop.f32.mrb[0].mxu0
        %1326 = vmatprep.mubr.bf16.mxu0 0
        %1327 = vmatmul.mubr.bf16.gmra.mrb[0].mxu0 %v1278
        %v1328 = vpop.f32.mrb[0].mxu0
        %v1329 = vadd.f32 %v1248, %v1328
        %v1330 = vpop.f32.mrb[0].mxu0
        %v1331 = vpop.f32.mrb[0].mxu0
        %v1332 = vadd.f32 %v1248, %v1331
        %v1333 = vpop.f32.mrb[0].mxu0
        %1334 = vmatprep.mubr.bf16.mxu0 0
        %1335 = vmatmul.mubr.bf16.gmra.mrb[0].mxu0 %v1281
        %v1336 = vpop.f32.mrb[0].mxu0
        %v1337 = vadd.f32 %v1248, %v1336
        %v1338 = vpop.f32.mrb[0].mxu0
        %v1339 = vpop.f32.mrb[0].mxu0
        %v1340 = vadd.f32 %v1248, %v1339
        %v1341 = vpop.f32.mrb[0].mxu0
        %1342 = vmatprep.mubr.bf16.mxu0 0
        %1343 = vmatmul.mubr.bf16.gmra.mrb[0].mxu0 %v1284
        %v1344 = vpop.f32.mrb[0].mxu0
        %v1345 = vadd.f32 %v1248, %v1344
        %v1346 = vpop.f32.mrb[0].mxu0
        %v1347 = vpop.f32.mrb[0].mxu0
        %v1348 = vadd.f32 %v1248, %v1347
        %v1349 = vpop.f32.mrb[0].mxu0
        %1350 = vdwg.mxu0
        %1351 = vst.msk [vmem:[%s452] sm:$0xff] %vm908, %v1321
        %1352 = vst.msk [vmem:[%s452 + $0x8] sm:$0xff] %vm908, %v1324
        %1353 = vst.msk [vmem:[%s452 + $0x10] sm:$0xff] %vm908, %v1329
        %1354 = vst.msk [vmem:[%s452 + $0x18] sm:$0xff] %vm908, %v1332
        %1355 = vst.msk [vmem:[%s452 + $0x20] sm:$0xff] %vm908, %v1337
        %1356 = vst.msk [vmem:[%s452 + $0x28] sm:$0xff] %vm908, %v1340
        %1357 = vst.msk [vmem:[%s452 + $0x30] sm:$0xff] %vm908, %v1345
        %1358 = vst.msk [vmem:[%s452 + $0x38] sm:$0xff] %vm908, %v1348
        %p1359 = scmp.lt.s32.totalorder %s26, 1
        %s1360 = scalar_select %p1359, %s26, 1
        %s1361 = smul.addr %s1360, 8
        %s1362 = smul.addr %s1361, 8
        %s1363 = scalar_lea.vmem %s9, %s1362
        %p1364 = scmp.lt.s32.totalorder %s26, 1
        %s1365 = scalar_select %p1364, %s26, 1
        %s1366 = smul.addr %s1365, 8
        %s1367 = smul.addr %s1366, 8
        %s1368 = scalar_lea.vmem %s10, %s1367
        // Predicated region
        $region81: #{ssdlite_forward.7} parent=55 // pred_check
          %p1369 = pneg %p238
        $region82: #{ssdlite_forward.7} parent=55 // pred_check_branch
          %1371 = sbr.rel (%p1369) target = $region84
        $region83: #{ssdlite_forward.7} parent=55 // pred_region
          _
        $region84: #{ssdlite_forward.7} parent=55 // pred_fallthru
          _
        // Predicated region
        $region85: #{ssdlite_forward.7} parent=55 // pred_check
          %p1372 = pneg %p264
        $region86: #{ssdlite_forward.7} parent=55 // pred_check_branch
          %1374 = sbr.rel (%p1372) target = $region88
        $region87: #{ssdlite_forward.7} parent=55 // pred_region
          _
        $region88: #{ssdlite_forward.7} parent=55 // pred_fallthru
          _
      $region56: #{ssdlite_forward.7} parent=5 // pred_fallthru
        _
      %p1375 = scmp.le.s32.totalorder 2, %s21
      // Predicated region
      $region89: #{ssdlite_forward.7} parent=5 // pred_check
        %p1376 = pneg %p1375
      $region90: #{ssdlite_forward.7} parent=5 // pred_check_branch
        %1378 = sbr.rel (%p1376) target = $region92
      $region91: #{ssdlite_forward.7} parent=5 // pred_region
        %s1379 = ssub.s32 %s21, 2
        // Predicated region
        $region93: #{ssdlite_forward.7} parent=91 // pred_check
          %p1380 = pneg %p244
        $region94: #{ssdlite_forward.7} parent=91 // pred_check_branch
          %1382 = sbr.rel (%p1380) target = $region96
        $region95: #{ssdlite_forward.7} parent=91 // pred_region
          %p1383 = scmp.lt.s32.totalorder %s27, 1
          %s1384 = scalar_select %p1383, %s27, 1
          %s1385 = smul.addr %s1384, 8
          %s1386 = smul.addr %s1385, 8
          %s1387 = scalar_lea.vmem %s9, %s1386
        $region96: #{ssdlite_forward.7} parent=91 // pred_fallthru
          _
        // Predicated region
        $region97: #{ssdlite_forward.7} parent=91 // pred_check
          %p1388 = pneg %p270
        $region98: #{ssdlite_forward.7} parent=91 // pred_check_branch
          %1390 = sbr.rel (%p1388) target = $region100
        $region99: #{ssdlite_forward.7} parent=91 // pred_region
          %p1391 = scmp.lt.s32.totalorder %s27, 1
          %s1392 = scalar_select %p1391, %s27, 1
          %s1393 = smul.addr %s1392, 8
          %s1394 = smul.addr %s1393, 8
          %s1395 = scalar_lea.vmem %s10, %s1394
        $region100: #{ssdlite_forward.7} parent=91 // pred_fallthru
          _
      $region92: #{ssdlite_forward.7} parent=5 // pred_fallthru
        _
    $region6: #{ssdlite_forward.7} parent=1 // loop_footer
      %s25 = sadd.s32 1, %s21
    $region7: #{ssdlite_forward.7} parent=1 // loop_footer_branch
      %20 = sbr.rel target = $region3
    $region8: #{ssdlite_forward.7} parent=1 // loop_exit
      _
    %1396 = vsyncpa [#allocation4], 1
    %s1397 = scalar_lea.sflag [#allocation4], 1
    %1398 = vsyncpa %s1397, 1
    %1399 = vsyncpa [#allocation6], 1
    %1400 = vsyncpa [#allocation9], 1
    %1401 = vsyncpa [#allocation12], 1

// kernel: ssdlite_forward.4
$region0: #{ssdlite_forward.4}
  #allocation0 [shape = 'u32[]', space=smem, size = 0x4, offset = 0x4, fixed_abs, tag = 'smem constant byte address 0x4 - core index']
  #allocation1 [shape = 'u32[144,128]{1,0:T(1,128)}', space=vmem, size = 0x12000, scoped, tag = 'internal scratch']
  #allocation2 [shape = 'f32[18,18,16]{2,1,0:T(8,128)}', space=vmem, size = 0x36000, scoped, tag = 'scratch operand']
  %s0 = inlined_call_operand.vmem [shape: f32[2,16,16,3], index: 0, kind: input, shape index: {}]
  %s1 = inlined_call_operand.hbm [shape: f32[3,16], index: 1, kind: input, shape index: {}]
  %s2 = inlined_call_operand.hbm [shape: f32[1,16], index: 2, kind: input, shape index: {}]
  %s3 = inlined_call_operand.hbm [shape: f32[3,3,16], index: 3, kind: input, shape index: {}]
  %s4 = inlined_call_operand.hbm [shape: f32[1,16], index: 4, kind: input, shape index: {}]
  %s5 = inlined_call_operand.vmem [shape: bf16[16,32], index: 5, kind: input, shape index: {}]
  %s6 = inlined_call_operand.hbm [shape: f32[1,32], index: 6, kind: input, shape index: {}]
  %s7 = inlined_call_operand.vmem [shape: bf16[2,16,16,32], index: 7, kind: output, shape index: {}]
  %s8 = sld [smem:[#allocation0]]
  $region81: #{ssdlite_forward.4} parent=0
    _
  %s10 = ssub.s32 1, %s8
  %s11 = scalar_select 0, %s10, %s8
  $region1: #{ssdlite_forward.4} parent=0
    #allocation3 [shape = 'u8[2048]{0}', space=vmem, size = 0x800, scoped, tag = 'input window, operand 1, single buffered']
    #allocation4 [shape = 's32[2]{0}', space=sflag, size = 0x8, scoped, tag = 'scoped memory for ssdlite_forward.4']
    #allocation5 [shape = 'u8[512]{0}', space=vmem, size = 0x400, scoped, tag = 'input window, operand 2, single buffered']
    #allocation6 [shape = 's32[1]{0}', space=sflag, size = 0x4, scoped, tag = 'scoped memory for ssdlite_forward.4']
    #allocation7 [shape = 'u8[6144]{0}', space=vmem, size = 0x1800, scoped, tag = 'input window, operand 3, single buffered']
    #allocation8 [shape = 'u8[512]{0}', space=vmem, size = 0x400, scoped, tag = 'input window, operand 4, single buffered']
    #allocation9 [shape = 's32[1]{0}', space=sflag, size = 0x4, scoped, tag = 'scoped memory for ssdlite_forward.4']
    #allocation10 [shape = 'u8[512]{0}', space=vmem, size = 0x400, scoped, tag = 'input window, operand 6, single buffered']
    %12 = vsyncpa [#allocation4], 0
    %13 = vsyncpa [#allocation6], 0
    %14 = vsyncpa [#allocation9], 0
    loop: start=0, step=1, limit=4
    $region2: #{ssdlite_forward.4} parent=1 // loop_pre_header
      _
    $region3: #{ssdlite_forward.4} parent=1 // loop_header
      %s16 = sphi 0, %s20
      %p17 = scmp.ge.s32.totalorder %s16, 4
      %s26 = sphi 0, %s28
      %s29 = sphi 0, %s26
      %s30 = sphi 0, %s29
      %s46 = sphi 0, %s30
      %s50 = sphi 0, %s50
      %s52 = sphi 0, %s50
      %s53 = sphi 0, %s52
      %s67 = sphi 0, %s53
      %s71 = sphi 0, %s71
      %s73 = sphi 0, %s71
      %s74 = sphi 0, %s73
      %s88 = sphi 0, %s74
      %s92 = sphi 0, %s92
      %s94 = sphi 0, %s92
      %s95 = sphi 0, %s94
      %s109 = sphi 0, %s95
      %s113 = sphi 0, %s113
      %s115 = sphi 0, %s113
      %s116 = sphi 0, %s115
      %s130 = sphi 0, %s116
      %s134 = sphi 0, %s134
      %s136 = sphi 0, %s134
      %s137 = sphi 0, %s136
      %s151 = sphi 0, %s137
      %s155 = sphi 0, %s155
      %s157 = sphi 0, %s155
      %s158 = sphi 0, %s157
      %s172 = sphi 0, %s158
      %s178 = sphi 0, %s180
      %s181 = sphi 0, %s178
      %s182 = sphi 0, %s181
      %s198 = sphi 0, %s182
    $region4: #{ssdlite_forward.4} parent=1 // loop_header_branch
      %19 = sbr.rel (%p17) target = $region8
    $region5: #{ssdlite_forward.4} parent=1 // loop_body
      %s21 = ssub.s32 %s16, 1
      %s22 = ssub.s32 %s16, 2
      %s23 = sadd.s32 %s16, 1
      %s24 = ssub.s32 %s16, %s23
      %p25 = scmp.eq.s32.totalorder %s24, 0
      %s27 = sadd.s32 %s26, 1
      %s28 = scalar_select %p25, %s26, %s27
      %p31 = pneg %p25
      %p32 = scmp.eq.s32.totalorder %s16, 1
      %p33 = por %p31, %p32
      %p34 = scmp.ne.s32.totalorder %s26, %s29
      %p35 = scmp.eq.s32.totalorder %s16, 0
      %p36 = por %p34, %p35
      %p37 = scmp.ne.s32.totalorder %s26, %s29
      %p38 = scmp.eq.s32.totalorder %s21, 1
      %p39 = por %p37, %p38
      %p40 = scmp.ne.s32.totalorder %s29, %s30
      %p41 = scmp.eq.s32.totalorder %s21, 0
      %p42 = por %p40, %p41
      %p43 = scmp.ne.s32.totalorder %s29, %s30
      %p44 = scmp.eq.s32.totalorder %s22, 1
      %p45 = por %p43, %p44
      %p47 = scmp.ne.s32.totalorder %s30, %s46
      %p48 = scmp.eq.s32.totalorder %s22, 0
      %p49 = por %p47, %p48
      %s51 = sadd.s32 %s50, 1
      %p54 = scmp.eq.s32.totalorder %s16, 1
      %p55 = scmp.ne.s32.totalorder %s50, %s52
      %p56 = scmp.eq.s32.totalorder %s16, 0
      %p57 = por %p55, %p56
      %p58 = scmp.ne.s32.totalorder %s50, %s52
      %p59 = scmp.eq.s32.totalorder %s21, 1
      %p60 = por %p58, %p59
      %p61 = scmp.ne.s32.totalorder %s52, %s53
      %p62 = scmp.eq.s32.totalorder %s21, 0
      %p63 = por %p61, %p62
      %p64 = scmp.ne.s32.totalorder %s52, %s53
      %p65 = scmp.eq.s32.totalorder %s22, 1
      %p66 = por %p64, %p65
      %p68 = scmp.ne.s32.totalorder %s53, %s67
      %p69 = scmp.eq.s32.totalorder %s22, 0
      %p70 = por %p68, %p69
      %s72 = sadd.s32 %s71, 1
      %p75 = scmp.eq.s32.totalorder %s16, 1
      %p76 = scmp.ne.s32.totalorder %s71, %s73
      %p77 = scmp.eq.s32.totalorder %s16, 0
      %p78 = por %p76, %p77
      %p79 = scmp.ne.s32.totalorder %s71, %s73
      %p80 = scmp.eq.s32.totalorder %s21, 1
      %p81 = por %p79, %p80
      %p82 = scmp.ne.s32.totalorder %s73, %s74
      %p83 = scmp.eq.s32.totalorder %s21, 0
      %p84 = por %p82, %p83
      %p85 = scmp.ne.s32.totalorder %s73, %s74
      %p86 = scmp.eq.s32.totalorder %s22, 1
      %p87 = por %p85, %p86
      %p89 = scmp.ne.s32.totalorder %s74, %s88
      %p90 = scmp.eq.s32.totalorder %s22, 0
      %p91 = por %p89, %p90
      %s93 = sadd.s32 %s92, 1
      %p96 = scmp.eq.s32.totalorder %s16, 1
      %p97 = scmp.ne.s32.totalorder %s92, %s94
      %p98 = scmp.eq.s32.totalorder %s16, 0
      %p99 = por %p97, %p98
      %p100 = scmp.ne.s32.totalorder %s92, %s94
      %p101 = scmp.eq.s32.totalorder %s21, 1
      %p102 = por %p100, %p101
      %p103 = scmp.ne.s32.totalorder %s94, %s95
      %p104 = scmp.eq.s32.totalorder %s21, 0
      %p105 = por %p103, %p104
      %p106 = scmp.ne.s32.totalorder %s94, %s95
      %p107 = scmp.eq.s32.totalorder %s22, 1
      %p108 = por %p106, %p107
      %p110 = scmp.ne.s32.totalorder %s95, %s109
      %p111 = scmp.eq.s32.totalorder %s22, 0
      %p112 = por %p110, %p111
      %s114 = sadd.s32 %s113, 1
      %p117 = scmp.eq.s32.totalorder %s16, 1
      %p118 = scmp.ne.s32.totalorder %s113, %s115
      %p119 = scmp.eq.s32.totalorder %s16, 0
      %p120 = por %p118, %p119
      %p121 = scmp.ne.s32.totalorder %s113, %s115
      %p122 = scmp.eq.s32.totalorder %s21, 1
      %p123 = por %p121, %p122
      %p124 = scmp.ne.s32.totalorder %s115, %s116
      %p125 = scmp.eq.s32.totalorder %s21, 0
      %p126 = por %p124, %p125
      %p127 = scmp.ne.s32.totalorder %s115, %s116
      %p128 = scmp.eq.s32.totalorder %s22, 1
      %p129 = por %p127, %p128
      %p131 = scmp.ne.s32.totalorder %s116, %s130
      %p132 = scmp.eq.s32.totalorder %s22, 0
      %p133 = por %p131, %p132
      %s135 = sadd.s32 %s134, 1
      %p138 = scmp.eq.s32.totalorder %s16, 1
      %p139 = scmp.ne.s32.totalorder %s134, %s136
      %p140 = scmp.eq.s32.totalorder %s16, 0
      %p141 = por %p139, %p140
      %p142 = scmp.ne.s32.totalorder %s134, %s136
      %p143 = scmp.eq.s32.totalorder %s21, 1
      %p144 = por %p142, %p143
      %p145 = scmp.ne.s32.totalorder %s136, %s137
      %p146 = scmp.eq.s32.totalorder %s21, 0
      %p147 = por %p145, %p146
      %p148 = scmp.ne.s32.totalorder %s136, %s137
      %p149 = scmp.eq.s32.totalorder %s22, 1
      %p150 = por %p148, %p149
      %p152 = scmp.ne.s32.totalorder %s137, %s151
      %p153 = scmp.eq.s32.totalorder %s22, 0
      %p154 = por %p152, %p153
      %s156 = sadd.s32 %s155, 1
      %p159 = scmp.eq.s32.totalorder %s16, 1
      %p160 = scmp.ne.s32.totalorder %s155, %s157
      %p161 = scmp.eq.s32.totalorder %s16, 0
      %p162 = por %p160, %p161
      %p163 = scmp.ne.s32.totalorder %s155, %s157
      %p164 = scmp.eq.s32.totalorder %s21, 1
      %p165 = por %p163, %p164
      %p166 = scmp.ne.s32.totalorder %s157, %s158
      %p167 = scmp.eq.s32.totalorder %s21, 0
      %p168 = por %p166, %p167
      %p169 = scmp.ne.s32.totalorder %s157, %s158
      %p170 = scmp.eq.s32.totalorder %s22, 1
      %p171 = por %p169, %p170
      %p173 = scmp.ne.s32.totalorder %s158, %s172
      %p174 = scmp.eq.s32.totalorder %s22, 0
      %p175 = por %p173, %p174
      %s176 = ssub.s32 %s16, %s23
      %p177 = scmp.eq.s32.totalorder %s176, 0
      %s179 = sadd.s32 %s178, 1
      %s180 = scalar_select %p177, %s178, %s179
      %p183 = pneg %p177
      %p184 = scmp.eq.s32.totalorder %s16, 1
      %p185 = por %p183, %p184
      %p186 = scmp.ne.s32.totalorder %s178, %s181
      %p187 = scmp.eq.s32.totalorder %s16, 0
      %p188 = por %p186, %p187
      %p189 = scmp.ne.s32.totalorder %s178, %s181
      %p190 = scmp.eq.s32.totalorder %s21, 1
      %p191 = por %p189, %p190
      %p192 = scmp.ne.s32.totalorder %s181, %s182
      %p193 = scmp.eq.s32.totalorder %s21, 0
      %p194 = por %p192, %p193
      %p195 = scmp.ne.s32.totalorder %s181, %s182
      %p196 = scmp.eq.s32.totalorder %s22, 1
      %p197 = por %p195, %p196
      %p199 = scmp.ne.s32.totalorder %s182, %s198
      %p200 = scmp.eq.s32.totalorder %s22, 0
      %p201 = por %p199, %p200
      %p202 = scmp.le.s32.totalorder 1, %s16
      %p203 = scmp.lt.s32.totalorder %s16, 3
      %p204 = pnand %p202, %p203
      %p205 = pneg %p204
      // Predicated region
      $region9: #{ssdlite_forward.4} parent=5 // pred_check
        _
      $region10: #{ssdlite_forward.4} parent=5 // pred_check_branch
        %207 = sbr.rel (%p204) target = $region12
      $region11: #{ssdlite_forward.4} parent=5 // pred_region
        %s208 = ssub.s32 %s16, 1
        // Predicated region
        $region13: #{ssdlite_forward.4} parent=11 // pred_check
          %p209 = pneg %p63
        $region14: #{ssdlite_forward.4} parent=11 // pred_check_branch
          %211 = sbr.rel (%p209) target = $region16
        $region15: #{ssdlite_forward.4} parent=11 // pred_region
          %s213 = ssub.s32 64, 64
          %214 = vsyncadd [#allocation4], %s213
          %s216 = sshll.u32 [#allocation3], 4
          %s217 = int_to_ptr.vmem [resolvable:$true] %s216
          %219 = dma.hbm_to_vmem [thread:$0]  %s1, 64, %s217, [#allocation4]
        $region16: #{ssdlite_forward.4} parent=11 // pred_fallthru
          _
        // Predicated region
        $region17: #{ssdlite_forward.4} parent=11 // pred_check
          %p220 = pneg %p84
        $region18: #{ssdlite_forward.4} parent=11 // pred_check_branch
          %222 = sbr.rel (%p220) target = $region20
        $region19: #{ssdlite_forward.4} parent=11 // pred_region
          %s224 = ssub.s32 16, 16
          %225 = vsyncadd [#allocation6], %s224
          %s227 = sshll.u32 [#allocation5], 4
          %s228 = int_to_ptr.vmem [resolvable:$true] %s227
          %230 = dma.hbm_to_vmem [thread:$0]  %s2, 16, %s228, [#allocation6]
        $region20: #{ssdlite_forward.4} parent=11 // pred_fallthru
          _
        // Predicated region
        $region21: #{ssdlite_forward.4} parent=11 // pred_check
          %p231 = pneg %p105
        $region22: #{ssdlite_forward.4} parent=11 // pred_check_branch
          %233 = sbr.rel (%p231) target = $region24
        $region23: #{ssdlite_forward.4} parent=11 // pred_region
          %s235 = ssub.s32 192, 192
          %236 = vsyncadd [#allocation6], %s235
          %s237 = sshll.u32 [#allocation7], 4
          %s238 = int_to_ptr.vmem [resolvable:$true] %s237
          %243 = dma.hbm_to_vmem [thread:$0]  %s3, 192, %s238, [#allocation6], 64, 64, 4
        $region24: #{ssdlite_forward.4} parent=11 // pred_fallthru
          _
        // Predicated region
        $region25: #{ssdlite_forward.4} parent=11 // pred_check
          %p244 = pneg %p126
        $region26: #{ssdlite_forward.4} parent=11 // pred_check_branch
          %246 = sbr.rel (%p244) target = $region28
        $region27: #{ssdlite_forward.4} parent=11 // pred_region
          %s248 = ssub.s32 16, 16
          %249 = vsyncadd [#allocation9], %s248
          %s251 = sshll.u32 [#allocation8], 4
          %s252 = int_to_ptr.vmem [resolvable:$true] %s251
          %254 = dma.hbm_to_vmem [thread:$0]  %s4, 16, %s252, [#allocation9]
        $region28: #{ssdlite_forward.4} parent=11 // pred_fallthru
          _
        // Predicated region
        $region29: #{ssdlite_forward.4} parent=11 // pred_check
          %p255 = pneg %p147
        $region30: #{ssdlite_forward.4} parent=11 // pred_check_branch
          %257 = sbr.rel (%p255) target = $region32
        $region31: #{ssdlite_forward.4} parent=11 // pred_region
          _
        $region32: #{ssdlite_forward.4} parent=11 // pred_fallthru
          _
        // Predicated region
        $region33: #{ssdlite_forward.4} parent=11 // pred_check
          %p258 = pneg %p168
        $region34: #{ssdlite_forward.4} parent=11 // pred_check_branch
          %260 = sbr.rel (%p258) target = $region36
        $region35: #{ssdlite_forward.4} parent=11 // pred_region
          %s262 = ssub.s32 16, 16
          %263 = vsyncadd [#allocation9], %s262
          %s265 = sshll.u32 [#allocation10], 4
          %s266 = int_to_ptr.vmem [resolvable:$true] %s265
          %268 = dma.hbm_to_vmem [thread:$0]  %s6, 16, %s266, [#allocation9]
        $region36: #{ssdlite_forward.4} parent=11 // pred_fallthru
          _
      $region12: #{ssdlite_forward.4} parent=5 // pred_fallthru
        _
      %p269 = scmp.lt.s32.totalorder %s16, 2
      // Predicated region
      $region37: #{ssdlite_forward.4} parent=5 // pred_check
        %p270 = pneg %p269
      $region38: #{ssdlite_forward.4} parent=5 // pred_check_branch
        %272 = sbr.rel (%p270) target = $region40
      $region39: #{ssdlite_forward.4} parent=5 // pred_region
        // Predicated region
        $region41: #{ssdlite_forward.4} parent=39 // pred_check
          %p273 = pneg %p36
        $region42: #{ssdlite_forward.4} parent=39 // pred_check_branch
          %275 = sbr.rel (%p273) target = $region44
        $region43: #{ssdlite_forward.4} parent=39 // pred_region
          %p276 = scmp.lt.s32.totalorder %s16, 1
          %s277 = scalar_select %p276, %s16, 1
          %s278 = smul.addr %s277, 32
          %s279 = smul.addr %s278, 8
          %s280 = scalar_lea.vmem %s0, %s279
        $region44: #{ssdlite_forward.4} parent=39 // pred_fallthru
          _
      $region40: #{ssdlite_forward.4} parent=5 // pred_fallthru
        _
      %p281 = scmp.le.s32.totalorder 1, %s16
      %p282 = scmp.lt.s32.totalorder %s16, 3
      %p283 = pnand %p281, %p282
      %p284 = pneg %p283
      // Predicated region
      $region45: #{ssdlite_forward.4} parent=5 // pred_check
        _
      $region46: #{ssdlite_forward.4} parent=5 // pred_check_branch
        %286 = sbr.rel (%p283) target = $region48
      $region47: #{ssdlite_forward.4} parent=5 // pred_region
        %s287 = ssub.s32 %s16, 1
        // Predicated region
        $region49: #{ssdlite_forward.4} parent=47 // pred_check
          %p288 = pneg %p63
        $region50: #{ssdlite_forward.4} parent=47 // pred_check_branch
          %290 = sbr.rel (%p288) target = $region52
        $region51: #{ssdlite_forward.4} parent=47 // pred_region
          %291 = dma.done [#allocation4], 64
        $region52: #{ssdlite_forward.4} parent=47 // pred_fallthru
          _
        // Predicated region
        $region53: #{ssdlite_forward.4} parent=47 // pred_check
          %p292 = pneg %p84
        $region54: #{ssdlite_forward.4} parent=47 // pred_check_branch
          %294 = sbr.rel (%p292) target = $region56
        $region55: #{ssdlite_forward.4} parent=47 // pred_region
          %295 = dma.done [#allocation6], 16
        $region56: #{ssdlite_forward.4} parent=47 // pred_fallthru
          _
        // Predicated region
        $region57: #{ssdlite_forward.4} parent=47 // pred_check
          %p296 = pneg %p105
        $region58: #{ssdlite_forward.4} parent=47 // pred_check_branch
          %298 = sbr.rel (%p296) target = $region60
        $region59: #{ssdlite_forward.4} parent=47 // pred_region
          %299 = dma.done [#allocation6], 192
        $region60: #{ssdlite_forward.4} parent=47 // pred_fallthru
          _
        // Predicated region
        $region61: #{ssdlite_forward.4} parent=47 // pred_check
          %p300 = pneg %p126
        $region62: #{ssdlite_forward.4} parent=47 // pred_check_branch
          %302 = sbr.rel (%p300) target = $region64
        $region63: #{ssdlite_forward.4} parent=47 // pred_region
          %303 = dma.done [#allocation9], 16
        $region64: #{ssdlite_forward.4} parent=47 // pred_fallthru
          _
        // Predicated region
        $region65: #{ssdlite_forward.4} parent=47 // pred_check
          %p304 = pneg %p168
        $region66: #{ssdlite_forward.4} parent=47 // pred_check_branch
          %306 = sbr.rel (%p304) target = $region68
        $region67: #{ssdlite_forward.4} parent=47 // pred_region
          %307 = dma.done [#allocation9], 16
        $region68: #{ssdlite_forward.4} parent=47 // pred_fallthru
          _
        %p308 = scmp.lt.s32.totalorder %s21, 1
        %s309 = scalar_select %p308, %s21, 1
        %s310 = smul.addr %s309, 32
        %s311 = smul.addr %s310, 8
        %s312 = scalar_lea.vmem %s0, %s311
        %p313 = pneg %p42
        %p314 = pneg %p39
        %p315 = pneg %p63
        %p316 = pneg %p60
        %p317 = pneg %p84
        %p318 = pneg %p81
        %p319 = pneg %p105
        %p320 = pneg %p102
        %p321 = pneg %p126
        %p322 = pneg %p123
        %p323 = pneg %p147
        %p324 = pneg %p144
        %p325 = pneg %p168
        %p326 = pneg %p165
        %p327 = pneg %p194
        %p328 = pneg %p191
        %p329 = scmp.lt.s32.totalorder %s21, 1
        %s330 = scalar_select %p329, %s21, 1
        %s331 = smul.addr %s330, 32
        %s332 = smul.addr %s331, 4
        %s333 = scalar_lea.vmem %s7, %s332
        %p334 = scmp.lt.s32.totalorder %s21, 1
        %s335 = scalar_select %p334, %s21, 1
        %s336 = smul.addr %s335, 32
        %s337 = smul.addr %s336, 8
        %s338 = scalar_lea.vmem %s0, %s337
        %p339 = scmp.lt.s32.totalorder %s21, 1
        %s340 = scalar_select %p339, %s21, 1
        %s341 = smul.addr %s340, 32
        %s342 = smul.addr %s341, 4
        %s343 = scalar_lea.vmem %s7, %s342
        %v345 = vld [vmem:[#allocation3] sm:$0x7]
        %v346 = vld [vmem:[%s338] sm:$0xff]
        %v347 = vld [vmem:[%s338 + $0x8] sm:$0xff]
        %v348 = vld [vmem:[%s338 + $0x10] sm:$0xff]
        %v349 = vld [vmem:[%s338 + $0x18] sm:$0xff]
        %v350 = vld [vmem:[%s338 + $0x20] sm:$0xff]
        %v351 = vld [vmem:[%s338 + $0x28] sm:$0xff]
        %v352 = vld [vmem:[%s338 + $0x30] sm:$0xff]
        %v353 = vld [vmem:[%s338 + $0x38] sm:$0xff]
        %v354 = vld [vmem:[%s338 + $0x40] sm:$0xff]
        %v355 = vld [vmem:[%s338 + $0x48] sm:$0xff]
        %v356 = vld [vmem:[%s338 + $0x50] sm:$0xff]
        %v357 = vld [vmem:[%s338 + $0x58] sm:$0xff]
        %v358 = vld [vmem:[%s338 + $0x60] sm:$0xff]
        %v359 = vld [vmem:[%s338 + $0x68] sm:$0xff]
        %v360 = vld [vmem:[%s338 + $0x70] sm:$0xff]
        %v361 = vld [vmem:[%s338 + $0x78] sm:$0xff]
        %v362 = vld [vmem:[%s338 + $0x80] sm:$0xff]
        %v363 = vld [vmem:[%s338 + $0x88] sm:$0xff]
        %v364 = vld [vmem:[%s338 + $0x90] sm:$0xff]
        %v365 = vld [vmem:[%s338 + $0x98] sm:$0xff]
        %v366 = vld [vmem:[%s338 + $0xa0] sm:$0xff]
        %v367 = vld [vmem:[%s338 + $0xa8] sm:$0xff]
        %v368 = vld [vmem:[%s338 + $0xb0] sm:$0xff]
        %v369 = vld [vmem:[%s338 + $0xb8] sm:$0xff]
        %v370 = vld [vmem:[%s338 + $0xc0] sm:$0xff]
        %v371 = vld [vmem:[%s338 + $0xc8] sm:$0xff]
        %v372 = vld [vmem:[%s338 + $0xd0] sm:$0xff]
        %v373 = vld [vmem:[%s338 + $0xd8] sm:$0xff]
        %v374 = vld [vmem:[%s338 + $0xe0] sm:$0xff]
        %v375 = vld [vmem:[%s338 + $0xe8] sm:$0xff]
        %v376 = vld [vmem:[%s338 + $0xf0] sm:$0xff]
        %v377 = vld [vmem:[%s338 + $0xf8] sm:$0xff]
        %379 = vset.pattern.permute.xlu0 0
        %380 = vperm.xlu0 %379, %v346
        %v381 = vpop.permute.xlu0 %380
        %384 = vset.pattern.permute.xlu0 0
        %385 = vperm.xlu0 %384, %v347
        %v386 = vpop.permute.xlu0 %385
        %389 = vset.pattern.permute.xlu0 0
        %390 = vperm.xlu0 %389, %v348
        %v391 = vpop.permute.xlu0 %390
        %394 = vset.pattern.permute.xlu0 0
        %395 = vperm.xlu0 %394, %v349
        %v396 = vpop.permute.xlu0 %395
        %399 = vset.pattern.permute.xlu0 0
        %400 = vperm.xlu0 %399, %v350
        %v401 = vpop.permute.xlu0 %400
        %404 = vset.pattern.permute.xlu0 0
        %405 = vperm.xlu0 %404, %v351
        %v406 = vpop.permute.xlu0 %405
        %409 = vset.pattern.permute.xlu0 0
        %410 = vperm.xlu0 %409, %v352
        %v411 = vpop.permute.xlu0 %410
        %414 = vset.pattern.permute.xlu0 0
        %415 = vperm.xlu0 %414, %v353
        %v416 = vpop.permute.xlu0 %415
        %419 = vset.pattern.permute.xlu0 0
        %420 = vperm.xlu0 %419, %v354
        %v421 = vpop.permute.xlu0 %420
        %424 = vset.pattern.permute.xlu0 0
        %425 = vperm.xlu0 %424, %v355
        %v426 = vpop.permute.xlu0 %425
        %429 = vset.pattern.permute.xlu0 0
        %430 = vperm.xlu0 %429, %v356
        %v431 = vpop.permute.xlu0 %430
        %434 = vset.pattern.permute.xlu0 0
        %435 = vperm.xlu0 %434, %v357
        %v436 = vpop.permute.xlu0 %435
        %439 = vset.pattern.permute.xlu0 0
        %440 = vperm.xlu0 %439, %v358
        %v441 = vpop.permute.xlu0 %440
        %444 = vset.pattern.permute.xlu0 0
        %445 = vperm.xlu0 %444, %v359
        %v446 = vpop.permute.xlu0 %445
        %449 = vset.pattern.permute.xlu0 0
        %450 = vperm.xlu0 %449, %v360
        %v451 = vpop.permute.xlu0 %450
        %454 = vset.pattern.permute.xlu0 0
        %455 = vperm.xlu0 %454, %v361
        %v456 = vpop.permute.xlu0 %455
        %459 = vset.pattern.permute.xlu0 0
        %460 = vperm.xlu0 %459, %v362
        %v461 = vpop.permute.xlu0 %460
        %464 = vset.pattern.permute.xlu0 0
        %465 = vperm.xlu0 %464, %v363
        %v466 = vpop.permute.xlu0 %465
        %469 = vset.pattern.permute.xlu0 0
        %470 = vperm.xlu0 %469, %v364
        %v471 = vpop.permute.xlu0 %470
        %474 = vset.pattern.permute.xlu0 0
        %475 = vperm.xlu0 %474, %v365
        %v476 = vpop.permute.xlu0 %475
        %479 = vset.pattern.permute.xlu0 0
        %480 = vperm.xlu0 %479, %v366
        %v481 = vpop.permute.xlu0 %480
        %484 = vset.pattern.permute.xlu0 0
        %485 = vperm.xlu0 %484, %v367
        %v486 = vpop.permute.xlu0 %485
        %489 = vset.pattern.permute.xlu0 0
        %490 = vperm.xlu0 %489, %v368
        %v491 = vpop.permute.xlu0 %490
        %494 = vset.pattern.permute.xlu0 0
        %495 = vperm.xlu0 %494, %v369
        %v496 = vpop.permute.xlu0 %495
        %499 = vset.pattern.permute.xlu0 0
        %500 = vperm.xlu0 %499, %v370
        %v501 = vpop.permute.xlu0 %500
        %504 = vset.pattern.permute.xlu0 0
        %505 = vperm.xlu0 %504, %v371
        %v506 = vpop.permute.xlu0 %505
        %509 = vset.pattern.permute.xlu0 0
        %510 = vperm.xlu0 %509, %v372
        %v511 = vpop.permute.xlu0 %510
        %514 = vset.pattern.permute.xlu0 0
        %515 = vperm.xlu0 %514, %v373
        %v516 = vpop.permute.xlu0 %515
        %519 = vset.pattern.permute.xlu0 0
        %520 = vperm.xlu0 %519, %v374
        %v521 = vpop.permute.xlu0 %520
        %524 = vset.pattern.permute.xlu0 0
        %525 = vperm.xlu0 %524, %v375
        %v526 = vpop.permute.xlu0 %525
        %529 = vset.pattern.permute.xlu0 0
        %530 = vperm.xlu0 %529, %v376
        %v531 = vpop.permute.xlu0 %530
        %534 = vset.pattern.permute.xlu0 0
        %535 = vperm.xlu0 %534, %v377
        %v536 = vpop.permute.xlu0 %535
        %v538 = vlaneseq
        %v539 = vshrl.u32 %v538, 7
        %v540 = vsub.s32 0, %v539
        %v541 = vrot.slane %v345, %v540
        %v542 = vmul.f32 %v381, %v541
        %v543 = vmul.f32 %v386, %v541
        %v544 = vmul.f32 %v391, %v541
        %v545 = vmul.f32 %v396, %v541
        %v546 = vmul.f32 %v401, %v541
        %v547 = vmul.f32 %v406, %v541
        %v548 = vmul.f32 %v411, %v541
        %v549 = vmul.f32 %v416, %v541
        %v550 = vmul.f32 %v421, %v541
        %v551 = vmul.f32 %v426, %v541
        %v552 = vmul.f32 %v431, %v541
        %v553 = vmul.f32 %v436, %v541
        %v554 = vmul.f32 %v441, %v541
        %v555 = vmul.f32 %v446, %v541
        %v556 = vmul.f32 %v451, %v541
        %v557 = vmul.f32 %v456, %v541
        %v558 = vmul.f32 %v461, %v541
        %v559 = vmul.f32 %v466, %v541
        %v560 = vmul.f32 %v471, %v541
        %v561 = vmul.f32 %v476, %v541
        %v562 = vmul.f32 %v481, %v541
        %v563 = vmul.f32 %v486, %v541
        %v564 = vmul.f32 %v491, %v541
        %v565 = vmul.f32 %v496, %v541
        %v566 = vmul.f32 %v501, %v541
        %v567 = vmul.f32 %v506, %v541
        %v568 = vmul.f32 %v511, %v541
        %v569 = vmul.f32 %v516, %v541
        %v570 = vmul.f32 %v521, %v541
        %v571 = vmul.f32 %v526, %v541
        %v572 = vmul.f32 %v531, %v541
        %v573 = vmul.f32 %v536, %v541
        %574 = vset.pattern.permute.xlu0 1
        %575 = vperm.xlu0 %574, %v346
        %v576 = vpop.permute.xlu0 %575
        %578 = vset.pattern.permute.xlu0 1
        %579 = vperm.xlu0 %578, %v347
        %v580 = vpop.permute.xlu0 %579
        %582 = vset.pattern.permute.xlu0 1
        %583 = vperm.xlu0 %582, %v348
        %v584 = vpop.permute.xlu0 %583
        %586 = vset.pattern.permute.xlu0 1
        %587 = vperm.xlu0 %586, %v349
        %v588 = vpop.permute.xlu0 %587
        %590 = vset.pattern.permute.xlu0 1
        %591 = vperm.xlu0 %590, %v350
        %v592 = vpop.permute.xlu0 %591
        %594 = vset.pattern.permute.xlu0 1
        %595 = vperm.xlu0 %594, %v351
        %v596 = vpop.permute.xlu0 %595
        %598 = vset.pattern.permute.xlu0 1
        %599 = vperm.xlu0 %598, %v352
        %v600 = vpop.permute.xlu0 %599
        %602 = vset.pattern.permute.xlu0 1
        %603 = vperm.xlu0 %602, %v353
        %v604 = vpop.permute.xlu0 %603
        %606 = vset.pattern.permute.xlu0 1
        %607 = vperm.xlu0 %606, %v354
        %v608 = vpop.permute.xlu0 %607
        %610 = vset.pattern.permute.xlu0 1
        %611 = vperm.xlu0 %610, %v355
        %v612 = vpop.permute.xlu0 %611
        %614 = vset.pattern.permute.xlu0 1
        %615 = vperm.xlu0 %614, %v356
        %v616 = vpop.permute.xlu0 %615
        %618 = vset.pattern.permute.xlu0 1
        %619 = vperm.xlu0 %618, %v357
        %v620 = vpop.permute.xlu0 %619
        %622 = vset.pattern.permute.xlu0 1
        %623 = vperm.xlu0 %622, %v358
        %v624 = vpop.permute.xlu0 %623
        %626 = vset.pattern.permute.xlu0 1
        %627 = vperm.xlu0 %626, %v359
        %v628 = vpop.permute.xlu0 %627
        %630 = vset.pattern.permute.xlu0 1
        %631 = vperm.xlu0 %630, %v360
        %v632 = vpop.permute.xlu0 %631
        %634 = vset.pattern.permute.xlu0 1
        %635 = vperm.xlu0 %634, %v361
        %v636 = vpop.permute.xlu0 %635
        %638 = vset.pattern.permute.xlu0 1
        %639 = vperm.xlu0 %638, %v362
        %v640 = vpop.permute.xlu0 %639
        %642 = vset.pattern.permute.xlu0 1
        %643 = vperm.xlu0 %642, %v363
        %v644 = vpop.permute.xlu0 %643
        %646 = vset.pattern.permute.xlu0 1
        %647 = vperm.xlu0 %646, %v364
        %v648 = vpop.permute.xlu0 %647
        %650 = vset.pattern.permute.xlu0 1
        %651 = vperm.xlu0 %650, %v365
        %v652 = vpop.permute.xlu0 %651
        %654 = vset.pattern.permute.xlu0 1
        %655 = vperm.xlu0 %654, %v366
        %v656 = vpop.permute.xlu0 %655
        %658 = vset.pattern.permute.xlu0 1
        %659 = vperm.xlu0 %658, %v367
        %v660 = vpop.permute.xlu0 %659
        %662 = vset.pattern.permute.xlu0 1
        %663 = vperm.xlu0 %662, %v368
        %v664 = vpop.permute.xlu0 %663
        %666 = vset.pattern.permute.xlu0 1
        %667 = vperm.xlu0 %666, %v369
        %v668 = vpop.permute.xlu0 %667
        %670 = vset.pattern.permute.xlu0 1
        %671 = vperm.xlu0 %670, %v370
        %v672 = vpop.permute.xlu0 %671
        %674 = vset.pattern.permute.xlu0 1
        %675 = vperm.xlu0 %674, %v371
        %v676 = vpop.permute.xlu0 %675
        %678 = vset.pattern.permute.xlu0 1
        %679 = vperm.xlu0 %678, %v372
        %v680 = vpop.permute.xlu0 %679
        %682 = vset.pattern.permute.xlu0 1
        %683 = vperm.xlu0 %682, %v373
        %v684 = vpop.permute.xlu0 %683
        %686 = vset.pattern.permute.xlu0 1
        %687 = vperm.xlu0 %686, %v374
        %v688 = vpop.permute.xlu0 %687
        %690 = vset.pattern.permute.xlu0 1
        %691 = vperm.xlu0 %690, %v375
        %v692 = vpop.permute.xlu0 %691
        %694 = vset.pattern.permute.xlu0 1
        %695 = vperm.xlu0 %694, %v376
        %v696 = vpop.permute.xlu0 %695
        %698 = vset.pattern.permute.xlu0 1
        %699 = vperm.xlu0 %698, %v377
        %v700 = vpop.permute.xlu0 %699
        %v702 = vlaneseq
        %v703 = vshrl.u32 %v702, 7
        %v704 = vsub.s32 1, %v703
        %v705 = vrot.slane %v345, %v704
        %v706 = vmul.f32 %v576, %v705
        %v707 = vmul.f32 %v580, %v705
        %v708 = vmul.f32 %v584, %v705
        %v709 = vmul.f32 %v588, %v705
        %v710 = vmul.f32 %v592, %v705
        %v711 = vmul.f32 %v596, %v705
        %v712 = vmul.f32 %v600, %v705
        %v713 = vmul.f32 %v604, %v705
        %v714 = vmul.f32 %v608, %v705
        %v715 = vmul.f32 %v612, %v705
        %v716 = vmul.f32 %v616, %v705
        %v717 = vmul.f32 %v620, %v705
        %v718 = vmul.f32 %v624, %v705
        %v719 = vmul.f32 %v628, %v705
        %v720 = vmul.f32 %v632, %v705
        %v721 = vmul.f32 %v636, %v705
        %v722 = vmul.f32 %v640, %v705
        %v723 = vmul.f32 %v644, %v705
        %v724 = vmul.f32 %v648, %v705
        %v725 = vmul.f32 %v652, %v705
        %v726 = vmul.f32 %v656, %v705
        %v727 = vmul.f32 %v660, %v705
        %v728 = vmul.f32 %v664, %v705
        %v729 = vmul.f32 %v668, %v705
        %v730 = vmul.f32 %v672, %v705
        %v731 = vmul.f32 %v676, %v705
        %v732 = vmul.f32 %v680, %v705
        %v733 = vmul.f32 %v684, %v705
        %v734 = vmul.f32 %v688, %v705
        %v735 = vmul.f32 %v692, %v705
        %v736 = vmul.f32 %v696, %v705
        %v737 = vmul.f32 %v700, %v705
        %v738 = vadd.f32 %v542, %v706
        %v739 = vadd.f32 %v543, %v707
        %v740 = vadd.f32 %v544, %v708
        %v741 = vadd.f32 %v545, %v709
        %v742 = vadd.f32 %v546, %v710
        %v743 = vadd.f32 %v547, %v711
        %v744 = vadd.f32 %v548, %v712
        %v745 = vadd.f32 %v549, %v713
        %v746 = vadd.f32 %v550, %v714
        %v747 = vadd.f32 %v551, %v715
        %v748 = vadd.f32 %v552, %v716
        %v749 = vadd.f32 %v553, %v717
        %v750 = vadd.f32 %v554, %v718
        %v751 = vadd.f32 %v555, %v719
        %v752 = vadd.f32 %v556, %v720
        %v753 = vadd.f32 %v557, %v721
        %v754 = vadd.f32 %v558, %v722
        %v755 = vadd.f32 %v559, %v723
        %v756 = vadd.f32 %v560, %v724
        %v757 = vadd.f32 %v561, %v725
        %v758 = vadd.f32 %v562, %v726
        %v759 = vadd.f32 %v563, %v727
        %v760 = vadd.f32 %v564, %v728
        %v761 = vadd.f32 %v565, %v729
        %v762 = vadd.f32 %v566, %v730
        %v763 = vadd.f32 %v567, %v731
        %v764 = vadd.f32 %v568, %v732
        %v765 = vadd.f32 %v569, %v733
        %v766 = vadd.f32 %v570, %v734
        %v767 = vadd.f32 %v571, %v735
        %v768 = vadd.f32 %v572, %v736
        %v769 = vadd.f32 %v573, %v737
        %770 = vset.pattern.permute.xlu0 2
        %771 = vperm.xlu0 %770, %v346
        %v772 = vpop.permute.xlu0 %771
        %774 = vset.pattern.permute.xlu0 2
        %775 = vperm.xlu0 %774, %v347
        %v776 = vpop.permute.xlu0 %775
        %778 = vset.pattern.permute.xlu0 2
        %779 = vperm.xlu0 %778, %v348
        %v780 = vpop.permute.xlu0 %779
        %782 = vset.pattern.permute.xlu0 2
        %783 = vperm.xlu0 %782, %v349
        %v784 = vpop.permute.xlu0 %783
        %786 = vset.pattern.permute.xlu0 2
        %787 = vperm.xlu0 %786, %v350
        %v788 = vpop.permute.xlu0 %787
        %790 = vset.pattern.permute.xlu0 2
        %791 = vperm.xlu0 %790, %v351
        %v792 = vpop.permute.xlu0 %791
        %794 = vset.pattern.permute.xlu0 2
        %795 = vperm.xlu0 %794, %v352
        %v796 = vpop.permute.xlu0 %795
        %798 = vset.pattern.permute.xlu0 2
        %799 = vperm.xlu0 %798, %v353
        %v800 = vpop.permute.xlu0 %799
        %802 = vset.pattern.permute.xlu0 2
        %803 = vperm.xlu0 %802, %v354
        %v804 = vpop.permute.xlu0 %803
        %806 = vset.pattern.permute.xlu0 2
        %807 = vperm.xlu0 %806, %v355
        %v808 = vpop.permute.xlu0 %807
        %810 = vset.pattern.permute.xlu0 2
        %811 = vperm.xlu0 %810, %v356
        %v812 = vpop.permute.xlu0 %811
        %814 = vset.pattern.permute.xlu0 2
        %815 = vperm.xlu0 %814, %v357
        %v816 = vpop.permute.xlu0 %815
        %818 = vset.pattern.permute.xlu0 2
        %819 = vperm.xlu0 %818, %v358
        %v820 = vpop.permute.xlu0 %819
        %822 = vset.pattern.permute.xlu0 2
        %823 = vperm.xlu0 %822, %v359
        %v824 = vpop.permute.xlu0 %823
        %826 = vset.pattern.permute.xlu0 2
        %827 = vperm.xlu0 %826, %v360
        %v828 = vpop.permute.xlu0 %827
        %830 = vset.pattern.permute.xlu0 2
        %831 = vperm.xlu0 %830, %v361
        %v832 = vpop.permute.xlu0 %831
        %834 = vset.pattern.permute.xlu0 2
        %835 = vperm.xlu0 %834, %v362
        %v836 = vpop.permute.xlu0 %835
        %838 = vset.pattern.permute.xlu0 2
        %839 = vperm.xlu0 %838, %v363
        %v840 = vpop.permute.xlu0 %839
        %842 = vset.pattern.permute.xlu0 2
        %843 = vperm.xlu0 %842, %v364
        %v844 = vpop.permute.xlu0 %843
        %846 = vset.pattern.permute.xlu0 2
        %847 = vperm.xlu0 %846, %v365
        %v848 = vpop.permute.xlu0 %847
        %850 = vset.pattern.permute.xlu0 2
        %851 = vperm.xlu0 %850, %v366
        %v852 = vpop.permute.xlu0 %851
        %854 = vset.pattern.permute.xlu0 2
        %855 = vperm.xlu0 %854, %v367
        %v856 = vpop.permute.xlu0 %855
        %858 = vset.pattern.permute.xlu0 2
        %859 = vperm.xlu0 %858, %v368
        %v860 = vpop.permute.xlu0 %859
        %862 = vset.pattern.permute.xlu0 2
        %863 = vperm.xlu0 %862, %v369
        %v864 = vpop.permute.xlu0 %863
        %866 = vset.pattern.permute.xlu0 2
        %867 = vperm.xlu0 %866, %v370
        %v868 = vpop.permute.xlu0 %867
        %870 = vset.pattern.permute.xlu0 2
        %871 = vperm.xlu0 %870, %v371
        %v872 = vpop.permute.xlu0 %871
        %874 = vset.pattern.permute.xlu0 2
        %875 = vperm.xlu0 %874, %v372
        %v876 = vpop.permute.xlu0 %875
        %878 = vset.pattern.permute.xlu0 2
        %879 = vperm.xlu0 %878, %v373
        %v880 = vpop.permute.xlu0 %879
        %882 = vset.pattern.permute.xlu0 2
        %883 = vperm.xlu0 %882, %v374
        %v884 = vpop.permute.xlu0 %883
        %886 = vset.pattern.permute.xlu0 2
        %887 = vperm.xlu0 %886, %v375
        %v888 = vpop.permute.xlu0 %887
        %890 = vset.pattern.permute.xlu0 2
        %891 = vperm.xlu0 %890, %v376
        %v892 = vpop.permute.xlu0 %891
        %894 = vset.pattern.permute.xlu0 2
        %895 = vperm.xlu0 %894, %v377
        %v896 = vpop.permute.xlu0 %895
        %v898 = vlaneseq
        %v899 = vshrl.u32 %v898, 7
        %v900 = vsub.s32 2, %v899
        %v901 = vrot.slane %v345, %v900
        %v902 = vmul.f32 %v772, %v901
        %v903 = vmul.f32 %v776, %v901
        %v904 = vmul.f32 %v780, %v901
        %v905 = vmul.f32 %v784, %v901
        %v906 = vmul.f32 %v788, %v901
        %v907 = vmul.f32 %v792, %v901
        %v908 = vmul.f32 %v796, %v901
        %v909 = vmul.f32 %v800, %v901
        %v910 = vmul.f32 %v804, %v901
        %v911 = vmul.f32 %v808, %v901
        %v912 = vmul.f32 %v812, %v901
        %v913 = vmul.f32 %v816, %v901
        %v914 = vmul.f32 %v820, %v901
        %v915 = vmul.f32 %v824, %v901
        %v916 = vmul.f32 %v828, %v901
        %v917 = vmul.f32 %v832, %v901
        %v918 = vmul.f32 %v836, %v901
        %v919 = vmul.f32 %v840, %v901
        %v920 = vmul.f32 %v844, %v901
        %v921 = vmul.f32 %v848, %v901
        %v922 = vmul.f32 %v852, %v901
        %v923 = vmul.f32 %v856, %v901
        %v924 = vmul.f32 %v860, %v901
        %v925 = vmul.f32 %v864, %v901
        %v926 = vmul.f32 %v868, %v901
        %v927 = vmul.f32 %v872, %v901
        %v928 = vmul.f32 %v876, %v901
        %v929 = vmul.f32 %v880, %v901
        %v930 = vmul.f32 %v884, %v901
        %v931 = vmul.f32 %v888, %v901
        %v932 = vmul.f32 %v892, %v901
        %v933 = vmul.f32 %v896, %v901
        %v934 = vadd.f32 %v738, %v902
        %v935 = vadd.f32 %v739, %v903
        %v936 = vadd.f32 %v740, %v904
        %v937 = vadd.f32 %v741, %v905
        %v938 = vadd.f32 %v742, %v906
        %v939 = vadd.f32 %v743, %v907
        %v940 = vadd.f32 %v744, %v908
        %v941 = vadd.f32 %v745, %v909
        %v942 = vadd.f32 %v746, %v910
        %v943 = vadd.f32 %v747, %v911
        %v944 = vadd.f32 %v748, %v912
        %v945 = vadd.f32 %v749, %v913
        %v946 = vadd.f32 %v750, %v914
        %v947 = vadd.f32 %v751, %v915
        %v948 = vadd.f32 %v752, %v916
        %v949 = vadd.f32 %v753, %v917
        %v950 = vadd.f32 %v754, %v918
        %v951 = vadd.f32 %v755, %v919
        %v952 = vadd.f32 %v756, %v920
        %v953 = vadd.f32 %v757, %v921
        %v954 = vadd.f32 %v758, %v922
        %v955 = vadd.f32 %v759, %v923
        %v956 = vadd.f32 %v760, %v924
        %v957 = vadd.f32 %v761, %v925
        %v958 = vadd.f32 %v762, %v926
        %v959 = vadd.f32 %v763, %v927
        %v960 = vadd.f32 %v764, %v928
        %v961 = vadd.f32 %v765, %v929
        %v962 = vadd.f32 %v766, %v930
        %v963 = vadd.f32 %v767, %v931
        %v964 = vadd.f32 %v768, %v932
        %v965 = vadd.f32 %v769, %v933
        %v966 = vld [vmem:[#allocation5] sm:$0x1]
        %v968 = vlaneseq
        %v969 = vshrl.u32 %v968, 7
        %v970 = vsub.s32 0, %v969
        %v971 = vrot.slane %v966, %v970
        %v973 = vadd.f32 %v934, %v971
        %v974 = vadd.f32 %v935, %v971
        %v975 = vadd.f32 %v936, %v971
        %v976 = vadd.f32 %v937, %v971
        %v977 = vadd.f32 %v938, %v971
        %v978 = vadd.f32 %v939, %v971
        %v979 = vadd.f32 %v940, %v971
        %v980 = vadd.f32 %v941, %v971
        %v981 = vadd.f32 %v942, %v971
        %v982 = vadd.f32 %v943, %v971
        %v983 = vadd.f32 %v944, %v971
        %v984 = vadd.f32 %v945, %v971
        %v985 = vadd.f32 %v946, %v971
        %v986 = vadd.f32 %v947, %v971
        %v987 = vadd.f32 %v948, %v971
        %v988 = vadd.f32 %v949, %v971
        %v989 = vadd.f32 %v950, %v971
        %v990 = vadd.f32 %v951, %v971
        %v991 = vadd.f32 %v952, %v971
        %v992 = vadd.f32 %v953, %v971
        %v993 = vadd.f32 %v954, %v971
        %v994 = vadd.f32 %v955, %v971
        %v995 = vadd.f32 %v956, %v971
        %v996 = vadd.f32 %v957, %v971
        %v997 = vadd.f32 %v958, %v971
        %v998 = vadd.f32 %v959, %v971
        %v999 = vadd.f32 %v960, %v971
        %v1000 = vadd.f32 %v961, %v971
        %v1001 = vadd.f32 %v962, %v971
        %v1002 = vadd.f32 %v963, %v971
        %v1003 = vadd.f32 %v964, %v971
        %v1004 = vadd.f32 %v965, %v971
        %v1005 = vadd.f32 %v973, 3.0
        %v1006 = vadd.f32 %v974, 3.0
        %v1007 = vadd.f32 %v975, 3.0
        %v1008 = vadd.f32 %v976, 3.0
        %v1009 = vadd.f32 %v977, 3.0
        %v1010 = vadd.f32 %v978, 3.0
        %v1011 = vadd.f32 %v979, 3.0
        %v1012 = vadd.f32 %v980, 3.0
        %v1013 = vadd.f32 %v981, 3.0
        %v1014 = vadd.f32 %v982, 3.0
        %v1015 = vadd.f32 %v983, 3.0
        %v1016 = vadd.f32 %v984, 3.0
        %v1017 = vadd.f32 %v985, 3.0
        %v1018 = vadd.f32 %v986, 3.0
        %v1019 = vadd.f32 %v987, 3.0
        %v1020 = vadd.f32 %v988, 3.0
        %v1021 = vadd.f32 %v989, 3.0
        %v1022 = vadd.f32 %v990, 3.0
        %v1023 = vadd.f32 %v991, 3.0
        %v1024 = vadd.f32 %v992, 3.0
        %v1025 = vadd.f32 %v993, 3.0
        %v1026 = vadd.f32 %v994, 3.0
        %v1027 = vadd.f32 %v995, 3.0
        %v1028 = vadd.f32 %v996, 3.0
        %v1029 = vadd.f32 %v997, 3.0
        %v1030 = vadd.f32 %v998, 3.0
        %v1031 = vadd.f32 %v999, 3.0
        %v1032 = vadd.f32 %v1000, 3.0
        %v1033 = vadd.f32 %v1001, 3.0
        %v1034 = vadd.f32 %v1002, 3.0
        %v1035 = vadd.f32 %v1003, 3.0
        %v1036 = vadd.f32 %v1004, 3.0
        %v1037 = vmax.f32 %v1005, 0.0
        %v1038 = vmax.f32 %v1006, 0.0
        %v1039 = vmax.f32 %v1007, 0.0
        %v1040 = vmax.f32 %v1008, 0.0
        %v1041 = vmax.f32 %v1009, 0.0
        %v1042 = vmax.f32 %v1010, 0.0
        %v1043 = vmax.f32 %v1011, 0.0
        %v1044 = vmax.f32 %v1012, 0.0
        %v1045 = vmax.f32 %v1013, 0.0
        %v1046 = vmax.f32 %v1014, 0.0
        %v1047 = vmax.f32 %v1015, 0.0
        %v1048 = vmax.f32 %v1016, 0.0
        %v1049 = vmax.f32 %v1017, 0.0
        %v1050 = vmax.f32 %v1018, 0.0
        %v1051 = vmax.f32 %v1019, 0.0
        %v1052 = vmax.f32 %v1020, 0.0
        %v1053 = vmax.f32 %v1021, 0.0
        %v1054 = vmax.f32 %v1022, 0.0
        %v1055 = vmax.f32 %v1023, 0.0
        %v1056 = vmax.f32 %v1024, 0.0
        %v1057 = vmax.f32 %v1025, 0.0
        %v1058 = vmax.f32 %v1026, 0.0
        %v1059 = vmax.f32 %v1027, 0.0
        %v1060 = vmax.f32 %v1028, 0.0
        %v1061 = vmax.f32 %v1029, 0.0
        %v1062 = vmax.f32 %v1030, 0.0
        %v1063 = vmax.f32 %v1031, 0.0
        %v1064 = vmax.f32 %v1032, 0.0
        %v1065 = vmax.f32 %v1033, 0.0
        %v1066 = vmax.f32 %v1034, 0.0
        %v1067 = vmax.f32 %v1035, 0.0
        %v1068 = vmax.f32 %v1036, 0.0
        %v1069 = vmin.f32 %v1037, 6.0
        %v1070 = vmin.f32 %v1038, 6.0
        %v1071 = vmin.f32 %v1039, 6.0
        %v1072 = vmin.f32 %v1040, 6.0
        %v1073 = vmin.f32 %v1041, 6.0
        %v1074 = vmin.f32 %v1042, 6.0
        %v1075 = vmin.f32 %v1043, 6.0
        %v1076 = vmin.f32 %v1044, 6.0
        %v1077 = vmin.f32 %v1045, 6.0
        %v1078 = vmin.f32 %v1046, 6.0
        %v1079 = vmin.f32 %v1047, 6.0
        %v1080 = vmin.f32 %v1048, 6.0
        %v1081 = vmin.f32 %v1049, 6.0
        %v1082 = vmin.f32 %v1050, 6.0
        %v1083 = vmin.f32 %v1051, 6.0
        %v1084 = vmin.f32 %v1052, 6.0
        %v1085 = vmin.f32 %v1053, 6.0
        %v1086 = vmin.f32 %v1054, 6.0
        %v1087 = vmin.f32 %v1055, 6.0
        %v1088 = vmin.f32 %v1056, 6.0
        %v1089 = vmin.f32 %v1057, 6.0
        %v1090 = vmin.f32 %v1058, 6.0
        %v1091 = vmin.f32 %v1059, 6.0
        %v1092 = vmin.f32 %v1060, 6.0
        %v1093 = vmin.f32 %v1061, 6.0
        %v1094 = vmin.f32 %v1062, 6.0
        %v1095 = vmin.f32 %v1063, 6.0
        %v1096 = vmin.f32 %v1064, 6.0
        %v1097 = vmin.f32 %v1065, 6.0
        %v1098 = vmin.f32 %v1066, 6.0
        %v1099 = vmin.f32 %v1067, 6.0
        %v1100 = vmin.f32 %v1068, 6.0
        %v1101 = vmul.f32 %v973, %v1069
        %v1102 = vmul.f32 %v974, %v1070
        %v1103 = vmul.f32 %v975, %v1071
        %v1104 = vmul.f32 %v976, %v1072
        %v1105 = vmul.f32 %v977, %v1073
        %v1106 = vmul.f32 %v978, %v1074
        %v1107 = vmul.f32 %v979, %v1075
        %v1108 = vmul.f32 %v980, %v1076
        %v1109 = vmul.f32 %v981, %v1077
        %v1110 = vmul.f32 %v982, %v1078
        %v1111 = vmul.f32 %v983, %v1079
        %v1112 = vmul.f32 %v984, %v1080
        %v1113 = vmul.f32 %v985, %v1081
        %v1114 = vmul.f32 %v986, %v1082
        %v1115 = vmul.f32 %v987, %v1083
        %v1116 = vmul.f32 %v988, %v1084
        %v1117 = vmul.f32 %v989, %v1085
        %v1118 = vmul.f32 %v990, %v1086
        %v1119 = vmul.f32 %v991, %v1087
        %v1120 = vmul.f32 %v992, %v1088
        %v1121 = vmul.f32 %v993, %v1089
        %v1122 = vmul.f32 %v994, %v1090
        %v1123 = vmul.f32 %v995, %v1091
        %v1124 = vmul.f32 %v996, %v1092
        %v1125 = vmul.f32 %v997, %v1093
        %v1126 = vmul.f32 %v998, %v1094
        %v1127 = vmul.f32 %v999, %v1095
        %v1128 = vmul.f32 %v1000, %v1096
        %v1129 = vmul.f32 %v1001, %v1097
        %v1130 = vmul.f32 %v1002, %v1098
        %v1131 = vmul.f32 %v1003, %v1099
        %v1132 = vmul.f32 %v1004, %v1100
        %v1133 = vmul.f32 %v1101, 0.16666667
        %v1134 = vmul.f32 %v1102, 0.16666667
        %v1135 = vmul.f32 %v1103, 0.16666667
        %v1136 = vmul.f32 %v1104, 0.16666667
        %v1137 = vmul.f32 %v1105, 0.16666667
        %v1138 = vmul.f32 %v1106, 0.16666667
        %v1139 = vmul.f32 %v1107, 0.16666667
        %v1140 = vmul.f32 %v1108, 0.16666667
        %v1141 = vmul.f32 %v1109, 0.16666667
        %v1142 = vmul.f32 %v1110, 0.16666667
        %v1143 = vmul.f32 %v1111, 0.16666667
        %v1144 = vmul.f32 %v1112, 0.16666667
        %v1145 = vmul.f32 %v1113, 0.16666667
        %v1146 = vmul.f32 %v1114, 0.16666667
        %v1147 = vmul.f32 %v1115, 0.16666667
        %v1148 = vmul.f32 %v1116, 0.16666667
        %v1149 = vmul.f32 %v1117, 0.16666667
        %v1150 = vmul.f32 %v1118, 0.16666667
        %v1151 = vmul.f32 %v1119, 0.16666667
        %v1152 = vmul.f32 %v1120, 0.16666667
        %v1153 = vmul.f32 %v1121, 0.16666667
        %v1154 = vmul.f32 %v1122, 0.16666667
        %v1155 = vmul.f32 %v1123, 0.16666667
        %v1156 = vmul.f32 %v1124, 0.16666667
        %v1157 = vmul.f32 %v1125, 0.16666667
        %v1158 = vmul.f32 %v1126, 0.16666667
        %v1159 = vmul.f32 %v1127, 0.16666667
        %v1160 = vmul.f32 %v1128, 0.16666667
        %v1161 = vmul.f32 %v1129, 0.16666667
        %v1162 = vmul.f32 %v1130, 0.16666667
        %v1163 = vmul.f32 %v1131, 0.16666667
        %v1164 = vmul.f32 %v1132, 0.16666667
        %v1165 = vld [vmem:[#allocation7] sm:$0x7]
        %v1166 = vld [vmem:[#allocation7 + $0x4] sm:$0x7]
        %v1167 = vld [vmem:[#allocation7 + $0x8] sm:$0x7]
        %v1168 = vld [vmem:[#allocation8] sm:$0x1]
        %vm1169 = vcmask 130048
        %1170 = vst.msk [vmem:[#allocation2] sm:$0xff] %vm1169, 0.0
        %1171 = vst.msk [vmem:[#allocation2 + $0x8] sm:$0xff] %vm1169, 0.0
        %vm1172 = vcmask 123904
        %1173 = vst.msk [vmem:[#allocation2 + $0x10] sm:$0x3] %vm1172, 0.0
        %1174 = vst.msk [vmem:[#allocation2 + $0x18] sm:$0xff] %vm1169, 0.0
        %1175 = vst.msk [vmem:[#allocation2 + $0x20] sm:$0xff] %vm1169, 0.0
        %1176 = vst.msk [vmem:[#allocation2 + $0x28] sm:$0x3] %vm1172, 0.0
        %1177 = vst.msk [vmem:[#allocation2 + $0x30] sm:$0xff] %vm1169, 0.0
        %1178 = vst.msk [vmem:[#allocation2 + $0x38] sm:$0xff] %vm1169, 0.0
        %1179 = vst.msk [vmem:[#allocation2 + $0x40] sm:$0x3] %vm1172, 0.0
        %1180 = vst.msk [vmem:[#allocation2 + $0x48] sm:$0xff] %vm1169, 0.0
        %1181 = vst.msk [vmem:[#allocation2 + $0x50] sm:$0xff] %vm1169, 0.0
        %1182 = vst.msk [vmem:[#allocation2 + $0x58] sm:$0x3] %vm1172, 0.0
        %1183 = vst.msk [vmem:[#allocation2 + $0x60] sm:$0xff] %vm1169, 0.0
        %1184 = vst.msk [vmem:[#allocation2 + $0x68] sm:$0xff] %vm1169, 0.0
        %1185 = vst.msk [vmem:[#allocation2 + $0x70] sm:$0x3] %vm1172, 0.0
        %1186 = vst.msk [vmem:[#allocation2 + $0x78] sm:$0xff] %vm1169, 0.0
        %1187 = vst.msk [vmem:[#allocation2 + $0x80] sm:$0xff] %vm1169, 0.0
        %1188 = vst.msk [vmem:[#allocation2 + $0x88] sm:$0x3] %vm1172, 0.0
        %1189 = vst.msk [vmem:[#allocation2 + $0x90] sm:$0xff] %vm1169, 0.0
        %1190 = vst.msk [vmem:[#allocation2 + $0x98] sm:$0xff] %vm1169, 0.0
        %1191 = vst.msk [vmem:[#allocation2 + $0xa0] sm:$0x3] %vm1172, 0.0
        %1192 = vst.msk [vmem:[#allocation2 + $0xa8] sm:$0xff] %vm1169, 0.0
        %1193 = vst.msk [vmem:[#allocation2 + $0xb0] sm:$0xff] %vm1169, 0.0
        %1194 = vst.msk [vmem:[#allocation2 + $0xb8] sm:$0x3] %vm1172, 0.0
        %1195 = vst.msk [vmem:[#allocation2 + $0xc0] sm:$0xff] %vm1169, 0.0
        %1196 = vst.msk [vmem:[#allocation2 + $0xc8] sm:$0xff] %vm1169, 0.0
        %1197 = vst.msk [vmem:[#allocation2 + $0xd0] sm:$0x3] %vm1172, 0.0
        %1198 = vst.msk [vmem:[#allocation2 + $0xd8] sm:$0xff] %vm1169, 0.0
        %1199 = vst.msk [vmem:[#allocation2 + $0xe0] sm:$0xff] %vm1169, 0.0
        %1200 = vst.msk [vmem:[#allocation2 + $0xe8] sm:$0x3] %vm1172, 0.0
        %1201 = vst.msk [vmem:[#allocation2 + $0xf0] sm:$0xff] %vm1169, 0.0
        %1202 = vst.msk [vmem:[#allocation2 + $0xf8] sm:$0xff] %vm1169, 0.0
        %1203 = vst.msk [vmem:[#allocation2 + $0x100] sm:$0x3] %vm1172, 0.0
        %1204 = vst.msk [vmem:[#allocation2 + $0x108] sm:$0xff] %vm1169, 0.0
        %1205 = vst.msk [vmem:[#allocation2 + $0x110] sm:$0xff] %vm1169, 0.0
        %1206 = vst.msk [vmem:[#allocation2 + $0x118] sm:$0x3] %vm1172, 0.0
        %1207 = vst.msk [vmem:[#allocation2 + $0x120] sm:$0xff] %vm1169, 0.0
        %1208 = vst.msk [vmem:[#allocation2 + $0x128] sm:$0xff] %vm1169, 0.0
        %1209 = vst.msk [vmem:[#allocation2 + $0x130] sm:$0x3] %vm1172, 0.0
        %1210 = vst.msk [vmem:[#allocation2 + $0x138] sm:$0xff] %vm1169, 0.0
        %1211 = vst.msk [vmem:[#allocation2 + $0x140] sm:$0xff] %vm1169, 0.0
        %1212 = vst.msk [vmem:[#allocation2 + $0x148] sm:$0x3] %vm1172, 0.0
        %1213 = vst.msk [vmem:[#allocation2 + $0x150] sm:$0xff] %vm1169, 0.0
        %1214 = vst.msk [vmem:[#allocation2 + $0x158] sm:$0xff] %vm1169, 0.0
        %1215 = vst.msk [vmem:[#allocation2 + $0x160] sm:$0x3] %vm1172, 0.0
        %1216 = vst.msk [vmem:[#allocation2 + $0x168] sm:$0xff] %vm1169, 0.0
        %1217 = vst.msk [vmem:[#allocation2 + $0x170] sm:$0xff] %vm1169, 0.0
        %1218 = vst.msk [vmem:[#allocation2 + $0x178] sm:$0x3] %vm1172, 0.0
        %1219 = vst.msk [vmem:[#allocation2 + $0x180] sm:$0xff] %vm1169, 0.0
        %1220 = vst.msk [vmem:[#allocation2 + $0x188] sm:$0xff] %vm1169, 0.0
        %1221 = vst.msk [vmem:[#allocation2 + $0x190] sm:$0x3] %vm1172, 0.0
        %1222 = vst.msk [vmem:[#allocation2 + $0x198] sm:$0xff] %vm1169, 0.0
        %1223 = vst.msk [vmem:[#allocation2 + $0x1a0] sm:$0xff] %vm1169, 0.0
        %1224 = vst.msk [vmem:[#allocation2 + $0x1a8] sm:$0x3] %vm1172, 0.0
        %s1225 = scalar_lea.vmem [#allocation2], 24
        %1226 = vst.msk [vmem:[%s1225 + $0x1] sm:$0xff] %vm1169, %v1133
        %1227 = vst.msk [vmem:[%s1225 + $0x9] sm:$0xff] %vm1169, %v1134
        %1228 = vst.msk [vmem:[%s1225 + $0x19] sm:$0xff] %vm1169, %v1135
        %1229 = vst.msk [vmem:[%s1225 + $0x21] sm:$0xff] %vm1169, %v1136
        %1230 = vst.msk [vmem:[%s1225 + $0x31] sm:$0xff] %vm1169, %v1137
        %1231 = vst.msk [vmem:[%s1225 + $0x39] sm:$0xff] %vm1169, %v1138
        %1232 = vst.msk [vmem:[%s1225 + $0x49] sm:$0xff] %vm1169, %v1139
        %1233 = vst.msk [vmem:[%s1225 + $0x51] sm:$0xff] %vm1169, %v1140
        %1234 = vst.msk [vmem:[%s1225 + $0x61] sm:$0xff] %vm1169, %v1141
        %1235 = vst.msk [vmem:[%s1225 + $0x69] sm:$0xff] %vm1169, %v1142
        %1236 = vst.msk [vmem:[%s1225 + $0x79] sm:$0xff] %vm1169, %v1143
        %1237 = vst.msk [vmem:[%s1225 + $0x81] sm:$0xff] %vm1169, %v1144
        %1238 = vst.msk [vmem:[%s1225 + $0x91] sm:$0xff] %vm1169, %v1145
        %1239 = vst.msk [vmem:[%s1225 + $0x99] sm:$0xff] %vm1169, %v1146
        %1240 = vst.msk [vmem:[%s1225 + $0xa9] sm:$0xff] %vm1169, %v1147
        %1241 = vst.msk [vmem:[%s1225 + $0xb1] sm:$0xff] %vm1169, %v1148
        %1242 = vst.msk [vmem:[%s1225 + $0xc1] sm:$0xff] %vm1169, %v1149
        %1243 = vst.msk [vmem:[%s1225 + $0xc9] sm:$0xff] %vm1169, %v1150
        %1244 = vst.msk [vmem:[%s1225 + $0xd9] sm:$0xff] %vm1169, %v1151
        %1245 = vst.msk [vmem:[%s1225 + $0xe1] sm:$0xff] %vm1169, %v1152
        %1246 = vst.msk [vmem:[%s1225 + $0xf1] sm:$0xff] %vm1169, %v1153
        %1247 = vst.msk [vmem:[%s1225 + $0xf9] sm:$0xff] %vm1169, %v1154
        %1248 = vst.msk [vmem:[%s1225 + $0x109] sm:$0xff] %vm1169, %v1155
        %1249 = vst.msk [vmem:[%s1225 + $0x111] sm:$0xff] %vm1169, %v1156
        %1250 = vst.msk [vmem:[%s1225 + $0x121] sm:$0xff] %vm1169, %v1157
        %1251 = vst.msk [vmem:[%s1225 + $0x129] sm:$0xff] %vm1169, %v1158
        %1252 = vst.msk [vmem:[%s1225 + $0x139] sm:$0xff] %vm1169, %v1159
        %1253 = vst.msk [vmem:[%s1225 + $0x141] sm:$0xff] %vm1169, %v1160
        %1254 = vst.msk [vmem:[%s1225 + $0x151] sm:$0xff] %vm1169, %v1161
        %1255 = vst.msk [vmem:[%s1225 + $0x159] sm:$0xff] %vm1169, %v1162
        %1256 = vst.msk [vmem:[%s1225 + $0x169] sm:$0xff] %vm1169, %v1163
        %1257 = vst.msk [vmem:[%s1225 + $0x171] sm:$0xff] %vm1169, %v1164
        %v1258 = vld [vmem:[#allocation2] sm:$0xff]
        %v1259 = vld [vmem:[#allocation2 + $0x8] sm:$0xff]
        %v1260 = vld [vmem:[#allocation2 + $0x18] sm:$0xff]
        %v1261 = vld [vmem:[#allocation2 + $0x20] sm:$0xff]
        %v1262 = vld [vmem:[#allocation2 + $0x30] sm:$0xff]
        %v1263 = vld [vmem:[#allocation2 + $0x38] sm:$0xff]
        %v1264 = vld [vmem:[#allocation2 + $0x48] sm:$0xff]
        %v1265 = vld [vmem:[#allocation2 + $0x50] sm:$0xff]
        %v1266 = vld [vmem:[#allocation2 + $0x60] sm:$0xff]
        %v1267 = vld [vmem:[#allocation2 + $0x68] sm:$0xff]
        %v1268 = vld [vmem:[#allocation2 + $0x78] sm:$0xff]
        %v1269 = vld [vmem:[#allocation2 + $0x80] sm:$0xff]
        %v1270 = vld [vmem:[#allocation2 + $0x90] sm:$0xff]
        %v1271 = vld [vmem:[#allocation2 + $0x98] sm:$0xff]
        %v1272 = vld [vmem:[#allocation2 + $0xa8] sm:$0xff]
        %v1273 = vld [vmem:[#allocation2 + $0xb0] sm:$0xff]
        %v1274 = vld [vmem:[#allocation2 + $0xc0] sm:$0xff]
        %v1275 = vld [vmem:[#allocation2 + $0xc8] sm:$0xff]
        %v1276 = vld [vmem:[#allocation2 + $0xd8] sm:$0xff]
        %v1277 = vld [vmem:[#allocation2 + $0xe0] sm:$0xff]
        %v1278 = vld [vmem:[#allocation2 + $0xf0] sm:$0xff]
        %v1279 = vld [vmem:[#allocation2 + $0xf8] sm:$0xff]
        %v1280 = vld [vmem:[#allocation2 + $0x108] sm:$0xff]
        %v1281 = vld [vmem:[#allocation2 + $0x110] sm:$0xff]
        %v1282 = vld [vmem:[#allocation2 + $0x120] sm:$0xff]
        %v1283 = vld [vmem:[#allocation2 + $0x128] sm:$0xff]
        %v1284 = vld [vmem:[#allocation2 + $0x138] sm:$0xff]
        %v1285 = vld [vmem:[#allocation2 + $0x140] sm:$0xff]
        %v1286 = vld [vmem:[#allocation2 + $0x150] sm:$0xff]
        %v1287 = vld [vmem:[#allocation2 + $0x158] sm:$0xff]
        %v1288 = vld [vmem:[#allocation2 + $0x168] sm:$0xff]
        %v1289 = vld [vmem:[#allocation2 + $0x170] sm:$0xff]
        %v1290 = vlaneseq
        %v1291 = vshrl.u32 %v1290, 7
        %v1292 = vsub.s32 0, %v1291
        %v1293 = vrot.slane %v1165, %v1292
        %v1294 = vmul.f32 %v1258, %v1293
        %v1295 = vmul.f32 %v1259, %v1293
        %v1296 = vmul.f32 %v1260, %v1293
        %v1297 = vmul.f32 %v1261, %v1293
        %v1298 = vmul.f32 %v1262, %v1293
        %v1299 = vmul.f32 %v1263, %v1293
        %v1300 = vmul.f32 %v1264, %v1293
        %v1301 = vmul.f32 %v1265, %v1293
        %v1302 = vmul.f32 %v1266, %v1293
        %v1303 = vmul.f32 %v1267, %v1293
        %v1304 = vmul.f32 %v1268, %v1293
        %v1305 = vmul.f32 %v1269, %v1293
        %v1306 = vmul.f32 %v1270, %v1293
        %v1307 = vmul.f32 %v1271, %v1293
        %v1308 = vmul.f32 %v1272, %v1293
        %v1309 = vmul.f32 %v1273, %v1293
        %v1310 = vmul.f32 %v1274, %v1293
        %v1311 = vmul.f32 %v1275, %v1293
        %v1312 = vmul.f32 %v1276, %v1293
        %v1313 = vmul.f32 %v1277, %v1293
        %v1314 = vmul.f32 %v1278, %v1293
        %v1315 = vmul.f32 %v1279, %v1293
        %v1316 = vmul.f32 %v1280, %v1293
        %v1317 = vmul.f32 %v1281, %v1293
        %v1318 = vmul.f32 %v1282, %v1293
        %v1319 = vmul.f32 %v1283, %v1293
        %v1320 = vmul.f32 %v1284, %v1293
        %v1321 = vmul.f32 %v1285, %v1293
        %v1322 = vmul.f32 %v1286, %v1293
        %v1323 = vmul.f32 %v1287, %v1293
        %v1324 = vmul.f32 %v1288, %v1293
        %v1325 = vmul.f32 %v1289, %v1293
        %v1326 = vadd.f32 %v1294, 0.0
        %v1327 = vadd.f32 %v1295, 0.0
        %v1328 = vadd.f32 %v1296, 0.0
        %v1329 = vadd.f32 %v1297, 0.0
        %v1330 = vadd.f32 %v1298, 0.0
        %v1331 = vadd.f32 %v1299, 0.0
        %v1332 = vadd.f32 %v1300, 0.0
        %v1333 = vadd.f32 %v1301, 0.0
        %v1334 = vadd.f32 %v1302, 0.0
        %v1335 = vadd.f32 %v1303, 0.0
        %v1336 = vadd.f32 %v1304, 0.0
        %v1337 = vadd.f32 %v1305, 0.0
        %v1338 = vadd.f32 %v1306, 0.0
        %v1339 = vadd.f32 %v1307, 0.0
        %v1340 = vadd.f32 %v1308, 0.0
        %v1341 = vadd.f32 %v1309, 0.0
        %v1342 = vadd.f32 %v1310, 0.0
        %v1343 = vadd.f32 %v1311, 0.0
        %v1344 = vadd.f32 %v1312, 0.0
        %v1345 = vadd.f32 %v1313, 0.0
        %v1346 = vadd.f32 %v1314, 0.0
        %v1347 = vadd.f32 %v1315, 0.0
        %v1348 = vadd.f32 %v1316, 0.0
        %v1349 = vadd.f32 %v1317, 0.0
        %v1350 = vadd.f32 %v1318, 0.0
        %v1351 = vadd.f32 %v1319, 0.0
        %v1352 = vadd.f32 %v1320, 0.0
        %v1353 = vadd.f32 %v1321, 0.0
        %v1354 = vadd.f32 %v1322, 0.0
        %v1355 = vadd.f32 %v1323, 0.0
        %v1356 = vadd.f32 %v1324, 0.0
        %v1357 = vadd.f32 %v1325, 0.0
        %v1358 = vld [vmem:[#allocation2 + $0x1] sm:$0xff]
        %v1359 = vld [vmem:[#allocation2 + $0x9] sm:$0xff]
        %v1360 = vld [vmem:[#allocation2 + $0x19] sm:$0xff]
        %v1361 = vld [vmem:[#allocation2 + $0x21] sm:$0xff]
        %v1362 = vld [vmem:[#allocation2 + $0x31] sm:$0xff]
        %v1363 = vld [vmem:[#allocation2 + $0x39] sm:$0xff]
        %v1364 = vld [vmem:[#allocation2 + $0x49] sm:$0xff]
        %v1365 = vld [vmem:[#allocation2 + $0x51] sm:$0xff]
        %v1366 = vld [vmem:[#allocation2 + $0x61] sm:$0xff]
        %v1367 = vld [vmem:[#allocation2 + $0x69] sm:$0xff]
        %v1368 = vld [vmem:[#allocation2 + $0x79] sm:$0xff]
        %v1369 = vld [vmem:[#allocation2 + $0x81] sm:$0xff]
        %v1370 = vld [vmem:[#allocation2 + $0x91] sm:$0xff]
        %v1371 = vld [vmem:[#allocation2 + $0x99] sm:$0xff]
        %v1372 = vld [vmem:[#allocation2 + $0xa9] sm:$0xff]
        %v1373 = vld [vmem:[#allocation2 + $0xb1] sm:$0xff]
        %v1374 = vld [vmem:[#allocation2 + $0xc1] sm:$0xff]
        %v1375 = vld [vmem:[#allocation2 + $0xc9] sm:$0xff]
        %v1376 = vld [vmem:[#allocation2 + $0xd9] sm:$0xff]
        %v1377 = vld [vmem:[#allocation2 + $0xe1] sm:$0xff]
        %v1378 = vld [vmem:[#allocation2 + $0xf1] sm:$0xff]
        %v1379 = vld [vmem:[#allocation2 + $0xf9] sm:$0xff]
        %v1380 = vld [vmem:[#allocation2 + $0x109] sm:$0xff]
        %v1381 = vld [vmem:[#allocation2 + $0x111] sm:$0xff]
        %v1382 = vld [vmem:[#allocation2 + $0x121] sm:$0xff]
        %v1383 = vld [vmem:[#allocation2 + $0x129] sm:$0xff]
        %v1384 = vld [vmem:[#allocation2 + $0x139] sm:$0xff]
        %v1385 = vld [vmem:[#allocation2 + $0x141] sm:$0xff]
        %v1386 = vld [vmem:[#allocation2 + $0x151] sm:$0xff]
        %v1387 = vld [vmem:[#allocation2 + $0x159] sm:$0xff]
        %v1388 = vld [vmem:[#allocation2 + $0x169] sm:$0xff]
        %v1389 = vld [vmem:[#allocation2 + $0x171] sm:$0xff]
        %v1390 = vlaneseq
        %v1391 = vshrl.u32 %v1390, 7
        %v1392 = vsub.s32 1, %v1391
        %v1393 = vrot.slane %v1165, %v1392
        %v1394 = vmul.f32 %v1358, %v1393
        %v1395 = vmul.f32 %v1359, %v1393
        %v1396 = vmul.f32 %v1360, %v1393
        %v1397 = vmul.f32 %v1361, %v1393
        %v1398 = vmul.f32 %v1362, %v1393
        %v1399 = vmul.f32 %v1363, %v1393
        %v1400 = vmul.f32 %v1364, %v1393
        %v1401 = vmul.f32 %v1365, %v1393
        %v1402 = vmul.f32 %v1366, %v1393
        %v1403 = vmul.f32 %v1367, %v1393
        %v1404 = vmul.f32 %v1368, %v1393
        %v1405 = vmul.f32 %v1369, %v1393
        %v1406 = vmul.f32 %v1370, %v1393
        %v1407 = vmul.f32 %v1371, %v1393
        %v1408 = vmul.f32 %v1372, %v1393
        %v1409 = vmul.f32 %v1373, %v1393
        %v1410 = vmul.f32 %v1374, %v1393
        %v1411 = vmul.f32 %v1375, %v1393
        %v1412 = vmul.f32 %v1376, %v1393
        %v1413 = vmul.f32 %v1377, %v1393
        %v1414 = vmul.f32 %v1378, %v1393
        %v1415 = vmul.f32 %v1379, %v1393
        %v1416 = vmul.f32 %v1380, %v1393
        %v1417 = vmul.f32 %v1381, %v1393
        %v1418 = vmul.f32 %v1382, %v1393
        %v1419 = vmul.f32 %v1383, %v1393
        %v1420 = vmul.f32 %v1384, %v1393
        %v1421 = vmul.f32 %v1385, %v1393
        %v1422 = vmul.f32 %v1386, %v1393
        %v1423 = vmul.f32 %v1387, %v1393
        %v1424 = vmul.f32 %v1388, %v1393
        %v1425 = vmul.f32 %v1389, %v1393
        %v1426 = vadd.f32 %v1326, %v1394
        %v1427 = vadd.f32 %v1327, %v1395
        %v1428 = vadd.f32 %v1328, %v1396
        %v1429 = vadd.f32 %v1329, %v1397
        %v1430 = vadd.f32 %v1330, %v1398
        %v1431 = vadd.f32 %v1331, %v1399
        %v1432 = vadd.f32 %v1332, %v1400
        %v1433 = vadd.f32 %v1333, %v1401
        %v1434 = vadd.f32 %v1334, %v1402
        %v1435 = vadd.f32 %v1335, %v1403
        %v1436 = vadd.f32 %v1336, %v1404
        %v1437 = vadd.f32 %v1337, %v1405
        %v1438 = vadd.f32 %v1338, %v1406
        %v1439 = vadd.f32 %v1339, %v1407
        %v1440 = vadd.f32 %v1340, %v1408
        %v1441 = vadd.f32 %v1341, %v1409
        %v1442 = vadd.f32 %v1342, %v1410
        %v1443 = vadd.f32 %v1343, %v1411
        %v1444 = vadd.f32 %v1344, %v1412
        %v1445 = vadd.f32 %v1345, %v1413
        %v1446 = vadd.f32 %v1346, %v1414
        %v1447 = vadd.f32 %v1347, %v1415
        %v1448 = vadd.f32 %v1348, %v1416
        %v1449 = vadd.f32 %v1349, %v1417
        %v1450 = vadd.f32 %v1350, %v1418
        %v1451 = vadd.f32 %v1351, %v1419
        %v1452 = vadd.f32 %v1352, %v1420
        %v1453 = vadd.f32 %v1353, %v1421
        %v1454 = vadd.f32 %v1354, %v1422
        %v1455 = vadd.f32 %v1355, %v1423
        %v1456 = vadd.f32 %v1356, %v1424
        %v1457 = vadd.f32 %v1357, %v1425
        %v1458 = vld [vmem:[#allocation2 + $0x2] sm:$0xff]
        %v1459 = vld [vmem:[#allocation2 + $0xa] sm:$0xff]
        %v1460 = vld [vmem:[#allocation2 + $0x1a] sm:$0xff]
        %v1461 = vld [vmem:[#allocation2 + $0x22] sm:$0xff]
        %v1462 = vld [vmem:[#allocation2 + $0x32] sm:$0xff]
        %v1463 = vld [vmem:[#allocation2 + $0x3a] sm:$0xff]
        %v1464 = vld [vmem:[#allocation2 + $0x4a] sm:$0xff]
        %v1465 = vld [vmem:[#allocation2 + $0x52] sm:$0xff]
        %v1466 = vld [vmem:[#allocation2 + $0x62] sm:$0xff]
        %v1467 = vld [vmem:[#allocation2 + $0x6a] sm:$0xff]
        %v1468 = vld [vmem:[#allocation2 + $0x7a] sm:$0xff]
        %v1469 = vld [vmem:[#allocation2 + $0x82] sm:$0xff]
        %v1470 = vld [vmem:[#allocation2 + $0x92] sm:$0xff]
        %v1471 = vld [vmem:[#allocation2 + $0x9a] sm:$0xff]
        %v1472 = vld [vmem:[#allocation2 + $0xaa] sm:$0xff]
        %v1473 = vld [vmem:[#allocation2 + $0xb2] sm:$0xff]
        %v1474 = vld [vmem:[#allocation2 + $0xc2] sm:$0xff]
        %v1475 = vld [vmem:[#allocation2 + $0xca] sm:$0xff]
        %v1476 = vld [vmem:[#allocation2 + $0xda] sm:$0xff]
        %v1477 = vld [vmem:[#allocation2 + $0xe2] sm:$0xff]
        %v1478 = vld [vmem:[#allocation2 + $0xf2] sm:$0xff]
        %v1479 = vld [vmem:[#allocation2 + $0xfa] sm:$0xff]
        %v1480 = vld [vmem:[#allocation2 + $0x10a] sm:$0xff]
        %v1481 = vld [vmem:[#allocation2 + $0x112] sm:$0xff]
        %v1482 = vld [vmem:[#allocation2 + $0x122] sm:$0xff]
        %v1483 = vld [vmem:[#allocation2 + $0x12a] sm:$0xff]
        %v1484 = vld [vmem:[#allocation2 + $0x13a] sm:$0xff]
        %v1485 = vld [vmem:[#allocation2 + $0x142] sm:$0xff]
        %v1486 = vld [vmem:[#allocation2 + $0x152] sm:$0xff]
        %v1487 = vld [vmem:[#allocation2 + $0x15a] sm:$0xff]
        %v1488 = vld [vmem:[#allocation2 + $0x16a] sm:$0xff]
        %v1489 = vld [vmem:[#allocation2 + $0x172] sm:$0xff]
        %v1490 = vlaneseq
        %v1491 = vshrl.u32 %v1490, 7
        %v1492 = vsub.s32 2, %v1491
        %v1493 = vrot.slane %v1165, %v1492
        %v1494 = vmul.f32 %v1458, %v1493
        %v1495 = vmul.f32 %v1459, %v1493
        %v1496 = vmul.f32 %v1460, %v1493
        %v1497 = vmul.f32 %v1461, %v1493
        %v1498 = vmul.f32 %v1462, %v1493
        %v1499 = vmul.f32 %v1463, %v1493
        %v1500 = vmul.f32 %v1464, %v1493
        %v1501 = vmul.f32 %v1465, %v1493
        %v1502 = vmul.f32 %v1466, %v1493
        %v1503 = vmul.f32 %v1467, %v1493
        %v1504 = vmul.f32 %v1468, %v1493
        %v1505 = vmul.f32 %v1469, %v1493
        %v1506 = vmul.f32 %v1470, %v1493
        %v1507 = vmul.f32 %v1471, %v1493
        %v1508 = vmul.f32 %v1472, %v1493
        %v1509 = vmul.f32 %v1473, %v1493
        %v1510 = vmul.f32 %v1474, %v1493
        %v1511 = vmul.f32 %v1475, %v1493
        %v1512 = vmul.f32 %v1476, %v1493
        %v1513 = vmul.f32 %v1477, %v1493
        %v1514 = vmul.f32 %v1478, %v1493
        %v1515 = vmul.f32 %v1479, %v1493
        %v1516 = vmul.f32 %v1480, %v1493
        %v1517 = vmul.f32 %v1481, %v1493
        %v1518 = vmul.f32 %v1482, %v1493
        %v1519 = vmul.f32 %v1483, %v1493
        %v1520 = vmul.f32 %v1484, %v1493
        %v1521 = vmul.f32 %v1485, %v1493
        %v1522 = vmul.f32 %v1486, %v1493
        %v1523 = vmul.f32 %v1487, %v1493
        %v1524 = vmul.f32 %v1488, %v1493
        %v1525 = vmul.f32 %v1489, %v1493
        %v1526 = vadd.f32 %v1426, %v1494
        %v1527 = vadd.f32 %v1427, %v1495
        %v1528 = vadd.f32 %v1428, %v1496
        %v1529 = vadd.f32 %v1429, %v1497
        %v1530 = vadd.f32 %v1430, %v1498
        %v1531 = vadd.f32 %v1431, %v1499
        %v1532 = vadd.f32 %v1432, %v1500
        %v1533 = vadd.f32 %v1433, %v1501
        %v1534 = vadd.f32 %v1434, %v1502
        %v1535 = vadd.f32 %v1435, %v1503
        %v1536 = vadd.f32 %v1436, %v1504
        %v1537 = vadd.f32 %v1437, %v1505
        %v1538 = vadd.f32 %v1438, %v1506
        %v1539 = vadd.f32 %v1439, %v1507
        %v1540 = vadd.f32 %v1440, %v1508
        %v1541 = vadd.f32 %v1441, %v1509
        %v1542 = vadd.f32 %v1442, %v1510
        %v1543 = vadd.f32 %v1443, %v1511
        %v1544 = vadd.f32 %v1444, %v1512
        %v1545 = vadd.f32 %v1445, %v1513
        %v1546 = vadd.f32 %v1446, %v1514
        %v1547 = vadd.f32 %v1447, %v1515
        %v1548 = vadd.f32 %v1448, %v1516
        %v1549 = vadd.f32 %v1449, %v1517
        %v1550 = vadd.f32 %v1450, %v1518
        %v1551 = vadd.f32 %v1451, %v1519
        %v1552 = vadd.f32 %v1452, %v1520
        %v1553 = vadd.f32 %v1453, %v1521
        %v1554 = vadd.f32 %v1454, %v1522
        %v1555 = vadd.f32 %v1455, %v1523
        %v1556 = vadd.f32 %v1456, %v1524
        %v1557 = vadd.f32 %v1457, %v1525
        %v1558 = vld [vmem:[%s1225] sm:$0xff]
        %v1559 = vld [vmem:[%s1225 + $0x8] sm:$0xff]
        %v1560 = vld [vmem:[%s1225 + $0x18] sm:$0xff]
        %v1561 = vld [vmem:[%s1225 + $0x20] sm:$0xff]
        %v1562 = vld [vmem:[%s1225 + $0x30] sm:$0xff]
        %v1563 = vld [vmem:[%s1225 + $0x38] sm:$0xff]
        %v1564 = vld [vmem:[%s1225 + $0x48] sm:$0xff]
        %v1565 = vld [vmem:[%s1225 + $0x50] sm:$0xff]
        %v1566 = vld [vmem:[%s1225 + $0x60] sm:$0xff]
        %v1567 = vld [vmem:[%s1225 + $0x68] sm:$0xff]
        %v1568 = vld [vmem:[%s1225 + $0x78] sm:$0xff]
        %v1569 = vld [vmem:[%s1225 + $0x80] sm:$0xff]
        %v1570 = vld [vmem:[%s1225 + $0x90] sm:$0xff]
        %v1571 = vld [vmem:[%s1225 + $0x98] sm:$0xff]
        %v1572 = vld [vmem:[%s1225 + $0xa8] sm:$0xff]
        %v1573 = vld [vmem:[%s1225 + $0xb0] sm:$0xff]
        %v1574 = vld [vmem:[%s1225 + $0xc0] sm:$0xff]
        %v1575 = vld [vmem:[%s1225 + $0xc8] sm:$0xff]
        %v1576 = vld [vmem:[%s1225 + $0xd8] sm:$0xff]
        %v1577 = vld [vmem:[%s1225 + $0xe0] sm:$0xff]
        %v1578 = vld [vmem:[%s1225 + $0xf0] sm:$0xff]
        %v1579 = vld [vmem:[%s1225 + $0xf8] sm:$0xff]
        %v1580 = vld [vmem:[%s1225 + $0x108] sm:$0xff]
        %v1581 = vld [vmem:[%s1225 + $0x110] sm:$0xff]
        %v1582 = vld [vmem:[%s1225 + $0x120] sm:$0xff]
        %v1583 = vld [vmem:[%s1225 + $0x128] sm:$0xff]
        %v1584 = vld [vmem:[%s1225 + $0x138] sm:$0xff]
        %v1585 = vld [vmem:[%s1225 + $0x140] sm:$0xff]
        %v1586 = vld [vmem:[%s1225 + $0x150] sm:$0xff]
        %v1587 = vld [vmem:[%s1225 + $0x158] sm:$0xff]
        %v1588 = vld [vmem:[%s1225 + $0x168] sm:$0xff]
        %v1589 = vld [vmem:[%s1225 + $0x170] sm:$0xff]
        %v1590 = vlaneseq
        %v1591 = vshrl.u32 %v1590, 7
        %v1592 = vsub.s32 0, %v1591
        %v1593 = vrot.slane %v1166, %v1592
        %v1594 = vmul.f32 %v1558, %v1593
        %v1595 = vmul.f32 %v1559, %v1593
        %v1596 = vmul.f32 %v1560, %v1593
        %v1597 = vmul.f32 %v1561, %v1593
        %v1598 = vmul.f32 %v1562, %v1593
        %v1599 = vmul.f32 %v1563, %v1593
        %v1600 = vmul.f32 %v1564, %v1593
        %v1601 = vmul.f32 %v1565, %v1593
        %v1602 = vmul.f32 %v1566, %v1593
        %v1603 = vmul.f32 %v1567, %v1593
        %v1604 = vmul.f32 %v1568, %v1593
        %v1605 = vmul.f32 %v1569, %v1593
        %v1606 = vmul.f32 %v1570, %v1593
        %v1607 = vmul.f32 %v1571, %v1593
        %v1608 = vmul.f32 %v1572, %v1593
        %v1609 = vmul.f32 %v1573, %v1593
        %v1610 = vmul.f32 %v1574, %v1593
        %v1611 = vmul.f32 %v1575, %v1593
        %v1612 = vmul.f32 %v1576, %v1593
        %v1613 = vmul.f32 %v1577, %v1593
        %v1614 = vmul.f32 %v1578, %v1593
        %v1615 = vmul.f32 %v1579, %v1593
        %v1616 = vmul.f32 %v1580, %v1593
        %v1617 = vmul.f32 %v1581, %v1593
        %v1618 = vmul.f32 %v1582, %v1593
        %v1619 = vmul.f32 %v1583, %v1593
        %v1620 = vmul.f32 %v1584, %v1593
        %v1621 = vmul.f32 %v1585, %v1593
        %v1622 = vmul.f32 %v1586, %v1593
        %v1623 = vmul.f32 %v1587, %v1593
        %v1624 = vmul.f32 %v1588, %v1593
        %v1625 = vmul.f32 %v1589, %v1593
        %v1626 = vadd.f32 %v1526, %v1594
        %v1627 = vadd.f32 %v1527, %v1595
        %v1628 = vadd.f32 %v1528, %v1596
        %v1629 = vadd.f32 %v1529, %v1597
        %v1630 = vadd.f32 %v1530, %v1598
        %v1631 = vadd.f32 %v1531, %v1599
        %v1632 = vadd.f32 %v1532, %v1600
        %v1633 = vadd.f32 %v1533, %v1601
        %v1634 = vadd.f32 %v1534, %v1602
        %v1635 = vadd.f32 %v1535, %v1603
        %v1636 = vadd.f32 %v1536, %v1604
        %v1637 = vadd.f32 %v1537, %v1605
        %v1638 = vadd.f32 %v1538, %v1606
        %v1639 = vadd.f32 %v1539, %v1607
        %v1640 = vadd.f32 %v1540, %v1608
        %v1641 = vadd.f32 %v1541, %v1609
        %v1642 = vadd.f32 %v1542, %v1610
        %v1643 = vadd.f32 %v1543, %v1611
        %v1644 = vadd.f32 %v1544, %v1612
        %v1645 = vadd.f32 %v1545, %v1613
        %v1646 = vadd.f32 %v1546, %v1614
        %v1647 = vadd.f32 %v1547, %v1615
        %v1648 = vadd.f32 %v1548, %v1616
        %v1649 = vadd.f32 %v1549, %v1617
        %v1650 = vadd.f32 %v1550, %v1618
        %v1651 = vadd.f32 %v1551, %v1619
        %v1652 = vadd.f32 %v1552, %v1620
        %v1653 = vadd.f32 %v1553, %v1621
        %v1654 = vadd.f32 %v1554, %v1622
        %v1655 = vadd.f32 %v1555, %v1623
        %v1656 = vadd.f32 %v1556, %v1624
        %v1657 = vadd.f32 %v1557, %v1625
        %v1658 = vld [vmem:[%s1225 + $0x1] sm:$0xff]
        %v1659 = vld [vmem:[%s1225 + $0x9] sm:$0xff]
        %v1660 = vld [vmem:[%s1225 + $0x19] sm:$0xff]
        %v1661 = vld [vmem:[%s1225 + $0x21] sm:$0xff]
        %v1662 = vld [vmem:[%s1225 + $0x31] sm:$0xff]
        %v1663 = vld [vmem:[%s1225 + $0x39] sm:$0xff]
        %v1664 = vld [vmem:[%s1225 + $0x49] sm:$0xff]
        %v1665 = vld [vmem:[%s1225 + $0x51] sm:$0xff]
        %v1666 = vld [vmem:[%s1225 + $0x61] sm:$0xff]
        %v1667 = vld [vmem:[%s1225 + $0x69] sm:$0xff]
        %v1668 = vld [vmem:[%s1225 + $0x79] sm:$0xff]
        %v1669 = vld [vmem:[%s1225 + $0x81] sm:$0xff]
        %v1670 = vld [vmem:[%s1225 + $0x91] sm:$0xff]
        %v1671 = vld [vmem:[%s1225 + $0x99] sm:$0xff]
        %v1672 = vld [vmem:[%s1225 + $0xa9] sm:$0xff]
        %v1673 = vld [vmem:[%s1225 + $0xb1] sm:$0xff]
        %v1674 = vld [vmem:[%s1225 + $0xc1] sm:$0xff]
        %v1675 = vld [vmem:[%s1225 + $0xc9] sm:$0xff]
        %v1676 = vld [vmem:[%s1225 + $0xd9] sm:$0xff]
        %v1677 = vld [vmem:[%s1225 + $0xe1] sm:$0xff]
        %v1678 = vld [vmem:[%s1225 + $0xf1] sm:$0xff]
        %v1679 = vld [vmem:[%s1225 + $0xf9] sm:$0xff]
        %v1680 = vld [vmem:[%s1225 + $0x109] sm:$0xff]
        %v1681 = vld [vmem:[%s1225 + $0x111] sm:$0xff]
        %v1682 = vld [vmem:[%s1225 + $0x121] sm:$0xff]
        %v1683 = vld [vmem:[%s1225 + $0x129] sm:$0xff]
        %v1684 = vld [vmem:[%s1225 + $0x139] sm:$0xff]
        %v1685 = vld [vmem:[%s1225 + $0x141] sm:$0xff]
        %v1686 = vld [vmem:[%s1225 + $0x151] sm:$0xff]
        %v1687 = vld [vmem:[%s1225 + $0x159] sm:$0xff]
        %v1688 = vld [vmem:[%s1225 + $0x169] sm:$0xff]
        %v1689 = vld [vmem:[%s1225 + $0x171] sm:$0xff]
        %v1690 = vlaneseq
        %v1691 = vshrl.u32 %v1690, 7
        %v1692 = vsub.s32 1, %v1691
        %v1693 = vrot.slane %v1166, %v1692
        %v1694 = vmul.f32 %v1658, %v1693
        %v1695 = vmul.f32 %v1659, %v1693
        %v1696 = vmul.f32 %v1660, %v1693
        %v1697 = vmul.f32 %v1661, %v1693
        %v1698 = vmul.f32 %v1662, %v1693
        %v1699 = vmul.f32 %v1663, %v1693
        %v1700 = vmul.f32 %v1664, %v1693
        %v1701 = vmul.f32 %v1665, %v1693
        %v1702 = vmul.f32 %v1666, %v1693
        %v1703 = vmul.f32 %v1667, %v1693
        %v1704 = vmul.f32 %v1668, %v1693
        %v1705 = vmul.f32 %v1669, %v1693
        %v1706 = vmul.f32 %v1670, %v1693
        %v1707 = vmul.f32 %v1671, %v1693
        %v1708 = vmul.f32 %v1672, %v1693
        %v1709 = vmul.f32 %v1673, %v1693
        %v1710 = vmul.f32 %v1674, %v1693
        %v1711 = vmul.f32 %v1675, %v1693
        %v1712 = vmul.f32 %v1676, %v1693
        %v1713 = vmul.f32 %v1677, %v1693
        %v1714 = vmul.f32 %v1678, %v1693
        %v1715 = vmul.f32 %v1679, %v1693
        %v1716 = vmul.f32 %v1680, %v1693
        %v1717 = vmul.f32 %v1681, %v1693
        %v1718 = vmul.f32 %v1682, %v1693
        %v1719 = vmul.f32 %v1683, %v1693
        %v1720 = vmul.f32 %v1684, %v1693
        %v1721 = vmul.f32 %v1685, %v1693
        %v1722 = vmul.f32 %v1686, %v1693
        %v1723 = vmul.f32 %v1687, %v1693
        %v1724 = vmul.f32 %v1688, %v1693
        %v1725 = vmul.f32 %v1689, %v1693
        %v1726 = vadd.f32 %v1626, %v1694
        %v1727 = vadd.f32 %v1627, %v1695
        %v1728 = vadd.f32 %v1628, %v1696
        %v1729 = vadd.f32 %v1629, %v1697
        %v1730 = vadd.f32 %v1630, %v1698
        %v1731 = vadd.f32 %v1631, %v1699
        %v1732 = vadd.f32 %v1632, %v1700
        %v1733 = vadd.f32 %v1633, %v1701
        %v1734 = vadd.f32 %v1634, %v1702
        %v1735 = vadd.f32 %v1635, %v1703
        %v1736 = vadd.f32 %v1636, %v1704
        %v1737 = vadd.f32 %v1637, %v1705
        %v1738 = vadd.f32 %v1638, %v1706
        %v1739 = vadd.f32 %v1639, %v1707
        %v1740 = vadd.f32 %v1640, %v1708
        %v1741 = vadd.f32 %v1641, %v1709
        %v1742 = vadd.f32 %v1642, %v1710
        %v1743 = vadd.f32 %v1643, %v1711
        %v1744 = vadd.f32 %v1644, %v1712
        %v1745 = vadd.f32 %v1645, %v1713
        %v1746 = vadd.f32 %v1646, %v1714
        %v1747 = vadd.f32 %v1647, %v1715
        %v1748 = vadd.f32 %v1648, %v1716
        %v1749 = vadd.f32 %v1649, %v1717
        %v1750 = vadd.f32 %v1650, %v1718
        %v1751 = vadd.f32 %v1651, %v1719
        %v1752 = vadd.f32 %v1652, %v1720
        %v1753 = vadd.f32 %v1653, %v1721
        %v1754 = vadd.f32 %v1654, %v1722
        %v1755 = vadd.f32 %v1655, %v1723
        %v1756 = vadd.f32 %v1656, %v1724
        %v1757 = vadd.f32 %v1657, %v1725
        %v1758 = vld [vmem:[%s1225 + $0x2] sm:$0xff]
        %v1759 = vld [vmem:[%s1225 + $0xa] sm:$0xff]
        %v1760 = vld [vmem:[%s1225 + $0x1a] sm:$0xff]
        %v1761 = vld [vmem:[%s1225 + $0x22] sm:$0xff]
        %v1762 = vld [vmem:[%s1225 + $0x32] sm:$0xff]
        %v1763 = vld [vmem:[%s1225 + $0x3a] sm:$0xff]
        %v1764 = vld [vmem:[%s1225 + $0x4a] sm:$0xff]
        %v1765 = vld [vmem:[%s1225 + $0x52] sm:$0xff]
        %v1766 = vld [vmem:[%s1225 + $0x62] sm:$0xff]
        %v1767 = vld [vmem:[%s1225 + $0x6a] sm:$0xff]
        %v1768 = vld [vmem:[%s1225 + $0x7a] sm:$0xff]
        %v1769 = vld [vmem:[%s1225 + $0x82] sm:$0xff]
        %v1770 = vld [vmem:[%s1225 + $0x92] sm:$0xff]
        %v1771 = vld [vmem:[%s1225 + $0x9a] sm:$0xff]
        %v1772 = vld [vmem:[%s1225 + $0xaa] sm:$0xff]
        %v1773 = vld [vmem:[%s1225 + $0xb2] sm:$0xff]
        %v1774 = vld [vmem:[%s1225 + $0xc2] sm:$0xff]
        %v1775 = vld [vmem:[%s1225 + $0xca] sm:$0xff]
        %v1776 = vld [vmem:[%s1225 + $0xda] sm:$0xff]
        %v1777 = vld [vmem:[%s1225 + $0xe2] sm:$0xff]
        %v1778 = vld [vmem:[%s1225 + $0xf2] sm:$0xff]
        %v1779 = vld [vmem:[%s1225 + $0xfa] sm:$0xff]
        %v1780 = vld [vmem:[%s1225 + $0x10a] sm:$0xff]
        %v1781 = vld [vmem:[%s1225 + $0x112] sm:$0xff]
        %v1782 = vld [vmem:[%s1225 + $0x122] sm:$0xff]
        %v1783 = vld [vmem:[%s1225 + $0x12a] sm:$0xff]
        %v1784 = vld [vmem:[%s1225 + $0x13a] sm:$0xff]
        %v1785 = vld [vmem:[%s1225 + $0x142] sm:$0xff]
        %v1786 = vld [vmem:[%s1225 + $0x152] sm:$0xff]
        %v1787 = vld [vmem:[%s1225 + $0x15a] sm:$0xff]
        %v1788 = vld [vmem:[%s1225 + $0x16a] sm:$0xff]
        %v1789 = vld [vmem:[%s1225 + $0x172] sm:$0xff]
        %v1790 = vlaneseq
        %v1791 = vshrl.u32 %v1790, 7
        %v1792 = vsub.s32 2, %v1791
        %v1793 = vrot.slane %v1166, %v1792
        %v1794 = vmul.f32 %v1758, %v1793
        %v1795 = vmul.f32 %v1759, %v1793
        %v1796 = vmul.f32 %v1760, %v1793
        %v1797 = vmul.f32 %v1761, %v1793
        %v1798 = vmul.f32 %v1762, %v1793
        %v1799 = vmul.f32 %v1763, %v1793
        %v1800 = vmul.f32 %v1764, %v1793
        %v1801 = vmul.f32 %v1765, %v1793
        %v1802 = vmul.f32 %v1766, %v1793
        %v1803 = vmul.f32 %v1767, %v1793
        %v1804 = vmul.f32 %v1768, %v1793
        %v1805 = vmul.f32 %v1769, %v1793
        %v1806 = vmul.f32 %v1770, %v1793
        %v1807 = vmul.f32 %v1771, %v1793
        %v1808 = vmul.f32 %v1772, %v1793
        %v1809 = vmul.f32 %v1773, %v1793
        %v1810 = vmul.f32 %v1774, %v1793
        %v1811 = vmul.f32 %v1775, %v1793
        %v1812 = vmul.f32 %v1776, %v1793
        %v1813 = vmul.f32 %v1777, %v1793
        %v1814 = vmul.f32 %v1778, %v1793
        %v1815 = vmul.f32 %v1779, %v1793
        %v1816 = vmul.f32 %v1780, %v1793
        %v1817 = vmul.f32 %v1781, %v1793
        %v1818 = vmul.f32 %v1782, %v1793
        %v1819 = vmul.f32 %v1783, %v1793
        %v1820 = vmul.f32 %v1784, %v1793
        %v1821 = vmul.f32 %v1785, %v1793
        %v1822 = vmul.f32 %v1786, %v1793
        %v1823 = vmul.f32 %v1787, %v1793
        %v1824 = vmul.f32 %v1788, %v1793
        %v1825 = vmul.f32 %v1789, %v1793
        %v1826 = vadd.f32 %v1726, %v1794
        %v1827 = vadd.f32 %v1727, %v1795
        %v1828 = vadd.f32 %v1728, %v1796
        %v1829 = vadd.f32 %v1729, %v1797
        %v1830 = vadd.f32 %v1730, %v1798
        %v1831 = vadd.f32 %v1731, %v1799
        %v1832 = vadd.f32 %v1732, %v1800
        %v1833 = vadd.f32 %v1733, %v1801
        %v1834 = vadd.f32 %v1734, %v1802
        %v1835 = vadd.f32 %v1735, %v1803
        %v1836 = vadd.f32 %v1736, %v1804
        %v1837 = vadd.f32 %v1737, %v1805
        %v1838 = vadd.f32 %v1738, %v1806
        %v1839 = vadd.f32 %v1739, %v1807
        %v1840 = vadd.f32 %v1740, %v1808
        %v1841 = vadd.f32 %v1741, %v1809
        %v1842 = vadd.f32 %v1742, %v1810
        %v1843 = vadd.f32 %v1743, %v1811
        %v1844 = vadd.f32 %v1744, %v1812
        %v1845 = vadd.f32 %v1745, %v1813
        %v1846 = vadd.f32 %v1746, %v1814
        %v1847 = vadd.f32 %v1747, %v1815
        %v1848 = vadd.f32 %v1748, %v1816
        %v1849 = vadd.f32 %v1749, %v1817
        %v1850 = vadd.f32 %v1750, %v1818
        %v1851 = vadd.f32 %v1751, %v1819
        %v1852 = vadd.f32 %v1752, %v1820
        %v1853 = vadd.f32 %v1753, %v1821
        %v1854 = vadd.f32 %v1754, %v1822
        %v1855 = vadd.f32 %v1755, %v1823
        %v1856 = vadd.f32 %v1756, %v1824
        %v1857 = vadd.f32 %v1757, %v1825
        %s1858 = scalar_lea.vmem [#allocation2], 48
        %v1859 = vld [vmem:[%s1858] sm:$0xff]
        %v1860 = vld [vmem:[%s1858 + $0x8] sm:$0xff]
        %v1861 = vld [vmem:[%s1858 + $0x18] sm:$0xff]
        %v1862 = vld [vmem:[%s1858 + $0x20] sm:$0xff]
        %v1863 = vld [vmem:[%s1858 + $0x30] sm:$0xff]
        %v1864 = vld [vmem:[%s1858 + $0x38] sm:$0xff]
        %v1865 = vld [vmem:[%s1858 + $0x48] sm:$0xff]
        %v1866 = vld [vmem:[%s1858 + $0x50] sm:$0xff]
        %v1867 = vld [vmem:[%s1858 + $0x60] sm:$0xff]
        %v1868 = vld [vmem:[%s1858 + $0x68] sm:$0xff]
        %v1869 = vld [vmem:[%s1858 + $0x78] sm:$0xff]
        %v1870 = vld [vmem:[%s1858 + $0x80] sm:$0xff]
        %v1871 = vld [vmem:[%s1858 + $0x90] sm:$0xff]
        %v1872 = vld [vmem:[%s1858 + $0x98] sm:$0xff]
        %v1873 = vld [vmem:[%s1858 + $0xa8] sm:$0xff]
        %v1874 = vld [vmem:[%s1858 + $0xb0] sm:$0xff]
        %v1875 = vld [vmem:[%s1858 + $0xc0] sm:$0xff]
        %v1876 = vld [vmem:[%s1858 + $0xc8] sm:$0xff]
        %v1877 = vld [vmem:[%s1858 + $0xd8] sm:$0xff]
        %v1878 = vld [vmem:[%s1858 + $0xe0] sm:$0xff]
        %v1879 = vld [vmem:[%s1858 + $0xf0] sm:$0xff]
        %v1880 = vld [vmem:[%s1858 + $0xf8] sm:$0xff]
        %v1881 = vld [vmem:[%s1858 + $0x108] sm:$0xff]
        %v1882 = vld [vmem:[%s1858 + $0x110] sm:$0xff]
        %v1883 = vld [vmem:[%s1858 + $0x120] sm:$0xff]
        %v1884 = vld [vmem:[%s1858 + $0x128] sm:$0xff]
        %v1885 = vld [vmem:[%s1858 + $0x138] sm:$0xff]
        %v1886 = vld [vmem:[%s1858 + $0x140] sm:$0xff]
        %v1887 = vld [vmem:[%s1858 + $0x150] sm:$0xff]
        %v1888 = vld [vmem:[%s1858 + $0x158] sm:$0xff]
        %v1889 = vld [vmem:[%s1858 + $0x168] sm:$0xff]
        %v1890 = vld [vmem:[%s1858 + $0x170] sm:$0xff]
        %v1891 = vlaneseq
        %v1892 = vshrl.u32 %v1891, 7
        %v1893 = vsub.s32 0, %v1892
        %v1894 = vrot.slane %v1167, %v1893
        %v1895 = vmul.f32 %v1859, %v1894
        %v1896 = vmul.f32 %v1860, %v1894
        %v1897 = vmul.f32 %v1861, %v1894
        %v1898 = vmul.f32 %v1862, %v1894
        %v1899 = vmul.f32 %v1863, %v1894
        %v1900 = vmul.f32 %v1864, %v1894
        %v1901 = vmul.f32 %v1865, %v1894
        %v1902 = vmul.f32 %v1866, %v1894
        %v1903 = vmul.f32 %v1867, %v1894
        %v1904 = vmul.f32 %v1868, %v1894
        %v1905 = vmul.f32 %v1869, %v1894
        %v1906 = vmul.f32 %v1870, %v1894
        %v1907 = vmul.f32 %v1871, %v1894
        %v1908 = vmul.f32 %v1872, %v1894
        %v1909 = vmul.f32 %v1873, %v1894
        %v1910 = vmul.f32 %v1874, %v1894
        %v1911 = vmul.f32 %v1875, %v1894
        %v1912 = vmul.f32 %v1876, %v1894
        %v1913 = vmul.f32 %v1877, %v1894
        %v1914 = vmul.f32 %v1878, %v1894
        %v1915 = vmul.f32 %v1879, %v1894
        %v1916 = vmul.f32 %v1880, %v1894
        %v1917 = vmul.f32 %v1881, %v1894
        %v1918 = vmul.f32 %v1882, %v1894
        %v1919 = vmul.f32 %v1883, %v1894
        %v1920 = vmul.f32 %v1884, %v1894
        %v1921 = vmul.f32 %v1885, %v1894
        %v1922 = vmul.f32 %v1886, %v1894
        %v1923 = vmul.f32 %v1887, %v1894
        %v1924 = vmul.f32 %v1888, %v1894
        %v1925 = vmul.f32 %v1889, %v1894
        %v1926 = vmul.f32 %v1890, %v1894
        %v1927 = vadd.f32 %v1826, %v1895
        %v1928 = vadd.f32 %v1827, %v1896
        %v1929 = vadd.f32 %v1828, %v1897
        %v1930 = vadd.f32 %v1829, %v1898
        %v1931 = vadd.f32 %v1830, %v1899
        %v1932 = vadd.f32 %v1831, %v1900
        %v1933 = vadd.f32 %v1832, %v1901
        %v1934 = vadd.f32 %v1833, %v1902
        %v1935 = vadd.f32 %v1834, %v1903
        %v1936 = vadd.f32 %v1835, %v1904
        %v1937 = vadd.f32 %v1836, %v1905
        %v1938 = vadd.f32 %v1837, %v1906
        %v1939 = vadd.f32 %v1838, %v1907
        %v1940 = vadd.f32 %v1839, %v1908
        %v1941 = vadd.f32 %v1840, %v1909
        %v1942 = vadd.f32 %v1841, %v1910
        %v1943 = vadd.f32 %v1842, %v1911
        %v1944 = vadd.f32 %v1843, %v1912
        %v1945 = vadd.f32 %v1844, %v1913
        %v1946 = vadd.f32 %v1845, %v1914
        %v1947 = vadd.f32 %v1846, %v1915
        %v1948 = vadd.f32 %v1847, %v1916
        %v1949 = vadd.f32 %v1848, %v1917
        %v1950 = vadd.f32 %v1849, %v1918
        %v1951 = vadd.f32 %v1850, %v1919
        %v1952 = vadd.f32 %v1851, %v1920
        %v1953 = vadd.f32 %v1852, %v1921
        %v1954 = vadd.f32 %v1853, %v1922
        %v1955 = vadd.f32 %v1854, %v1923
        %v1956 = vadd.f32 %v1855, %v1924
        %v1957 = vadd.f32 %v1856, %v1925
        %v1958 = vadd.f32 %v1857, %v1926
        %v1959 = vld [vmem:[%s1858 + $0x1] sm:$0xff]
        %v1960 = vld [vmem:[%s1858 + $0x9] sm:$0xff]
        %v1961 = vld [vmem:[%s1858 + $0x19] sm:$0xff]
        %v1962 = vld [vmem:[%s1858 + $0x21] sm:$0xff]
        %v1963 = vld [vmem:[%s1858 + $0x31] sm:$0xff]
        %v1964 = vld [vmem:[%s1858 + $0x39] sm:$0xff]
        %v1965 = vld [vmem:[%s1858 + $0x49] sm:$0xff]
        %v1966 = vld [vmem:[%s1858 + $0x51] sm:$0xff]
        %v1967 = vld [vmem:[%s1858 + $0x61] sm:$0xff]
        %v1968 = vld [vmem:[%s1858 + $0x69] sm:$0xff]
        %v1969 = vld [vmem:[%s1858 + $0x79] sm:$0xff]
        %v1970 = vld [vmem:[%s1858 + $0x81] sm:$0xff]
        %v1971 = vld [vmem:[%s1858 + $0x91] sm:$0xff]
        %v1972 = vld [vmem:[%s1858 + $0x99] sm:$0xff]
        %v1973 = vld [vmem:[%s1858 + $0xa9] sm:$0xff]
        %v1974 = vld [vmem:[%s1858 + $0xb1] sm:$0xff]
        %v1975 = vld [vmem:[%s1858 + $0xc1] sm:$0xff]
        %v1976 = vld [vmem:[%s1858 + $0xc9] sm:$0xff]
        %v1977 = vld [vmem:[%s1858 + $0xd9] sm:$0xff]
        %v1978 = vld [vmem:[%s1858 + $0xe1] sm:$0xff]
        %v1979 = vld [vmem:[%s1858 + $0xf1] sm:$0xff]
        %v1980 = vld [vmem:[%s1858 + $0xf9] sm:$0xff]
        %v1981 = vld [vmem:[%s1858 + $0x109] sm:$0xff]
        %v1982 = vld [vmem:[%s1858 + $0x111] sm:$0xff]
        %v1983 = vld [vmem:[%s1858 + $0x121] sm:$0xff]
        %v1984 = vld [vmem:[%s1858 + $0x129] sm:$0xff]
        %v1985 = vld [vmem:[%s1858 + $0x139] sm:$0xff]
        %v1986 = vld [vmem:[%s1858 + $0x141] sm:$0xff]
        %v1987 = vld [vmem:[%s1858 + $0x151] sm:$0xff]
        %v1988 = vld [vmem:[%s1858 + $0x159] sm:$0xff]
        %v1989 = vld [vmem:[%s1858 + $0x169] sm:$0xff]
        %v1990 = vld [vmem:[%s1858 + $0x171] sm:$0xff]
        %v1991 = vlaneseq
        %v1992 = vshrl.u32 %v1991, 7
        %v1993 = vsub.s32 1, %v1992
        %v1994 = vrot.slane %v1167, %v1993
        %v1995 = vmul.f32 %v1959, %v1994
        %v1996 = vmul.f32 %v1960, %v1994
        %v1997 = vmul.f32 %v1961, %v1994
        %v1998 = vmul.f32 %v1962, %v1994
        %v1999 = vmul.f32 %v1963, %v1994
        %v2000 = vmul.f32 %v1964, %v1994
        %v2001 = vmul.f32 %v1965, %v1994
        %v2002 = vmul.f32 %v1966, %v1994
        %v2003 = vmul.f32 %v1967, %v1994
        %v2004 = vmul.f32 %v1968, %v1994
        %v2005 = vmul.f32 %v1969, %v1994
        %v2006 = vmul.f32 %v1970, %v1994
        %v2007 = vmul.f32 %v1971, %v1994
        %v2008 = vmul.f32 %v1972, %v1994
        %v2009 = vmul.f32 %v1973, %v1994
        %v2010 = vmul.f32 %v1974, %v1994
        %v2011 = vmul.f32 %v1975, %v1994
        %v2012 = vmul.f32 %v1976, %v1994
        %v2013 = vmul.f32 %v1977, %v1994
        %v2014 = vmul.f32 %v1978, %v1994
        %v2015 = vmul.f32 %v1979, %v1994
        %v2016 = vmul.f32 %v1980, %v1994
        %v2017 = vmul.f32 %v1981, %v1994
        %v2018 = vmul.f32 %v1982, %v1994
        %v2019 = vmul.f32 %v1983, %v1994
        %v2020 = vmul.f32 %v1984, %v1994
        %v2021 = vmul.f32 %v1985, %v1994
        %v2022 = vmul.f32 %v1986, %v1994
        %v2023 = vmul.f32 %v1987, %v1994
        %v2024 = vmul.f32 %v1988, %v1994
        %v2025 = vmul.f32 %v1989, %v1994
        %v2026 = vmul.f32 %v1990, %v1994
        %v2027 = vadd.f32 %v1927, %v1995
        %v2028 = vadd.f32 %v1928, %v1996
        %v2029 = vadd.f32 %v1929, %v1997
        %v2030 = vadd.f32 %v1930, %v1998
        %v2031 = vadd.f32 %v1931, %v1999
        %v2032 = vadd.f32 %v1932, %v2000
        %v2033 = vadd.f32 %v1933, %v2001
        %v2034 = vadd.f32 %v1934, %v2002
        %v2035 = vadd.f32 %v1935, %v2003
        %v2036 = vadd.f32 %v1936, %v2004
        %v2037 = vadd.f32 %v1937, %v2005
        %v2038 = vadd.f32 %v1938, %v2006
        %v2039 = vadd.f32 %v1939, %v2007
        %v2040 = vadd.f32 %v1940, %v2008
        %v2041 = vadd.f32 %v1941, %v2009
        %v2042 = vadd.f32 %v1942, %v2010
        %v2043 = vadd.f32 %v1943, %v2011
        %v2044 = vadd.f32 %v1944, %v2012
        %v2045 = vadd.f32 %v1945, %v2013
        %v2046 = vadd.f32 %v1946, %v2014
        %v2047 = vadd.f32 %v1947, %v2015
        %v2048 = vadd.f32 %v1948, %v2016
        %v2049 = vadd.f32 %v1949, %v2017
        %v2050 = vadd.f32 %v1950, %v2018
        %v2051 = vadd.f32 %v1951, %v2019
        %v2052 = vadd.f32 %v1952, %v2020
        %v2053 = vadd.f32 %v1953, %v2021
        %v2054 = vadd.f32 %v1954, %v2022
        %v2055 = vadd.f32 %v1955, %v2023
        %v2056 = vadd.f32 %v1956, %v2024
        %v2057 = vadd.f32 %v1957, %v2025
        %v2058 = vadd.f32 %v1958, %v2026
        %v2059 = vld [vmem:[%s1858 + $0x2] sm:$0xff]
        %v2060 = vld [vmem:[%s1858 + $0xa] sm:$0xff]
        %v2061 = vld [vmem:[%s1858 + $0x1a] sm:$0xff]
        %v2062 = vld [vmem:[%s1858 + $0x22] sm:$0xff]
        %v2063 = vld [vmem:[%s1858 + $0x32] sm:$0xff]
        %v2064 = vld [vmem:[%s1858 + $0x3a] sm:$0xff]
        %v2065 = vld [vmem:[%s1858 + $0x4a] sm:$0xff]
        %v2066 = vld [vmem:[%s1858 + $0x52] sm:$0xff]
        %v2067 = vld [vmem:[%s1858 + $0x62] sm:$0xff]
        %v2068 = vld [vmem:[%s1858 + $0x6a] sm:$0xff]
        %v2069 = vld [vmem:[%s1858 + $0x7a] sm:$0xff]
        %v2070 = vld [vmem:[%s1858 + $0x82] sm:$0xff]
        %v2071 = vld [vmem:[%s1858 + $0x92] sm:$0xff]
        %v2072 = vld [vmem:[%s1858 + $0x9a] sm:$0xff]
        %v2073 = vld [vmem:[%s1858 + $0xaa] sm:$0xff]
        %v2074 = vld [vmem:[%s1858 + $0xb2] sm:$0xff]
        %v2075 = vld [vmem:[%s1858 + $0xc2] sm:$0xff]
        %v2076 = vld [vmem:[%s1858 + $0xca] sm:$0xff]
        %v2077 = vld [vmem:[%s1858 + $0xda] sm:$0xff]
        %v2078 = vld [vmem:[%s1858 + $0xe2] sm:$0xff]
        %v2079 = vld [vmem:[%s1858 + $0xf2] sm:$0xff]
        %v2080 = vld [vmem:[%s1858 + $0xfa] sm:$0xff]
        %v2081 = vld [vmem:[%s1858 + $0x10a] sm:$0xff]
        %v2082 = vld [vmem:[%s1858 + $0x112] sm:$0xff]
        %v2083 = vld [vmem:[%s1858 + $0x122] sm:$0xff]
        %v2084 = vld [vmem:[%s1858 + $0x12a] sm:$0xff]
        %v2085 = vld [vmem:[%s1858 + $0x13a] sm:$0xff]
        %v2086 = vld [vmem:[%s1858 + $0x142] sm:$0xff]
        %v2087 = vld [vmem:[%s1858 + $0x152] sm:$0xff]
        %v2088 = vld [vmem:[%s1858 + $0x15a] sm:$0xff]
        %v2089 = vld [vmem:[%s1858 + $0x16a] sm:$0xff]
        %v2090 = vld [vmem:[%s1858 + $0x172] sm:$0xff]
        %v2091 = vlaneseq
        %v2092 = vshrl.u32 %v2091, 7
        %v2093 = vsub.s32 2, %v2092
        %v2094 = vrot.slane %v1167, %v2093
        %v2095 = vmul.f32 %v2059, %v2094
        %v2096 = vmul.f32 %v2060, %v2094
        %v2097 = vmul.f32 %v2061, %v2094
        %v2098 = vmul.f32 %v2062, %v2094
        %v2099 = vmul.f32 %v2063, %v2094
        %v2100 = vmul.f32 %v2064, %v2094
        %v2101 = vmul.f32 %v2065, %v2094
        %v2102 = vmul.f32 %v2066, %v2094
        %v2103 = vmul.f32 %v2067, %v2094
        %v2104 = vmul.f32 %v2068, %v2094
        %v2105 = vmul.f32 %v2069, %v2094
        %v2106 = vmul.f32 %v2070, %v2094
        %v2107 = vmul.f32 %v2071, %v2094
        %v2108 = vmul.f32 %v2072, %v2094
        %v2109 = vmul.f32 %v2073, %v2094
        %v2110 = vmul.f32 %v2074, %v2094
        %v2111 = vmul.f32 %v2075, %v2094
        %v2112 = vmul.f32 %v2076, %v2094
        %v2113 = vmul.f32 %v2077, %v2094
        %v2114 = vmul.f32 %v2078, %v2094
        %v2115 = vmul.f32 %v2079, %v2094
        %v2116 = vmul.f32 %v2080, %v2094
        %v2117 = vmul.f32 %v2081, %v2094
        %v2118 = vmul.f32 %v2082, %v2094
        %v2119 = vmul.f32 %v2083, %v2094
        %v2120 = vmul.f32 %v2084, %v2094
        %v2121 = vmul.f32 %v2085, %v2094
        %v2122 = vmul.f32 %v2086, %v2094
        %v2123 = vmul.f32 %v2087, %v2094
        %v2124 = vmul.f32 %v2088, %v2094
        %v2125 = vmul.f32 %v2089, %v2094
        %v2126 = vmul.f32 %v2090, %v2094
        %v2127 = vadd.f32 %v2027, %v2095
        %v2128 = vadd.f32 %v2028, %v2096
        %v2129 = vadd.f32 %v2029, %v2097
        %v2130 = vadd.f32 %v2030, %v2098
        %v2131 = vadd.f32 %v2031, %v2099
        %v2132 = vadd.f32 %v2032, %v2100
        %v2133 = vadd.f32 %v2033, %v2101
        %v2134 = vadd.f32 %v2034, %v2102
        %v2135 = vadd.f32 %v2035, %v2103
        %v2136 = vadd.f32 %v2036, %v2104
        %v2137 = vadd.f32 %v2037, %v2105
        %v2138 = vadd.f32 %v2038, %v2106
        %v2139 = vadd.f32 %v2039, %v2107
        %v2140 = vadd.f32 %v2040, %v2108
        %v2141 = vadd.f32 %v2041, %v2109
        %v2142 = vadd.f32 %v2042, %v2110
        %v2143 = vadd.f32 %v2043, %v2111
        %v2144 = vadd.f32 %v2044, %v2112
        %v2145 = vadd.f32 %v2045, %v2113
        %v2146 = vadd.f32 %v2046, %v2114
        %v2147 = vadd.f32 %v2047, %v2115
        %v2148 = vadd.f32 %v2048, %v2116
        %v2149 = vadd.f32 %v2049, %v2117
        %v2150 = vadd.f32 %v2050, %v2118
        %v2151 = vadd.f32 %v2051, %v2119
        %v2152 = vadd.f32 %v2052, %v2120
        %v2153 = vadd.f32 %v2053, %v2121
        %v2154 = vadd.f32 %v2054, %v2122
        %v2155 = vadd.f32 %v2055, %v2123
        %v2156 = vadd.f32 %v2056, %v2124
        %v2157 = vadd.f32 %v2057, %v2125
        %v2158 = vadd.f32 %v2058, %v2126
        %v2160 = vlaneseq
        %v2161 = vshrl.u32 %v2160, 7
        %v2162 = vsub.s32 0, %v2161
        %v2163 = vrot.slane %v1168, %v2162
        %v2165 = vadd.f32 %v2127, %v2163
        %v2166 = vadd.f32 %v2128, %v2163
        %v2167 = vadd.f32 %v2129, %v2163
        %v2168 = vadd.f32 %v2130, %v2163
        %v2169 = vadd.f32 %v2131, %v2163
        %v2170 = vadd.f32 %v2132, %v2163
        %v2171 = vadd.f32 %v2133, %v2163
        %v2172 = vadd.f32 %v2134, %v2163
        %v2173 = vadd.f32 %v2135, %v2163
        %v2174 = vadd.f32 %v2136, %v2163
        %v2175 = vadd.f32 %v2137, %v2163
        %v2176 = vadd.f32 %v2138, %v2163
        %v2177 = vadd.f32 %v2139, %v2163
        %v2178 = vadd.f32 %v2140, %v2163
        %v2179 = vadd.f32 %v2141, %v2163
        %v2180 = vadd.f32 %v2142, %v2163
        %v2181 = vadd.f32 %v2143, %v2163
        %v2182 = vadd.f32 %v2144, %v2163
        %v2183 = vadd.f32 %v2145, %v2163
        %v2184 = vadd.f32 %v2146, %v2163
        %v2185 = vadd.f32 %v2147, %v2163
        %v2186 = vadd.f32 %v2148, %v2163
        %v2187 = vadd.f32 %v2149, %v2163
        %v2188 = vadd.f32 %v2150, %v2163
        %v2189 = vadd.f32 %v2151, %v2163
        %v2190 = vadd.f32 %v2152, %v2163
        %v2191 = vadd.f32 %v2153, %v2163
        %v2192 = vadd.f32 %v2154, %v2163
        %v2193 = vadd.f32 %v2155, %v2163
        %v2194 = vadd.f32 %v2156, %v2163
        %v2195 = vadd.f32 %v2157, %v2163
        %v2196 = vadd.f32 %v2158, %v2163
        %v2197 = vmax.f32 %v2165, 0.0
        %v2198 = vmax.f32 %v2166, 0.0
        %v2199 = vmax.f32 %v2167, 0.0
        %v2200 = vmax.f32 %v2168, 0.0
        %v2201 = vmax.f32 %v2169, 0.0
        %v2202 = vmax.f32 %v2170, 0.0
        %v2203 = vmax.f32 %v2171, 0.0
        %v2204 = vmax.f32 %v2172, 0.0
        %v2205 = vmax.f32 %v2173, 0.0
        %v2206 = vmax.f32 %v2174, 0.0
        %v2207 = vmax.f32 %v2175, 0.0
        %v2208 = vmax.f32 %v2176, 0.0
        %v2209 = vmax.f32 %v2177, 0.0
        %v2210 = vmax.f32 %v2178, 0.0
        %v2211 = vmax.f32 %v2179, 0.0
        %v2212 = vmax.f32 %v2180, 0.0
        %v2213 = vmax.f32 %v2181, 0.0
        %v2214 = vmax.f32 %v2182, 0.0
        %v2215 = vmax.f32 %v2183, 0.0
        %v2216 = vmax.f32 %v2184, 0.0
        %v2217 = vmax.f32 %v2185, 0.0
        %v2218 = vmax.f32 %v2186, 0.0
        %v2219 = vmax.f32 %v2187, 0.0
        %v2220 = vmax.f32 %v2188, 0.0
        %v2221 = vmax.f32 %v2189, 0.0
        %v2222 = vmax.f32 %v2190, 0.0
        %v2223 = vmax.f32 %v2191, 0.0
        %v2224 = vmax.f32 %v2192, 0.0
        %v2225 = vmax.f32 %v2193, 0.0
        %v2226 = vmax.f32 %v2194, 0.0
        %v2227 = vmax.f32 %v2195, 0.0
        %v2228 = vmax.f32 %v2196, 0.0
        %v2229 = vmin.f32 %v2197, 6.0
        %v2230 = vmin.f32 %v2198, 6.0
        %v2231 = vmin.f32 %v2199, 6.0
        %v2232 = vmin.f32 %v2200, 6.0
        %v2233 = vmin.f32 %v2201, 6.0
        %v2234 = vmin.f32 %v2202, 6.0
        %v2235 = vmin.f32 %v2203, 6.0
        %v2236 = vmin.f32 %v2204, 6.0
        %v2237 = vmin.f32 %v2205, 6.0
        %v2238 = vmin.f32 %v2206, 6.0
        %v2239 = vmin.f32 %v2207, 6.0
        %v2240 = vmin.f32 %v2208, 6.0
        %v2241 = vmin.f32 %v2209, 6.0
        %v2242 = vmin.f32 %v2210, 6.0
        %v2243 = vmin.f32 %v2211, 6.0
        %v2244 = vmin.f32 %v2212, 6.0
        %v2245 = vmin.f32 %v2213, 6.0
        %v2246 = vmin.f32 %v2214, 6.0
        %v2247 = vmin.f32 %v2215, 6.0
        %v2248 = vmin.f32 %v2216, 6.0
        %v2249 = vmin.f32 %v2217, 6.0
        %v2250 = vmin.f32 %v2218, 6.0
        %v2251 = vmin.f32 %v2219, 6.0
        %v2252 = vmin.f32 %v2220, 6.0
        %v2253 = vmin.f32 %v2221, 6.0
        %v2254 = vmin.f32 %v2222, 6.0
        %v2255 = vmin.f32 %v2223, 6.0
        %v2256 = vmin.f32 %v2224, 6.0
        %v2257 = vmin.f32 %v2225, 6.0
        %v2258 = vmin.f32 %v2226, 6.0
        %v2259 = vmin.f32 %v2227, 6.0
        %v2260 = vmin.f32 %v2228, 6.0
        %v2261 = vpack.c.bf16 %v2230, %v2229
        %v2262 = vpack.c.bf16 %v2232, %v2231
        %v2263 = vpack.c.bf16 %v2234, %v2233
        %v2264 = vpack.c.bf16 %v2236, %v2235
        %v2265 = vpack.c.bf16 %v2238, %v2237
        %v2266 = vpack.c.bf16 %v2240, %v2239
        %v2267 = vpack.c.bf16 %v2242, %v2241
        %v2268 = vpack.c.bf16 %v2244, %v2243
        %v2269 = vpack.c.bf16 %v2246, %v2245
        %v2270 = vpack.c.bf16 %v2248, %v2247
        %v2271 = vpack.c.bf16 %v2250, %v2249
        %v2272 = vpack.c.bf16 %v2252, %v2251
        %v2273 = vpack.c.bf16 %v2254, %v2253
        %v2274 = vpack.c.bf16 %v2256, %v2255
        %v2275 = vpack.c.bf16 %v2258, %v2257
        %v2276 = vpack.c.bf16 %v2260, %v2259
        %v2277 = vld [vmem:[%s5] sm:$0xf]
        %v2278 = vld [vmem:[%s5 + $0x4] sm:$0xf]
        %v2279 = vld [vmem:[#allocation10] sm:$0x1]
        %v2281 = vlaneseq
        %v2282 = vshrl.u32 %v2281, 7
        %v2283 = vsub.s32 0, %v2282
        %v2284 = vrot.slane %v2279, %v2283
        %v2288 = vunpack.c.l.b16 %v2277
        %v2289 = vunpack.c.l.b16 %v2278
        %v2290 = vpack.c.b16 %v2289, %v2288
        %v2293 = vsel %vm1169, %v2261, 0
        %v2296 = vsel %vm1169, %v2262, 0
        %v2299 = vsel %vm1169, %v2263, 0
        %v2302 = vsel %vm1169, %v2264, 0
        %v2305 = vsel %vm1169, %v2265, 0
        %v2308 = vsel %vm1169, %v2266, 0
        %v2311 = vsel %vm1169, %v2267, 0
        %v2314 = vsel %vm1169, %v2268, 0
        %v2317 = vsel %vm1169, %v2269, 0
        %v2320 = vsel %vm1169, %v2270, 0
        %v2323 = vsel %vm1169, %v2271, 0
        %v2326 = vsel %vm1169, %v2272, 0
        %v2329 = vsel %vm1169, %v2273, 0
        %v2332 = vsel %vm1169, %v2274, 0
        %v2335 = vsel %vm1169, %v2275, 0
        %v2338 = vsel %vm1169, %v2276, 0
        %2340 = vmatprep.subr.bf16.mxu0 0
        %2341 = vmatpush1.bf16.msra.mxu0 %v2290
        %2342 = vmatprep.subr.bf16.mxu0 0
        %2343 = vmatpush1.bf16.msra.mxu0 0
        %2344 = vmatprep.subr.bf16.mxu0 0
        %2345 = vmatpush1.bf16.msra.mxu0 0
        %2346 = vmatprep.subr.bf16.mxu0 0
        %2347 = vmatpush1.bf16.msra.mxu0 0
        %2348 = vmatprep.subr.bf16.mxu0 0
        %2349 = vmatpush1.bf16.msra.mxu0 0
        %2350 = vmatprep.subr.bf16.mxu0 0
        %2351 = vmatpush1.bf16.msra.mxu0 0
        %2352 = vmatprep.subr.bf16.mxu0 0
        %2353 = vmatpush1.bf16.msra.mxu0 0
        %2354 = vmatprep.subr.bf16.mxu0 0
        %2355 = vmatpush1.bf16.msra.mxu0 0
        %2356 = vmatprep.subr.bf16.mxu0 0
        %2357 = vmatpush1.bf16.msra.mxu0 0
        %2358 = vmatprep.subr.bf16.mxu0 0
        %2359 = vmatpush1.bf16.msra.mxu0 0
        %2360 = vmatprep.subr.bf16.mxu0 0
        %2361 = vmatpush1.bf16.msra.mxu0 0
        %2362 = vmatprep.subr.bf16.mxu0 0
        %2363 = vmatpush1.bf16.msra.mxu0 0
        %2364 = vmatprep.subr.bf16.mxu0 0
        %2365 = vmatpush1.bf16.msra.mxu0 0
        %2366 = vmatprep.subr.bf16.mxu0 0
        %2367 = vmatpush1.bf16.msra.mxu0 0
        %2368 = vmatprep.subr.bf16.mxu0 0
        %2369 = vmatpush1.bf16.msra.mxu0 0
        %2370 = vmatprep.subr.bf16.mxu0 0
        %2371 = vmatpush1.bf16.msra.mxu0 0
        %2372 = vmatprep.mubr.bf16.mxu0 0
        %2373 = vmatmul.mubr.bf16.gmra.mrb[0].mxu0 %v2293
        %v2374 = vpop.f32.mrb[0].mxu0
        %v2375 = vadd.f32 %v2284, %v2374
        %v2376 = vpop.f32.mrb[0].mxu0
        %v2377 = vpop.f32.mrb[0].mxu0
        %v2378 = vadd.f32 %v2284, %v2377
        %v2379 = vpop.f32.mrb[0].mxu0
        %2380 = vmatprep.mubr.bf16.mxu0 0
        %2381 = vmatmul.mubr.bf16.gmra.mrb[0].mxu0 %v2296
        %v2382 = vpop.f32.mrb[0].mxu0
        %v2383 = vadd.f32 %v2284, %v2382
        %v2384 = vpop.f32.mrb[0].mxu0
        %v2385 = vpop.f32.mrb[0].mxu0
        %v2386 = vadd.f32 %v2284, %v2385
        %v2387 = vpop.f32.mrb[0].mxu0
        %2388 = vmatprep.mubr.bf16.mxu0 0
        %2389 = vmatmul.mubr.bf16.gmra.mrb[0].mxu0 %v2299
        %v2390 = vpop.f32.mrb[0].mxu0
        %v2391 = vadd.f32 %v2284, %v2390
        %v2392 = vpop.f32.mrb[0].mxu0
        %v2393 = vpop.f32.mrb[0].mxu0
        %v2394 = vadd.f32 %v2284, %v2393
        %v2395 = vpop.f32.mrb[0].mxu0
        %2396 = vmatprep.mubr.bf16.mxu0 0
        %2397 = vmatmul.mubr.bf16.gmra.mrb[0].mxu0 %v2302
        %v2398 = vpop.f32.mrb[0].mxu0
        %v2399 = vadd.f32 %v2284, %v2398
        %v2400 = vpop.f32.mrb[0].mxu0
        %v2401 = vpop.f32.mrb[0].mxu0
        %v2402 = vadd.f32 %v2284, %v2401
        %v2403 = vpop.f32.mrb[0].mxu0
        %2404 = vmatprep.mubr.bf16.mxu0 0
        %2405 = vmatmul.mubr.bf16.gmra.mrb[0].mxu0 %v2305
        %v2406 = vpop.f32.mrb[0].mxu0
        %v2407 = vadd.f32 %v2284, %v2406
        %v2408 = vpop.f32.mrb[0].mxu0
        %v2409 = vpop.f32.mrb[0].mxu0
        %v2410 = vadd.f32 %v2284, %v2409
        %v2411 = vpop.f32.mrb[0].mxu0
        %2412 = vmatprep.mubr.bf16.mxu0 0
        %2413 = vmatmul.mubr.bf16.gmra.mrb[0].mxu0 %v2308
        %v2414 = vpop.f32.mrb[0].mxu0
        %v2415 = vadd.f32 %v2284, %v2414
        %v2416 = vpop.f32.mrb[0].mxu0
        %v2417 = vpop.f32.mrb[0].mxu0
        %v2418 = vadd.f32 %v2284, %v2417
        %v2419 = vpop.f32.mrb[0].mxu0
        %2420 = vmatprep.mubr.bf16.mxu0 0
        %2421 = vmatmul.mubr.bf16.gmra.mrb[0].mxu0 %v2311
        %v2422 = vpop.f32.mrb[0].mxu0
        %v2423 = vadd.f32 %v2284, %v2422
        %v2424 = vpop.f32.mrb[0].mxu0
        %v2425 = vpop.f32.mrb[0].mxu0
        %v2426 = vadd.f32 %v2284, %v2425
        %v2427 = vpop.f32.mrb[0].mxu0
        %2428 = vmatprep.mubr.bf16.mxu0 0
        %2429 = vmatmul.mubr.bf16.gmra.mrb[0].mxu0 %v2314
        %v2430 = vpop.f32.mrb[0].mxu0
        %v2431 = vadd.f32 %v2284, %v2430
        %v2432 = vpop.f32.mrb[0].mxu0
        %v2433 = vpop.f32.mrb[0].mxu0
        %v2434 = vadd.f32 %v2284, %v2433
        %v2435 = vpop.f32.mrb[0].mxu0
        %2436 = vmatprep.mubr.bf16.mxu0 0
        %2437 = vmatmul.mubr.bf16.gmra.mrb[0].mxu0 %v2317
        %v2438 = vpop.f32.mrb[0].mxu0
        %v2439 = vadd.f32 %v2284, %v2438
        %v2440 = vpop.f32.mrb[0].mxu0
        %v2441 = vpop.f32.mrb[0].mxu0
        %v2442 = vadd.f32 %v2284, %v2441
        %v2443 = vpop.f32.mrb[0].mxu0
        %2444 = vmatprep.mubr.bf16.mxu0 0
        %2445 = vmatmul.mubr.bf16.gmra.mrb[0].mxu0 %v2320
        %v2446 = vpop.f32.mrb[0].mxu0
        %v2447 = vadd.f32 %v2284, %v2446
        %v2448 = vpop.f32.mrb[0].mxu0
        %v2449 = vpop.f32.mrb[0].mxu0
        %v2450 = vadd.f32 %v2284, %v2449
        %v2451 = vpop.f32.mrb[0].mxu0
        %2452 = vmatprep.mubr.bf16.mxu0 0
        %2453 = vmatmul.mubr.bf16.gmra.mrb[0].mxu0 %v2323
        %v2454 = vpop.f32.mrb[0].mxu0
        %v2455 = vadd.f32 %v2284, %v2454
        %v2456 = vpop.f32.mrb[0].mxu0
        %v2457 = vpop.f32.mrb[0].mxu0
        %v2458 = vadd.f32 %v2284, %v2457
        %v2459 = vpop.f32.mrb[0].mxu0
        %2460 = vmatprep.mubr.bf16.mxu0 0
        %2461 = vmatmul.mubr.bf16.gmra.mrb[0].mxu0 %v2326
        %v2462 = vpop.f32.mrb[0].mxu0
        %v2463 = vadd.f32 %v2284, %v2462
        %v2464 = vpop.f32.mrb[0].mxu0
        %v2465 = vpop.f32.mrb[0].mxu0
        %v2466 = vadd.f32 %v2284, %v2465
        %v2467 = vpop.f32.mrb[0].mxu0
        %2468 = vmatprep.mubr.bf16.mxu0 0
        %2469 = vmatmul.mubr.bf16.gmra.mrb[0].mxu0 %v2329
        %v2470 = vpop.f32.mrb[0].mxu0
        %v2471 = vadd.f32 %v2284, %v2470
        %v2472 = vpop.f32.mrb[0].mxu0
        %v2473 = vpop.f32.mrb[0].mxu0
        %v2474 = vadd.f32 %v2284, %v2473
        %v2475 = vpop.f32.mrb[0].mxu0
        %2476 = vmatprep.mubr.bf16.mxu0 0
        %2477 = vmatmul.mubr.bf16.gmra.mrb[0].mxu0 %v2332
        %v2478 = vpop.f32.mrb[0].mxu0
        %v2479 = vadd.f32 %v2284, %v2478
        %v2480 = vpop.f32.mrb[0].mxu0
        %v2481 = vpop.f32.mrb[0].mxu0
        %v2482 = vadd.f32 %v2284, %v2481
        %v2483 = vpop.f32.mrb[0].mxu0
        %2484 = vmatprep.mubr.bf16.mxu0 0
        %2485 = vmatmul.mubr.bf16.gmra.mrb[0].mxu0 %v2335
        %v2486 = vpop.f32.mrb[0].mxu0
        %v2487 = vadd.f32 %v2284, %v2486
        %v2488 = vpop.f32.mrb[0].mxu0
        %v2489 = vpop.f32.mrb[0].mxu0
        %v2490 = vadd.f32 %v2284, %v2489
        %v2491 = vpop.f32.mrb[0].mxu0
        %2492 = vmatprep.mubr.bf16.mxu0 0
        %2493 = vmatmul.mubr.bf16.gmra.mrb[0].mxu0 %v2338
        %v2494 = vpop.f32.mrb[0].mxu0
        %v2495 = vadd.f32 %v2284, %v2494
        %v2496 = vpop.f32.mrb[0].mxu0
        %v2497 = vpop.f32.mrb[0].mxu0
        %v2498 = vadd.f32 %v2284, %v2497
        %v2499 = vpop.f32.mrb[0].mxu0
        %2500 = vdwg.mxu0
        %v2501 = vadd.f32 %v2375, 3.0
        %v2502 = vadd.f32 %v2378, 3.0
        %v2503 = vadd.f32 %v2383, 3.0
        %v2504 = vadd.f32 %v2386, 3.0
        %v2505 = vadd.f32 %v2391, 3.0
        %v2506 = vadd.f32 %v2394, 3.0
        %v2507 = vadd.f32 %v2399, 3.0
        %v2508 = vadd.f32 %v2402, 3.0
        %v2509 = vadd.f32 %v2407, 3.0
        %v2510 = vadd.f32 %v2410, 3.0
        %v2511 = vadd.f32 %v2415, 3.0
        %v2512 = vadd.f32 %v2418, 3.0
        %v2513 = vadd.f32 %v2423, 3.0
        %v2514 = vadd.f32 %v2426, 3.0
        %v2515 = vadd.f32 %v2431, 3.0
        %v2516 = vadd.f32 %v2434, 3.0
        %v2517 = vadd.f32 %v2439, 3.0
        %v2518 = vadd.f32 %v2442, 3.0
        %v2519 = vadd.f32 %v2447, 3.0
        %v2520 = vadd.f32 %v2450, 3.0
        %v2521 = vadd.f32 %v2455, 3.0
        %v2522 = vadd.f32 %v2458, 3.0
        %v2523 = vadd.f32 %v2463, 3.0
        %v2524 = vadd.f32 %v2466, 3.0
        %v2525 = vadd.f32 %v2471, 3.0
        %v2526 = vadd.f32 %v2474, 3.0
        %v2527 = vadd.f32 %v2479, 3.0
        %v2528 = vadd.f32 %v2482, 3.0
        %v2529 = vadd.f32 %v2487, 3.0
        %v2530 = vadd.f32 %v2490, 3.0
        %v2531 = vadd.f32 %v2495, 3.0
        %v2532 = vadd.f32 %v2498, 3.0
        %v2533 = vmax.f32 %v2501, 0.0
        %v2534 = vmax.f32 %v2502, 0.0
        %v2535 = vmax.f32 %v2503, 0.0
        %v2536 = vmax.f32 %v2504, 0.0
        %v2537 = vmax.f32 %v2505, 0.0
        %v2538 = vmax.f32 %v2506, 0.0
        %v2539 = vmax.f32 %v2507, 0.0
        %v2540 = vmax.f32 %v2508, 0.0
        %v2541 = vmax.f32 %v2509, 0.0
        %v2542 = vmax.f32 %v2510, 0.0
        %v2543 = vmax.f32 %v2511, 0.0
        %v2544 = vmax.f32 %v2512, 0.0
        %v2545 = vmax.f32 %v2513, 0.0
        %v2546 = vmax.f32 %v2514, 0.0
        %v2547 = vmax.f32 %v2515, 0.0
        %v2548 = vmax.f32 %v2516, 0.0
        %v2549 = vmax.f32 %v2517, 0.0
        %v2550 = vmax.f32 %v2518, 0.0
        %v2551 = vmax.f32 %v2519, 0.0
        %v2552 = vmax.f32 %v2520, 0.0
        %v2553 = vmax.f32 %v2521, 0.0
        %v2554 = vmax.f32 %v2522, 0.0
        %v2555 = vmax.f32 %v2523, 0.0
        %v2556 = vmax.f32 %v2524, 0.0
        %v2557 = vmax.f32 %v2525, 0.0
        %v2558 = vmax.f32 %v2526, 0.0
        %v2559 = vmax.f32 %v2527, 0.0
        %v2560 = vmax.f32 %v2528, 0.0
        %v2561 = vmax.f32 %v2529, 0.0
        %v2562 = vmax.f32 %v2530, 0.0
        %v2563 = vmax.f32 %v2531, 0.0
        %v2564 = vmax.f32 %v2532, 0.0
        %v2565 = vmin.f32 %v2533, 6.0
        %v2566 = vmin.f32 %v2534, 6.0
        %v2567 = vmin.f32 %v2535, 6.0
        %v2568 = vmin.f32 %v2536, 6.0
        %v2569 = vmin.f32 %v2537, 6.0
        %v2570 = vmin.f32 %v2538, 6.0
        %v2571 = vmin.f32 %v2539, 6.0
        %v2572 = vmin.f32 %v2540, 6.0
        %v2573 = vmin.f32 %v2541, 6.0
        %v2574 = vmin.f32 %v2542, 6.0
        %v2575 = vmin.f32 %v2543, 6.0
        %v2576 = vmin.f32 %v2544, 6.0
        %v2577 = vmin.f32 %v2545, 6.0
        %v2578 = vmin.f32 %v2546, 6.0
        %v2579 = vmin.f32 %v2547, 6.0
        %v2580 = vmin.f32 %v2548, 6.0
        %v2581 = vmin.f32 %v2549, 6.0
        %v2582 = vmin.f32 %v2550, 6.0
        %v2583 = vmin.f32 %v2551, 6.0
        %v2584 = vmin.f32 %v2552, 6.0
        %v2585 = vmin.f32 %v2553, 6.0
        %v2586 = vmin.f32 %v2554, 6.0
        %v2587 = vmin.f32 %v2555, 6.0
        %v2588 = vmin.f32 %v2556, 6.0
        %v2589 = vmin.f32 %v2557, 6.0
        %v2590 = vmin.f32 %v2558, 6.0
        %v2591 = vmin.f32 %v2559, 6.0
        %v2592 = vmin.f32 %v2560, 6.0
        %v2593 = vmin.f32 %v2561, 6.0
        %v2594 = vmin.f32 %v2562, 6.0
        %v2595 = vmin.f32 %v2563, 6.0
        %v2596 = vmin.f32 %v2564, 6.0
        %v2597 = vmul.f32 %v2375, %v2565
        %v2598 = vmul.f32 %v2378, %v2566
        %v2599 = vmul.f32 %v2383, %v2567
        %v2600 = vmul.f32 %v2386, %v2568
        %v2601 = vmul.f32 %v2391, %v2569
        %v2602 = vmul.f32 %v2394, %v2570
        %v2603 = vmul.f32 %v2399, %v2571
        %v2604 = vmul.f32 %v2402, %v2572
        %v2605 = vmul.f32 %v2407, %v2573
        %v2606 = vmul.f32 %v2410, %v2574
        %v2607 = vmul.f32 %v2415, %v2575
        %v2608 = vmul.f32 %v2418, %v2576
        %v2609 = vmul.f32 %v2423, %v2577
        %v2610 = vmul.f32 %v2426, %v2578
        %v2611 = vmul.f32 %v2431, %v2579
        %v2612 = vmul.f32 %v2434, %v2580
        %v2613 = vmul.f32 %v2439, %v2581
        %v2614 = vmul.f32 %v2442, %v2582
        %v2615 = vmul.f32 %v2447, %v2583
        %v2616 = vmul.f32 %v2450, %v2584
        %v2617 = vmul.f32 %v2455, %v2585
        %v2618 = vmul.f32 %v2458, %v2586
        %v2619 = vmul.f32 %v2463, %v2587
        %v2620 = vmul.f32 %v2466, %v2588
        %v2621 = vmul.f32 %v2471, %v2589
        %v2622 = vmul.f32 %v2474, %v2590
        %v2623 = vmul.f32 %v2479, %v2591
        %v2624 = vmul.f32 %v2482, %v2592
        %v2625 = vmul.f32 %v2487, %v2593
        %v2626 = vmul.f32 %v2490, %v2594
        %v2627 = vmul.f32 %v2495, %v2595
        %v2628 = vmul.f32 %v2498, %v2596
        %v2629 = vmul.f32 %v2597, 0.16666667
        %v2630 = vmul.f32 %v2598, 0.16666667
        %v2631 = vmul.f32 %v2599, 0.16666667
        %v2632 = vmul.f32 %v2600, 0.16666667
        %v2633 = vmul.f32 %v2601, 0.16666667
        %v2634 = vmul.f32 %v2602, 0.16666667
        %v2635 = vmul.f32 %v2603, 0.16666667
        %v2636 = vmul.f32 %v2604, 0.16666667
        %v2637 = vmul.f32 %v2605, 0.16666667
        %v2638 = vmul.f32 %v2606, 0.16666667
        %v2639 = vmul.f32 %v2607, 0.16666667
        %v2640 = vmul.f32 %v2608, 0.16666667
        %v2641 = vmul.f32 %v2609, 0.16666667
        %v2642 = vmul.f32 %v2610, 0.16666667
        %v2643 = vmul.f32 %v2611, 0.16666667
        %v2644 = vmul.f32 %v2612, 0.16666667
        %v2645 = vmul.f32 %v2613, 0.16666667
        %v2646 = vmul.f32 %v2614, 0.16666667
        %v2647 = vmul.f32 %v2615, 0.16666667
        %v2648 = vmul.f32 %v2616, 0.16666667
        %v2649 = vmul.f32 %v2617, 0.16666667
        %v2650 = vmul.f32 %v2618, 0.16666667
        %v2651 = vmul.f32 %v2619, 0.16666667
        %v2652 = vmul.f32 %v2620, 0.16666667
        %v2653 = vmul.f32 %v2621, 0.16666667
        %v2654 = vmul.f32 %v2622, 0.16666667
        %v2655 = vmul.f32 %v2623, 0.16666667
        %v2656 = vmul.f32 %v2624, 0.16666667
        %v2657 = vmul.f32 %v2625, 0.16666667
        %v2658 = vmul.f32 %v2626, 0.16666667
        %v2659 = vmul.f32 %v2627, 0.16666667
        %v2660 = vmul.f32 %v2628, 0.16666667
        %v2661 = vpack.c.bf16 %v2630, %v2629
        %v2662 = vpack.c.bf16 %v2632, %v2631
        %v2663 = vpack.c.bf16 %v2634, %v2633
        %v2664 = vpack.c.bf16 %v2636, %v2635
        %v2665 = vpack.c.bf16 %v2638, %v2637
        %v2666 = vpack.c.bf16 %v2640, %v2639
        %v2667 = vpack.c.bf16 %v2642, %v2641
        %v2668 = vpack.c.bf16 %v2644, %v2643
        %v2669 = vpack.c.bf16 %v2646, %v2645
        %v2670 = vpack.c.bf16 %v2648, %v2647
        %v2671 = vpack.c.bf16 %v2650, %v2649
        %v2672 = vpack.c.bf16 %v2652, %v2651
        %v2673 = vpack.c.bf16 %v2654, %v2653
        %v2674 = vpack.c.bf16 %v2656, %v2655
        %v2675 = vpack.c.bf16 %v2658, %v2657
        %v2676 = vpack.c.bf16 %v2660, %v2659
        %v2693 = vunpack.c.l.b16 %v2661
        %v2694 = vunpack.c.h.b16 %v2661
        %v2695 = vunpack.c.l.b16 %v2662
        %v2696 = vunpack.c.h.b16 %v2662
        %v2697 = vunpack.c.l.b16 %v2663
        %v2698 = vunpack.c.h.b16 %v2663
        %v2699 = vunpack.c.l.b16 %v2664
        %v2700 = vunpack.c.h.b16 %v2664
        %v2701 = vunpack.c.l.b16 %v2665
        %v2702 = vunpack.c.h.b16 %v2665
        %v2703 = vunpack.c.l.b16 %v2666
        %v2704 = vunpack.c.h.b16 %v2666
        %v2705 = vunpack.c.l.b16 %v2667
        %v2706 = vunpack.c.h.b16 %v2667
        %v2707 = vunpack.c.l.b16 %v2668
        %v2708 = vunpack.c.h.b16 %v2668
        %v2709 = vunpack.c.l.b16 %v2669
        %v2710 = vunpack.c.h.b16 %v2669
        %v2711 = vunpack.c.l.b16 %v2670
        %v2712 = vunpack.c.h.b16 %v2670
        %v2713 = vunpack.c.l.b16 %v2671
        %v2714 = vunpack.c.h.b16 %v2671
        %v2715 = vunpack.c.l.b16 %v2672
        %v2716 = vunpack.c.h.b16 %v2672
        %v2717 = vunpack.c.l.b16 %v2673
        %v2718 = vunpack.c.h.b16 %v2673
        %v2719 = vunpack.c.l.b16 %v2674
        %v2720 = vunpack.c.h.b16 %v2674
        %v2721 = vunpack.c.l.b16 %v2675
        %v2722 = vunpack.c.h.b16 %v2675
        %v2723 = vunpack.c.l.b16 %v2676
        %v2724 = vunpack.c.h.b16 %v2676
        %v2725 = vpack.c.b16 %v2693, %v2693
        %v2726 = vpack.c.b16 %v2694, %v2694
        %v2727 = vpack.c.b16 %v2695, %v2695
        %v2728 = vpack.c.b16 %v2696, %v2696
        %v2729 = vpack.c.b16 %v2697, %v2697
        %v2730 = vpack.c.b16 %v2698, %v2698
        %v2731 = vpack.c.b16 %v2699, %v2699
        %v2732 = vpack.c.b16 %v2700, %v2700
        %v2733 = vpack.c.b16 %v2701, %v2701
        %v2734 = vpack.c.b16 %v2702, %v2702
        %v2735 = vpack.c.b16 %v2703, %v2703
        %v2736 = vpack.c.b16 %v2704, %v2704
        %v2737 = vpack.c.b16 %v2705, %v2705
        %v2738 = vpack.c.b16 %v2706, %v2706
        %v2739 = vpack.c.b16 %v2707, %v2707
        %v2740 = vpack.c.b16 %v2708, %v2708
        %v2741 = vpack.c.b16 %v2709, %v2709
        %v2742 = vpack.c.b16 %v2710, %v2710
        %v2743 = vpack.c.b16 %v2711, %v2711
        %v2744 = vpack.c.b16 %v2712, %v2712
        %v2745 = vpack.c.b16 %v2713, %v2713
        %v2746 = vpack.c.b16 %v2714, %v2714
        %v2747 = vpack.c.b16 %v2715, %v2715
        %v2748 = vpack.c.b16 %v2716, %v2716
        %v2749 = vpack.c.b16 %v2717, %v2717
        %v2750 = vpack.c.b16 %v2718, %v2718
        %v2751 = vpack.c.b16 %v2719, %v2719
        %v2752 = vpack.c.b16 %v2720, %v2720
        %v2753 = vpack.c.b16 %v2721, %v2721
        %v2754 = vpack.c.b16 %v2722, %v2722
        %v2755 = vpack.c.b16 %v2723, %v2723
        %v2756 = vpack.c.b16 %v2724, %v2724
        %vm2789 = vcmask 257024
        %2790 = vst.msk [vmem:[%s343] sm:$0xf] %vm2789, %v2725
        %2791 = vst.msk [vmem:[%s343 + $0x4] sm:$0xf] %vm2789, %v2726
        %2792 = vst.msk [vmem:[%s343 + $0x8] sm:$0xf] %vm2789, %v2727
        %2793 = vst.msk [vmem:[%s343 + $0xc] sm:$0xf] %vm2789, %v2728
        %2794 = vst.msk [vmem:[%s343 + $0x10] sm:$0xf] %vm2789, %v2729
        %2795 = vst.msk [vmem:[%s343 + $0x14] sm:$0xf] %vm2789, %v2730
        %2796 = vst.msk [vmem:[%s343 + $0x18] sm:$0xf] %vm2789, %v2731
        %2797 = vst.msk [vmem:[%s343 + $0x1c] sm:$0xf] %vm2789, %v2732
        %2798 = vst.msk [vmem:[%s343 + $0x20] sm:$0xf] %vm2789, %v2733
        %2799 = vst.msk [vmem:[%s343 + $0x24] sm:$0xf] %vm2789, %v2734
        %2800 = vst.msk [vmem:[%s343 + $0x28] sm:$0xf] %vm2789, %v2735
        %2801 = vst.msk [vmem:[%s343 + $0x2c] sm:$0xf] %vm2789, %v2736
        %2802 = vst.msk [vmem:[%s343 + $0x30] sm:$0xf] %vm2789, %v2737
        %2803 = vst.msk [vmem:[%s343 + $0x34] sm:$0xf] %vm2789, %v2738
        %2804 = vst.msk [vmem:[%s343 + $0x38] sm:$0xf] %vm2789, %v2739
        %2805 = vst.msk [vmem:[%s343 + $0x3c] sm:$0xf] %vm2789, %v2740
        %2806 = vst.msk [vmem:[%s343 + $0x40] sm:$0xf] %vm2789, %v2741
        %2807 = vst.msk [vmem:[%s343 + $0x44] sm:$0xf] %vm2789, %v2742
        %2808 = vst.msk [vmem:[%s343 + $0x48] sm:$0xf] %vm2789, %v2743
        %2809 = vst.msk [vmem:[%s343 + $0x4c] sm:$0xf] %vm2789, %v2744
        %2810 = vst.msk [vmem:[%s343 + $0x50] sm:$0xf] %vm2789, %v2745
        %2811 = vst.msk [vmem:[%s343 + $0x54] sm:$0xf] %vm2789, %v2746
        %2812 = vst.msk [vmem:[%s343 + $0x58] sm:$0xf] %vm2789, %v2747
        %2813 = vst.msk [vmem:[%s343 + $0x5c] sm:$0xf] %vm2789, %v2748
        %2814 = vst.msk [vmem:[%s343 + $0x60] sm:$0xf] %vm2789, %v2749
        %2815 = vst.msk [vmem:[%s343 + $0x64] sm:$0xf] %vm2789, %v2750
        %2816 = vst.msk [vmem:[%s343 + $0x68] sm:$0xf] %vm2789, %v2751
        %2817 = vst.msk [vmem:[%s343 + $0x6c] sm:$0xf] %vm2789, %v2752
        %2818 = vst.msk [vmem:[%s343 + $0x70] sm:$0xf] %vm2789, %v2753
        %2819 = vst.msk [vmem:[%s343 + $0x74] sm:$0xf] %vm2789, %v2754
        %2820 = vst.msk [vmem:[%s343 + $0x78] sm:$0xf] %vm2789, %v2755
        %2821 = vst.msk [vmem:[%s343 + $0x7c] sm:$0xf] %vm2789, %v2756
        %p2822 = scmp.lt.s32.totalorder %s21, 1
        %s2823 = scalar_select %p2822, %s21, 1
        %s2824 = smul.addr %s2823, 32
        %s2825 = smul.addr %s2824, 4
        %s2826 = scalar_lea.vmem %s7, %s2825
        // Predicated region
        $region69: #{ssdlite_forward.4} parent=47 // pred_check
          %p2827 = pneg %p191
        $region70: #{ssdlite_forward.4} parent=47 // pred_check_branch
          %2829 = sbr.rel (%p2827) target = $region72
        $region71: #{ssdlite_forward.4} parent=47 // pred_region
          _
        $region72: #{ssdlite_forward.4} parent=47 // pred_fallthru
          _
      $region48: #{ssdlite_forward.4} parent=5 // pred_fallthru
        _
      %p2830 = scmp.le.s32.totalorder 2, %s16
      // Predicated region
      $region73: #{ssdlite_forward.4} parent=5 // pred_check
        %p2831 = pneg %p2830
      $region74: #{ssdlite_forward.4} parent=5 // pred_check_branch
        %2833 = sbr.rel (%p2831) target = $region76
      $region75: #{ssdlite_forward.4} parent=5 // pred_region
        %s2834 = ssub.s32 %s16, 2
        // Predicated region
        $region77: #{ssdlite_forward.4} parent=75 // pred_check
          %p2835 = pneg %p197
        $region78: #{ssdlite_forward.4} parent=75 // pred_check_branch
          %2837 = sbr.rel (%p2835) target = $region80
        $region79: #{ssdlite_forward.4} parent=75 // pred_region
          %p2838 = scmp.lt.s32.totalorder %s22, 1
          %s2839 = scalar_select %p2838, %s22, 1
          %s2840 = smul.addr %s2839, 32
          %s2841 = smul.addr %s2840, 4
          %s2842 = scalar_lea.vmem %s7, %s2841
        $region80: #{ssdlite_forward.4} parent=75 // pred_fallthru
          _
      $region76: #{ssdlite_forward.4} parent=5 // pred_fallthru
        _
    $region6: #{ssdlite_forward.4} parent=1 // loop_footer
      %s20 = sadd.s32 1, %s16
    $region7: #{ssdlite_forward.4} parent=1 // loop_footer_branch
      %15 = sbr.rel target = $region3
    $region8: #{ssdlite_forward.4} parent=1 // loop_exit
      _
    %2843 = vsyncpa [#allocation4], 1
    %s2844 = scalar_lea.sflag [#allocation4], 1
    %2845 = vsyncpa %s2844, 1
    %2846 = vsyncpa [#allocation6], 1
    %2847 = vsyncpa [#allocation9], 1

// kernel: ssdlite_forward.6
$region0: #{ssdlite_forward.6}
  #allocation0 [shape = 'u32[]', space=smem, size = 0x4, offset = 0x4, fixed_abs, tag = 'smem constant byte address 0x4 - core index']
  #allocation1 [shape = 'u32[144,128]{1,0:T(1,128)}', space=vmem, size = 0x12000, scoped, tag = 'internal scratch']
  #allocation2 [shape = 'f32[18,18,32]{2,1,0:T(8,128)}', space=vmem, size = 0x36000, scoped, tag = 'scratch operand']
  %s0 = inlined_call_operand.vmem [shape: bf16[2,16,16,32], index: 0, kind: input, shape index: {}]
  %s1 = inlined_call_operand.vmem [shape: f32[3,3,32], index: 1, kind: input, shape index: {}]
  %s2 = inlined_call_operand.vmem [shape: f32[1,32], index: 2, kind: input, shape index: {}]
  %s3 = inlined_call_operand.vmem [shape: bf16[32,24], index: 3, kind: input, shape index: {}]
  %s4 = inlined_call_operand.vmem [shape: f32[1,24], index: 4, kind: input, shape index: {}]
  %s5 = inlined_call_operand.vmem [shape: f32[3,3,32], index: 5, kind: input, shape index: {}]
  %s6 = inlined_call_operand.vmem [shape: f32[1,32], index: 6, kind: input, shape index: {}]
  %s7 = inlined_call_operand.vmem [shape: bf16[32,24], index: 7, kind: input, shape index: {}]
  %s8 = inlined_call_operand.vmem [shape: f32[1,24], index: 8, kind: input, shape index: {}]
  %s9 = inlined_call_operand.vmem [shape: f32[2,16,16,24], index: 9, kind: output, shape index: {0}]
  %s10 = inlined_call_operand.vmem [shape: f32[2,16,16,24], index: 10, kind: output, shape index: {1}]
  %11 = xla_tuple %s9, %s10
  %s12 = sld [smem:[#allocation0]]
  $region77: #{ssdlite_forward.6} parent=0
    _
  %s14 = ssub.s32 1, %s12
  %s15 = scalar_select 0, %s14, %s12
  loop: start=0, step=1, limit=4
  $region2: #{ssdlite_forward.6} parent=0 // loop_pre_header
    _
  $region3: #{ssdlite_forward.6} parent=0 // loop_header
    %s17 = sphi 0, %s21
    %p18 = scmp.ge.s32.totalorder %s17, 4
    %s27 = sphi 0, %s29
    %s30 = sphi 0, %s27
    %s31 = sphi 0, %s30
    %s47 = sphi 0, %s31
    %s51 = sphi 0, %s51
    %s53 = sphi 0, %s51
    %s54 = sphi 0, %s53
    %s68 = sphi 0, %s54
    %s72 = sphi 0, %s72
    %s74 = sphi 0, %s72
    %s75 = sphi 0, %s74
    %s89 = sphi 0, %s75
    %s93 = sphi 0, %s93
    %s95 = sphi 0, %s93
    %s96 = sphi 0, %s95
    %s110 = sphi 0, %s96
    %s114 = sphi 0, %s114
    %s116 = sphi 0, %s114
    %s117 = sphi 0, %s116
    %s131 = sphi 0, %s117
    %s135 = sphi 0, %s135
    %s137 = sphi 0, %s135
    %s138 = sphi 0, %s137
    %s152 = sphi 0, %s138
    %s156 = sphi 0, %s156
    %s158 = sphi 0, %s156
    %s159 = sphi 0, %s158
    %s173 = sphi 0, %s159
    %s177 = sphi 0, %s177
    %s179 = sphi 0, %s177
    %s180 = sphi 0, %s179
    %s194 = sphi 0, %s180
    %s198 = sphi 0, %s198
    %s200 = sphi 0, %s198
    %s201 = sphi 0, %s200
    %s215 = sphi 0, %s201
    %s221 = sphi 0, %s223
    %s224 = sphi 0, %s221
    %s225 = sphi 0, %s224
    %s241 = sphi 0, %s225
    %s247 = sphi 0, %s249
    %s250 = sphi 0, %s247
    %s251 = sphi 0, %s250
    %s267 = sphi 0, %s251
  $region4: #{ssdlite_forward.6} parent=0 // loop_header_branch
    %20 = sbr.rel (%p18) target = $region8
  $region5: #{ssdlite_forward.6} parent=0 // loop_body
    %s22 = ssub.s32 %s17, 1
    %s23 = ssub.s32 %s17, 2
    %s24 = sadd.s32 %s17, 1
    %s25 = ssub.s32 %s17, %s24
    %p26 = scmp.eq.s32.totalorder %s25, 0
    %s28 = sadd.s32 %s27, 1
    %s29 = scalar_select %p26, %s27, %s28
    %p32 = pneg %p26
    %p33 = scmp.eq.s32.totalorder %s17, 1
    %p34 = por %p32, %p33
    %p35 = scmp.ne.s32.totalorder %s27, %s30
    %p36 = scmp.eq.s32.totalorder %s17, 0
    %p37 = por %p35, %p36
    %p38 = scmp.ne.s32.totalorder %s27, %s30
    %p39 = scmp.eq.s32.totalorder %s22, 1
    %p40 = por %p38, %p39
    %p41 = scmp.ne.s32.totalorder %s30, %s31
    %p42 = scmp.eq.s32.totalorder %s22, 0
    %p43 = por %p41, %p42
    %p44 = scmp.ne.s32.totalorder %s30, %s31
    %p45 = scmp.eq.s32.totalorder %s23, 1
    %p46 = por %p44, %p45
    %p48 = scmp.ne.s32.totalorder %s31, %s47
    %p49 = scmp.eq.s32.totalorder %s23, 0
    %p50 = por %p48, %p49
    %s52 = sadd.s32 %s51, 1
    %p55 = scmp.eq.s32.totalorder %s17, 1
    %p56 = scmp.ne.s32.totalorder %s51, %s53
    %p57 = scmp.eq.s32.totalorder %s17, 0
    %p58 = por %p56, %p57
    %p59 = scmp.ne.s32.totalorder %s51, %s53
    %p60 = scmp.eq.s32.totalorder %s22, 1
    %p61 = por %p59, %p60
    %p62 = scmp.ne.s32.totalorder %s53, %s54
    %p63 = scmp.eq.s32.totalorder %s22, 0
    %p64 = por %p62, %p63
    %p65 = scmp.ne.s32.totalorder %s53, %s54
    %p66 = scmp.eq.s32.totalorder %s23, 1
    %p67 = por %p65, %p66
    %p69 = scmp.ne.s32.totalorder %s54, %s68
    %p70 = scmp.eq.s32.totalorder %s23, 0
    %p71 = por %p69, %p70
    %s73 = sadd.s32 %s72, 1
    %p76 = scmp.eq.s32.totalorder %s17, 1
    %p77 = scmp.ne.s32.totalorder %s72, %s74
    %p78 = scmp.eq.s32.totalorder %s17, 0
    %p79 = por %p77, %p78
    %p80 = scmp.ne.s32.totalorder %s72, %s74
    %p81 = scmp.eq.s32.totalorder %s22, 1
    %p82 = por %p80, %p81
    %p83 = scmp.ne.s32.totalorder %s74, %s75
    %p84 = scmp.eq.s32.totalorder %s22, 0
    %p85 = por %p83, %p84
    %p86 = scmp.ne.s32.totalorder %s74, %s75
    %p87 = scmp.eq.s32.totalorder %s23, 1
    %p88 = por %p86, %p87
    %p90 = scmp.ne.s32.totalorder %s75, %s89
    %p91 = scmp.eq.s32.totalorder %s23, 0
    %p92 = por %p90, %p91
    %s94 = sadd.s32 %s93, 1
    %p97 = scmp.eq.s32.totalorder %s17, 1
    %p98 = scmp.ne.s32.totalorder %s93, %s95
    %p99 = scmp.eq.s32.totalorder %s17, 0
    %p100 = por %p98, %p99
    %p101 = scmp.ne.s32.totalorder %s93, %s95
    %p102 = scmp.eq.s32.totalorder %s22, 1
    %p103 = por %p101, %p102
    %p104 = scmp.ne.s32.totalorder %s95, %s96
    %p105 = scmp.eq.s32.totalorder %s22, 0
    %p106 = por %p104, %p105
    %p107 = scmp.ne.s32.totalorder %s95, %s96
    %p108 = scmp.eq.s32.totalorder %s23, 1
    %p109 = por %p107, %p108
    %p111 = scmp.ne.s32.totalorder %s96, %s110
    %p112 = scmp.eq.s32.totalorder %s23, 0
    %p113 = por %p111, %p112
    %s115 = sadd.s32 %s114, 1
    %p118 = scmp.eq.s32.totalorder %s17, 1
    %p119 = scmp.ne.s32.totalorder %s114, %s116
    %p120 = scmp.eq.s32.totalorder %s17, 0
    %p121 = por %p119, %p120
    %p122 = scmp.ne.s32.totalorder %s114, %s116
    %p123 = scmp.eq.s32.totalorder %s22, 1
    %p124 = por %p122, %p123
    %p125 = scmp.ne.s32.totalorder %s116, %s117
    %p126 = scmp.eq.s32.totalorder %s22, 0
    %p127 = por %p125, %p126
    %p128 = scmp.ne.s32.totalorder %s116, %s117
    %p129 = scmp.eq.s32.totalorder %s23, 1
    %p130 = por %p128, %p129
    %p132 = scmp.ne.s32.totalorder %s117, %s131
    %p133 = scmp.eq.s32.totalorder %s23, 0
    %p134 = por %p132, %p133
    %s136 = sadd.s32 %s135, 1
    %p139 = scmp.eq.s32.totalorder %s17, 1
    %p140 = scmp.ne.s32.totalorder %s135, %s137
    %p141 = scmp.eq.s32.totalorder %s17, 0
    %p142 = por %p140, %p141
    %p143 = scmp.ne.s32.totalorder %s135, %s137
    %p144 = scmp.eq.s32.totalorder %s22, 1
    %p145 = por %p143, %p144
    %p146 = scmp.ne.s32.totalorder %s137, %s138
    %p147 = scmp.eq.s32.totalorder %s22, 0
    %p148 = por %p146, %p147
    %p149 = scmp.ne.s32.totalorder %s137, %s138
    %p150 = scmp.eq.s32.totalorder %s23, 1
    %p151 = por %p149, %p150
    %p153 = scmp.ne.s32.totalorder %s138, %s152
    %p154 = scmp.eq.s32.totalorder %s23, 0
    %p155 = por %p153, %p154
    %s157 = sadd.s32 %s156, 1
    %p160 = scmp.eq.s32.totalorder %s17, 1
    %p161 = scmp.ne.s32.totalorder %s156, %s158
    %p162 = scmp.eq.s32.totalorder %s17, 0
    %p163 = por %p161, %p162
    %p164 = scmp.ne.s32.totalorder %s156, %s158
    %p165 = scmp.eq.s32.totalorder %s22, 1
    %p166 = por %p164, %p165
    %p167 = scmp.ne.s32.totalorder %s158, %s159
    %p168 = scmp.eq.s32.totalorder %s22, 0
    %p169 = por %p167, %p168
    %p170 = scmp.ne.s32.totalorder %s158, %s159
    %p171 = scmp.eq.s32.totalorder %s23, 1
    %p172 = por %p170, %p171
    %p174 = scmp.ne.s32.totalorder %s159, %s173
    %p175 = scmp.eq.s32.totalorder %s23, 0
    %p176 = por %p174, %p175
    %s178 = sadd.s32 %s177, 1
    %p181 = scmp.eq.s32.totalorder %s17, 1
    %p182 = scmp.ne.s32.totalorder %s177, %s179
    %p183 = scmp.eq.s32.totalorder %s17, 0
    %p184 = por %p182, %p183
    %p185 = scmp.ne.s32.totalorder %s177, %s179
    %p186 = scmp.eq.s32.totalorder %s22, 1
    %p187 = por %p185, %p186
    %p188 = scmp.ne.s32.totalorder %s179, %s180
    %p189 = scmp.eq.s32.totalorder %s22, 0
    %p190 = por %p188, %p189
    %p191 = scmp.ne.s32.totalorder %s179, %s180
    %p192 = scmp.eq.s32.totalorder %s23, 1
    %p193 = por %p191, %p192
    %p195 = scmp.ne.s32.totalorder %s180, %s194
    %p196 = scmp.eq.s32.totalorder %s23, 0
    %p197 = por %p195, %p196
    %s199 = sadd.s32 %s198, 1
    %p202 = scmp.eq.s32.totalorder %s17, 1
    %p203 = scmp.ne.s32.totalorder %s198, %s200
    %p204 = scmp.eq.s32.totalorder %s17, 0
    %p205 = por %p203, %p204
    %p206 = scmp.ne.s32.totalorder %s198, %s200
    %p207 = scmp.eq.s32.totalorder %s22, 1
    %p208 = por %p206, %p207
    %p209 = scmp.ne.s32.totalorder %s200, %s201
    %p210 = scmp.eq.s32.totalorder %s22, 0
    %p211 = por %p209, %p210
    %p212 = scmp.ne.s32.totalorder %s200, %s201
    %p213 = scmp.eq.s32.totalorder %s23, 1
    %p214 = por %p212, %p213
    %p216 = scmp.ne.s32.totalorder %s201, %s215
    %p217 = scmp.eq.s32.totalorder %s23, 0
    %p218 = por %p216, %p217
    %s219 = ssub.s32 %s17, %s24
    %p220 = scmp.eq.s32.totalorder %s219, 0
    %s222 = sadd.s32 %s221, 1
    %s223 = scalar_select %p220, %s221, %s222
    %p226 = pneg %p220
    %p227 = scmp.eq.s32.totalorder %s17, 1
    %p228 = por %p226, %p227
    %p229 = scmp.ne.s32.totalorder %s221, %s224
    %p230 = scmp.eq.s32.totalorder %s17, 0
    %p231 = por %p229, %p230
    %p232 = scmp.ne.s32.totalorder %s221, %s224
    %p233 = scmp.eq.s32.totalorder %s22, 1
    %p234 = por %p232, %p233
    %p235 = scmp.ne.s32.totalorder %s224, %s225
    %p236 = scmp.eq.s32.totalorder %s22, 0
    %p237 = por %p235, %p236
    %p238 = scmp.ne.s32.totalorder %s224, %s225
    %p239 = scmp.eq.s32.totalorder %s23, 1
    %p240 = por %p238, %p239
    %p242 = scmp.ne.s32.totalorder %s225, %s241
    %p243 = scmp.eq.s32.totalorder %s23, 0
    %p244 = por %p242, %p243
    %s245 = ssub.s32 %s17, %s24
    %p246 = scmp.eq.s32.totalorder %s245, 0
    %s248 = sadd.s32 %s247, 1
    %s249 = scalar_select %p246, %s247, %s248
    %p252 = pneg %p246
    %p253 = scmp.eq.s32.totalorder %s17, 1
    %p254 = por %p252, %p253
    %p255 = scmp.ne.s32.totalorder %s247, %s250
    %p256 = scmp.eq.s32.totalorder %s17, 0
    %p257 = por %p255, %p256
    %p258 = scmp.ne.s32.totalorder %s247, %s250
    %p259 = scmp.eq.s32.totalorder %s22, 1
    %p260 = por %p258, %p259
    %p261 = scmp.ne.s32.totalorder %s250, %s251
    %p262 = scmp.eq.s32.totalorder %s22, 0
    %p263 = por %p261, %p262
    %p264 = scmp.ne.s32.totalorder %s250, %s251
    %p265 = scmp.eq.s32.totalorder %s23, 1
    %p266 = por %p264, %p265
    %p268 = scmp.ne.s32.totalorder %s251, %s267
    %p269 = scmp.eq.s32.totalorder %s23, 0
    %p270 = por %p268, %p269
    %p271 = scmp.le.s32.totalorder 1, %s17
    %p272 = scmp.lt.s32.totalorder %s17, 3
    %p273 = pnand %p271, %p272
    %p274 = pneg %p273
    // Predicated region
    $region9: #{ssdlite_forward.6} parent=5 // pred_check
      _
    $region10: #{ssdlite_forward.6} parent=5 // pred_check_branch
      %276 = sbr.rel (%p273) target = $region12
    $region11: #{ssdlite_forward.6} parent=5 // pred_region
      %s277 = ssub.s32 %s17, 1
      // Predicated region
      $region13: #{ssdlite_forward.6} parent=11 // pred_check
        %p278 = pneg %p64
      $region14: #{ssdlite_forward.6} parent=11 // pred_check_branch
        %280 = sbr.rel (%p278) target = $region16
      $region15: #{ssdlite_forward.6} parent=11 // pred_region
        _
      $region16: #{ssdlite_forward.6} parent=11 // pred_fallthru
        _
      // Predicated region
      $region17: #{ssdlite_forward.6} parent=11 // pred_check
        %p281 = pneg %p85
      $region18: #{ssdlite_forward.6} parent=11 // pred_check_branch
        %283 = sbr.rel (%p281) target = $region20
      $region19: #{ssdlite_forward.6} parent=11 // pred_region
        _
      $region20: #{ssdlite_forward.6} parent=11 // pred_fallthru
        _
      // Predicated region
      $region21: #{ssdlite_forward.6} parent=11 // pred_check
        %p284 = pneg %p106
      $region22: #{ssdlite_forward.6} parent=11 // pred_check_branch
        %286 = sbr.rel (%p284) target = $region24
      $region23: #{ssdlite_forward.6} parent=11 // pred_region
        _
      $region24: #{ssdlite_forward.6} parent=11 // pred_fallthru
        _
      // Predicated region
      $region25: #{ssdlite_forward.6} parent=11 // pred_check
        %p287 = pneg %p127
      $region26: #{ssdlite_forward.6} parent=11 // pred_check_branch
        %289 = sbr.rel (%p287) target = $region28
      $region27: #{ssdlite_forward.6} parent=11 // pred_region
        _
      $region28: #{ssdlite_forward.6} parent=11 // pred_fallthru
        _
      // Predicated region
      $region29: #{ssdlite_forward.6} parent=11 // pred_check
        %p290 = pneg %p148
      $region30: #{ssdlite_forward.6} parent=11 // pred_check_branch
        %292 = sbr.rel (%p290) target = $region32
      $region31: #{ssdlite_forward.6} parent=11 // pred_region
        _
      $region32: #{ssdlite_forward.6} parent=11 // pred_fallthru
        _
      // Predicated region
      $region33: #{ssdlite_forward.6} parent=11 // pred_check
        %p293 = pneg %p169
      $region34: #{ssdlite_forward.6} parent=11 // pred_check_branch
        %295 = sbr.rel (%p293) target = $region36
      $region35: #{ssdlite_forward.6} parent=11 // pred_region
        _
      $region36: #{ssdlite_forward.6} parent=11 // pred_fallthru
        _
      // Predicated region
      $region37: #{ssdlite_forward.6} parent=11 // pred_check
        %p296 = pneg %p190
      $region38: #{ssdlite_forward.6} parent=11 // pred_check_branch
        %298 = sbr.rel (%p296) target = $region40
      $region39: #{ssdlite_forward.6} parent=11 // pred_region
        _
      $region40: #{ssdlite_forward.6} parent=11 // pred_fallthru
        _
      // Predicated region
      $region41: #{ssdlite_forward.6} parent=11 // pred_check
        %p299 = pneg %p211
      $region42: #{ssdlite_forward.6} parent=11 // pred_check_branch
        %301 = sbr.rel (%p299) target = $region44
      $region43: #{ssdlite_forward.6} parent=11 // pred_region
        _
      $region44: #{ssdlite_forward.6} parent=11 // pred_fallthru
        _
    $region12: #{ssdlite_forward.6} parent=5 // pred_fallthru
      _
    %p302 = scmp.lt.s32.totalorder %s17, 2
    // Predicated region
    $region45: #{ssdlite_forward.6} parent=5 // pred_check
      %p303 = pneg %p302
    $region46: #{ssdlite_forward.6} parent=5 // pred_check_branch
      %305 = sbr.rel (%p303) target = $region48
    $region47: #{ssdlite_forward.6} parent=5 // pred_region
      // Predicated region
      $region49: #{ssdlite_forward.6} parent=47 // pred_check
        %p306 = pneg %p37
      $region50: #{ssdlite_forward.6} parent=47 // pred_check_branch
        %308 = sbr.rel (%p306) target = $region52
      $region51: #{ssdlite_forward.6} parent=47 // pred_region
        %p309 = scmp.lt.s32.totalorder %s17, 1
        %s310 = scalar_select %p309, %s17, 1
        %s311 = smul.addr %s310, 32
        %s312 = smul.addr %s311, 4
        %s313 = scalar_lea.vmem %s0, %s312
      $region52: #{ssdlite_forward.6} parent=47 // pred_fallthru
        _
    $region48: #{ssdlite_forward.6} parent=5 // pred_fallthru
      _
    %p314 = scmp.le.s32.totalorder 1, %s17
    %p315 = scmp.lt.s32.totalorder %s17, 3
    %p316 = pnand %p314, %p315
    %p317 = pneg %p316
    // Predicated region
    $region53: #{ssdlite_forward.6} parent=5 // pred_check
      _
    $region54: #{ssdlite_forward.6} parent=5 // pred_check_branch
      %319 = sbr.rel (%p316) target = $region56
    $region55: #{ssdlite_forward.6} parent=5 // pred_region
      %s320 = ssub.s32 %s17, 1
      %p321 = scmp.lt.s32.totalorder %s22, 1
      %s322 = scalar_select %p321, %s22, 1
      %s323 = smul.addr %s322, 32
      %s324 = smul.addr %s323, 4
      %s325 = scalar_lea.vmem %s0, %s324
      %p326 = pneg %p43
      %p327 = pneg %p40
      %p328 = pneg %p64
      %p329 = pneg %p61
      %p330 = pneg %p85
      %p331 = pneg %p82
      %p332 = pneg %p106
      %p333 = pneg %p103
      %p334 = pneg %p127
      %p335 = pneg %p124
      %p336 = pneg %p148
      %p337 = pneg %p145
      %p338 = pneg %p169
      %p339 = pneg %p166
      %p340 = pneg %p190
      %p341 = pneg %p187
      %p342 = pneg %p211
      %p343 = pneg %p208
      %p344 = pneg %p237
      %p345 = pneg %p234
      %p346 = scmp.lt.s32.totalorder %s22, 1
      %s347 = scalar_select %p346, %s22, 1
      %s348 = smul.addr %s347, 32
      %s349 = smul.addr %s348, 8
      %s350 = scalar_lea.vmem %s9, %s349
      %p351 = pneg %p263
      %p352 = pneg %p260
      %p353 = scmp.lt.s32.totalorder %s22, 1
      %s354 = scalar_select %p353, %s22, 1
      %s355 = smul.addr %s354, 32
      %s356 = smul.addr %s355, 8
      %s357 = scalar_lea.vmem %s10, %s356
      %p358 = scmp.lt.s32.totalorder %s22, 1
      %s359 = scalar_select %p358, %s22, 1
      %s360 = smul.addr %s359, 32
      %s361 = smul.addr %s360, 4
      %s362 = scalar_lea.vmem %s0, %s361
      %p363 = scmp.lt.s32.totalorder %s22, 1
      %s364 = scalar_select %p363, %s22, 1
      %s365 = smul.addr %s364, 32
      %s366 = smul.addr %s365, 8
      %s367 = scalar_lea.vmem %s9, %s366
      %p368 = scmp.lt.s32.totalorder %s22, 1
      %s369 = scalar_select %p368, %s22, 1
      %s370 = smul.addr %s369, 32
      %s371 = smul.addr %s370, 8
      %s372 = scalar_lea.vmem %s10, %s371
      %v374 = vld [vmem:[%s362] sm:$0xf]
      %v375 = vld [vmem:[%s362 + $0x4] sm:$0xf]
      %v376 = vld [vmem:[%s362 + $0x8] sm:$0xf]
      %v377 = vld [vmem:[%s362 + $0xc] sm:$0xf]
      %v378 = vld [vmem:[%s362 + $0x10] sm:$0xf]
      %v379 = vld [vmem:[%s362 + $0x14] sm:$0xf]
      %v380 = vld [vmem:[%s362 + $0x18] sm:$0xf]
      %v381 = vld [vmem:[%s362 + $0x1c] sm:$0xf]
      %v382 = vld [vmem:[%s362 + $0x20] sm:$0xf]
      %v383 = vld [vmem:[%s362 + $0x24] sm:$0xf]
      %v384 = vld [vmem:[%s362 + $0x28] sm:$0xf]
      %v385 = vld [vmem:[%s362 + $0x2c] sm:$0xf]
      %v386 = vld [vmem:[%s362 + $0x30] sm:$0xf]
      %v387 = vld [vmem:[%s362 + $0x34] sm:$0xf]
      %v388 = vld [vmem:[%s362 + $0x38] sm:$0xf]
      %v389 = vld [vmem:[%s362 + $0x3c] sm:$0xf]
      %v390 = vld [vmem:[%s362 + $0x40] sm:$0xf]
      %v391 = vld [vmem:[%s362 + $0x44] sm:$0xf]
      %v392 = vld [vmem:[%s362 + $0x48] sm:$0xf]
      %v393 = vld [vmem:[%s362 + $0x4c] sm:$0xf]
      %v394 = vld [vmem:[%s362 + $0x50] sm:$0xf]
      %v395 = vld [vmem:[%s362 + $0x54] sm:$0xf]
      %v396 = vld [vmem:[%s362 + $0x58] sm:$0xf]
      %v397 = vld [vmem:[%s362 + $0x5c] sm:$0xf]
      %v398 = vld [vmem:[%s362 + $0x60] sm:$0xf]
      %v399 = vld [vmem:[%s362 + $0x64] sm:$0xf]
      %v400 = vld [vmem:[%s362 + $0x68] sm:$0xf]
      %v401 = vld [vmem:[%s362 + $0x6c] sm:$0xf]
      %v402 = vld [vmem:[%s362 + $0x70] sm:$0xf]
      %v403 = vld [vmem:[%s362 + $0x74] sm:$0xf]
      %v404 = vld [vmem:[%s362 + $0x78] sm:$0xf]
      %v405 = vld [vmem:[%s362 + $0x7c] sm:$0xf]
      %v406 = vunpack.c.l.bf16 %v374
      %v407 = vunpack.c.l.bf16 %v375
      %v408 = vunpack.c.l.bf16 %v376
      %v409 = vunpack.c.l.bf16 %v377
      %v410 = vunpack.c.l.bf16 %v378
      %v411 = vunpack.c.l.bf16 %v379
      %v412 = vunpack.c.l.bf16 %v380
      %v413 = vunpack.c.l.bf16 %v381
      %v414 = vunpack.c.l.bf16 %v382
      %v415 = vunpack.c.l.bf16 %v383
      %v416 = vunpack.c.l.bf16 %v384
      %v417 = vunpack.c.l.bf16 %v385
      %v418 = vunpack.c.l.bf16 %v386
      %v419 = vunpack.c.l.bf16 %v387
      %v420 = vunpack.c.l.bf16 %v388
      %v421 = vunpack.c.l.bf16 %v389
      %v422 = vunpack.c.l.bf16 %v390
      %v423 = vunpack.c.l.bf16 %v391
      %v424 = vunpack.c.l.bf16 %v392
      %v425 = vunpack.c.l.bf16 %v393
      %v426 = vunpack.c.l.bf16 %v394
      %v427 = vunpack.c.l.bf16 %v395
      %v428 = vunpack.c.l.bf16 %v396
      %v429 = vunpack.c.l.bf16 %v397
      %v430 = vunpack.c.l.bf16 %v398
      %v431 = vunpack.c.l.bf16 %v399
      %v432 = vunpack.c.l.bf16 %v400
      %v433 = vunpack.c.l.bf16 %v401
      %v434 = vunpack.c.l.bf16 %v402
      %v435 = vunpack.c.l.bf16 %v403
      %v436 = vunpack.c.l.bf16 %v404
      %v437 = vunpack.c.l.bf16 %v405
      %v438 = vld [vmem:[%s1] sm:$0x7]
      %v439 = vld [vmem:[%s1 + $0x4] sm:$0x7]
      %v440 = vld [vmem:[%s1 + $0x8] sm:$0x7]
      %v441 = vld [vmem:[%s2] sm:$0x1]
      %vm442 = vcmask 261120
      %443 = vst.msk [vmem:[#allocation2] sm:$0xff] %vm442, 0.0
      %444 = vst.msk [vmem:[#allocation2 + $0x8] sm:$0xff] %vm442, 0.0
      %vm445 = vcmask 254976
      %446 = vst.msk [vmem:[#allocation2 + $0x10] sm:$0x3] %vm445, 0.0
      %447 = vst.msk [vmem:[#allocation2 + $0x18] sm:$0xff] %vm442, 0.0
      %448 = vst.msk [vmem:[#allocation2 + $0x20] sm:$0xff] %vm442, 0.0
      %449 = vst.msk [vmem:[#allocation2 + $0x28] sm:$0x3] %vm445, 0.0
      %450 = vst.msk [vmem:[#allocation2 + $0x30] sm:$0xff] %vm442, 0.0
      %451 = vst.msk [vmem:[#allocation2 + $0x38] sm:$0xff] %vm442, 0.0
      %452 = vst.msk [vmem:[#allocation2 + $0x40] sm:$0x3] %vm445, 0.0
      %453 = vst.msk [vmem:[#allocation2 + $0x48] sm:$0xff] %vm442, 0.0
      %454 = vst.msk [vmem:[#allocation2 + $0x50] sm:$0xff] %vm442, 0.0
      %455 = vst.msk [vmem:[#allocation2 + $0x58] sm:$0x3] %vm445, 0.0
      %456 = vst.msk [vmem:[#allocation2 + $0x60] sm:$0xff] %vm442, 0.0
      %457 = vst.msk [vmem:[#allocation2 + $0x68] sm:$0xff] %vm442, 0.0
      %458 = vst.msk [vmem:[#allocation2 + $0x70] sm:$0x3] %vm445, 0.0
      %459 = vst.msk [vmem:[#allocation2 + $0x78] sm:$0xff] %vm442, 0.0
      %460 = vst.msk [vmem:[#allocation2 + $0x80] sm:$0xff] %vm442, 0.0
      %461 = vst.msk [vmem:[#allocation2 + $0x88] sm:$0x3] %vm445, 0.0
      %462 = vst.msk [vmem:[#allocation2 + $0x90] sm:$0xff] %vm442, 0.0
      %463 = vst.msk [vmem:[#allocation2 + $0x98] sm:$0xff] %vm442, 0.0
      %464 = vst.msk [vmem:[#allocation2 + $0xa0] sm:$0x3] %vm445, 0.0
      %465 = vst.msk [vmem:[#allocation2 + $0xa8] sm:$0xff] %vm442, 0.0
      %466 = vst.msk [vmem:[#allocation2 + $0xb0] sm:$0xff] %vm442, 0.0
      %467 = vst.msk [vmem:[#allocation2 + $0xb8] sm:$0x3] %vm445, 0.0
      %468 = vst.msk [vmem:[#allocation2 + $0xc0] sm:$0xff] %vm442, 0.0
      %469 = vst.msk [vmem:[#allocation2 + $0xc8] sm:$0xff] %vm442, 0.0
      %470 = vst.msk [vmem:[#allocation2 + $0xd0] sm:$0x3] %vm445, 0.0
      %471 = vst.msk [vmem:[#allocation2 + $0xd8] sm:$0xff] %vm442, 0.0
      %472 = vst.msk [vmem:[#allocation2 + $0xe0] sm:$0xff] %vm442, 0.0
      %473 = vst.msk [vmem:[#allocation2 + $0xe8] sm:$0x3] %vm445, 0.0
      %474 = vst.msk [vmem:[#allocation2 + $0xf0] sm:$0xff] %vm442, 0.0
      %475 = vst.msk [vmem:[#allocation2 + $0xf8] sm:$0xff] %vm442, 0.0
      %476 = vst.msk [vmem:[#allocation2 + $0x100] sm:$0x3] %vm445, 0.0
      %477 = vst.msk [vmem:[#allocation2 + $0x108] sm:$0xff] %vm442, 0.0
      %478 = vst.msk [vmem:[#allocation2 + $0x110] sm:$0xff] %vm442, 0.0
      %479 = vst.msk [vmem:[#allocation2 + $0x118] sm:$0x3] %vm445, 0.0
      %480 = vst.msk [vmem:[#allocation2 + $0x120] sm:$0xff] %vm442, 0.0
      %481 = vst.msk [vmem:[#allocation2 + $0x128] sm:$0xff] %vm442, 0.0
      %482 = vst.msk [vmem:[#allocation2 + $0x130] sm:$0x3] %vm445, 0.0
      %483 = vst.msk [vmem:[#allocation2 + $0x138] sm:$0xff] %vm442, 0.0
      %484 = vst.msk [vmem:[#allocation2 + $0x140] sm:$0xff] %vm442, 0.0
      %485 = vst.msk [vmem:[#allocation2 + $0x148] sm:$0x3] %vm445, 0.0
      %486 = vst.msk [vmem:[#allocation2 + $0x150] sm:$0xff] %vm442, 0.0
      %487 = vst.msk [vmem:[#allocation2 + $0x158] sm:$0xff] %vm442, 0.0
      %488 = vst.msk [vmem:[#allocation2 + $0x160] sm:$0x3] %vm445, 0.0
      %489 = vst.msk [vmem:[#allocation2 + $0x168] sm:$0xff] %vm442, 0.0
      %490 = vst.msk [vmem:[#allocation2 + $0x170] sm:$0xff] %vm442, 0.0
      %491 = vst.msk [vmem:[#allocation2 + $0x178] sm:$0x3] %vm445, 0.0
      %492 = vst.msk [vmem:[#allocation2 + $0x180] sm:$0xff] %vm442, 0.0
      %493 = vst.msk [vmem:[#allocation2 + $0x188] sm:$0xff] %vm442, 0.0
      %494 = vst.msk [vmem:[#allocation2 + $0x190] sm:$0x3] %vm445, 0.0
      %495 = vst.msk [vmem:[#allocation2 + $0x198] sm:$0xff] %vm442, 0.0
      %496 = vst.msk [vmem:[#allocation2 + $0x1a0] sm:$0xff] %vm442, 0.0
      %497 = vst.msk [vmem:[#allocation2 + $0x1a8] sm:$0x3] %vm445, 0.0
      %s498 = scalar_lea.vmem [#allocation2], 24
      %499 = vst.msk [vmem:[%s498 + $0x1] sm:$0xff] %vm442, %v406
      %500 = vst.msk [vmem:[%s498 + $0x9] sm:$0xff] %vm442, %v407
      %501 = vst.msk [vmem:[%s498 + $0x19] sm:$0xff] %vm442, %v408
      %502 = vst.msk [vmem:[%s498 + $0x21] sm:$0xff] %vm442, %v409
      %503 = vst.msk [vmem:[%s498 + $0x31] sm:$0xff] %vm442, %v410
      %504 = vst.msk [vmem:[%s498 + $0x39] sm:$0xff] %vm442, %v411
      %505 = vst.msk [vmem:[%s498 + $0x49] sm:$0xff] %vm442, %v412
      %506 = vst.msk [vmem:[%s498 + $0x51] sm:$0xff] %vm442, %v413
      %507 = vst.msk [vmem:[%s498 + $0x61] sm:$0xff] %vm442, %v414
      %508 = vst.msk [vmem:[%s498 + $0x69] sm:$0xff] %vm442, %v415
      %509 = vst.msk [vmem:[%s498 + $0x79] sm:$0xff] %vm442, %v416
      %510 = vst.msk [vmem:[%s498 + $0x81] sm:$0xff] %vm442, %v417
      %511 = vst.msk [vmem:[%s498 + $0x91] sm:$0xff] %vm442, %v418
      %512 = vst.msk [vmem:[%s498 + $0x99] sm:$0xff] %vm442, %v419
      %513 = vst.msk [vmem:[%s498 + $0xa9] sm:$0xff] %vm442, %v420
      %514 = vst.msk [vmem:[%s498 + $0xb1] sm:$0xff] %vm442, %v421
      %515 = vst.msk [vmem:[%s498 + $0xc1] sm:$0xff] %vm442, %v422
      %516 = vst.msk [vmem:[%s498 + $0xc9] sm:$0xff] %vm442, %v423
      %517 = vst.msk [vmem:[%s498 + $0xd9] sm:$0xff] %vm442, %v424
      %518 = vst.msk [vmem:[%s498 + $0xe1] sm:$0xff] %vm442, %v425
      %519 = vst.msk [vmem:[%s498 + $0xf1] sm:$0xff] %vm442, %v426
      %520 = vst.msk [vmem:[%s498 + $0xf9] sm:$0xff] %vm442, %v427
      %521 = vst.msk [vmem:[%s498 + $0x109] sm:$0xff] %vm442, %v428
      %522 = vst.msk [vmem:[%s498 + $0x111] sm:$0xff] %vm442, %v429
      %523 = vst.msk [vmem:[%s498 + $0x121] sm:$0xff] %vm442, %v430
      %524 = vst.msk [vmem:[%s498 + $0x129] sm:$0xff] %vm442, %v431
      %525 = vst.msk [vmem:[%s498 + $0x139] sm:$0xff] %vm442, %v432
      %526 = vst.msk [vmem:[%s498 + $0x141] sm:$0xff] %vm442, %v433
      %527 = vst.msk [vmem:[%s498 + $0x151] sm:$0xff] %vm442, %v434
      %528 = vst.msk [vmem:[%s498 + $0x159] sm:$0xff] %vm442, %v435
      %529 = vst.msk [vmem:[%s498 + $0x169] sm:$0xff] %vm442, %v436
      %530 = vst.msk [vmem:[%s498 + $0x171] sm:$0xff] %vm442, %v437
      %v531 = vld [vmem:[#allocation2] sm:$0xff]
      %v532 = vld [vmem:[#allocation2 + $0x8] sm:$0xff]
      %v533 = vld [vmem:[#allocation2 + $0x18] sm:$0xff]
      %v534 = vld [vmem:[#allocation2 + $0x20] sm:$0xff]
      %v535 = vld [vmem:[#allocation2 + $0x30] sm:$0xff]
      %v536 = vld [vmem:[#allocation2 + $0x38] sm:$0xff]
      %v537 = vld [vmem:[#allocation2 + $0x48] sm:$0xff]
      %v538 = vld [vmem:[#allocation2 + $0x50] sm:$0xff]
      %v539 = vld [vmem:[#allocation2 + $0x60] sm:$0xff]
      %v540 = vld [vmem:[#allocation2 + $0x68] sm:$0xff]
      %v541 = vld [vmem:[#allocation2 + $0x78] sm:$0xff]
      %v542 = vld [vmem:[#allocation2 + $0x80] sm:$0xff]
      %v543 = vld [vmem:[#allocation2 + $0x90] sm:$0xff]
      %v544 = vld [vmem:[#allocation2 + $0x98] sm:$0xff]
      %v545 = vld [vmem:[#allocation2 + $0xa8] sm:$0xff]
      %v546 = vld [vmem:[#allocation2 + $0xb0] sm:$0xff]
      %v547 = vld [vmem:[#allocation2 + $0xc0] sm:$0xff]
      %v548 = vld [vmem:[#allocation2 + $0xc8] sm:$0xff]
      %v549 = vld [vmem:[#allocation2 + $0xd8] sm:$0xff]
      %v550 = vld [vmem:[#allocation2 + $0xe0] sm:$0xff]
      %v551 = vld [vmem:[#allocation2 + $0xf0] sm:$0xff]
      %v552 = vld [vmem:[#allocation2 + $0xf8] sm:$0xff]
      %v553 = vld [vmem:[#allocation2 + $0x108] sm:$0xff]
      %v554 = vld [vmem:[#allocation2 + $0x110] sm:$0xff]
      %v555 = vld [vmem:[#allocation2 + $0x120] sm:$0xff]
      %v556 = vld [vmem:[#allocation2 + $0x128] sm:$0xff]
      %v557 = vld [vmem:[#allocation2 + $0x138] sm:$0xff]
      %v558 = vld [vmem:[#allocation2 + $0x140] sm:$0xff]
      %v559 = vld [vmem:[#allocation2 + $0x150] sm:$0xff]
      %v560 = vld [vmem:[#allocation2 + $0x158] sm:$0xff]
      %v561 = vld [vmem:[#allocation2 + $0x168] sm:$0xff]
      %v562 = vld [vmem:[#allocation2 + $0x170] sm:$0xff]
      %v563 = vlaneseq
      %v564 = vshrl.u32 %v563, 7
      %v565 = vsub.s32 0, %v564
      %v566 = vrot.slane %v438, %v565
      %v567 = vmul.f32 %v531, %v566
      %v568 = vmul.f32 %v532, %v566
      %v569 = vmul.f32 %v533, %v566
      %v570 = vmul.f32 %v534, %v566
      %v571 = vmul.f32 %v535, %v566
      %v572 = vmul.f32 %v536, %v566
      %v573 = vmul.f32 %v537, %v566
      %v574 = vmul.f32 %v538, %v566
      %v575 = vmul.f32 %v539, %v566
      %v576 = vmul.f32 %v540, %v566
      %v577 = vmul.f32 %v541, %v566
      %v578 = vmul.f32 %v542, %v566
      %v579 = vmul.f32 %v543, %v566
      %v580 = vmul.f32 %v544, %v566
      %v581 = vmul.f32 %v545, %v566
      %v582 = vmul.f32 %v546, %v566
      %v583 = vmul.f32 %v547, %v566
      %v584 = vmul.f32 %v548, %v566
      %v585 = vmul.f32 %v549, %v566
      %v586 = vmul.f32 %v550, %v566
      %v587 = vmul.f32 %v551, %v566
      %v588 = vmul.f32 %v552, %v566
      %v589 = vmul.f32 %v553, %v566
      %v590 = vmul.f32 %v554, %v566
      %v591 = vmul.f32 %v555, %v566
      %v592 = vmul.f32 %v556, %v566
      %v593 = vmul.f32 %v557, %v566
      %v594 = vmul.f32 %v558, %v566
      %v595 = vmul.f32 %v559, %v566
      %v596 = vmul.f32 %v560, %v566
      %v597 = vmul.f32 %v561, %v566
      %v598 = vmul.f32 %v562, %v566
      %v599 = vadd.f32 %v567, 0.0
      %v600 = vadd.f32 %v568, 0.0
      %v601 = vadd.f32 %v569, 0.0
      %v602 = vadd.f32 %v570, 0.0
      %v603 = vadd.f32 %v571, 0.0
      %v604 = vadd.f32 %v572, 0.0
      %v605 = vadd.f32 %v573, 0.0
      %v606 = vadd.f32 %v574, 0.0
      %v607 = vadd.f32 %v575, 0.0
      %v608 = vadd.f32 %v576, 0.0
      %v609 = vadd.f32 %v577, 0.0
      %v610 = vadd.f32 %v578, 0.0
      %v611 = vadd.f32 %v579, 0.0
      %v612 = vadd.f32 %v580, 0.0
      %v613 = vadd.f32 %v581, 0.0
      %v614 = vadd.f32 %v582, 0.0
      %v615 = vadd.f32 %v583, 0.0
      %v616 = vadd.f32 %v584, 0.0
      %v617 = vadd.f32 %v585, 0.0
      %v618 = vadd.f32 %v586, 0.0
      %v619 = vadd.f32 %v587, 0.0
      %v620 = vadd.f32 %v588, 0.0
      %v621 = vadd.f32 %v589, 0.0
      %v622 = vadd.f32 %v590, 0.0
      %v623 = vadd.f32 %v591, 0.0
      %v624 = vadd.f32 %v592, 0.0
      %v625 = vadd.f32 %v593, 0.0
      %v626 = vadd.f32 %v594, 0.0
      %v627 = vadd.f32 %v595, 0.0
      %v628 = vadd.f32 %v596, 0.0
      %v629 = vadd.f32 %v597, 0.0
      %v630 = vadd.f32 %v598, 0.0
      %v631 = vld [vmem:[#allocation2 + $0x1] sm:$0xff]
      %v632 = vld [vmem:[#allocation2 + $0x9] sm:$0xff]
      %v633 = vld [vmem:[#allocation2 + $0x19] sm:$0xff]
      %v634 = vld [vmem:[#allocation2 + $0x21] sm:$0xff]
      %v635 = vld [vmem:[#allocation2 + $0x31] sm:$0xff]
      %v636 = vld [vmem:[#allocation2 + $0x39] sm:$0xff]
      %v637 = vld [vmem:[#allocation2 + $0x49] sm:$0xff]
      %v638 = vld [vmem:[#allocation2 + $0x51] sm:$0xff]
      %v639 = vld [vmem:[#allocation2 + $0x61] sm:$0xff]
      %v640 = vld [vmem:[#allocation2 + $0x69] sm:$0xff]
      %v641 = vld [vmem:[#allocation2 + $0x79] sm:$0xff]
      %v642 = vld [vmem:[#allocation2 + $0x81] sm:$0xff]
      %v643 = vld [vmem:[#allocation2 + $0x91] sm:$0xff]
      %v644 = vld [vmem:[#allocation2 + $0x99] sm:$0xff]
      %v645 = vld [vmem:[#allocation2 + $0xa9] sm:$0xff]
      %v646 = vld [vmem:[#allocation2 + $0xb1] sm:$0xff]
      %v647 = vld [vmem:[#allocation2 + $0xc1] sm:$0xff]
      %v648 = vld [vmem:[#allocation2 + $0xc9] sm:$0xff]
      %v649 = vld [vmem:[#allocation2 + $0xd9] sm:$0xff]
      %v650 = vld [vmem:[#allocation2 + $0xe1] sm:$0xff]
      %v651 = vld [vmem:[#allocation2 + $0xf1] sm:$0xff]
      %v652 = vld [vmem:[#allocation2 + $0xf9] sm:$0xff]
      %v653 = vld [vmem:[#allocation2 + $0x109] sm:$0xff]
      %v654 = vld [vmem:[#allocation2 + $0x111] sm:$0xff]
      %v655 = vld [vmem:[#allocation2 + $0x121] sm:$0xff]
      %v656 = vld [vmem:[#allocation2 + $0x129] sm:$0xff]
      %v657 = vld [vmem:[#allocation2 + $0x139] sm:$0xff]
      %v658 = vld [vmem:[#allocation2 + $0x141] sm:$0xff]
      %v659 = vld [vmem:[#allocation2 + $0x151] sm:$0xff]
      %v660 = vld [vmem:[#allocation2 + $0x159] sm:$0xff]
      %v661 = vld [vmem:[#allocation2 + $0x169] sm:$0xff]
      %v662 = vld [vmem:[#allocation2 + $0x171] sm:$0xff]
      %v663 = vlaneseq
      %v664 = vshrl.u32 %v663, 7
      %v665 = vsub.s32 1, %v664
      %v666 = vrot.slane %v438, %v665
      %v667 = vmul.f32 %v631, %v666
      %v668 = vmul.f32 %v632, %v666
      %v669 = vmul.f32 %v633, %v666
      %v670 = vmul.f32 %v634, %v666
      %v671 = vmul.f32 %v635, %v666
      %v672 = vmul.f32 %v636, %v666
      %v673 = vmul.f32 %v637, %v666
      %v674 = vmul.f32 %v638, %v666
      %v675 = vmul.f32 %v639, %v666
      %v676 = vmul.f32 %v640, %v666
      %v677 = vmul.f32 %v641, %v666
      %v678 = vmul.f32 %v642, %v666
      %v679 = vmul.f32 %v643, %v666
      %v680 = vmul.f32 %v644, %v666
      %v681 = vmul.f32 %v645, %v666
      %v682 = vmul.f32 %v646, %v666
      %v683 = vmul.f32 %v647, %v666
      %v684 = vmul.f32 %v648, %v666
      %v685 = vmul.f32 %v649, %v666
      %v686 = vmul.f32 %v650, %v666
      %v687 = vmul.f32 %v651, %v666
      %v688 = vmul.f32 %v652, %v666
      %v689 = vmul.f32 %v653, %v666
      %v690 = vmul.f32 %v654, %v666
      %v691 = vmul.f32 %v655, %v666
      %v692 = vmul.f32 %v656, %v666
      %v693 = vmul.f32 %v657, %v666
      %v694 = vmul.f32 %v658, %v666
      %v695 = vmul.f32 %v659, %v666
      %v696 = vmul.f32 %v660, %v666
      %v697 = vmul.f32 %v661, %v666
      %v698 = vmul.f32 %v662, %v666
      %v699 = vadd.f32 %v599, %v667
      %v700 = vadd.f32 %v600, %v668
      %v701 = vadd.f32 %v601, %v669
      %v702 = vadd.f32 %v602, %v670
      %v703 = vadd.f32 %v603, %v671
      %v704 = vadd.f32 %v604, %v672
      %v705 = vadd.f32 %v605, %v673
      %v706 = vadd.f32 %v606, %v674
      %v707 = vadd.f32 %v607, %v675
      %v708 = vadd.f32 %v608, %v676
      %v709 = vadd.f32 %v609, %v677
      %v710 = vadd.f32 %v610, %v678
      %v711 = vadd.f32 %v611, %v679
      %v712 = vadd.f32 %v612, %v680
      %v713 = vadd.f32 %v613, %v681
      %v714 = vadd.f32 %v614, %v682
      %v715 = vadd.f32 %v615, %v683
      %v716 = vadd.f32 %v616, %v684
      %v717 = vadd.f32 %v617, %v685
      %v718 = vadd.f32 %v618, %v686
      %v719 = vadd.f32 %v619, %v687
      %v720 = vadd.f32 %v620, %v688
      %v721 = vadd.f32 %v621, %v689
      %v722 = vadd.f32 %v622, %v690
      %v723 = vadd.f32 %v623, %v691
      %v724 = vadd.f32 %v624, %v692
      %v725 = vadd.f32 %v625, %v693
      %v726 = vadd.f32 %v626, %v694
      %v727 = vadd.f32 %v627, %v695
      %v728 = vadd.f32 %v628, %v696
      %v729 = vadd.f32 %v629, %v697
      %v730 = vadd.f32 %v630, %v698
      %v731 = vld [vmem:[#allocation2 + $0x2] sm:$0xff]
      %v732 = vld [vmem:[#allocation2 + $0xa] sm:$0xff]
      %v733 = vld [vmem:[#allocation2 + $0x1a] sm:$0xff]
      %v734 = vld [vmem:[#allocation2 + $0x22] sm:$0xff]
      %v735 = vld [vmem:[#allocation2 + $0x32] sm:$0xff]
      %v736 = vld [vmem:[#allocation2 + $0x3a] sm:$0xff]
      %v737 = vld [vmem:[#allocation2 + $0x4a] sm:$0xff]
      %v738 = vld [vmem:[#allocation2 + $0x52] sm:$0xff]
      %v739 = vld [vmem:[#allocation2 + $0x62] sm:$0xff]
      %v740 = vld [vmem:[#allocation2 + $0x6a] sm:$0xff]
      %v741 = vld [vmem:[#allocation2 + $0x7a] sm:$0xff]
      %v742 = vld [vmem:[#allocation2 + $0x82] sm:$0xff]
      %v743 = vld [vmem:[#allocation2 + $0x92] sm:$0xff]
      %v744 = vld [vmem:[#allocation2 + $0x9a] sm:$0xff]
      %v745 = vld [vmem:[#allocation2 + $0xaa] sm:$0xff]
      %v746 = vld [vmem:[#allocation2 + $0xb2] sm:$0xff]
      %v747 = vld [vmem:[#allocation2 + $0xc2] sm:$0xff]
      %v748 = vld [vmem:[#allocation2 + $0xca] sm:$0xff]
      %v749 = vld [vmem:[#allocation2 + $0xda] sm:$0xff]
      %v750 = vld [vmem:[#allocation2 + $0xe2] sm:$0xff]
      %v751 = vld [vmem:[#allocation2 + $0xf2] sm:$0xff]
      %v752 = vld [vmem:[#allocation2 + $0xfa] sm:$0xff]
      %v753 = vld [vmem:[#allocation2 + $0x10a] sm:$0xff]
      %v754 = vld [vmem:[#allocation2 + $0x112] sm:$0xff]
      %v755 = vld [vmem:[#allocation2 + $0x122] sm:$0xff]
      %v756 = vld [vmem:[#allocation2 + $0x12a] sm:$0xff]
      %v757 = vld [vmem:[#allocation2 + $0x13a] sm:$0xff]
      %v758 = vld [vmem:[#allocation2 + $0x142] sm:$0xff]
      %v759 = vld [vmem:[#allocation2 + $0x152] sm:$0xff]
      %v760 = vld [vmem:[#allocation2 + $0x15a] sm:$0xff]
      %v761 = vld [vmem:[#allocation2 + $0x16a] sm:$0xff]
      %v762 = vld [vmem:[#allocation2 + $0x172] sm:$0xff]
      %v763 = vlaneseq
      %v764 = vshrl.u32 %v763, 7
      %v765 = vsub.s32 2, %v764
      %v766 = vrot.slane %v438, %v765
      %v767 = vmul.f32 %v731, %v766
      %v768 = vmul.f32 %v732, %v766
      %v769 = vmul.f32 %v733, %v766
      %v770 = vmul.f32 %v734, %v766
      %v771 = vmul.f32 %v735, %v766
      %v772 = vmul.f32 %v736, %v766
      %v773 = vmul.f32 %v737, %v766
      %v774 = vmul.f32 %v738, %v766
      %v775 = vmul.f32 %v739, %v766
      %v776 = vmul.f32 %v740, %v766
      %v777 = vmul.f32 %v741, %v766
      %v778 = vmul.f32 %v742, %v766
      %v779 = vmul.f32 %v743, %v766
      %v780 = vmul.f32 %v744, %v766
      %v781 = vmul.f32 %v745, %v766
      %v782 = vmul.f32 %v746, %v766
      %v783 = vmul.f32 %v747, %v766
      %v784 = vmul.f32 %v748, %v766
      %v785 = vmul.f32 %v749, %v766
      %v786 = vmul.f32 %v750, %v766
      %v787 = vmul.f32 %v751, %v766
      %v788 = vmul.f32 %v752, %v766
      %v789 = vmul.f32 %v753, %v766
      %v790 = vmul.f32 %v754, %v766
      %v791 = vmul.f32 %v755, %v766
      %v792 = vmul.f32 %v756, %v766
      %v793 = vmul.f32 %v757, %v766
      %v794 = vmul.f32 %v758, %v766
      %v795 = vmul.f32 %v759, %v766
      %v796 = vmul.f32 %v760, %v766
      %v797 = vmul.f32 %v761, %v766
      %v798 = vmul.f32 %v762, %v766
      %v799 = vadd.f32 %v699, %v767
      %v800 = vadd.f32 %v700, %v768
      %v801 = vadd.f32 %v701, %v769
      %v802 = vadd.f32 %v702, %v770
      %v803 = vadd.f32 %v703, %v771
      %v804 = vadd.f32 %v704, %v772
      %v805 = vadd.f32 %v705, %v773
      %v806 = vadd.f32 %v706, %v774
      %v807 = vadd.f32 %v707, %v775
      %v808 = vadd.f32 %v708, %v776
      %v809 = vadd.f32 %v709, %v777
      %v810 = vadd.f32 %v710, %v778
      %v811 = vadd.f32 %v711, %v779
      %v812 = vadd.f32 %v712, %v780
      %v813 = vadd.f32 %v713, %v781
      %v814 = vadd.f32 %v714, %v782
      %v815 = vadd.f32 %v715, %v783
      %v816 = vadd.f32 %v716, %v784
      %v817 = vadd.f32 %v717, %v785
      %v818 = vadd.f32 %v718, %v786
      %v819 = vadd.f32 %v719, %v787
      %v820 = vadd.f32 %v720, %v788
      %v821 = vadd.f32 %v721, %v789
      %v822 = vadd.f32 %v722, %v790
      %v823 = vadd.f32 %v723, %v791
      %v824 = vadd.f32 %v724, %v792
      %v825 = vadd.f32 %v725, %v793
      %v826 = vadd.f32 %v726, %v794
      %v827 = vadd.f32 %v727, %v795
      %v828 = vadd.f32 %v728, %v796
      %v829 = vadd.f32 %v729, %v797
      %v830 = vadd.f32 %v730, %v798
      %v831 = vld [vmem:[%s498] sm:$0xff]
      %v832 = vld [vmem:[%s498 + $0x8] sm:$0xff]
      %v833 = vld [vmem:[%s498 + $0x18] sm:$0xff]
      %v834 = vld [vmem:[%s498 + $0x20] sm:$0xff]
      %v835 = vld [vmem:[%s498 + $0x30] sm:$0xff]
      %v836 = vld [vmem:[%s498 + $0x38] sm:$0xff]
      %v837 = vld [vmem:[%s498 + $0x48] sm:$0xff]
      %v838 = vld [vmem:[%s498 + $0x50] sm:$0xff]
      %v839 = vld [vmem:[%s498 + $0x60] sm:$0xff]
      %v840 = vld [vmem:[%s498 + $0x68] sm:$0xff]
      %v841 = vld [vmem:[%s498 + $0x78] sm:$0xff]
      %v842 = vld [vmem:[%s498 + $0x80] sm:$0xff]
      %v843 = vld [vmem:[%s498 + $0x90] sm:$0xff]
      %v844 = vld [vmem:[%s498 + $0x98] sm:$0xff]
      %v845 = vld [vmem:[%s498 + $0xa8] sm:$0xff]
      %v846 = vld [vmem:[%s498 + $0xb0] sm:$0xff]
      %v847 = vld [vmem:[%s498 + $0xc0] sm:$0xff]
      %v848 = vld [vmem:[%s498 + $0xc8] sm:$0xff]
      %v849 = vld [vmem:[%s498 + $0xd8] sm:$0xff]
      %v850 = vld [vmem:[%s498 + $0xe0] sm:$0xff]
      %v851 = vld [vmem:[%s498 + $0xf0] sm:$0xff]
      %v852 = vld [vmem:[%s498 + $0xf8] sm:$0xff]
      %v853 = vld [vmem:[%s498 + $0x108] sm:$0xff]
      %v854 = vld [vmem:[%s498 + $0x110] sm:$0xff]
      %v855 = vld [vmem:[%s498 + $0x120] sm:$0xff]
      %v856 = vld [vmem:[%s498 + $0x128] sm:$0xff]
      %v857 = vld [vmem:[%s498 + $0x138] sm:$0xff]
      %v858 = vld [vmem:[%s498 + $0x140] sm:$0xff]
      %v859 = vld [vmem:[%s498 + $0x150] sm:$0xff]
      %v860 = vld [vmem:[%s498 + $0x158] sm:$0xff]
      %v861 = vld [vmem:[%s498 + $0x168] sm:$0xff]
      %v862 = vld [vmem:[%s498 + $0x170] sm:$0xff]
      %v863 = vlaneseq
      %v864 = vshrl.u32 %v863, 7
      %v865 = vsub.s32 0, %v864
      %v866 = vrot.slane %v439, %v865
      %v867 = vmul.f32 %v831, %v866
      %v868 = vmul.f32 %v832, %v866
      %v869 = vmul.f32 %v833, %v866
      %v870 = vmul.f32 %v834, %v866
      %v871 = vmul.f32 %v835, %v866
      %v872 = vmul.f32 %v836, %v866
      %v873 = vmul.f32 %v837, %v866
      %v874 = vmul.f32 %v838, %v866
      %v875 = vmul.f32 %v839, %v866
      %v876 = vmul.f32 %v840, %v866
      %v877 = vmul.f32 %v841, %v866
      %v878 = vmul.f32 %v842, %v866
      %v879 = vmul.f32 %v843, %v866
      %v880 = vmul.f32 %v844, %v866
      %v881 = vmul.f32 %v845, %v866
      %v882 = vmul.f32 %v846, %v866
      %v883 = vmul.f32 %v847, %v866
      %v884 = vmul.f32 %v848, %v866
      %v885 = vmul.f32 %v849, %v866
      %v886 = vmul.f32 %v850, %v866
      %v887 = vmul.f32 %v851, %v866
      %v888 = vmul.f32 %v852, %v866
      %v889 = vmul.f32 %v853, %v866
      %v890 = vmul.f32 %v854, %v866
      %v891 = vmul.f32 %v855, %v866
      %v892 = vmul.f32 %v856, %v866
      %v893 = vmul.f32 %v857, %v866
      %v894 = vmul.f32 %v858, %v866
      %v895 = vmul.f32 %v859, %v866
      %v896 = vmul.f32 %v860, %v866
      %v897 = vmul.f32 %v861, %v866
      %v898 = vmul.f32 %v862, %v866
      %v899 = vadd.f32 %v799, %v867
      %v900 = vadd.f32 %v800, %v868
      %v901 = vadd.f32 %v801, %v869
      %v902 = vadd.f32 %v802, %v870
      %v903 = vadd.f32 %v803, %v871
      %v904 = vadd.f32 %v804, %v872
      %v905 = vadd.f32 %v805, %v873
      %v906 = vadd.f32 %v806, %v874
      %v907 = vadd.f32 %v807, %v875
      %v908 = vadd.f32 %v808, %v876
      %v909 = vadd.f32 %v809, %v877
      %v910 = vadd.f32 %v810, %v878
      %v911 = vadd.f32 %v811, %v879
      %v912 = vadd.f32 %v812, %v880
      %v913 = vadd.f32 %v813, %v881
      %v914 = vadd.f32 %v814, %v882
      %v915 = vadd.f32 %v815, %v883
      %v916 = vadd.f32 %v816, %v884
      %v917 = vadd.f32 %v817, %v885
      %v918 = vadd.f32 %v818, %v886
      %v919 = vadd.f32 %v819, %v887
      %v920 = vadd.f32 %v820, %v888
      %v921 = vadd.f32 %v821, %v889
      %v922 = vadd.f32 %v822, %v890
      %v923 = vadd.f32 %v823, %v891
      %v924 = vadd.f32 %v824, %v892
      %v925 = vadd.f32 %v825, %v893
      %v926 = vadd.f32 %v826, %v894
      %v927 = vadd.f32 %v827, %v895
      %v928 = vadd.f32 %v828, %v896
      %v929 = vadd.f32 %v829, %v897
      %v930 = vadd.f32 %v830, %v898
      %v931 = vld [vmem:[%s498 + $0x1] sm:$0xff]
      %v932 = vld [vmem:[%s498 + $0x9] sm:$0xff]
      %v933 = vld [vmem:[%s498 + $0x19] sm:$0xff]
      %v934 = vld [vmem:[%s498 + $0x21] sm:$0xff]
      %v935 = vld [vmem:[%s498 + $0x31] sm:$0xff]
      %v936 = vld [vmem:[%s498 + $0x39] sm:$0xff]
      %v937 = vld [vmem:[%s498 + $0x49] sm:$0xff]
      %v938 = vld [vmem:[%s498 + $0x51] sm:$0xff]
      %v939 = vld [vmem:[%s498 + $0x61] sm:$0xff]
      %v940 = vld [vmem:[%s498 + $0x69] sm:$0xff]
      %v941 = vld [vmem:[%s498 + $0x79] sm:$0xff]
      %v942 = vld [vmem:[%s498 + $0x81] sm:$0xff]
      %v943 = vld [vmem:[%s498 + $0x91] sm:$0xff]
      %v944 = vld [vmem:[%s498 + $0x99] sm:$0xff]
      %v945 = vld [vmem:[%s498 + $0xa9] sm:$0xff]
      %v946 = vld [vmem:[%s498 + $0xb1] sm:$0xff]
      %v947 = vld [vmem:[%s498 + $0xc1] sm:$0xff]
      %v948 = vld [vmem:[%s498 + $0xc9] sm:$0xff]
      %v949 = vld [vmem:[%s498 + $0xd9] sm:$0xff]
      %v950 = vld [vmem:[%s498 + $0xe1] sm:$0xff]
      %v951 = vld [vmem:[%s498 + $0xf1] sm:$0xff]
      %v952 = vld [vmem:[%s498 + $0xf9] sm:$0xff]
      %v953 = vld [vmem:[%s498 + $0x109] sm:$0xff]
      %v954 = vld [vmem:[%s498 + $0x111] sm:$0xff]
      %v955 = vld [vmem:[%s498 + $0x121] sm:$0xff]
      %v956 = vld [vmem:[%s498 + $0x129] sm:$0xff]
      %v957 = vld [vmem:[%s498 + $0x139] sm:$0xff]
      %v958 = vld [vmem:[%s498 + $0x141] sm:$0xff]
      %v959 = vld [vmem:[%s498 + $0x151] sm:$0xff]
      %v960 = vld [vmem:[%s498 + $0x159] sm:$0xff]
      %v961 = vld [vmem:[%s498 + $0x169] sm:$0xff]
      %v962 = vld [vmem:[%s498 + $0x171] sm:$0xff]
      %v963 = vlaneseq
      %v964 = vshrl.u32 %v963, 7
      %v965 = vsub.s32 1, %v964
      %v966 = vrot.slane %v439, %v965
      %v967 = vmul.f32 %v931, %v966
      %v968 = vmul.f32 %v932, %v966
      %v969 = vmul.f32 %v933, %v966
      %v970 = vmul.f32 %v934, %v966
      %v971 = vmul.f32 %v935, %v966
      %v972 = vmul.f32 %v936, %v966
      %v973 = vmul.f32 %v937, %v966
      %v974 = vmul.f32 %v938, %v966
      %v975 = vmul.f32 %v939, %v966
      %v976 = vmul.f32 %v940, %v966
      %v977 = vmul.f32 %v941, %v966
      %v978 = vmul.f32 %v942, %v966
      %v979 = vmul.f32 %v943, %v966
      %v980 = vmul.f32 %v944, %v966
      %v981 = vmul.f32 %v945, %v966
      %v982 = vmul.f32 %v946, %v966
      %v983 = vmul.f32 %v947, %v966
      %v984 = vmul.f32 %v948, %v966
      %v985 = vmul.f32 %v949, %v966
      %v986 = vmul.f32 %v950, %v966
      %v987 = vmul.f32 %v951, %v966
      %v988 = vmul.f32 %v952, %v966
      %v989 = vmul.f32 %v953, %v966
      %v990 = vmul.f32 %v954, %v966
      %v991 = vmul.f32 %v955, %v966
      %v992 = vmul.f32 %v956, %v966
      %v993 = vmul.f32 %v957, %v966
      %v994 = vmul.f32 %v958, %v966
      %v995 = vmul.f32 %v959, %v966
      %v996 = vmul.f32 %v960, %v966
      %v997 = vmul.f32 %v961, %v966
      %v998 = vmul.f32 %v962, %v966
      %v999 = vadd.f32 %v899, %v967
      %v1000 = vadd.f32 %v900, %v968
      %v1001 = vadd.f32 %v901, %v969
      %v1002 = vadd.f32 %v902, %v970
      %v1003 = vadd.f32 %v903, %v971
      %v1004 = vadd.f32 %v904, %v972
      %v1005 = vadd.f32 %v905, %v973
      %v1006 = vadd.f32 %v906, %v974
      %v1007 = vadd.f32 %v907, %v975
      %v1008 = vadd.f32 %v908, %v976
      %v1009 = vadd.f32 %v909, %v977
      %v1010 = vadd.f32 %v910, %v978
      %v1011 = vadd.f32 %v911, %v979
      %v1012 = vadd.f32 %v912, %v980
      %v1013 = vadd.f32 %v913, %v981
      %v1014 = vadd.f32 %v914, %v982
      %v1015 = vadd.f32 %v915, %v983
      %v1016 = vadd.f32 %v916, %v984
      %v1017 = vadd.f32 %v917, %v985
      %v1018 = vadd.f32 %v918, %v986
      %v1019 = vadd.f32 %v919, %v987
      %v1020 = vadd.f32 %v920, %v988
      %v1021 = vadd.f32 %v921, %v989
      %v1022 = vadd.f32 %v922, %v990
      %v1023 = vadd.f32 %v923, %v991
      %v1024 = vadd.f32 %v924, %v992
      %v1025 = vadd.f32 %v925, %v993
      %v1026 = vadd.f32 %v926, %v994
      %v1027 = vadd.f32 %v927, %v995
      %v1028 = vadd.f32 %v928, %v996
      %v1029 = vadd.f32 %v929, %v997
      %v1030 = vadd.f32 %v930, %v998
      %v1031 = vld [vmem:[%s498 + $0x2] sm:$0xff]
      %v1032 = vld [vmem:[%s498 + $0xa] sm:$0xff]
      %v1033 = vld [vmem:[%s498 + $0x1a] sm:$0xff]
      %v1034 = vld [vmem:[%s498 + $0x22] sm:$0xff]
      %v1035 = vld [vmem:[%s498 + $0x32] sm:$0xff]
      %v1036 = vld [vmem:[%s498 + $0x3a] sm:$0xff]
      %v1037 = vld [vmem:[%s498 + $0x4a] sm:$0xff]
      %v1038 = vld [vmem:[%s498 + $0x52] sm:$0xff]
      %v1039 = vld [vmem:[%s498 + $0x62] sm:$0xff]
      %v1040 = vld [vmem:[%s498 + $0x6a] sm:$0xff]
      %v1041 = vld [vmem:[%s498 + $0x7a] sm:$0xff]
      %v1042 = vld [vmem:[%s498 + $0x82] sm:$0xff]
      %v1043 = vld [vmem:[%s498 + $0x92] sm:$0xff]
      %v1044 = vld [vmem:[%s498 + $0x9a] sm:$0xff]
      %v1045 = vld [vmem:[%s498 + $0xaa] sm:$0xff]
      %v1046 = vld [vmem:[%s498 + $0xb2] sm:$0xff]
      %v1047 = vld [vmem:[%s498 + $0xc2] sm:$0xff]
      %v1048 = vld [vmem:[%s498 + $0xca] sm:$0xff]
      %v1049 = vld [vmem:[%s498 + $0xda] sm:$0xff]
      %v1050 = vld [vmem:[%s498 + $0xe2] sm:$0xff]
      %v1051 = vld [vmem:[%s498 + $0xf2] sm:$0xff]
      %v1052 = vld [vmem:[%s498 + $0xfa] sm:$0xff]
      %v1053 = vld [vmem:[%s498 + $0x10a] sm:$0xff]
      %v1054 = vld [vmem:[%s498 + $0x112] sm:$0xff]
      %v1055 = vld [vmem:[%s498 + $0x122] sm:$0xff]
      %v1056 = vld [vmem:[%s498 + $0x12a] sm:$0xff]
      %v1057 = vld [vmem:[%s498 + $0x13a] sm:$0xff]
      %v1058 = vld [vmem:[%s498 + $0x142] sm:$0xff]
      %v1059 = vld [vmem:[%s498 + $0x152] sm:$0xff]
      %v1060 = vld [vmem:[%s498 + $0x15a] sm:$0xff]
      %v1061 = vld [vmem:[%s498 + $0x16a] sm:$0xff]
      %v1062 = vld [vmem:[%s498 + $0x172] sm:$0xff]
      %v1063 = vlaneseq
      %v1064 = vshrl.u32 %v1063, 7
      %v1065 = vsub.s32 2, %v1064
      %v1066 = vrot.slane %v439, %v1065
      %v1067 = vmul.f32 %v1031, %v1066
      %v1068 = vmul.f32 %v1032, %v1066
      %v1069 = vmul.f32 %v1033, %v1066
      %v1070 = vmul.f32 %v1034, %v1066
      %v1071 = vmul.f32 %v1035, %v1066
      %v1072 = vmul.f32 %v1036, %v1066
      %v1073 = vmul.f32 %v1037, %v1066
      %v1074 = vmul.f32 %v1038, %v1066
      %v1075 = vmul.f32 %v1039, %v1066
      %v1076 = vmul.f32 %v1040, %v1066
      %v1077 = vmul.f32 %v1041, %v1066
      %v1078 = vmul.f32 %v1042, %v1066
      %v1079 = vmul.f32 %v1043, %v1066
      %v1080 = vmul.f32 %v1044, %v1066
      %v1081 = vmul.f32 %v1045, %v1066
      %v1082 = vmul.f32 %v1046, %v1066
      %v1083 = vmul.f32 %v1047, %v1066
      %v1084 = vmul.f32 %v1048, %v1066
      %v1085 = vmul.f32 %v1049, %v1066
      %v1086 = vmul.f32 %v1050, %v1066
      %v1087 = vmul.f32 %v1051, %v1066
      %v1088 = vmul.f32 %v1052, %v1066
      %v1089 = vmul.f32 %v1053, %v1066
      %v1090 = vmul.f32 %v1054, %v1066
      %v1091 = vmul.f32 %v1055, %v1066
      %v1092 = vmul.f32 %v1056, %v1066
      %v1093 = vmul.f32 %v1057, %v1066
      %v1094 = vmul.f32 %v1058, %v1066
      %v1095 = vmul.f32 %v1059, %v1066
      %v1096 = vmul.f32 %v1060, %v1066
      %v1097 = vmul.f32 %v1061, %v1066
      %v1098 = vmul.f32 %v1062, %v1066
      %v1099 = vadd.f32 %v999, %v1067
      %v1100 = vadd.f32 %v1000, %v1068
      %v1101 = vadd.f32 %v1001, %v1069
      %v1102 = vadd.f32 %v1002, %v1070
      %v1103 = vadd.f32 %v1003, %v1071
      %v1104 = vadd.f32 %v1004, %v1072
      %v1105 = vadd.f32 %v1005, %v1073
      %v1106 = vadd.f32 %v1006, %v1074
      %v1107 = vadd.f32 %v1007, %v1075
      %v1108 = vadd.f32 %v1008, %v1076
      %v1109 = vadd.f32 %v1009, %v1077
      %v1110 = vadd.f32 %v1010, %v1078
      %v1111 = vadd.f32 %v1011, %v1079
      %v1112 = vadd.f32 %v1012, %v1080
      %v1113 = vadd.f32 %v1013, %v1081
      %v1114 = vadd.f32 %v1014, %v1082
      %v1115 = vadd.f32 %v1015, %v1083
      %v1116 = vadd.f32 %v1016, %v1084
      %v1117 = vadd.f32 %v1017, %v1085
      %v1118 = vadd.f32 %v1018, %v1086
      %v1119 = vadd.f32 %v1019, %v1087
      %v1120 = vadd.f32 %v1020, %v1088
      %v1121 = vadd.f32 %v1021, %v1089
      %v1122 = vadd.f32 %v1022, %v1090
      %v1123 = vadd.f32 %v1023, %v1091
      %v1124 = vadd.f32 %v1024, %v1092
      %v1125 = vadd.f32 %v1025, %v1093
      %v1126 = vadd.f32 %v1026, %v1094
      %v1127 = vadd.f32 %v1027, %v1095
      %v1128 = vadd.f32 %v1028, %v1096
      %v1129 = vadd.f32 %v1029, %v1097
      %v1130 = vadd.f32 %v1030, %v1098
      %s1131 = scalar_lea.vmem [#allocation2], 48
      %v1132 = vld [vmem:[%s1131] sm:$0xff]
      %v1133 = vld [vmem:[%s1131 + $0x8] sm:$0xff]
      %v1134 = vld [vmem:[%s1131 + $0x18] sm:$0xff]
      %v1135 = vld [vmem:[%s1131 + $0x20] sm:$0xff]
      %v1136 = vld [vmem:[%s1131 + $0x30] sm:$0xff]
      %v1137 = vld [vmem:[%s1131 + $0x38] sm:$0xff]
      %v1138 = vld [vmem:[%s1131 + $0x48] sm:$0xff]
      %v1139 = vld [vmem:[%s1131 + $0x50] sm:$0xff]
      %v1140 = vld [vmem:[%s1131 + $0x60] sm:$0xff]
      %v1141 = vld [vmem:[%s1131 + $0x68] sm:$0xff]
      %v1142 = vld [vmem:[%s1131 + $0x78] sm:$0xff]
      %v1143 = vld [vmem:[%s1131 + $0x80] sm:$0xff]
      %v1144 = vld [vmem:[%s1131 + $0x90] sm:$0xff]
      %v1145 = vld [vmem:[%s1131 + $0x98] sm:$0xff]
      %v1146 = vld [vmem:[%s1131 + $0xa8] sm:$0xff]
      %v1147 = vld [vmem:[%s1131 + $0xb0] sm:$0xff]
      %v1148 = vld [vmem:[%s1131 + $0xc0] sm:$0xff]
      %v1149 = vld [vmem:[%s1131 + $0xc8] sm:$0xff]
      %v1150 = vld [vmem:[%s1131 + $0xd8] sm:$0xff]
      %v1151 = vld [vmem:[%s1131 + $0xe0] sm:$0xff]
      %v1152 = vld [vmem:[%s1131 + $0xf0] sm:$0xff]
      %v1153 = vld [vmem:[%s1131 + $0xf8] sm:$0xff]
      %v1154 = vld [vmem:[%s1131 + $0x108] sm:$0xff]
      %v1155 = vld [vmem:[%s1131 + $0x110] sm:$0xff]
      %v1156 = vld [vmem:[%s1131 + $0x120] sm:$0xff]
      %v1157 = vld [vmem:[%s1131 + $0x128] sm:$0xff]
      %v1158 = vld [vmem:[%s1131 + $0x138] sm:$0xff]
      %v1159 = vld [vmem:[%s1131 + $0x140] sm:$0xff]
      %v1160 = vld [vmem:[%s1131 + $0x150] sm:$0xff]
      %v1161 = vld [vmem:[%s1131 + $0x158] sm:$0xff]
      %v1162 = vld [vmem:[%s1131 + $0x168] sm:$0xff]
      %v1163 = vld [vmem:[%s1131 + $0x170] sm:$0xff]
      %v1164 = vlaneseq
      %v1165 = vshrl.u32 %v1164, 7
      %v1166 = vsub.s32 0, %v1165
      %v1167 = vrot.slane %v440, %v1166
      %v1168 = vmul.f32 %v1132, %v1167
      %v1169 = vmul.f32 %v1133, %v1167
      %v1170 = vmul.f32 %v1134, %v1167
      %v1171 = vmul.f32 %v1135, %v1167
      %v1172 = vmul.f32 %v1136, %v1167
      %v1173 = vmul.f32 %v1137, %v1167
      %v1174 = vmul.f32 %v1138, %v1167
      %v1175 = vmul.f32 %v1139, %v1167
      %v1176 = vmul.f32 %v1140, %v1167
      %v1177 = vmul.f32 %v1141, %v1167
      %v1178 = vmul.f32 %v1142, %v1167
      %v1179 = vmul.f32 %v1143, %v1167
      %v1180 = vmul.f32 %v1144, %v1167
      %v1181 = vmul.f32 %v1145, %v1167
      %v1182 = vmul.f32 %v1146, %v1167
      %v1183 = vmul.f32 %v1147, %v1167
      %v1184 = vmul.f32 %v1148, %v1167
      %v1185 = vmul.f32 %v1149, %v1167
      %v1186 = vmul.f32 %v1150, %v1167
      %v1187 = vmul.f32 %v1151, %v1167
      %v1188 = vmul.f32 %v1152, %v1167
      %v1189 = vmul.f32 %v1153, %v1167
      %v1190 = vmul.f32 %v1154, %v1167
      %v1191 = vmul.f32 %v1155, %v1167
      %v1192 = vmul.f32 %v1156, %v1167
      %v1193 = vmul.f32 %v1157, %v1167
      %v1194 = vmul.f32 %v1158, %v1167
      %v1195 = vmul.f32 %v1159, %v1167
      %v1196 = vmul.f32 %v1160, %v1167
      %v1197 = vmul.f32 %v1161, %v1167
      %v1198 = vmul.f32 %v1162, %v1167
      %v1199 = vmul.f32 %v1163, %v1167
      %v1200 = vadd.f32 %v1099, %v1168
      %v1201 = vadd.f32 %v1100, %v1169
      %v1202 = vadd.f32 %v1101, %v1170
      %v1203 = vadd.f32 %v1102, %v1171
      %v1204 = vadd.f32 %v1103, %v1172
      %v1205 = vadd.f32 %v1104, %v1173
      %v1206 = vadd.f32 %v1105, %v1174
      %v1207 = vadd.f32 %v1106, %v1175
      %v1208 = vadd.f32 %v1107, %v1176
      %v1209 = vadd.f32 %v1108, %v1177
      %v1210 = vadd.f32 %v1109, %v1178
      %v1211 = vadd.f32 %v1110, %v1179
      %v1212 = vadd.f32 %v1111, %v1180
      %v1213 = vadd.f32 %v1112, %v1181
      %v1214 = vadd.f32 %v1113, %v1182
      %v1215 = vadd.f32 %v1114, %v1183
      %v1216 = vadd.f32 %v1115, %v1184
      %v1217 = vadd.f32 %v1116, %v1185
      %v1218 = vadd.f32 %v1117, %v1186
      %v1219 = vadd.f32 %v1118, %v1187
      %v1220 = vadd.f32 %v1119, %v1188
      %v1221 = vadd.f32 %v1120, %v1189
      %v1222 = vadd.f32 %v1121, %v1190
      %v1223 = vadd.f32 %v1122, %v1191
      %v1224 = vadd.f32 %v1123, %v1192
      %v1225 = vadd.f32 %v1124, %v1193
      %v1226 = vadd.f32 %v1125, %v1194
      %v1227 = vadd.f32 %v1126, %v1195
      %v1228 = vadd.f32 %v1127, %v1196
      %v1229 = vadd.f32 %v1128, %v1197
      %v1230 = vadd.f32 %v1129, %v1198
      %v1231 = vadd.f32 %v1130, %v1199
      %v1232 = vld [vmem:[%s1131 + $0x1] sm:$0xff]
      %v1233 = vld [vmem:[%s1131 + $0x9] sm:$0xff]
      %v1234 = vld [vmem:[%s1131 + $0x19] sm:$0xff]
      %v1235 = vld [vmem:[%s1131 + $0x21] sm:$0xff]
      %v1236 = vld [vmem:[%s1131 + $0x31] sm:$0xff]
      %v1237 = vld [vmem:[%s1131 + $0x39] sm:$0xff]
      %v1238 = vld [vmem:[%s1131 + $0x49] sm:$0xff]
      %v1239 = vld [vmem:[%s1131 + $0x51] sm:$0xff]
      %v1240 = vld [vmem:[%s1131 + $0x61] sm:$0xff]
      %v1241 = vld [vmem:[%s1131 + $0x69] sm:$0xff]
      %v1242 = vld [vmem:[%s1131 + $0x79] sm:$0xff]
      %v1243 = vld [vmem:[%s1131 + $0x81] sm:$0xff]
      %v1244 = vld [vmem:[%s1131 + $0x91] sm:$0xff]
      %v1245 = vld [vmem:[%s1131 + $0x99] sm:$0xff]
      %v1246 = vld [vmem:[%s1131 + $0xa9] sm:$0xff]
      %v1247 = vld [vmem:[%s1131 + $0xb1] sm:$0xff]
      %v1248 = vld [vmem:[%s1131 + $0xc1] sm:$0xff]
      %v1249 = vld [vmem:[%s1131 + $0xc9] sm:$0xff]
      %v1250 = vld [vmem:[%s1131 + $0xd9] sm:$0xff]
      %v1251 = vld [vmem:[%s1131 + $0xe1] sm:$0xff]
      %v1252 = vld [vmem:[%s1131 + $0xf1] sm:$0xff]
      %v1253 = vld [vmem:[%s1131 + $0xf9] sm:$0xff]
      %v1254 = vld [vmem:[%s1131 + $0x109] sm:$0xff]
      %v1255 = vld [vmem:[%s1131 + $0x111] sm:$0xff]
      %v1256 = vld [vmem:[%s1131 + $0x121] sm:$0xff]
      %v1257 = vld [vmem:[%s1131 + $0x129] sm:$0xff]
      %v1258 = vld [vmem:[%s1131 + $0x139] sm:$0xff]
      %v1259 = vld [vmem:[%s1131 + $0x141] sm:$0xff]
      %v1260 = vld [vmem:[%s1131 + $0x151] sm:$0xff]
      %v1261 = vld [vmem:[%s1131 + $0x159] sm:$0xff]
      %v1262 = vld [vmem:[%s1131 + $0x169] sm:$0xff]
      %v1263 = vld [vmem:[%s1131 + $0x171] sm:$0xff]
      %v1264 = vlaneseq
      %v1265 = vshrl.u32 %v1264, 7
      %v1266 = vsub.s32 1, %v1265
      %v1267 = vrot.slane %v440, %v1266
      %v1268 = vmul.f32 %v1232, %v1267
      %v1269 = vmul.f32 %v1233, %v1267
      %v1270 = vmul.f32 %v1234, %v1267
      %v1271 = vmul.f32 %v1235, %v1267
      %v1272 = vmul.f32 %v1236, %v1267
      %v1273 = vmul.f32 %v1237, %v1267
      %v1274 = vmul.f32 %v1238, %v1267
      %v1275 = vmul.f32 %v1239, %v1267
      %v1276 = vmul.f32 %v1240, %v1267
      %v1277 = vmul.f32 %v1241, %v1267
      %v1278 = vmul.f32 %v1242, %v1267
      %v1279 = vmul.f32 %v1243, %v1267
      %v1280 = vmul.f32 %v1244, %v1267
      %v1281 = vmul.f32 %v1245, %v1267
      %v1282 = vmul.f32 %v1246, %v1267
      %v1283 = vmul.f32 %v1247, %v1267
      %v1284 = vmul.f32 %v1248, %v1267
      %v1285 = vmul.f32 %v1249, %v1267
      %v1286 = vmul.f32 %v1250, %v1267
      %v1287 = vmul.f32 %v1251, %v1267
      %v1288 = vmul.f32 %v1252, %v1267
      %v1289 = vmul.f32 %v1253, %v1267
      %v1290 = vmul.f32 %v1254, %v1267
      %v1291 = vmul.f32 %v1255, %v1267
      %v1292 = vmul.f32 %v1256, %v1267
      %v1293 = vmul.f32 %v1257, %v1267
      %v1294 = vmul.f32 %v1258, %v1267
      %v1295 = vmul.f32 %v1259, %v1267
      %v1296 = vmul.f32 %v1260, %v1267
      %v1297 = vmul.f32 %v1261, %v1267
      %v1298 = vmul.f32 %v1262, %v1267
      %v1299 = vmul.f32 %v1263, %v1267
      %v1300 = vadd.f32 %v1200, %v1268
      %v1301 = vadd.f32 %v1201, %v1269
      %v1302 = vadd.f32 %v1202, %v1270
      %v1303 = vadd.f32 %v1203, %v1271
      %v1304 = vadd.f32 %v1204, %v1272
      %v1305 = vadd.f32 %v1205, %v1273
      %v1306 = vadd.f32 %v1206, %v1274
      %v1307 = vadd.f32 %v1207, %v1275
      %v1308 = vadd.f32 %v1208, %v1276
      %v1309 = vadd.f32 %v1209, %v1277
      %v1310 = vadd.f32 %v1210, %v1278
      %v1311 = vadd.f32 %v1211, %v1279
      %v1312 = vadd.f32 %v1212, %v1280
      %v1313 = vadd.f32 %v1213, %v1281
      %v1314 = vadd.f32 %v1214, %v1282
      %v1315 = vadd.f32 %v1215, %v1283
      %v1316 = vadd.f32 %v1216, %v1284
      %v1317 = vadd.f32 %v1217, %v1285
      %v1318 = vadd.f32 %v1218, %v1286
      %v1319 = vadd.f32 %v1219, %v1287
      %v1320 = vadd.f32 %v1220, %v1288
      %v1321 = vadd.f32 %v1221, %v1289
      %v1322 = vadd.f32 %v1222, %v1290
      %v1323 = vadd.f32 %v1223, %v1291
      %v1324 = vadd.f32 %v1224, %v1292
      %v1325 = vadd.f32 %v1225, %v1293
      %v1326 = vadd.f32 %v1226, %v1294
      %v1327 = vadd.f32 %v1227, %v1295
      %v1328 = vadd.f32 %v1228, %v1296
      %v1329 = vadd.f32 %v1229, %v1297
      %v1330 = vadd.f32 %v1230, %v1298
      %v1331 = vadd.f32 %v1231, %v1299
      %v1332 = vld [vmem:[%s1131 + $0x2] sm:$0xff]
      %v1333 = vld [vmem:[%s1131 + $0xa] sm:$0xff]
      %v1334 = vld [vmem:[%s1131 + $0x1a] sm:$0xff]
      %v1335 = vld [vmem:[%s1131 + $0x22] sm:$0xff]
      %v1336 = vld [vmem:[%s1131 + $0x32] sm:$0xff]
      %v1337 = vld [vmem:[%s1131 + $0x3a] sm:$0xff]
      %v1338 = vld [vmem:[%s1131 + $0x4a] sm:$0xff]
      %v1339 = vld [vmem:[%s1131 + $0x52] sm:$0xff]
      %v1340 = vld [vmem:[%s1131 + $0x62] sm:$0xff]
      %v1341 = vld [vmem:[%s1131 + $0x6a] sm:$0xff]
      %v1342 = vld [vmem:[%s1131 + $0x7a] sm:$0xff]
      %v1343 = vld [vmem:[%s1131 + $0x82] sm:$0xff]
      %v1344 = vld [vmem:[%s1131 + $0x92] sm:$0xff]
      %v1345 = vld [vmem:[%s1131 + $0x9a] sm:$0xff]
      %v1346 = vld [vmem:[%s1131 + $0xaa] sm:$0xff]
      %v1347 = vld [vmem:[%s1131 + $0xb2] sm:$0xff]
      %v1348 = vld [vmem:[%s1131 + $0xc2] sm:$0xff]
      %v1349 = vld [vmem:[%s1131 + $0xca] sm:$0xff]
      %v1350 = vld [vmem:[%s1131 + $0xda] sm:$0xff]
      %v1351 = vld [vmem:[%s1131 + $0xe2] sm:$0xff]
      %v1352 = vld [vmem:[%s1131 + $0xf2] sm:$0xff]
      %v1353 = vld [vmem:[%s1131 + $0xfa] sm:$0xff]
      %v1354 = vld [vmem:[%s1131 + $0x10a] sm:$0xff]
      %v1355 = vld [vmem:[%s1131 + $0x112] sm:$0xff]
      %v1356 = vld [vmem:[%s1131 + $0x122] sm:$0xff]
      %v1357 = vld [vmem:[%s1131 + $0x12a] sm:$0xff]
      %v1358 = vld [vmem:[%s1131 + $0x13a] sm:$0xff]
      %v1359 = vld [vmem:[%s1131 + $0x142] sm:$0xff]
      %v1360 = vld [vmem:[%s1131 + $0x152] sm:$0xff]
      %v1361 = vld [vmem:[%s1131 + $0x15a] sm:$0xff]
      %v1362 = vld [vmem:[%s1131 + $0x16a] sm:$0xff]
      %v1363 = vld [vmem:[%s1131 + $0x172] sm:$0xff]
      %v1364 = vlaneseq
      %v1365 = vshrl.u32 %v1364, 7
      %v1366 = vsub.s32 2, %v1365
      %v1367 = vrot.slane %v440, %v1366
      %v1368 = vmul.f32 %v1332, %v1367
      %v1369 = vmul.f32 %v1333, %v1367
      %v1370 = vmul.f32 %v1334, %v1367
      %v1371 = vmul.f32 %v1335, %v1367
      %v1372 = vmul.f32 %v1336, %v1367
      %v1373 = vmul.f32 %v1337, %v1367
      %v1374 = vmul.f32 %v1338, %v1367
      %v1375 = vmul.f32 %v1339, %v1367
      %v1376 = vmul.f32 %v1340, %v1367
      %v1377 = vmul.f32 %v1341, %v1367
      %v1378 = vmul.f32 %v1342, %v1367
      %v1379 = vmul.f32 %v1343, %v1367
      %v1380 = vmul.f32 %v1344, %v1367
      %v1381 = vmul.f32 %v1345, %v1367
      %v1382 = vmul.f32 %v1346, %v1367
      %v1383 = vmul.f32 %v1347, %v1367
      %v1384 = vmul.f32 %v1348, %v1367
      %v1385 = vmul.f32 %v1349, %v1367
      %v1386 = vmul.f32 %v1350, %v1367
      %v1387 = vmul.f32 %v1351, %v1367
      %v1388 = vmul.f32 %v1352, %v1367
      %v1389 = vmul.f32 %v1353, %v1367
      %v1390 = vmul.f32 %v1354, %v1367
      %v1391 = vmul.f32 %v1355, %v1367
      %v1392 = vmul.f32 %v1356, %v1367
      %v1393 = vmul.f32 %v1357, %v1367
      %v1394 = vmul.f32 %v1358, %v1367
      %v1395 = vmul.f32 %v1359, %v1367
      %v1396 = vmul.f32 %v1360, %v1367
      %v1397 = vmul.f32 %v1361, %v1367
      %v1398 = vmul.f32 %v1362, %v1367
      %v1399 = vmul.f32 %v1363, %v1367
      %v1400 = vadd.f32 %v1300, %v1368
      %v1401 = vadd.f32 %v1301, %v1369
      %v1402 = vadd.f32 %v1302, %v1370
      %v1403 = vadd.f32 %v1303, %v1371
      %v1404 = vadd.f32 %v1304, %v1372
      %v1405 = vadd.f32 %v1305, %v1373
      %v1406 = vadd.f32 %v1306, %v1374
      %v1407 = vadd.f32 %v1307, %v1375
      %v1408 = vadd.f32 %v1308, %v1376
      %v1409 = vadd.f32 %v1309, %v1377
      %v1410 = vadd.f32 %v1310, %v1378
      %v1411 = vadd.f32 %v1311, %v1379
      %v1412 = vadd.f32 %v1312, %v1380
      %v1413 = vadd.f32 %v1313, %v1381
      %v1414 = vadd.f32 %v1314, %v1382
      %v1415 = vadd.f32 %v1315, %v1383
      %v1416 = vadd.f32 %v1316, %v1384
      %v1417 = vadd.f32 %v1317, %v1385
      %v1418 = vadd.f32 %v1318, %v1386
      %v1419 = vadd.f32 %v1319, %v1387
      %v1420 = vadd.f32 %v1320, %v1388
      %v1421 = vadd.f32 %v1321, %v1389
      %v1422 = vadd.f32 %v1322, %v1390
      %v1423 = vadd.f32 %v1323, %v1391
      %v1424 = vadd.f32 %v1324, %v1392
      %v1425 = vadd.f32 %v1325, %v1393
      %v1426 = vadd.f32 %v1326, %v1394
      %v1427 = vadd.f32 %v1327, %v1395
      %v1428 = vadd.f32 %v1328, %v1396
      %v1429 = vadd.f32 %v1329, %v1397
      %v1430 = vadd.f32 %v1330, %v1398
      %v1431 = vadd.f32 %v1331, %v1399
      %v1433 = vlaneseq
      %v1434 = vshrl.u32 %v1433, 7
      %v1435 = vsub.s32 0, %v1434
      %v1436 = vrot.slane %v441, %v1435
      %v1438 = vadd.f32 %v1400, %v1436
      %v1439 = vadd.f32 %v1401, %v1436
      %v1440 = vadd.f32 %v1402, %v1436
      %v1441 = vadd.f32 %v1403, %v1436
      %v1442 = vadd.f32 %v1404, %v1436
      %v1443 = vadd.f32 %v1405, %v1436
      %v1444 = vadd.f32 %v1406, %v1436
      %v1445 = vadd.f32 %v1407, %v1436
      %v1446 = vadd.f32 %v1408, %v1436
      %v1447 = vadd.f32 %v1409, %v1436
      %v1448 = vadd.f32 %v1410, %v1436
      %v1449 = vadd.f32 %v1411, %v1436
      %v1450 = vadd.f32 %v1412, %v1436
      %v1451 = vadd.f32 %v1413, %v1436
      %v1452 = vadd.f32 %v1414, %v1436
      %v1453 = vadd.f32 %v1415, %v1436
      %v1454 = vadd.f32 %v1416, %v1436
      %v1455 = vadd.f32 %v1417, %v1436
      %v1456 = vadd.f32 %v1418, %v1436
      %v1457 = vadd.f32 %v1419, %v1436
      %v1458 = vadd.f32 %v1420, %v1436
      %v1459 = vadd.f32 %v1421, %v1436
      %v1460 = vadd.f32 %v1422, %v1436
      %v1461 = vadd.f32 %v1423, %v1436
      %v1462 = vadd.f32 %v1424, %v1436
      %v1463 = vadd.f32 %v1425, %v1436
      %v1464 = vadd.f32 %v1426, %v1436
      %v1465 = vadd.f32 %v1427, %v1436
      %v1466 = vadd.f32 %v1428, %v1436
      %v1467 = vadd.f32 %v1429, %v1436
      %v1468 = vadd.f32 %v1430, %v1436
      %v1469 = vadd.f32 %v1431, %v1436
      %v1470 = vmax.f32 %v1438, 0.0
      %v1471 = vmax.f32 %v1439, 0.0
      %v1472 = vmax.f32 %v1440, 0.0
      %v1473 = vmax.f32 %v1441, 0.0
      %v1474 = vmax.f32 %v1442, 0.0
      %v1475 = vmax.f32 %v1443, 0.0
      %v1476 = vmax.f32 %v1444, 0.0
      %v1477 = vmax.f32 %v1445, 0.0
      %v1478 = vmax.f32 %v1446, 0.0
      %v1479 = vmax.f32 %v1447, 0.0
      %v1480 = vmax.f32 %v1448, 0.0
      %v1481 = vmax.f32 %v1449, 0.0
      %v1482 = vmax.f32 %v1450, 0.0
      %v1483 = vmax.f32 %v1451, 0.0
      %v1484 = vmax.f32 %v1452, 0.0
      %v1485 = vmax.f32 %v1453, 0.0
      %v1486 = vmax.f32 %v1454, 0.0
      %v1487 = vmax.f32 %v1455, 0.0
      %v1488 = vmax.f32 %v1456, 0.0
      %v1489 = vmax.f32 %v1457, 0.0
      %v1490 = vmax.f32 %v1458, 0.0
      %v1491 = vmax.f32 %v1459, 0.0
      %v1492 = vmax.f32 %v1460, 0.0
      %v1493 = vmax.f32 %v1461, 0.0
      %v1494 = vmax.f32 %v1462, 0.0
      %v1495 = vmax.f32 %v1463, 0.0
      %v1496 = vmax.f32 %v1464, 0.0
      %v1497 = vmax.f32 %v1465, 0.0
      %v1498 = vmax.f32 %v1466, 0.0
      %v1499 = vmax.f32 %v1467, 0.0
      %v1500 = vmax.f32 %v1468, 0.0
      %v1501 = vmax.f32 %v1469, 0.0
      %v1502 = vmin.f32 %v1470, 6.0
      %v1503 = vmin.f32 %v1471, 6.0
      %v1504 = vmin.f32 %v1472, 6.0
      %v1505 = vmin.f32 %v1473, 6.0
      %v1506 = vmin.f32 %v1474, 6.0
      %v1507 = vmin.f32 %v1475, 6.0
      %v1508 = vmin.f32 %v1476, 6.0
      %v1509 = vmin.f32 %v1477, 6.0
      %v1510 = vmin.f32 %v1478, 6.0
      %v1511 = vmin.f32 %v1479, 6.0
      %v1512 = vmin.f32 %v1480, 6.0
      %v1513 = vmin.f32 %v1481, 6.0
      %v1514 = vmin.f32 %v1482, 6.0
      %v1515 = vmin.f32 %v1483, 6.0
      %v1516 = vmin.f32 %v1484, 6.0
      %v1517 = vmin.f32 %v1485, 6.0
      %v1518 = vmin.f32 %v1486, 6.0
      %v1519 = vmin.f32 %v1487, 6.0
      %v1520 = vmin.f32 %v1488, 6.0
      %v1521 = vmin.f32 %v1489, 6.0
      %v1522 = vmin.f32 %v1490, 6.0
      %v1523 = vmin.f32 %v1491, 6.0
      %v1524 = vmin.f32 %v1492, 6.0
      %v1525 = vmin.f32 %v1493, 6.0
      %v1526 = vmin.f32 %v1494, 6.0
      %v1527 = vmin.f32 %v1495, 6.0
      %v1528 = vmin.f32 %v1496, 6.0
      %v1529 = vmin.f32 %v1497, 6.0
      %v1530 = vmin.f32 %v1498, 6.0
      %v1531 = vmin.f32 %v1499, 6.0
      %v1532 = vmin.f32 %v1500, 6.0
      %v1533 = vmin.f32 %v1501, 6.0
      %v1534 = vpack.c.bf16 %v1503, %v1502
      %v1535 = vpack.c.bf16 %v1505, %v1504
      %v1536 = vpack.c.bf16 %v1507, %v1506
      %v1537 = vpack.c.bf16 %v1509, %v1508
      %v1538 = vpack.c.bf16 %v1511, %v1510
      %v1539 = vpack.c.bf16 %v1513, %v1512
      %v1540 = vpack.c.bf16 %v1515, %v1514
      %v1541 = vpack.c.bf16 %v1517, %v1516
      %v1542 = vpack.c.bf16 %v1519, %v1518
      %v1543 = vpack.c.bf16 %v1521, %v1520
      %v1544 = vpack.c.bf16 %v1523, %v1522
      %v1545 = vpack.c.bf16 %v1525, %v1524
      %v1546 = vpack.c.bf16 %v1527, %v1526
      %v1547 = vpack.c.bf16 %v1529, %v1528
      %v1548 = vpack.c.bf16 %v1531, %v1530
      %v1549 = vpack.c.bf16 %v1533, %v1532
      %v1550 = vld [vmem:[%s3] sm:$0xf]
      %v1551 = vld [vmem:[%s3 + $0x4] sm:$0xf]
      %v1552 = vld [vmem:[%s3 + $0x8] sm:$0xf]
      %v1553 = vld [vmem:[%s3 + $0xc] sm:$0xf]
      %v1554 = vld [vmem:[%s4] sm:$0x1]
      %v1556 = vlaneseq
      %v1557 = vshrl.u32 %v1556, 7
      %v1558 = vsub.s32 0, %v1557
      %v1559 = vrot.slane %v1554, %v1558
      %v1565 = vunpack.c.l.b16 %v1550
      %v1566 = vunpack.c.l.b16 %v1551
      %v1567 = vunpack.c.l.b16 %v1552
      %v1568 = vunpack.c.l.b16 %v1553
      %v1569 = vpack.c.b16 %v1566, %v1565
      %v1570 = vpack.c.b16 %v1568, %v1567
      %v1574 = vsel %vm442, %v1534, 0
      %v1577 = vsel %vm442, %v1535, 0
      %v1580 = vsel %vm442, %v1536, 0
      %v1583 = vsel %vm442, %v1537, 0
      %v1586 = vsel %vm442, %v1538, 0
      %v1589 = vsel %vm442, %v1539, 0
      %v1592 = vsel %vm442, %v1540, 0
      %v1595 = vsel %vm442, %v1541, 0
      %v1598 = vsel %vm442, %v1542, 0
      %v1601 = vsel %vm442, %v1543, 0
      %v1604 = vsel %vm442, %v1544, 0
      %v1607 = vsel %vm442, %v1545, 0
      %v1610 = vsel %vm442, %v1546, 0
      %v1613 = vsel %vm442, %v1547, 0
      %v1616 = vsel %vm442, %v1548, 0
      %v1619 = vsel %vm442, %v1549, 0
      %1621 = vmatprep.subr.bf16.mxu0 0
      %1622 = vmatpush1.bf16.msra.mxu0 %v1569
      %1623 = vmatprep.subr.bf16.mxu0 0
      %1624 = vmatpush1.bf16.msra.mxu0 %v1570
      %1625 = vmatprep.subr.bf16.mxu0 0
      %1626 = vmatpush1.bf16.msra.mxu0 0
      %1627 = vmatprep.subr.bf16.mxu0 0
      %1628 = vmatpush1.bf16.msra.mxu0 0
      %1629 = vmatprep.subr.bf16.mxu0 0
      %1630 = vmatpush1.bf16.msra.mxu0 0
      %1631 = vmatprep.subr.bf16.mxu0 0
      %1632 = vmatpush1.bf16.msra.mxu0 0
      %1633 = vmatprep.subr.bf16.mxu0 0
      %1634 = vmatpush1.bf16.msra.mxu0 0
      %1635 = vmatprep.subr.bf16.mxu0 0
      %1636 = vmatpush1.bf16.msra.mxu0 0
      %1637 = vmatprep.subr.bf16.mxu0 0
      %1638 = vmatpush1.bf16.msra.mxu0 0
      %1639 = vmatprep.subr.bf16.mxu0 0
      %1640 = vmatpush1.bf16.msra.mxu0 0
      %1641 = vmatprep.subr.bf16.mxu0 0
      %1642 = vmatpush1.bf16.msra.mxu0 0
      %1643 = vmatprep.subr.bf16.mxu0 0
      %1644 = vmatpush1.bf16.msra.mxu0 0
      %1645 = vmatprep.subr.bf16.mxu0 0
      %1646 = vmatpush1.bf16.msra.mxu0 0
      %1647 = vmatprep.subr.bf16.mxu0 0
      %1648 = vmatpush1.bf16.msra.mxu0 0
      %1649 = vmatprep.subr.bf16.mxu0 0
      %1650 = vmatpush1.bf16.msra.mxu0 0
      %1651 = vmatprep.subr.bf16.mxu0 0
      %1652 = vmatpush1.bf16.msra.mxu0 0
      %1653 = vmatprep.mubr.bf16.mxu0 0
      %1654 = vmatmul.mubr.bf16.gmra.mrb[0].mxu0 %v1574
      %v1655 = vpop.f32.mrb[0].mxu0
      %v1656 = vadd.f32 %v1559, %v1655
      %v1657 = vpop.f32.mrb[0].mxu0
      %v1658 = vpop.f32.mrb[0].mxu0
      %v1659 = vadd.f32 %v1559, %v1658
      %v1660 = vpop.f32.mrb[0].mxu0
      %1661 = vmatprep.mubr.bf16.mxu0 0
      %1662 = vmatmul.mubr.bf16.gmra.mrb[0].mxu0 %v1577
      %v1663 = vpop.f32.mrb[0].mxu0
      %v1664 = vadd.f32 %v1559, %v1663
      %v1665 = vpop.f32.mrb[0].mxu0
      %v1666 = vpop.f32.mrb[0].mxu0
      %v1667 = vadd.f32 %v1559, %v1666
      %v1668 = vpop.f32.mrb[0].mxu0
      %1669 = vmatprep.mubr.bf16.mxu0 0
      %1670 = vmatmul.mubr.bf16.gmra.mrb[0].mxu0 %v1580
      %v1671 = vpop.f32.mrb[0].mxu0
      %v1672 = vadd.f32 %v1559, %v1671
      %v1673 = vpop.f32.mrb[0].mxu0
      %v1674 = vpop.f32.mrb[0].mxu0
      %v1675 = vadd.f32 %v1559, %v1674
      %v1676 = vpop.f32.mrb[0].mxu0
      %1677 = vmatprep.mubr.bf16.mxu0 0
      %1678 = vmatmul.mubr.bf16.gmra.mrb[0].mxu0 %v1583
      %v1679 = vpop.f32.mrb[0].mxu0
      %v1680 = vadd.f32 %v1559, %v1679
      %v1681 = vpop.f32.mrb[0].mxu0
      %v1682 = vpop.f32.mrb[0].mxu0
      %v1683 = vadd.f32 %v1559, %v1682
      %v1684 = vpop.f32.mrb[0].mxu0
      %1685 = vmatprep.mubr.bf16.mxu0 0
      %1686 = vmatmul.mubr.bf16.gmra.mrb[0].mxu0 %v1586
      %v1687 = vpop.f32.mrb[0].mxu0
      %v1688 = vadd.f32 %v1559, %v1687
      %v1689 = vpop.f32.mrb[0].mxu0
      %v1690 = vpop.f32.mrb[0].mxu0
      %v1691 = vadd.f32 %v1559, %v1690
      %v1692 = vpop.f32.mrb[0].mxu0
      %1693 = vmatprep.mubr.bf16.mxu0 0
      %1694 = vmatmul.mubr.bf16.gmra.mrb[0].mxu0 %v1589
      %v1695 = vpop.f32.mrb[0].mxu0
      %v1696 = vadd.f32 %v1559, %v1695
      %v1697 = vpop.f32.mrb[0].mxu0
      %v1698 = vpop.f32.mrb[0].mxu0
      %v1699 = vadd.f32 %v1559, %v1698
      %v1700 = vpop.f32.mrb[0].mxu0
      %1701 = vmatprep.mubr.bf16.mxu0 0
      %1702 = vmatmul.mubr.bf16.gmra.mrb[0].mxu0 %v1592
      %v1703 = vpop.f32.mrb[0].mxu0
      %v1704 = vadd.f32 %v1559, %v1703
      %v1705 = vpop.f32.mrb[0].mxu0
      %v1706 = vpop.f32.mrb[0].mxu0
      %v1707 = vadd.f32 %v1559, %v1706
      %v1708 = vpop.f32.mrb[0].mxu0
      %1709 = vmatprep.mubr.bf16.mxu0 0
      %1710 = vmatmul.mubr.bf16.gmra.mrb[0].mxu0 %v1595
      %v1711 = vpop.f32.mrb[0].mxu0
      %v1712 = vadd.f32 %v1559, %v1711
      %v1713 = vpop.f32.mrb[0].mxu0
      %v1714 = vpop.f32.mrb[0].mxu0
      %v1715 = vadd.f32 %v1559, %v1714
      %v1716 = vpop.f32.mrb[0].mxu0
      %1717 = vmatprep.mubr.bf16.mxu0 0
      %1718 = vmatmul.mubr.bf16.gmra.mrb[0].mxu0 %v1598
      %v1719 = vpop.f32.mrb[0].mxu0
      %v1720 = vadd.f32 %v1559, %v1719
      %v1721 = vpop.f32.mrb[0].mxu0
      %v1722 = vpop.f32.mrb[0].mxu0
      %v1723 = vadd.f32 %v1559, %v1722
      %v1724 = vpop.f32.mrb[0].mxu0
      %1725 = vmatprep.mubr.bf16.mxu0 0
      %1726 = vmatmul.mubr.bf16.gmra.mrb[0].mxu0 %v1601
      %v1727 = vpop.f32.mrb[0].mxu0
      %v1728 = vadd.f32 %v1559, %v1727
      %v1729 = vpop.f32.mrb[0].mxu0
      %v1730 = vpop.f32.mrb[0].mxu0
      %v1731 = vadd.f32 %v1559, %v1730
      %v1732 = vpop.f32.mrb[0].mxu0
      %1733 = vmatprep.mubr.bf16.mxu0 0
      %1734 = vmatmul.mubr.bf16.gmra.mrb[0].mxu0 %v1604
      %v1735 = vpop.f32.mrb[0].mxu0
      %v1736 = vadd.f32 %v1559, %v1735
      %v1737 = vpop.f32.mrb[0].mxu0
      %v1738 = vpop.f32.mrb[0].mxu0
      %v1739 = vadd.f32 %v1559, %v1738
      %v1740 = vpop.f32.mrb[0].mxu0
      %1741 = vmatprep.mubr.bf16.mxu0 0
      %1742 = vmatmul.mubr.bf16.gmra.mrb[0].mxu0 %v1607
      %v1743 = vpop.f32.mrb[0].mxu0
      %v1744 = vadd.f32 %v1559, %v1743
      %v1745 = vpop.f32.mrb[0].mxu0
      %v1746 = vpop.f32.mrb[0].mxu0
      %v1747 = vadd.f32 %v1559, %v1746
      %v1748 = vpop.f32.mrb[0].mxu0
      %1749 = vmatprep.mubr.bf16.mxu0 0
      %1750 = vmatmul.mubr.bf16.gmra.mrb[0].mxu0 %v1610
      %v1751 = vpop.f32.mrb[0].mxu0
      %v1752 = vadd.f32 %v1559, %v1751
      %v1753 = vpop.f32.mrb[0].mxu0
      %v1754 = vpop.f32.mrb[0].mxu0
      %v1755 = vadd.f32 %v1559, %v1754
      %v1756 = vpop.f32.mrb[0].mxu0
      %1757 = vmatprep.mubr.bf16.mxu0 0
      %1758 = vmatmul.mubr.bf16.gmra.mrb[0].mxu0 %v1613
      %v1759 = vpop.f32.mrb[0].mxu0
      %v1760 = vadd.f32 %v1559, %v1759
      %v1761 = vpop.f32.mrb[0].mxu0
      %v1762 = vpop.f32.mrb[0].mxu0
      %v1763 = vadd.f32 %v1559, %v1762
      %v1764 = vpop.f32.mrb[0].mxu0
      %1765 = vmatprep.mubr.bf16.mxu0 0
      %1766 = vmatmul.mubr.bf16.gmra.mrb[0].mxu0 %v1616
      %v1767 = vpop.f32.mrb[0].mxu0
      %v1768 = vadd.f32 %v1559, %v1767
      %v1769 = vpop.f32.mrb[0].mxu0
      %v1770 = vpop.f32.mrb[0].mxu0
      %v1771 = vadd.f32 %v1559, %v1770
      %v1772 = vpop.f32.mrb[0].mxu0
      %1773 = vmatprep.mubr.bf16.mxu0 0
      %1774 = vmatmul.mubr.bf16.gmra.mrb[0].mxu0 %v1619
      %v1775 = vpop.f32.mrb[0].mxu0
      %v1776 = vadd.f32 %v1559, %v1775
      %v1777 = vpop.f32.mrb[0].mxu0
      %v1778 = vpop.f32.mrb[0].mxu0
      %v1779 = vadd.f32 %v1559, %v1778
      %v1780 = vpop.f32.mrb[0].mxu0
      %1781 = vdwg.mxu0
      %vm1782 = vcmask 195584
      %1783 = vst.msk [vmem:[%s367] sm:$0xff] %vm1782, %v1656
      %1784 = vst.msk [vmem:[%s367 + $0x8] sm:$0xff] %vm1782, %v1659
      %1785 = vst.msk [vmem:[%s367 + $0x10] sm:$0xff] %vm1782, %v1664
      %1786 = vst.msk [vmem:[%s367 + $0x18] sm:$0xff] %vm1782, %v1667
      %1787 = vst.msk [vmem:[%s367 + $0x20] sm:$0xff] %vm1782, %v1672
      %1788 = vst.msk [vmem:[%s367 + $0x28] sm:$0xff] %vm1782, %v1675
      %1789 = vst.msk [vmem:[%s367 + $0x30] sm:$0xff] %vm1782, %v1680
      %1790 = vst.msk [vmem:[%s367 + $0x38] sm:$0xff] %vm1782, %v1683
      %1791 = vst.msk [vmem:[%s367 + $0x40] sm:$0xff] %vm1782, %v1688
      %1792 = vst.msk [vmem:[%s367 + $0x48] sm:$0xff] %vm1782, %v1691
      %1793 = vst.msk [vmem:[%s367 + $0x50] sm:$0xff] %vm1782, %v1696
      %1794 = vst.msk [vmem:[%s367 + $0x58] sm:$0xff] %vm1782, %v1699
      %1795 = vst.msk [vmem:[%s367 + $0x60] sm:$0xff] %vm1782, %v1704
      %1796 = vst.msk [vmem:[%s367 + $0x68] sm:$0xff] %vm1782, %v1707
      %1797 = vst.msk [vmem:[%s367 + $0x70] sm:$0xff] %vm1782, %v1712
      %1798 = vst.msk [vmem:[%s367 + $0x78] sm:$0xff] %vm1782, %v1715
      %1799 = vst.msk [vmem:[%s367 + $0x80] sm:$0xff] %vm1782, %v1720
      %1800 = vst.msk [vmem:[%s367 + $0x88] sm:$0xff] %vm1782, %v1723
      %1801 = vst.msk [vmem:[%s367 + $0x90] sm:$0xff] %vm1782, %v1728
      %1802 = vst.msk [vmem:[%s367 + $0x98] sm:$0xff] %vm1782, %v1731
      %1803 = vst.msk [vmem:[%s367 + $0xa0] sm:$0xff] %vm1782, %v1736
      %1804 = vst.msk [vmem:[%s367 + $0xa8] sm:$0xff] %vm1782, %v1739
      %1805 = vst.msk [vmem:[%s367 + $0xb0] sm:$0xff] %vm1782, %v1744
      %1806 = vst.msk [vmem:[%s367 + $0xb8] sm:$0xff] %vm1782, %v1747
      %1807 = vst.msk [vmem:[%s367 + $0xc0] sm:$0xff] %vm1782, %v1752
      %1808 = vst.msk [vmem:[%s367 + $0xc8] sm:$0xff] %vm1782, %v1755
      %1809 = vst.msk [vmem:[%s367 + $0xd0] sm:$0xff] %vm1782, %v1760
      %1810 = vst.msk [vmem:[%s367 + $0xd8] sm:$0xff] %vm1782, %v1763
      %1811 = vst.msk [vmem:[%s367 + $0xe0] sm:$0xff] %vm1782, %v1768
      %1812 = vst.msk [vmem:[%s367 + $0xe8] sm:$0xff] %vm1782, %v1771
      %1813 = vst.msk [vmem:[%s367 + $0xf0] sm:$0xff] %vm1782, %v1776
      %1814 = vst.msk [vmem:[%s367 + $0xf8] sm:$0xff] %vm1782, %v1779
      %v1815 = vld [vmem:[%s5] sm:$0x7]
      %v1816 = vld [vmem:[%s5 + $0x4] sm:$0x7]
      %v1817 = vld [vmem:[%s5 + $0x8] sm:$0x7]
      %v1818 = vld [vmem:[%s6] sm:$0x1]
      %1819 = vst.msk [vmem:[#allocation2] sm:$0xff] %vm442, 0.0
      %1820 = vst.msk [vmem:[#allocation2 + $0x8] sm:$0xff] %vm442, 0.0
      %1821 = vst.msk [vmem:[#allocation2 + $0x10] sm:$0x3] %vm445, 0.0
      %1822 = vst.msk [vmem:[#allocation2 + $0x18] sm:$0xff] %vm442, 0.0
      %1823 = vst.msk [vmem:[#allocation2 + $0x20] sm:$0xff] %vm442, 0.0
      %1824 = vst.msk [vmem:[#allocation2 + $0x28] sm:$0x3] %vm445, 0.0
      %1825 = vst.msk [vmem:[#allocation2 + $0x30] sm:$0xff] %vm442, 0.0
      %1826 = vst.msk [vmem:[#allocation2 + $0x38] sm:$0xff] %vm442, 0.0
      %1827 = vst.msk [vmem:[#allocation2 + $0x40] sm:$0x3] %vm445, 0.0
      %1828 = vst.msk [vmem:[#allocation2 + $0x48] sm:$0xff] %vm442, 0.0
      %1829 = vst.msk [vmem:[#allocation2 + $0x50] sm:$0xff] %vm442, 0.0
      %1830 = vst.msk [vmem:[#allocation2 + $0x58] sm:$0x3] %vm445, 0.0
      %1831 = vst.msk [vmem:[#allocation2 + $0x60] sm:$0xff] %vm442, 0.0
      %1832 = vst.msk [vmem:[#allocation2 + $0x68] sm:$0xff] %vm442, 0.0
      %1833 = vst.msk [vmem:[#allocation2 + $0x70] sm:$0x3] %vm445, 0.0
      %1834 = vst.msk [vmem:[#allocation2 + $0x78] sm:$0xff] %vm442, 0.0
      %1835 = vst.msk [vmem:[#allocation2 + $0x80] sm:$0xff] %vm442, 0.0
      %1836 = vst.msk [vmem:[#allocation2 + $0x88] sm:$0x3] %vm445, 0.0
      %1837 = vst.msk [vmem:[#allocation2 + $0x90] sm:$0xff] %vm442, 0.0
      %1838 = vst.msk [vmem:[#allocation2 + $0x98] sm:$0xff] %vm442, 0.0
      %1839 = vst.msk [vmem:[#allocation2 + $0xa0] sm:$0x3] %vm445, 0.0
      %1840 = vst.msk [vmem:[#allocation2 + $0xa8] sm:$0xff] %vm442, 0.0
      %1841 = vst.msk [vmem:[#allocation2 + $0xb0] sm:$0xff] %vm442, 0.0
      %1842 = vst.msk [vmem:[#allocation2 + $0xb8] sm:$0x3] %vm445, 0.0
      %1843 = vst.msk [vmem:[#allocation2 + $0xc0] sm:$0xff] %vm442, 0.0
      %1844 = vst.msk [vmem:[#allocation2 + $0xc8] sm:$0xff] %vm442, 0.0
      %1845 = vst.msk [vmem:[#allocation2 + $0xd0] sm:$0x3] %vm445, 0.0
      %1846 = vst.msk [vmem:[#allocation2 + $0xd8] sm:$0xff] %vm442, 0.0
      %1847 = vst.msk [vmem:[#allocation2 + $0xe0] sm:$0xff] %vm442, 0.0
      %1848 = vst.msk [vmem:[#allocation2 + $0xe8] sm:$0x3] %vm445, 0.0
      %1849 = vst.msk [vmem:[#allocation2 + $0xf0] sm:$0xff] %vm442, 0.0
      %1850 = vst.msk [vmem:[#allocation2 + $0xf8] sm:$0xff] %vm442, 0.0
      %1851 = vst.msk [vmem:[#allocation2 + $0x100] sm:$0x3] %vm445, 0.0
      %1852 = vst.msk [vmem:[#allocation2 + $0x108] sm:$0xff] %vm442, 0.0
      %1853 = vst.msk [vmem:[#allocation2 + $0x110] sm:$0xff] %vm442, 0.0
      %1854 = vst.msk [vmem:[#allocation2 + $0x118] sm:$0x3] %vm445, 0.0
      %1855 = vst.msk [vmem:[#allocation2 + $0x120] sm:$0xff] %vm442, 0.0
      %1856 = vst.msk [vmem:[#allocation2 + $0x128] sm:$0xff] %vm442, 0.0
      %1857 = vst.msk [vmem:[#allocation2 + $0x130] sm:$0x3] %vm445, 0.0
      %1858 = vst.msk [vmem:[#allocation2 + $0x138] sm:$0xff] %vm442, 0.0
      %1859 = vst.msk [vmem:[#allocation2 + $0x140] sm:$0xff] %vm442, 0.0
      %1860 = vst.msk [vmem:[#allocation2 + $0x148] sm:$0x3] %vm445, 0.0
      %1861 = vst.msk [vmem:[#allocation2 + $0x150] sm:$0xff] %vm442, 0.0
      %1862 = vst.msk [vmem:[#allocation2 + $0x158] sm:$0xff] %vm442, 0.0
      %1863 = vst.msk [vmem:[#allocation2 + $0x160] sm:$0x3] %vm445, 0.0
      %1864 = vst.msk [vmem:[#allocation2 + $0x168] sm:$0xff] %vm442, 0.0
      %1865 = vst.msk [vmem:[#allocation2 + $0x170] sm:$0xff] %vm442, 0.0
      %1866 = vst.msk [vmem:[#allocation2 + $0x178] sm:$0x3] %vm445, 0.0
      %1867 = vst.msk [vmem:[#allocation2 + $0x180] sm:$0xff] %vm442, 0.0
      %1868 = vst.msk [vmem:[#allocation2 + $0x188] sm:$0xff] %vm442, 0.0
      %1869 = vst.msk [vmem:[#allocation2 + $0x190] sm:$0x3] %vm445, 0.0
      %1870 = vst.msk [vmem:[#allocation2 + $0x198] sm:$0xff] %vm442, 0.0
      %1871 = vst.msk [vmem:[#allocation2 + $0x1a0] sm:$0xff] %vm442, 0.0
      %1872 = vst.msk [vmem:[#allocation2 + $0x1a8] sm:$0x3] %vm445, 0.0
      %1873 = vst.msk [vmem:[%s498 + $0x1] sm:$0xff] %vm442, %v406
      %1874 = vst.msk [vmem:[%s498 + $0x9] sm:$0xff] %vm442, %v407
      %1875 = vst.msk [vmem:[%s498 + $0x19] sm:$0xff] %vm442, %v408
      %1876 = vst.msk [vmem:[%s498 + $0x21] sm:$0xff] %vm442, %v409
      %1877 = vst.msk [vmem:[%s498 + $0x31] sm:$0xff] %vm442, %v410
      %1878 = vst.msk [vmem:[%s498 + $0x39] sm:$0xff] %vm442, %v411
      %1879 = vst.msk [vmem:[%s498 + $0x49] sm:$0xff] %vm442, %v412
      %1880 = vst.msk [vmem:[%s498 + $0x51] sm:$0xff] %vm442, %v413
      %1881 = vst.msk [vmem:[%s498 + $0x61] sm:$0xff] %vm442, %v414
      %1882 = vst.msk [vmem:[%s498 + $0x69] sm:$0xff] %vm442, %v415
      %1883 = vst.msk [vmem:[%s498 + $0x79] sm:$0xff] %vm442, %v416
      %1884 = vst.msk [vmem:[%s498 + $0x81] sm:$0xff] %vm442, %v417
      %1885 = vst.msk [vmem:[%s498 + $0x91] sm:$0xff] %vm442, %v418
      %1886 = vst.msk [vmem:[%s498 + $0x99] sm:$0xff] %vm442, %v419
      %1887 = vst.msk [vmem:[%s498 + $0xa9] sm:$0xff] %vm442, %v420
      %1888 = vst.msk [vmem:[%s498 + $0xb1] sm:$0xff] %vm442, %v421
      %1889 = vst.msk [vmem:[%s498 + $0xc1] sm:$0xff] %vm442, %v422
      %1890 = vst.msk [vmem:[%s498 + $0xc9] sm:$0xff] %vm442, %v423
      %1891 = vst.msk [vmem:[%s498 + $0xd9] sm:$0xff] %vm442, %v424
      %1892 = vst.msk [vmem:[%s498 + $0xe1] sm:$0xff] %vm442, %v425
      %1893 = vst.msk [vmem:[%s498 + $0xf1] sm:$0xff] %vm442, %v426
      %1894 = vst.msk [vmem:[%s498 + $0xf9] sm:$0xff] %vm442, %v427
      %1895 = vst.msk [vmem:[%s498 + $0x109] sm:$0xff] %vm442, %v428
      %1896 = vst.msk [vmem:[%s498 + $0x111] sm:$0xff] %vm442, %v429
      %1897 = vst.msk [vmem:[%s498 + $0x121] sm:$0xff] %vm442, %v430
      %1898 = vst.msk [vmem:[%s498 + $0x129] sm:$0xff] %vm442, %v431
      %1899 = vst.msk [vmem:[%s498 + $0x139] sm:$0xff] %vm442, %v432
      %1900 = vst.msk [vmem:[%s498 + $0x141] sm:$0xff] %vm442, %v433
      %1901 = vst.msk [vmem:[%s498 + $0x151] sm:$0xff] %vm442, %v434
      %1902 = vst.msk [vmem:[%s498 + $0x159] sm:$0xff] %vm442, %v435
      %1903 = vst.msk [vmem:[%s498 + $0x169] sm:$0xff] %vm442, %v436
      %1904 = vst.msk [vmem:[%s498 + $0x171] sm:$0xff] %vm442, %v437
      %v1905 = vld [vmem:[#allocation2] sm:$0xff]
      %v1906 = vld [vmem:[#allocation2 + $0x8] sm:$0xff]
      %v1907 = vld [vmem:[#allocation2 + $0x18] sm:$0xff]
      %v1908 = vld [vmem:[#allocation2 + $0x20] sm:$0xff]
      %v1909 = vld [vmem:[#allocation2 + $0x30] sm:$0xff]
      %v1910 = vld [vmem:[#allocation2 + $0x38] sm:$0xff]
      %v1911 = vld [vmem:[#allocation2 + $0x48] sm:$0xff]
      %v1912 = vld [vmem:[#allocation2 + $0x50] sm:$0xff]
      %v1913 = vld [vmem:[#allocation2 + $0x60] sm:$0xff]
      %v1914 = vld [vmem:[#allocation2 + $0x68] sm:$0xff]
      %v1915 = vld [vmem:[#allocation2 + $0x78] sm:$0xff]
      %v1916 = vld [vmem:[#allocation2 + $0x80] sm:$0xff]
      %v1917 = vld [vmem:[#allocation2 + $0x90] sm:$0xff]
      %v1918 = vld [vmem:[#allocation2 + $0x98] sm:$0xff]
      %v1919 = vld [vmem:[#allocation2 + $0xa8] sm:$0xff]
      %v1920 = vld [vmem:[#allocation2 + $0xb0] sm:$0xff]
      %v1921 = vld [vmem:[#allocation2 + $0xc0] sm:$0xff]
      %v1922 = vld [vmem:[#allocation2 + $0xc8] sm:$0xff]
      %v1923 = vld [vmem:[#allocation2 + $0xd8] sm:$0xff]
      %v1924 = vld [vmem:[#allocation2 + $0xe0] sm:$0xff]
      %v1925 = vld [vmem:[#allocation2 + $0xf0] sm:$0xff]
      %v1926 = vld [vmem:[#allocation2 + $0xf8] sm:$0xff]
      %v1927 = vld [vmem:[#allocation2 + $0x108] sm:$0xff]
      %v1928 = vld [vmem:[#allocation2 + $0x110] sm:$0xff]
      %v1929 = vld [vmem:[#allocation2 + $0x120] sm:$0xff]
      %v1930 = vld [vmem:[#allocation2 + $0x128] sm:$0xff]
      %v1931 = vld [vmem:[#allocation2 + $0x138] sm:$0xff]
      %v1932 = vld [vmem:[#allocation2 + $0x140] sm:$0xff]
      %v1933 = vld [vmem:[#allocation2 + $0x150] sm:$0xff]
      %v1934 = vld [vmem:[#allocation2 + $0x158] sm:$0xff]
      %v1935 = vld [vmem:[#allocation2 + $0x168] sm:$0xff]
      %v1936 = vld [vmem:[#allocation2 + $0x170] sm:$0xff]
      %v1937 = vlaneseq
      %v1938 = vshrl.u32 %v1937, 7
      %v1939 = vsub.s32 0, %v1938
      %v1940 = vrot.slane %v1815, %v1939
      %v1941 = vmul.f32 %v1905, %v1940
      %v1942 = vmul.f32 %v1906, %v1940
      %v1943 = vmul.f32 %v1907, %v1940
      %v1944 = vmul.f32 %v1908, %v1940
      %v1945 = vmul.f32 %v1909, %v1940
      %v1946 = vmul.f32 %v1910, %v1940
      %v1947 = vmul.f32 %v1911, %v1940
      %v1948 = vmul.f32 %v1912, %v1940
      %v1949 = vmul.f32 %v1913, %v1940
      %v1950 = vmul.f32 %v1914, %v1940
      %v1951 = vmul.f32 %v1915, %v1940
      %v1952 = vmul.f32 %v1916, %v1940
      %v1953 = vmul.f32 %v1917, %v1940
      %v1954 = vmul.f32 %v1918, %v1940
      %v1955 = vmul.f32 %v1919, %v1940
      %v1956 = vmul.f32 %v1920, %v1940
      %v1957 = vmul.f32 %v1921, %v1940
      %v1958 = vmul.f32 %v1922, %v1940
      %v1959 = vmul.f32 %v1923, %v1940
      %v1960 = vmul.f32 %v1924, %v1940
      %v1961 = vmul.f32 %v1925, %v1940
      %v1962 = vmul.f32 %v1926, %v1940
      %v1963 = vmul.f32 %v1927, %v1940
      %v1964 = vmul.f32 %v1928, %v1940
      %v1965 = vmul.f32 %v1929, %v1940
      %v1966 = vmul.f32 %v1930, %v1940
      %v1967 = vmul.f32 %v1931, %v1940
      %v1968 = vmul.f32 %v1932, %v1940
      %v1969 = vmul.f32 %v1933, %v1940
      %v1970 = vmul.f32 %v1934, %v1940
      %v1971 = vmul.f32 %v1935, %v1940
      %v1972 = vmul.f32 %v1936, %v1940
      %v1973 = vadd.f32 %v1941, 0.0
      %v1974 = vadd.f32 %v1942, 0.0
      %v1975 = vadd.f32 %v1943, 0.0
      %v1976 = vadd.f32 %v1944, 0.0
      %v1977 = vadd.f32 %v1945, 0.0
      %v1978 = vadd.f32 %v1946, 0.0
      %v1979 = vadd.f32 %v1947, 0.0
      %v1980 = vadd.f32 %v1948, 0.0
      %v1981 = vadd.f32 %v1949, 0.0
      %v1982 = vadd.f32 %v1950, 0.0
      %v1983 = vadd.f32 %v1951, 0.0
      %v1984 = vadd.f32 %v1952, 0.0
      %v1985 = vadd.f32 %v1953, 0.0
      %v1986 = vadd.f32 %v1954, 0.0
      %v1987 = vadd.f32 %v1955, 0.0
      %v1988 = vadd.f32 %v1956, 0.0
      %v1989 = vadd.f32 %v1957, 0.0
      %v1990 = vadd.f32 %v1958, 0.0
      %v1991 = vadd.f32 %v1959, 0.0
      %v1992 = vadd.f32 %v1960, 0.0
      %v1993 = vadd.f32 %v1961, 0.0
      %v1994 = vadd.f32 %v1962, 0.0
      %v1995 = vadd.f32 %v1963, 0.0
      %v1996 = vadd.f32 %v1964, 0.0
      %v1997 = vadd.f32 %v1965, 0.0
      %v1998 = vadd.f32 %v1966, 0.0
      %v1999 = vadd.f32 %v1967, 0.0
      %v2000 = vadd.f32 %v1968, 0.0
      %v2001 = vadd.f32 %v1969, 0.0
      %v2002 = vadd.f32 %v1970, 0.0
      %v2003 = vadd.f32 %v1971, 0.0
      %v2004 = vadd.f32 %v1972, 0.0
      %v2005 = vld [vmem:[#allocation2 + $0x1] sm:$0xff]
      %v2006 = vld [vmem:[#allocation2 + $0x9] sm:$0xff]
      %v2007 = vld [vmem:[#allocation2 + $0x19] sm:$0xff]
      %v2008 = vld [vmem:[#allocation2 + $0x21] sm:$0xff]
      %v2009 = vld [vmem:[#allocation2 + $0x31] sm:$0xff]
      %v2010 = vld [vmem:[#allocation2 + $0x39] sm:$0xff]
      %v2011 = vld [vmem:[#allocation2 + $0x49] sm:$0xff]
      %v2012 = vld [vmem:[#allocation2 + $0x51] sm:$0xff]
      %v2013 = vld [vmem:[#allocation2 + $0x61] sm:$0xff]
      %v2014 = vld [vmem:[#allocation2 + $0x69] sm:$0xff]
      %v2015 = vld [vmem:[#allocation2 + $0x79] sm:$0xff]
      %v2016 = vld [vmem:[#allocation2 + $0x81] sm:$0xff]
      %v2017 = vld [vmem:[#allocation2 + $0x91] sm:$0xff]
      %v2018 = vld [vmem:[#allocation2 + $0x99] sm:$0xff]
      %v2019 = vld [vmem:[#allocation2 + $0xa9] sm:$0xff]
      %v2020 = vld [vmem:[#allocation2 + $0xb1] sm:$0xff]
      %v2021 = vld [vmem:[#allocation2 + $0xc1] sm:$0xff]
      %v2022 = vld [vmem:[#allocation2 + $0xc9] sm:$0xff]
      %v2023 = vld [vmem:[#allocation2 + $0xd9] sm:$0xff]
      %v2024 = vld [vmem:[#allocation2 + $0xe1] sm:$0xff]
      %v2025 = vld [vmem:[#allocation2 + $0xf1] sm:$0xff]
      %v2026 = vld [vmem:[#allocation2 + $0xf9] sm:$0xff]
      %v2027 = vld [vmem:[#allocation2 + $0x109] sm:$0xff]
      %v2028 = vld [vmem:[#allocation2 + $0x111] sm:$0xff]
      %v2029 = vld [vmem:[#allocation2 + $0x121] sm:$0xff]
      %v2030 = vld [vmem:[#allocation2 + $0x129] sm:$0xff]
      %v2031 = vld [vmem:[#allocation2 + $0x139] sm:$0xff]
      %v2032 = vld [vmem:[#allocation2 + $0x141] sm:$0xff]
      %v2033 = vld [vmem:[#allocation2 + $0x151] sm:$0xff]
      %v2034 = vld [vmem:[#allocation2 + $0x159] sm:$0xff]
      %v2035 = vld [vmem:[#allocation2 + $0x169] sm:$0xff]
      %v2036 = vld [vmem:[#allocation2 + $0x171] sm:$0xff]
      %v2037 = vlaneseq
      %v2038 = vshrl.u32 %v2037, 7
      %v2039 = vsub.s32 1, %v2038
      %v2040 = vrot.slane %v1815, %v2039
      %v2041 = vmul.f32 %v2005, %v2040
      %v2042 = vmul.f32 %v2006, %v2040
      %v2043 = vmul.f32 %v2007, %v2040
      %v2044 = vmul.f32 %v2008, %v2040
      %v2045 = vmul.f32 %v2009, %v2040
      %v2046 = vmul.f32 %v2010, %v2040
      %v2047 = vmul.f32 %v2011, %v2040
      %v2048 = vmul.f32 %v2012, %v2040
      %v2049 = vmul.f32 %v2013, %v2040
      %v2050 = vmul.f32 %v2014, %v2040
      %v2051 = vmul.f32 %v2015, %v2040
      %v2052 = vmul.f32 %v2016, %v2040
      %v2053 = vmul.f32 %v2017, %v2040
      %v2054 = vmul.f32 %v2018, %v2040
      %v2055 = vmul.f32 %v2019, %v2040
      %v2056 = vmul.f32 %v2020, %v2040
      %v2057 = vmul.f32 %v2021, %v2040
      %v2058 = vmul.f32 %v2022, %v2040
      %v2059 = vmul.f32 %v2023, %v2040
      %v2060 = vmul.f32 %v2024, %v2040
      %v2061 = vmul.f32 %v2025, %v2040
      %v2062 = vmul.f32 %v2026, %v2040
      %v2063 = vmul.f32 %v2027, %v2040
      %v2064 = vmul.f32 %v2028, %v2040
      %v2065 = vmul.f32 %v2029, %v2040
      %v2066 = vmul.f32 %v2030, %v2040
      %v2067 = vmul.f32 %v2031, %v2040
      %v2068 = vmul.f32 %v2032, %v2040
      %v2069 = vmul.f32 %v2033, %v2040
      %v2070 = vmul.f32 %v2034, %v2040
      %v2071 = vmul.f32 %v2035, %v2040
      %v2072 = vmul.f32 %v2036, %v2040
      %v2073 = vadd.f32 %v1973, %v2041
      %v2074 = vadd.f32 %v1974, %v2042
      %v2075 = vadd.f32 %v1975, %v2043
      %v2076 = vadd.f32 %v1976, %v2044
      %v2077 = vadd.f32 %v1977, %v2045
      %v2078 = vadd.f32 %v1978, %v2046
      %v2079 = vadd.f32 %v1979, %v2047
      %v2080 = vadd.f32 %v1980, %v2048
      %v2081 = vadd.f32 %v1981, %v2049
      %v2082 = vadd.f32 %v1982, %v2050
      %v2083 = vadd.f32 %v1983, %v2051
      %v2084 = vadd.f32 %v1984, %v2052
      %v2085 = vadd.f32 %v1985, %v2053
      %v2086 = vadd.f32 %v1986, %v2054
      %v2087 = vadd.f32 %v1987, %v2055
      %v2088 = vadd.f32 %v1988, %v2056
      %v2089 = vadd.f32 %v1989, %v2057
      %v2090 = vadd.f32 %v1990, %v2058
      %v2091 = vadd.f32 %v1991, %v2059
      %v2092 = vadd.f32 %v1992, %v2060
      %v2093 = vadd.f32 %v1993, %v2061
      %v2094 = vadd.f32 %v1994, %v2062
      %v2095 = vadd.f32 %v1995, %v2063
      %v2096 = vadd.f32 %v1996, %v2064
      %v2097 = vadd.f32 %v1997, %v2065
      %v2098 = vadd.f32 %v1998, %v2066
      %v2099 = vadd.f32 %v1999, %v2067
      %v2100 = vadd.f32 %v2000, %v2068
      %v2101 = vadd.f32 %v2001, %v2069
      %v2102 = vadd.f32 %v2002, %v2070
      %v2103 = vadd.f32 %v2003, %v2071
      %v2104 = vadd.f32 %v2004, %v2072
      %v2105 = vld [vmem:[#allocation2 + $0x2] sm:$0xff]
      %v2106 = vld [vmem:[#allocation2 + $0xa] sm:$0xff]
      %v2107 = vld [vmem:[#allocation2 + $0x1a] sm:$0xff]
      %v2108 = vld [vmem:[#allocation2 + $0x22] sm:$0xff]
      %v2109 = vld [vmem:[#allocation2 + $0x32] sm:$0xff]
      %v2110 = vld [vmem:[#allocation2 + $0x3a] sm:$0xff]
      %v2111 = vld [vmem:[#allocation2 + $0x4a] sm:$0xff]
      %v2112 = vld [vmem:[#allocation2 + $0x52] sm:$0xff]
      %v2113 = vld [vmem:[#allocation2 + $0x62] sm:$0xff]
      %v2114 = vld [vmem:[#allocation2 + $0x6a] sm:$0xff]
      %v2115 = vld [vmem:[#allocation2 + $0x7a] sm:$0xff]
      %v2116 = vld [vmem:[#allocation2 + $0x82] sm:$0xff]
      %v2117 = vld [vmem:[#allocation2 + $0x92] sm:$0xff]
      %v2118 = vld [vmem:[#allocation2 + $0x9a] sm:$0xff]
      %v2119 = vld [vmem:[#allocation2 + $0xaa] sm:$0xff]
      %v2120 = vld [vmem:[#allocation2 + $0xb2] sm:$0xff]
      %v2121 = vld [vmem:[#allocation2 + $0xc2] sm:$0xff]
      %v2122 = vld [vmem:[#allocation2 + $0xca] sm:$0xff]
      %v2123 = vld [vmem:[#allocation2 + $0xda] sm:$0xff]
      %v2124 = vld [vmem:[#allocation2 + $0xe2] sm:$0xff]
      %v2125 = vld [vmem:[#allocation2 + $0xf2] sm:$0xff]
      %v2126 = vld [vmem:[#allocation2 + $0xfa] sm:$0xff]
      %v2127 = vld [vmem:[#allocation2 + $0x10a] sm:$0xff]
      %v2128 = vld [vmem:[#allocation2 + $0x112] sm:$0xff]
      %v2129 = vld [vmem:[#allocation2 + $0x122] sm:$0xff]
      %v2130 = vld [vmem:[#allocation2 + $0x12a] sm:$0xff]
      %v2131 = vld [vmem:[#allocation2 + $0x13a] sm:$0xff]
      %v2132 = vld [vmem:[#allocation2 + $0x142] sm:$0xff]
      %v2133 = vld [vmem:[#allocation2 + $0x152] sm:$0xff]
      %v2134 = vld [vmem:[#allocation2 + $0x15a] sm:$0xff]
      %v2135 = vld [vmem:[#allocation2 + $0x16a] sm:$0xff]
      %v2136 = vld [vmem:[#allocation2 + $0x172] sm:$0xff]
      %v2137 = vlaneseq
      %v2138 = vshrl.u32 %v2137, 7
      %v2139 = vsub.s32 2, %v2138
      %v2140 = vrot.slane %v1815, %v2139
      %v2141 = vmul.f32 %v2105, %v2140
      %v2142 = vmul.f32 %v2106, %v2140
      %v2143 = vmul.f32 %v2107, %v2140
      %v2144 = vmul.f32 %v2108, %v2140
      %v2145 = vmul.f32 %v2109, %v2140
      %v2146 = vmul.f32 %v2110, %v2140
      %v2147 = vmul.f32 %v2111, %v2140
      %v2148 = vmul.f32 %v2112, %v2140
      %v2149 = vmul.f32 %v2113, %v2140
      %v2150 = vmul.f32 %v2114, %v2140
      %v2151 = vmul.f32 %v2115, %v2140
      %v2152 = vmul.f32 %v2116, %v2140
      %v2153 = vmul.f32 %v2117, %v2140
      %v2154 = vmul.f32 %v2118, %v2140
      %v2155 = vmul.f32 %v2119, %v2140
      %v2156 = vmul.f32 %v2120, %v2140
      %v2157 = vmul.f32 %v2121, %v2140
      %v2158 = vmul.f32 %v2122, %v2140
      %v2159 = vmul.f32 %v2123, %v2140
      %v2160 = vmul.f32 %v2124, %v2140
      %v2161 = vmul.f32 %v2125, %v2140
      %v2162 = vmul.f32 %v2126, %v2140
      %v2163 = vmul.f32 %v2127, %v2140
      %v2164 = vmul.f32 %v2128, %v2140
      %v2165 = vmul.f32 %v2129, %v2140
      %v2166 = vmul.f32 %v2130, %v2140
      %v2167 = vmul.f32 %v2131, %v2140
      %v2168 = vmul.f32 %v2132, %v2140
      %v2169 = vmul.f32 %v2133, %v2140
      %v2170 = vmul.f32 %v2134, %v2140
      %v2171 = vmul.f32 %v2135, %v2140
      %v2172 = vmul.f32 %v2136, %v2140
      %v2173 = vadd.f32 %v2073, %v2141
      %v2174 = vadd.f32 %v2074, %v2142
      %v2175 = vadd.f32 %v2075, %v2143
      %v2176 = vadd.f32 %v2076, %v2144
      %v2177 = vadd.f32 %v2077, %v2145
      %v2178 = vadd.f32 %v2078, %v2146
      %v2179 = vadd.f32 %v2079, %v2147
      %v2180 = vadd.f32 %v2080, %v2148
      %v2181 = vadd.f32 %v2081, %v2149
      %v2182 = vadd.f32 %v2082, %v2150
      %v2183 = vadd.f32 %v2083, %v2151
      %v2184 = vadd.f32 %v2084, %v2152
      %v2185 = vadd.f32 %v2085, %v2153
      %v2186 = vadd.f32 %v2086, %v2154
      %v2187 = vadd.f32 %v2087, %v2155
      %v2188 = vadd.f32 %v2088, %v2156
      %v2189 = vadd.f32 %v2089, %v2157
      %v2190 = vadd.f32 %v2090, %v2158
      %v2191 = vadd.f32 %v2091, %v2159
      %v2192 = vadd.f32 %v2092, %v2160
      %v2193 = vadd.f32 %v2093, %v2161
      %v2194 = vadd.f32 %v2094, %v2162
      %v2195 = vadd.f32 %v2095, %v2163
      %v2196 = vadd.f32 %v2096, %v2164
      %v2197 = vadd.f32 %v2097, %v2165
      %v2198 = vadd.f32 %v2098, %v2166
      %v2199 = vadd.f32 %v2099, %v2167
      %v2200 = vadd.f32 %v2100, %v2168
      %v2201 = vadd.f32 %v2101, %v2169
      %v2202 = vadd.f32 %v2102, %v2170
      %v2203 = vadd.f32 %v2103, %v2171
      %v2204 = vadd.f32 %v2104, %v2172
      %v2205 = vld [vmem:[%s498] sm:$0xff]
      %v2206 = vld [vmem:[%s498 + $0x8] sm:$0xff]
      %v2207 = vld [vmem:[%s498 + $0x18] sm:$0xff]
      %v2208 = vld [vmem:[%s498 + $0x20] sm:$0xff]
      %v2209 = vld [vmem:[%s498 + $0x30] sm:$0xff]
      %v2210 = vld [vmem:[%s498 + $0x38] sm:$0xff]
      %v2211 = vld [vmem:[%s498 + $0x48] sm:$0xff]
      %v2212 = vld [vmem:[%s498 + $0x50] sm:$0xff]
      %v2213 = vld [vmem:[%s498 + $0x60] sm:$0xff]
      %v2214 = vld [vmem:[%s498 + $0x68] sm:$0xff]
      %v2215 = vld [vmem:[%s498 + $0x78] sm:$0xff]
      %v2216 = vld [vmem:[%s498 + $0x80] sm:$0xff]
      %v2217 = vld [vmem:[%s498 + $0x90] sm:$0xff]
      %v2218 = vld [vmem:[%s498 + $0x98] sm:$0xff]
      %v2219 = vld [vmem:[%s498 + $0xa8] sm:$0xff]
      %v2220 = vld [vmem:[%s498 + $0xb0] sm:$0xff]
      %v2221 = vld [vmem:[%s498 + $0xc0] sm:$0xff]
      %v2222 = vld [vmem:[%s498 + $0xc8] sm:$0xff]
      %v2223 = vld [vmem:[%s498 + $0xd8] sm:$0xff]
      %v2224 = vld [vmem:[%s498 + $0xe0] sm:$0xff]
      %v2225 = vld [vmem:[%s498 + $0xf0] sm:$0xff]
      %v2226 = vld [vmem:[%s498 + $0xf8] sm:$0xff]
      %v2227 = vld [vmem:[%s498 + $0x108] sm:$0xff]
      %v2228 = vld [vmem:[%s498 + $0x110] sm:$0xff]
      %v2229 = vld [vmem:[%s498 + $0x120] sm:$0xff]
      %v2230 = vld [vmem:[%s498 + $0x128] sm:$0xff]
      %v2231 = vld [vmem:[%s498 + $0x138] sm:$0xff]
      %v2232 = vld [vmem:[%s498 + $0x140] sm:$0xff]
      %v2233 = vld [vmem:[%s498 + $0x150] sm:$0xff]
      %v2234 = vld [vmem:[%s498 + $0x158] sm:$0xff]
      %v2235 = vld [vmem:[%s498 + $0x168] sm:$0xff]
      %v2236 = vld [vmem:[%s498 + $0x170] sm:$0xff]
      %v2237 = vlaneseq
      %v2238 = vshrl.u32 %v2237, 7
      %v2239 = vsub.s32 0, %v2238
      %v2240 = vrot.slane %v1816, %v2239
      %v2241 = vmul.f32 %v2205, %v2240
      %v2242 = vmul.f32 %v2206, %v2240
      %v2243 = vmul.f32 %v2207, %v2240
      %v2244 = vmul.f32 %v2208, %v2240
      %v2245 = vmul.f32 %v2209, %v2240
      %v2246 = vmul.f32 %v2210, %v2240
      %v2247 = vmul.f32 %v2211, %v2240
      %v2248 = vmul.f32 %v2212, %v2240
      %v2249 = vmul.f32 %v2213, %v2240
      %v2250 = vmul.f32 %v2214, %v2240
      %v2251 = vmul.f32 %v2215, %v2240
      %v2252 = vmul.f32 %v2216, %v2240
      %v2253 = vmul.f32 %v2217, %v2240
      %v2254 = vmul.f32 %v2218, %v2240
      %v2255 = vmul.f32 %v2219, %v2240
      %v2256 = vmul.f32 %v2220, %v2240
      %v2257 = vmul.f32 %v2221, %v2240
      %v2258 = vmul.f32 %v2222, %v2240
      %v2259 = vmul.f32 %v2223, %v2240
      %v2260 = vmul.f32 %v2224, %v2240
      %v2261 = vmul.f32 %v2225, %v2240
      %v2262 = vmul.f32 %v2226, %v2240
      %v2263 = vmul.f32 %v2227, %v2240
      %v2264 = vmul.f32 %v2228, %v2240
      %v2265 = vmul.f32 %v2229, %v2240
      %v2266 = vmul.f32 %v2230, %v2240
      %v2267 = vmul.f32 %v2231, %v2240
      %v2268 = vmul.f32 %v2232, %v2240
      %v2269 = vmul.f32 %v2233, %v2240
      %v2270 = vmul.f32 %v2234, %v2240
      %v2271 = vmul.f32 %v2235, %v2240
      %v2272 = vmul.f32 %v2236, %v2240
      %v2273 = vadd.f32 %v2173, %v2241
      %v2274 = vadd.f32 %v2174, %v2242
      %v2275 = vadd.f32 %v2175, %v2243
      %v2276 = vadd.f32 %v2176, %v2244
      %v2277 = vadd.f32 %v2177, %v2245
      %v2278 = vadd.f32 %v2178, %v2246
      %v2279 = vadd.f32 %v2179, %v2247
      %v2280 = vadd.f32 %v2180, %v2248
      %v2281 = vadd.f32 %v2181, %v2249
      %v2282 = vadd.f32 %v2182, %v2250
      %v2283 = vadd.f32 %v2183, %v2251
      %v2284 = vadd.f32 %v2184, %v2252
      %v2285 = vadd.f32 %v2185, %v2253
      %v2286 = vadd.f32 %v2186, %v2254
      %v2287 = vadd.f32 %v2187, %v2255
      %v2288 = vadd.f32 %v2188, %v2256
      %v2289 = vadd.f32 %v2189, %v2257
      %v2290 = vadd.f32 %v2190, %v2258
      %v2291 = vadd.f32 %v2191, %v2259
      %v2292 = vadd.f32 %v2192, %v2260
      %v2293 = vadd.f32 %v2193, %v2261
      %v2294 = vadd.f32 %v2194, %v2262
      %v2295 = vadd.f32 %v2195, %v2263
      %v2296 = vadd.f32 %v2196, %v2264
      %v2297 = vadd.f32 %v2197, %v2265
      %v2298 = vadd.f32 %v2198, %v2266
      %v2299 = vadd.f32 %v2199, %v2267
      %v2300 = vadd.f32 %v2200, %v2268
      %v2301 = vadd.f32 %v2201, %v2269
      %v2302 = vadd.f32 %v2202, %v2270
      %v2303 = vadd.f32 %v2203, %v2271
      %v2304 = vadd.f32 %v2204, %v2272
      %v2305 = vld [vmem:[%s498 + $0x1] sm:$0xff]
      %v2306 = vld [vmem:[%s498 + $0x9] sm:$0xff]
      %v2307 = vld [vmem:[%s498 + $0x19] sm:$0xff]
      %v2308 = vld [vmem:[%s498 + $0x21] sm:$0xff]
      %v2309 = vld [vmem:[%s498 + $0x31] sm:$0xff]
      %v2310 = vld [vmem:[%s498 + $0x39] sm:$0xff]
      %v2311 = vld [vmem:[%s498 + $0x49] sm:$0xff]
      %v2312 = vld [vmem:[%s498 + $0x51] sm:$0xff]
      %v2313 = vld [vmem:[%s498 + $0x61] sm:$0xff]
      %v2314 = vld [vmem:[%s498 + $0x69] sm:$0xff]
      %v2315 = vld [vmem:[%s498 + $0x79] sm:$0xff]
      %v2316 = vld [vmem:[%s498 + $0x81] sm:$0xff]
      %v2317 = vld [vmem:[%s498 + $0x91] sm:$0xff]
      %v2318 = vld [vmem:[%s498 + $0x99] sm:$0xff]
      %v2319 = vld [vmem:[%s498 + $0xa9] sm:$0xff]
      %v2320 = vld [vmem:[%s498 + $0xb1] sm:$0xff]
      %v2321 = vld [vmem:[%s498 + $0xc1] sm:$0xff]
      %v2322 = vld [vmem:[%s498 + $0xc9] sm:$0xff]
      %v2323 = vld [vmem:[%s498 + $0xd9] sm:$0xff]
      %v2324 = vld [vmem:[%s498 + $0xe1] sm:$0xff]
      %v2325 = vld [vmem:[%s498 + $0xf1] sm:$0xff]
      %v2326 = vld [vmem:[%s498 + $0xf9] sm:$0xff]
      %v2327 = vld [vmem:[%s498 + $0x109] sm:$0xff]
      %v2328 = vld [vmem:[%s498 + $0x111] sm:$0xff]
      %v2329 = vld [vmem:[%s498 + $0x121] sm:$0xff]
      %v2330 = vld [vmem:[%s498 + $0x129] sm:$0xff]
      %v2331 = vld [vmem:[%s498 + $0x139] sm:$0xff]
      %v2332 = vld [vmem:[%s498 + $0x141] sm:$0xff]
      %v2333 = vld [vmem:[%s498 + $0x151] sm:$0xff]
      %v2334 = vld [vmem:[%s498 + $0x159] sm:$0xff]
      %v2335 = vld [vmem:[%s498 + $0x169] sm:$0xff]
      %v2336 = vld [vmem:[%s498 + $0x171] sm:$0xff]
      %v2337 = vlaneseq
      %v2338 = vshrl.u32 %v2337, 7
      %v2339 = vsub.s32 1, %v2338
      %v2340 = vrot.slane %v1816, %v2339
      %v2341 = vmul.f32 %v2305, %v2340
      %v2342 = vmul.f32 %v2306, %v2340
      %v2343 = vmul.f32 %v2307, %v2340
      %v2344 = vmul.f32 %v2308, %v2340
      %v2345 = vmul.f32 %v2309, %v2340
      %v2346 = vmul.f32 %v2310, %v2340
      %v2347 = vmul.f32 %v2311, %v2340
      %v2348 = vmul.f32 %v2312, %v2340
      %v2349 = vmul.f32 %v2313, %v2340
      %v2350 = vmul.f32 %v2314, %v2340
      %v2351 = vmul.f32 %v2315, %v2340
      %v2352 = vmul.f32 %v2316, %v2340
      %v2353 = vmul.f32 %v2317, %v2340
      %v2354 = vmul.f32 %v2318, %v2340
      %v2355 = vmul.f32 %v2319, %v2340
      %v2356 = vmul.f32 %v2320, %v2340
      %v2357 = vmul.f32 %v2321, %v2340
      %v2358 = vmul.f32 %v2322, %v2340
      %v2359 = vmul.f32 %v2323, %v2340
      %v2360 = vmul.f32 %v2324, %v2340
      %v2361 = vmul.f32 %v2325, %v2340
      %v2362 = vmul.f32 %v2326, %v2340
      %v2363 = vmul.f32 %v2327, %v2340
      %v2364 = vmul.f32 %v2328, %v2340
      %v2365 = vmul.f32 %v2329, %v2340
      %v2366 = vmul.f32 %v2330, %v2340
      %v2367 = vmul.f32 %v2331, %v2340
      %v2368 = vmul.f32 %v2332, %v2340
      %v2369 = vmul.f32 %v2333, %v2340
      %v2370 = vmul.f32 %v2334, %v2340
      %v2371 = vmul.f32 %v2335, %v2340
      %v2372 = vmul.f32 %v2336, %v2340
      %v2373 = vadd.f32 %v2273, %v2341
      %v2374 = vadd.f32 %v2274, %v2342
      %v2375 = vadd.f32 %v2275, %v2343
      %v2376 = vadd.f32 %v2276, %v2344
      %v2377 = vadd.f32 %v2277, %v2345
      %v2378 = vadd.f32 %v2278, %v2346
      %v2379 = vadd.f32 %v2279, %v2347
      %v2380 = vadd.f32 %v2280, %v2348
      %v2381 = vadd.f32 %v2281, %v2349
      %v2382 = vadd.f32 %v2282, %v2350
      %v2383 = vadd.f32 %v2283, %v2351
      %v2384 = vadd.f32 %v2284, %v2352
      %v2385 = vadd.f32 %v2285, %v2353
      %v2386 = vadd.f32 %v2286, %v2354
      %v2387 = vadd.f32 %v2287, %v2355
      %v2388 = vadd.f32 %v2288, %v2356
      %v2389 = vadd.f32 %v2289, %v2357
      %v2390 = vadd.f32 %v2290, %v2358
      %v2391 = vadd.f32 %v2291, %v2359
      %v2392 = vadd.f32 %v2292, %v2360
      %v2393 = vadd.f32 %v2293, %v2361
      %v2394 = vadd.f32 %v2294, %v2362
      %v2395 = vadd.f32 %v2295, %v2363
      %v2396 = vadd.f32 %v2296, %v2364
      %v2397 = vadd.f32 %v2297, %v2365
      %v2398 = vadd.f32 %v2298, %v2366
      %v2399 = vadd.f32 %v2299, %v2367
      %v2400 = vadd.f32 %v2300, %v2368
      %v2401 = vadd.f32 %v2301, %v2369
      %v2402 = vadd.f32 %v2302, %v2370
      %v2403 = vadd.f32 %v2303, %v2371
      %v2404 = vadd.f32 %v2304, %v2372
      %v2405 = vld [vmem:[%s498 + $0x2] sm:$0xff]
      %v2406 = vld [vmem:[%s498 + $0xa] sm:$0xff]
      %v2407 = vld [vmem:[%s498 + $0x1a] sm:$0xff]
      %v2408 = vld [vmem:[%s498 + $0x22] sm:$0xff]
      %v2409 = vld [vmem:[%s498 + $0x32] sm:$0xff]
      %v2410 = vld [vmem:[%s498 + $0x3a] sm:$0xff]
      %v2411 = vld [vmem:[%s498 + $0x4a] sm:$0xff]
      %v2412 = vld [vmem:[%s498 + $0x52] sm:$0xff]
      %v2413 = vld [vmem:[%s498 + $0x62] sm:$0xff]
      %v2414 = vld [vmem:[%s498 + $0x6a] sm:$0xff]
      %v2415 = vld [vmem:[%s498 + $0x7a] sm:$0xff]
      %v2416 = vld [vmem:[%s498 + $0x82] sm:$0xff]
      %v2417 = vld [vmem:[%s498 + $0x92] sm:$0xff]
      %v2418 = vld [vmem:[%s498 + $0x9a] sm:$0xff]
      %v2419 = vld [vmem:[%s498 + $0xaa] sm:$0xff]
      %v2420 = vld [vmem:[%s498 + $0xb2] sm:$0xff]
      %v2421 = vld [vmem:[%s498 + $0xc2] sm:$0xff]
      %v2422 = vld [vmem:[%s498 + $0xca] sm:$0xff]
      %v2423 = vld [vmem:[%s498 + $0xda] sm:$0xff]
      %v2424 = vld [vmem:[%s498 + $0xe2] sm:$0xff]
      %v2425 = vld [vmem:[%s498 + $0xf2] sm:$0xff]
      %v2426 = vld [vmem:[%s498 + $0xfa] sm:$0xff]
      %v2427 = vld [vmem:[%s498 + $0x10a] sm:$0xff]
      %v2428 = vld [vmem:[%s498 + $0x112] sm:$0xff]
      %v2429 = vld [vmem:[%s498 + $0x122] sm:$0xff]
      %v2430 = vld [vmem:[%s498 + $0x12a] sm:$0xff]
      %v2431 = vld [vmem:[%s498 + $0x13a] sm:$0xff]
      %v2432 = vld [vmem:[%s498 + $0x142] sm:$0xff]
      %v2433 = vld [vmem:[%s498 + $0x152] sm:$0xff]
      %v2434 = vld [vmem:[%s498 + $0x15a] sm:$0xff]
      %v2435 = vld [vmem:[%s498 + $0x16a] sm:$0xff]
      %v2436 = vld [vmem:[%s498 + $0x172] sm:$0xff]
      %v2437 = vlaneseq
      %v2438 = vshrl.u32 %v2437, 7
      %v2439 = vsub.s32 2, %v2438
      %v2440 = vrot.slane %v1816, %v2439
      %v2441 = vmul.f32 %v2405, %v2440
      %v2442 = vmul.f32 %v2406, %v2440
      %v2443 = vmul.f32 %v2407, %v2440
      %v2444 = vmul.f32 %v2408, %v2440
      %v2445 = vmul.f32 %v2409, %v2440
      %v2446 = vmul.f32 %v2410, %v2440
      %v2447 = vmul.f32 %v2411, %v2440
      %v2448 = vmul.f32 %v2412, %v2440
      %v2449 = vmul.f32 %v2413, %v2440
      %v2450 = vmul.f32 %v2414, %v2440
      %v2451 = vmul.f32 %v2415, %v2440
      %v2452 = vmul.f32 %v2416, %v2440
      %v2453 = vmul.f32 %v2417, %v2440
      %v2454 = vmul.f32 %v2418, %v2440
      %v2455 = vmul.f32 %v2419, %v2440
      %v2456 = vmul.f32 %v2420, %v2440
      %v2457 = vmul.f32 %v2421, %v2440
      %v2458 = vmul.f32 %v2422, %v2440
      %v2459 = vmul.f32 %v2423, %v2440
      %v2460 = vmul.f32 %v2424, %v2440
      %v2461 = vmul.f32 %v2425, %v2440
      %v2462 = vmul.f32 %v2426, %v2440
      %v2463 = vmul.f32 %v2427, %v2440
      %v2464 = vmul.f32 %v2428, %v2440
      %v2465 = vmul.f32 %v2429, %v2440
      %v2466 = vmul.f32 %v2430, %v2440
      %v2467 = vmul.f32 %v2431, %v2440
      %v2468 = vmul.f32 %v2432, %v2440
      %v2469 = vmul.f32 %v2433, %v2440
      %v2470 = vmul.f32 %v2434, %v2440
      %v2471 = vmul.f32 %v2435, %v2440
      %v2472 = vmul.f32 %v2436, %v2440
      %v2473 = vadd.f32 %v2373, %v2441
      %v2474 = vadd.f32 %v2374, %v2442
      %v2475 = vadd.f32 %v2375, %v2443
      %v2476 = vadd.f32 %v2376, %v2444
      %v2477 = vadd.f32 %v2377, %v2445
      %v2478 = vadd.f32 %v2378, %v2446
      %v2479 = vadd.f32 %v2379, %v2447
      %v2480 = vadd.f32 %v2380, %v2448
      %v2481 = vadd.f32 %v2381, %v2449
      %v2482 = vadd.f32 %v2382, %v2450
      %v2483 = vadd.f32 %v2383, %v2451
      %v2484 = vadd.f32 %v2384, %v2452
      %v2485 = vadd.f32 %v2385, %v2453
      %v2486 = vadd.f32 %v2386, %v2454
      %v2487 = vadd.f32 %v2387, %v2455
      %v2488 = vadd.f32 %v2388, %v2456
      %v2489 = vadd.f32 %v2389, %v2457
      %v2490 = vadd.f32 %v2390, %v2458
      %v2491 = vadd.f32 %v2391, %v2459
      %v2492 = vadd.f32 %v2392, %v2460
      %v2493 = vadd.f32 %v2393, %v2461
      %v2494 = vadd.f32 %v2394, %v2462
      %v2495 = vadd.f32 %v2395, %v2463
      %v2496 = vadd.f32 %v2396, %v2464
      %v2497 = vadd.f32 %v2397, %v2465
      %v2498 = vadd.f32 %v2398, %v2466
      %v2499 = vadd.f32 %v2399, %v2467
      %v2500 = vadd.f32 %v2400, %v2468
      %v2501 = vadd.f32 %v2401, %v2469
      %v2502 = vadd.f32 %v2402, %v2470
      %v2503 = vadd.f32 %v2403, %v2471
      %v2504 = vadd.f32 %v2404, %v2472
      %v2505 = vld [vmem:[%s1131] sm:$0xff]
      %v2506 = vld [vmem:[%s1131 + $0x8] sm:$0xff]
      %v2507 = vld [vmem:[%s1131 + $0x18] sm:$0xff]
      %v2508 = vld [vmem:[%s1131 + $0x20] sm:$0xff]
      %v2509 = vld [vmem:[%s1131 + $0x30] sm:$0xff]
      %v2510 = vld [vmem:[%s1131 + $0x38] sm:$0xff]
      %v2511 = vld [vmem:[%s1131 + $0x48] sm:$0xff]
      %v2512 = vld [vmem:[%s1131 + $0x50] sm:$0xff]
      %v2513 = vld [vmem:[%s1131 + $0x60] sm:$0xff]
      %v2514 = vld [vmem:[%s1131 + $0x68] sm:$0xff]
      %v2515 = vld [vmem:[%s1131 + $0x78] sm:$0xff]
      %v2516 = vld [vmem:[%s1131 + $0x80] sm:$0xff]
      %v2517 = vld [vmem:[%s1131 + $0x90] sm:$0xff]
      %v2518 = vld [vmem:[%s1131 + $0x98] sm:$0xff]
      %v2519 = vld [vmem:[%s1131 + $0xa8] sm:$0xff]
      %v2520 = vld [vmem:[%s1131 + $0xb0] sm:$0xff]
      %v2521 = vld [vmem:[%s1131 + $0xc0] sm:$0xff]
      %v2522 = vld [vmem:[%s1131 + $0xc8] sm:$0xff]
      %v2523 = vld [vmem:[%s1131 + $0xd8] sm:$0xff]
      %v2524 = vld [vmem:[%s1131 + $0xe0] sm:$0xff]
      %v2525 = vld [vmem:[%s1131 + $0xf0] sm:$0xff]
      %v2526 = vld [vmem:[%s1131 + $0xf8] sm:$0xff]
      %v2527 = vld [vmem:[%s1131 + $0x108] sm:$0xff]
      %v2528 = vld [vmem:[%s1131 + $0x110] sm:$0xff]
      %v2529 = vld [vmem:[%s1131 + $0x120] sm:$0xff]
      %v2530 = vld [vmem:[%s1131 + $0x128] sm:$0xff]
      %v2531 = vld [vmem:[%s1131 + $0x138] sm:$0xff]
      %v2532 = vld [vmem:[%s1131 + $0x140] sm:$0xff]
      %v2533 = vld [vmem:[%s1131 + $0x150] sm:$0xff]
      %v2534 = vld [vmem:[%s1131 + $0x158] sm:$0xff]
      %v2535 = vld [vmem:[%s1131 + $0x168] sm:$0xff]
      %v2536 = vld [vmem:[%s1131 + $0x170] sm:$0xff]
      %v2537 = vlaneseq
      %v2538 = vshrl.u32 %v2537, 7
      %v2539 = vsub.s32 0, %v2538
      %v2540 = vrot.slane %v1817, %v2539
      %v2541 = vmul.f32 %v2505, %v2540
      %v2542 = vmul.f32 %v2506, %v2540
      %v2543 = vmul.f32 %v2507, %v2540
      %v2544 = vmul.f32 %v2508, %v2540
      %v2545 = vmul.f32 %v2509, %v2540
      %v2546 = vmul.f32 %v2510, %v2540
      %v2547 = vmul.f32 %v2511, %v2540
      %v2548 = vmul.f32 %v2512, %v2540
      %v2549 = vmul.f32 %v2513, %v2540
      %v2550 = vmul.f32 %v2514, %v2540
      %v2551 = vmul.f32 %v2515, %v2540
      %v2552 = vmul.f32 %v2516, %v2540
      %v2553 = vmul.f32 %v2517, %v2540
      %v2554 = vmul.f32 %v2518, %v2540
      %v2555 = vmul.f32 %v2519, %v2540
      %v2556 = vmul.f32 %v2520, %v2540
      %v2557 = vmul.f32 %v2521, %v2540
      %v2558 = vmul.f32 %v2522, %v2540
      %v2559 = vmul.f32 %v2523, %v2540
      %v2560 = vmul.f32 %v2524, %v2540
      %v2561 = vmul.f32 %v2525, %v2540
      %v2562 = vmul.f32 %v2526, %v2540
      %v2563 = vmul.f32 %v2527, %v2540
      %v2564 = vmul.f32 %v2528, %v2540
      %v2565 = vmul.f32 %v2529, %v2540
      %v2566 = vmul.f32 %v2530, %v2540
      %v2567 = vmul.f32 %v2531, %v2540
      %v2568 = vmul.f32 %v2532, %v2540
      %v2569 = vmul.f32 %v2533, %v2540
      %v2570 = vmul.f32 %v2534, %v2540
      %v2571 = vmul.f32 %v2535, %v2540
      %v2572 = vmul.f32 %v2536, %v2540
      %v2573 = vadd.f32 %v2473, %v2541
      %v2574 = vadd.f32 %v2474, %v2542
      %v2575 = vadd.f32 %v2475, %v2543
      %v2576 = vadd.f32 %v2476, %v2544
      %v2577 = vadd.f32 %v2477, %v2545
      %v2578 = vadd.f32 %v2478, %v2546
      %v2579 = vadd.f32 %v2479, %v2547
      %v2580 = vadd.f32 %v2480, %v2548
      %v2581 = vadd.f32 %v2481, %v2549
      %v2582 = vadd.f32 %v2482, %v2550
      %v2583 = vadd.f32 %v2483, %v2551
      %v2584 = vadd.f32 %v2484, %v2552
      %v2585 = vadd.f32 %v2485, %v2553
      %v2586 = vadd.f32 %v2486, %v2554
      %v2587 = vadd.f32 %v2487, %v2555
      %v2588 = vadd.f32 %v2488, %v2556
      %v2589 = vadd.f32 %v2489, %v2557
      %v2590 = vadd.f32 %v2490, %v2558
      %v2591 = vadd.f32 %v2491, %v2559
      %v2592 = vadd.f32 %v2492, %v2560
      %v2593 = vadd.f32 %v2493, %v2561
      %v2594 = vadd.f32 %v2494, %v2562
      %v2595 = vadd.f32 %v2495, %v2563
      %v2596 = vadd.f32 %v2496, %v2564
      %v2597 = vadd.f32 %v2497, %v2565
      %v2598 = vadd.f32 %v2498, %v2566
      %v2599 = vadd.f32 %v2499, %v2567
      %v2600 = vadd.f32 %v2500, %v2568
      %v2601 = vadd.f32 %v2501, %v2569
      %v2602 = vadd.f32 %v2502, %v2570
      %v2603 = vadd.f32 %v2503, %v2571
      %v2604 = vadd.f32 %v2504, %v2572
      %v2605 = vld [vmem:[%s1131 + $0x1] sm:$0xff]
      %v2606 = vld [vmem:[%s1131 + $0x9] sm:$0xff]
      %v2607 = vld [vmem:[%s1131 + $0x19] sm:$0xff]
      %v2608 = vld [vmem:[%s1131 + $0x21] sm:$0xff]
      %v2609 = vld [vmem:[%s1131 + $0x31] sm:$0xff]
      %v2610 = vld [vmem:[%s1131 + $0x39] sm:$0xff]
      %v2611 = vld [vmem:[%s1131 + $0x49] sm:$0xff]
      %v2612 = vld [vmem:[%s1131 + $0x51] sm:$0xff]
      %v2613 = vld [vmem:[%s1131 + $0x61] sm:$0xff]
      %v2614 = vld [vmem:[%s1131 + $0x69] sm:$0xff]
      %v2615 = vld [vmem:[%s1131 + $0x79] sm:$0xff]
      %v2616 = vld [vmem:[%s1131 + $0x81] sm:$0xff]
      %v2617 = vld [vmem:[%s1131 + $0x91] sm:$0xff]
      %v2618 = vld [vmem:[%s1131 + $0x99] sm:$0xff]
      %v2619 = vld [vmem:[%s1131 + $0xa9] sm:$0xff]
      %v2620 = vld [vmem:[%s1131 + $0xb1] sm:$0xff]
      %v2621 = vld [vmem:[%s1131 + $0xc1] sm:$0xff]
      %v2622 = vld [vmem:[%s1131 + $0xc9] sm:$0xff]
      %v2623 = vld [vmem:[%s1131 + $0xd9] sm:$0xff]
      %v2624 = vld [vmem:[%s1131 + $0xe1] sm:$0xff]
      %v2625 = vld [vmem:[%s1131 + $0xf1] sm:$0xff]
      %v2626 = vld [vmem:[%s1131 + $0xf9] sm:$0xff]
      %v2627 = vld [vmem:[%s1131 + $0x109] sm:$0xff]
      %v2628 = vld [vmem:[%s1131 + $0x111] sm:$0xff]
      %v2629 = vld [vmem:[%s1131 + $0x121] sm:$0xff]
      %v2630 = vld [vmem:[%s1131 + $0x129] sm:$0xff]
      %v2631 = vld [vmem:[%s1131 + $0x139] sm:$0xff]
      %v2632 = vld [vmem:[%s1131 + $0x141] sm:$0xff]
      %v2633 = vld [vmem:[%s1131 + $0x151] sm:$0xff]
      %v2634 = vld [vmem:[%s1131 + $0x159] sm:$0xff]
      %v2635 = vld [vmem:[%s1131 + $0x169] sm:$0xff]
      %v2636 = vld [vmem:[%s1131 + $0x171] sm:$0xff]
      %v2637 = vlaneseq
      %v2638 = vshrl.u32 %v2637, 7
      %v2639 = vsub.s32 1, %v2638
      %v2640 = vrot.slane %v1817, %v2639
      %v2641 = vmul.f32 %v2605, %v2640
      %v2642 = vmul.f32 %v2606, %v2640
      %v2643 = vmul.f32 %v2607, %v2640
      %v2644 = vmul.f32 %v2608, %v2640
      %v2645 = vmul.f32 %v2609, %v2640
      %v2646 = vmul.f32 %v2610, %v2640
      %v2647 = vmul.f32 %v2611, %v2640
      %v2648 = vmul.f32 %v2612, %v2640
      %v2649 = vmul.f32 %v2613, %v2640
      %v2650 = vmul.f32 %v2614, %v2640
      %v2651 = vmul.f32 %v2615, %v2640
      %v2652 = vmul.f32 %v2616, %v2640
      %v2653 = vmul.f32 %v2617, %v2640
      %v2654 = vmul.f32 %v2618, %v2640
      %v2655 = vmul.f32 %v2619, %v2640
      %v2656 = vmul.f32 %v2620, %v2640
      %v2657 = vmul.f32 %v2621, %v2640
      %v2658 = vmul.f32 %v2622, %v2640
      %v2659 = vmul.f32 %v2623, %v2640
      %v2660 = vmul.f32 %v2624, %v2640
      %v2661 = vmul.f32 %v2625, %v2640
      %v2662 = vmul.f32 %v2626, %v2640
      %v2663 = vmul.f32 %v2627, %v2640
      %v2664 = vmul.f32 %v2628, %v2640
      %v2665 = vmul.f32 %v2629, %v2640
      %v2666 = vmul.f32 %v2630, %v2640
      %v2667 = vmul.f32 %v2631, %v2640
      %v2668 = vmul.f32 %v2632, %v2640
      %v2669 = vmul.f32 %v2633, %v2640
      %v2670 = vmul.f32 %v2634, %v2640
      %v2671 = vmul.f32 %v2635, %v2640
      %v2672 = vmul.f32 %v2636, %v2640
      %v2673 = vadd.f32 %v2573, %v2641
      %v2674 = vadd.f32 %v2574, %v2642
      %v2675 = vadd.f32 %v2575, %v2643
      %v2676 = vadd.f32 %v2576, %v2644
      %v2677 = vadd.f32 %v2577, %v2645
      %v2678 = vadd.f32 %v2578, %v2646
      %v2679 = vadd.f32 %v2579, %v2647
      %v2680 = vadd.f32 %v2580, %v2648
      %v2681 = vadd.f32 %v2581, %v2649
      %v2682 = vadd.f32 %v2582, %v2650
      %v2683 = vadd.f32 %v2583, %v2651
      %v2684 = vadd.f32 %v2584, %v2652
      %v2685 = vadd.f32 %v2585, %v2653
      %v2686 = vadd.f32 %v2586, %v2654
      %v2687 = vadd.f32 %v2587, %v2655
      %v2688 = vadd.f32 %v2588, %v2656
      %v2689 = vadd.f32 %v2589, %v2657
      %v2690 = vadd.f32 %v2590, %v2658
      %v2691 = vadd.f32 %v2591, %v2659
      %v2692 = vadd.f32 %v2592, %v2660
      %v2693 = vadd.f32 %v2593, %v2661
      %v2694 = vadd.f32 %v2594, %v2662
      %v2695 = vadd.f32 %v2595, %v2663
      %v2696 = vadd.f32 %v2596, %v2664
      %v2697 = vadd.f32 %v2597, %v2665
      %v2698 = vadd.f32 %v2598, %v2666
      %v2699 = vadd.f32 %v2599, %v2667
      %v2700 = vadd.f32 %v2600, %v2668
      %v2701 = vadd.f32 %v2601, %v2669
      %v2702 = vadd.f32 %v2602, %v2670
      %v2703 = vadd.f32 %v2603, %v2671
      %v2704 = vadd.f32 %v2604, %v2672
      %v2705 = vld [vmem:[%s1131 + $0x2] sm:$0xff]
      %v2706 = vld [vmem:[%s1131 + $0xa] sm:$0xff]
      %v2707 = vld [vmem:[%s1131 + $0x1a] sm:$0xff]
      %v2708 = vld [vmem:[%s1131 + $0x22] sm:$0xff]
      %v2709 = vld [vmem:[%s1131 + $0x32] sm:$0xff]
      %v2710 = vld [vmem:[%s1131 + $0x3a] sm:$0xff]
      %v2711 = vld [vmem:[%s1131 + $0x4a] sm:$0xff]
      %v2712 = vld [vmem:[%s1131 + $0x52] sm:$0xff]
      %v2713 = vld [vmem:[%s1131 + $0x62] sm:$0xff]
      %v2714 = vld [vmem:[%s1131 + $0x6a] sm:$0xff]
      %v2715 = vld [vmem:[%s1131 + $0x7a] sm:$0xff]
      %v2716 = vld [vmem:[%s1131 + $0x82] sm:$0xff]
      %v2717 = vld [vmem:[%s1131 + $0x92] sm:$0xff]
      %v2718 = vld [vmem:[%s1131 + $0x9a] sm:$0xff]
      %v2719 = vld [vmem:[%s1131 + $0xaa] sm:$0xff]
      %v2720 = vld [vmem:[%s1131 + $0xb2] sm:$0xff]
      %v2721 = vld [vmem:[%s1131 + $0xc2] sm:$0xff]
      %v2722 = vld [vmem:[%s1131 + $0xca] sm:$0xff]
      %v2723 = vld [vmem:[%s1131 + $0xda] sm:$0xff]
      %v2724 = vld [vmem:[%s1131 + $0xe2] sm:$0xff]
      %v2725 = vld [vmem:[%s1131 + $0xf2] sm:$0xff]
      %v2726 = vld [vmem:[%s1131 + $0xfa] sm:$0xff]
      %v2727 = vld [vmem:[%s1131 + $0x10a] sm:$0xff]
      %v2728 = vld [vmem:[%s1131 + $0x112] sm:$0xff]
      %v2729 = vld [vmem:[%s1131 + $0x122] sm:$0xff]
      %v2730 = vld [vmem:[%s1131 + $0x12a] sm:$0xff]
      %v2731 = vld [vmem:[%s1131 + $0x13a] sm:$0xff]
      %v2732 = vld [vmem:[%s1131 + $0x142] sm:$0xff]
      %v2733 = vld [vmem:[%s1131 + $0x152] sm:$0xff]
      %v2734 = vld [vmem:[%s1131 + $0x15a] sm:$0xff]
      %v2735 = vld [vmem:[%s1131 + $0x16a] sm:$0xff]
      %v2736 = vld [vmem:[%s1131 + $0x172] sm:$0xff]
      %v2737 = vlaneseq
      %v2738 = vshrl.u32 %v2737, 7
      %v2739 = vsub.s32 2, %v2738
      %v2740 = vrot.slane %v1817, %v2739
      %v2741 = vmul.f32 %v2705, %v2740
      %v2742 = vmul.f32 %v2706, %v2740
      %v2743 = vmul.f32 %v2707, %v2740
      %v2744 = vmul.f32 %v2708, %v2740
      %v2745 = vmul.f32 %v2709, %v2740
      %v2746 = vmul.f32 %v2710, %v2740
      %v2747 = vmul.f32 %v2711, %v2740
      %v2748 = vmul.f32 %v2712, %v2740
      %v2749 = vmul.f32 %v2713, %v2740
      %v2750 = vmul.f32 %v2714, %v2740
      %v2751 = vmul.f32 %v2715, %v2740
      %v2752 = vmul.f32 %v2716, %v2740
      %v2753 = vmul.f32 %v2717, %v2740
      %v2754 = vmul.f32 %v2718, %v2740
      %v2755 = vmul.f32 %v2719, %v2740
      %v2756 = vmul.f32 %v2720, %v2740
      %v2757 = vmul.f32 %v2721, %v2740
      %v2758 = vmul.f32 %v2722, %v2740
      %v2759 = vmul.f32 %v2723, %v2740
      %v2760 = vmul.f32 %v2724, %v2740
      %v2761 = vmul.f32 %v2725, %v2740
      %v2762 = vmul.f32 %v2726, %v2740
      %v2763 = vmul.f32 %v2727, %v2740
      %v2764 = vmul.f32 %v2728, %v2740
      %v2765 = vmul.f32 %v2729, %v2740
      %v2766 = vmul.f32 %v2730, %v2740
      %v2767 = vmul.f32 %v2731, %v2740
      %v2768 = vmul.f32 %v2732, %v2740
      %v2769 = vmul.f32 %v2733, %v2740
      %v2770 = vmul.f32 %v2734, %v2740
      %v2771 = vmul.f32 %v2735, %v2740
      %v2772 = vmul.f32 %v2736, %v2740
      %v2773 = vadd.f32 %v2673, %v2741
      %v2774 = vadd.f32 %v2674, %v2742
      %v2775 = vadd.f32 %v2675, %v2743
      %v2776 = vadd.f32 %v2676, %v2744
      %v2777 = vadd.f32 %v2677, %v2745
      %v2778 = vadd.f32 %v2678, %v2746
      %v2779 = vadd.f32 %v2679, %v2747
      %v2780 = vadd.f32 %v2680, %v2748
      %v2781 = vadd.f32 %v2681, %v2749
      %v2782 = vadd.f32 %v2682, %v2750
      %v2783 = vadd.f32 %v2683, %v2751
      %v2784 = vadd.f32 %v2684, %v2752
      %v2785 = vadd.f32 %v2685, %v2753
      %v2786 = vadd.f32 %v2686, %v2754
      %v2787 = vadd.f32 %v2687, %v2755
      %v2788 = vadd.f32 %v2688, %v2756
      %v2789 = vadd.f32 %v2689, %v2757
      %v2790 = vadd.f32 %v2690, %v2758
      %v2791 = vadd.f32 %v2691, %v2759
      %v2792 = vadd.f32 %v2692, %v2760
      %v2793 = vadd.f32 %v2693, %v2761
      %v2794 = vadd.f32 %v2694, %v2762
      %v2795 = vadd.f32 %v2695, %v2763
      %v2796 = vadd.f32 %v2696, %v2764
      %v2797 = vadd.f32 %v2697, %v2765
      %v2798 = vadd.f32 %v2698, %v2766
      %v2799 = vadd.f32 %v2699, %v2767
      %v2800 = vadd.f32 %v2700, %v2768
      %v2801 = vadd.f32 %v2701, %v2769
      %v2802 = vadd.f32 %v2702, %v2770
      %v2803 = vadd.f32 %v2703, %v2771
      %v2804 = vadd.f32 %v2704, %v2772
      %v2806 = vlaneseq
      %v2807 = vshrl.u32 %v2806, 7
      %v2808 = vsub.s32 0, %v2807
      %v2809 = vrot.slane %v1818, %v2808
      %v2811 = vadd.f32 %v2773, %v2809
      %v2812 = vadd.f32 %v2774, %v2809
      %v2813 = vadd.f32 %v2775, %v2809
      %v2814 = vadd.f32 %v2776, %v2809
      %v2815 = vadd.f32 %v2777, %v2809
      %v2816 = vadd.f32 %v2778, %v2809
      %v2817 = vadd.f32 %v2779, %v2809
      %v2818 = vadd.f32 %v2780, %v2809
      %v2819 = vadd.f32 %v2781, %v2809
      %v2820 = vadd.f32 %v2782, %v2809
      %v2821 = vadd.f32 %v2783, %v2809
      %v2822 = vadd.f32 %v2784, %v2809
      %v2823 = vadd.f32 %v2785, %v2809
      %v2824 = vadd.f32 %v2786, %v2809
      %v2825 = vadd.f32 %v2787, %v2809
      %v2826 = vadd.f32 %v2788, %v2809
      %v2827 = vadd.f32 %v2789, %v2809
      %v2828 = vadd.f32 %v2790, %v2809
      %v2829 = vadd.f32 %v2791, %v2809
      %v2830 = vadd.f32 %v2792, %v2809
      %v2831 = vadd.f32 %v2793, %v2809
      %v2832 = vadd.f32 %v2794, %v2809
      %v2833 = vadd.f32 %v2795, %v2809
      %v2834 = vadd.f32 %v2796, %v2809
      %v2835 = vadd.f32 %v2797, %v2809
      %v2836 = vadd.f32 %v2798, %v2809
      %v2837 = vadd.f32 %v2799, %v2809
      %v2838 = vadd.f32 %v2800, %v2809
      %v2839 = vadd.f32 %v2801, %v2809
      %v2840 = vadd.f32 %v2802, %v2809
      %v2841 = vadd.f32 %v2803, %v2809
      %v2842 = vadd.f32 %v2804, %v2809
      %v2843 = vmax.f32 %v2811, 0.0
      %v2844 = vmax.f32 %v2812, 0.0
      %v2845 = vmax.f32 %v2813, 0.0
      %v2846 = vmax.f32 %v2814, 0.0
      %v2847 = vmax.f32 %v2815, 0.0
      %v2848 = vmax.f32 %v2816, 0.0
      %v2849 = vmax.f32 %v2817, 0.0
      %v2850 = vmax.f32 %v2818, 0.0
      %v2851 = vmax.f32 %v2819, 0.0
      %v2852 = vmax.f32 %v2820, 0.0
      %v2853 = vmax.f32 %v2821, 0.0
      %v2854 = vmax.f32 %v2822, 0.0
      %v2855 = vmax.f32 %v2823, 0.0
      %v2856 = vmax.f32 %v2824, 0.0
      %v2857 = vmax.f32 %v2825, 0.0
      %v2858 = vmax.f32 %v2826, 0.0
      %v2859 = vmax.f32 %v2827, 0.0
      %v2860 = vmax.f32 %v2828, 0.0
      %v2861 = vmax.f32 %v2829, 0.0
      %v2862 = vmax.f32 %v2830, 0.0
      %v2863 = vmax.f32 %v2831, 0.0
      %v2864 = vmax.f32 %v2832, 0.0
      %v2865 = vmax.f32 %v2833, 0.0
      %v2866 = vmax.f32 %v2834, 0.0
      %v2867 = vmax.f32 %v2835, 0.0
      %v2868 = vmax.f32 %v2836, 0.0
      %v2869 = vmax.f32 %v2837, 0.0
      %v2870 = vmax.f32 %v2838, 0.0
      %v2871 = vmax.f32 %v2839, 0.0
      %v2872 = vmax.f32 %v2840, 0.0
      %v2873 = vmax.f32 %v2841, 0.0
      %v2874 = vmax.f32 %v2842, 0.0
      %v2875 = vmin.f32 %v2843, 6.0
      %v2876 = vmin.f32 %v2844, 6.0
      %v2877 = vmin.f32 %v2845, 6.0
      %v2878 = vmin.f32 %v2846, 6.0
      %v2879 = vmin.f32 %v2847, 6.0
      %v2880 = vmin.f32 %v2848, 6.0
      %v2881 = vmin.f32 %v2849, 6.0
      %v2882 = vmin.f32 %v2850, 6.0
      %v2883 = vmin.f32 %v2851, 6.0
      %v2884 = vmin.f32 %v2852, 6.0
      %v2885 = vmin.f32 %v2853, 6.0
      %v2886 = vmin.f32 %v2854, 6.0
      %v2887 = vmin.f32 %v2855, 6.0
      %v2888 = vmin.f32 %v2856, 6.0
      %v2889 = vmin.f32 %v2857, 6.0
      %v2890 = vmin.f32 %v2858, 6.0
      %v2891 = vmin.f32 %v2859, 6.0
      %v2892 = vmin.f32 %v2860, 6.0
      %v2893 = vmin.f32 %v2861, 6.0
      %v2894 = vmin.f32 %v2862, 6.0
      %v2895 = vmin.f32 %v2863, 6.0
      %v2896 = vmin.f32 %v2864, 6.0
      %v2897 = vmin.f32 %v2865, 6.0
      %v2898 = vmin.f32 %v2866, 6.0
      %v2899 = vmin.f32 %v2867, 6.0
      %v2900 = vmin.f32 %v2868, 6.0
      %v2901 = vmin.f32 %v2869, 6.0
      %v2902 = vmin.f32 %v2870, 6.0
      %v2903 = vmin.f32 %v2871, 6.0
      %v2904 = vmin.f32 %v2872, 6.0
      %v2905 = vmin.f32 %v2873, 6.0
      %v2906 = vmin.f32 %v2874, 6.0
      %v2907 = vpack.c.bf16 %v2876, %v2875
      %v2908 = vpack.c.bf16 %v2878, %v2877
      %v2909 = vpack.c.bf16 %v2880, %v2879
      %v2910 = vpack.c.bf16 %v2882, %v2881
      %v2911 = vpack.c.bf16 %v2884, %v2883
      %v2912 = vpack.c.bf16 %v2886, %v2885
      %v2913 = vpack.c.bf16 %v2888, %v2887
      %v2914 = vpack.c.bf16 %v2890, %v2889
      %v2915 = vpack.c.bf16 %v2892, %v2891
      %v2916 = vpack.c.bf16 %v2894, %v2893
      %v2917 = vpack.c.bf16 %v2896, %v2895
      %v2918 = vpack.c.bf16 %v2898, %v2897
      %v2919 = vpack.c.bf16 %v2900, %v2899
      %v2920 = vpack.c.bf16 %v2902, %v2901
      %v2921 = vpack.c.bf16 %v2904, %v2903
      %v2922 = vpack.c.bf16 %v2906, %v2905
      %v2923 = vld [vmem:[%s7] sm:$0xf]
      %v2924 = vld [vmem:[%s7 + $0x4] sm:$0xf]
      %v2925 = vld [vmem:[%s7 + $0x8] sm:$0xf]
      %v2926 = vld [vmem:[%s7 + $0xc] sm:$0xf]
      %v2927 = vld [vmem:[%s8] sm:$0x1]
      %v2929 = vlaneseq
      %v2930 = vshrl.u32 %v2929, 7
      %v2931 = vsub.s32 0, %v2930
      %v2932 = vrot.slane %v2927, %v2931
      %v2938 = vunpack.c.l.b16 %v2923
      %v2939 = vunpack.c.l.b16 %v2924
      %v2940 = vunpack.c.l.b16 %v2925
      %v2941 = vunpack.c.l.b16 %v2926
      %v2942 = vpack.c.b16 %v2939, %v2938
      %v2943 = vpack.c.b16 %v2941, %v2940
      %v2947 = vsel %vm442, %v2907, 0
      %v2950 = vsel %vm442, %v2908, 0
      %v2953 = vsel %vm442, %v2909, 0
      %v2956 = vsel %vm442, %v2910, 0
      %v2959 = vsel %vm442, %v2911, 0
      %v2962 = vsel %vm442, %v2912, 0
      %v2965 = vsel %vm442, %v2913, 0
      %v2968 = vsel %vm442, %v2914, 0
      %v2971 = vsel %vm442, %v2915, 0
      %v2974 = vsel %vm442, %v2916, 0
      %v2977 = vsel %vm442, %v2917, 0
      %v2980 = vsel %vm442, %v2918, 0
      %v2983 = vsel %vm442, %v2919, 0
      %v2986 = vsel %vm442, %v2920, 0
      %v2989 = vsel %vm442, %v2921, 0
      %v2992 = vsel %vm442, %v2922, 0
      %2994 = vmatprep.subr.bf16.mxu0 0
      %2995 = vmatpush1.bf16.msra.mxu0 %v2942
      %2996 = vmatprep.subr.bf16.mxu0 0
      %2997 = vmatpush1.bf16.msra.mxu0 %v2943
      %2998 = vmatprep.subr.bf16.mxu0 0
      %2999 = vmatpush1.bf16.msra.mxu0 0
      %3000 = vmatprep.subr.bf16.mxu0 0
      %3001 = vmatpush1.bf16.msra.mxu0 0
      %3002 = vmatprep.subr.bf16.mxu0 0
      %3003 = vmatpush1.bf16.msra.mxu0 0
      %3004 = vmatprep.subr.bf16.mxu0 0
      %3005 = vmatpush1.bf16.msra.mxu0 0
      %3006 = vmatprep.subr.bf16.mxu0 0
      %3007 = vmatpush1.bf16.msra.mxu0 0
      %3008 = vmatprep.subr.bf16.mxu0 0
      %3009 = vmatpush1.bf16.msra.mxu0 0
      %3010 = vmatprep.subr.bf16.mxu0 0
      %3011 = vmatpush1.bf16.msra.mxu0 0
      %3012 = vmatprep.subr.bf16.mxu0 0
      %3013 = vmatpush1.bf16.msra.mxu0 0
      %3014 = vmatprep.subr.bf16.mxu0 0
      %3015 = vmatpush1.bf16.msra.mxu0 0
      %3016 = vmatprep.subr.bf16.mxu0 0
      %3017 = vmatpush1.bf16.msra.mxu0 0
      %3018 = vmatprep.subr.bf16.mxu0 0
      %3019 = vmatpush1.bf16.msra.mxu0 0
      %3020 = vmatprep.subr.bf16.mxu0 0
      %3021 = vmatpush1.bf16.msra.mxu0 0
      %3022 = vmatprep.subr.bf16.mxu0 0
      %3023 = vmatpush1.bf16.msra.mxu0 0
      %3024 = vmatprep.subr.bf16.mxu0 0
      %3025 = vmatpush1.bf16.msra.mxu0 0
      %3026 = vmatprep.mubr.bf16.mxu0 0
      %3027 = vmatmul.mubr.bf16.gmra.mrb[0].mxu0 %v2947
      %v3028 = vpop.f32.mrb[0].mxu0
      %v3029 = vadd.f32 %v2932, %v3028
      %v3030 = vpop.f32.mrb[0].mxu0
      %v3031 = vpop.f32.mrb[0].mxu0
      %v3032 = vadd.f32 %v2932, %v3031
      %v3033 = vpop.f32.mrb[0].mxu0
      %3034 = vmatprep.mubr.bf16.mxu0 0
      %3035 = vmatmul.mubr.bf16.gmra.mrb[0].mxu0 %v2950
      %v3036 = vpop.f32.mrb[0].mxu0
      %v3037 = vadd.f32 %v2932, %v3036
      %v3038 = vpop.f32.mrb[0].mxu0
      %v3039 = vpop.f32.mrb[0].mxu0
      %v3040 = vadd.f32 %v2932, %v3039
      %v3041 = vpop.f32.mrb[0].mxu0
      %3042 = vmatprep.mubr.bf16.mxu0 0
      %3043 = vmatmul.mubr.bf16.gmra.mrb[0].mxu0 %v2953
      %v3044 = vpop.f32.mrb[0].mxu0
      %v3045 = vadd.f32 %v2932, %v3044
      %v3046 = vpop.f32.mrb[0].mxu0
      %v3047 = vpop.f32.mrb[0].mxu0
      %v3048 = vadd.f32 %v2932, %v3047
      %v3049 = vpop.f32.mrb[0].mxu0
      %3050 = vmatprep.mubr.bf16.mxu0 0
      %3051 = vmatmul.mubr.bf16.gmra.mrb[0].mxu0 %v2956
      %v3052 = vpop.f32.mrb[0].mxu0
      %v3053 = vadd.f32 %v2932, %v3052
      %v3054 = vpop.f32.mrb[0].mxu0
      %v3055 = vpop.f32.mrb[0].mxu0
      %v3056 = vadd.f32 %v2932, %v3055
      %v3057 = vpop.f32.mrb[0].mxu0
      %3058 = vmatprep.mubr.bf16.mxu0 0
      %3059 = vmatmul.mubr.bf16.gmra.mrb[0].mxu0 %v2959
      %v3060 = vpop.f32.mrb[0].mxu0
      %v3061 = vadd.f32 %v2932, %v3060
      %v3062 = vpop.f32.mrb[0].mxu0
      %v3063 = vpop.f32.mrb[0].mxu0
      %v3064 = vadd.f32 %v2932, %v3063
      %v3065 = vpop.f32.mrb[0].mxu0
      %3066 = vmatprep.mubr.bf16.mxu0 0
      %3067 = vmatmul.mubr.bf16.gmra.mrb[0].mxu0 %v2962
      %v3068 = vpop.f32.mrb[0].mxu0
      %v3069 = vadd.f32 %v2932, %v3068
      %v3070 = vpop.f32.mrb[0].mxu0
      %v3071 = vpop.f32.mrb[0].mxu0
      %v3072 = vadd.f32 %v2932, %v3071
      %v3073 = vpop.f32.mrb[0].mxu0
      %3074 = vmatprep.mubr.bf16.mxu0 0
      %3075 = vmatmul.mubr.bf16.gmra.mrb[0].mxu0 %v2965
      %v3076 = vpop.f32.mrb[0].mxu0
      %v3077 = vadd.f32 %v2932, %v3076
      %v3078 = vpop.f32.mrb[0].mxu0
      %v3079 = vpop.f32.mrb[0].mxu0
      %v3080 = vadd.f32 %v2932, %v3079
      %v3081 = vpop.f32.mrb[0].mxu0
      %3082 = vmatprep.mubr.bf16.mxu0 0
      %3083 = vmatmul.mubr.bf16.gmra.mrb[0].mxu0 %v2968
      %v3084 = vpop.f32.mrb[0].mxu0
      %v3085 = vadd.f32 %v2932, %v3084
      %v3086 = vpop.f32.mrb[0].mxu0
      %v3087 = vpop.f32.mrb[0].mxu0
      %v3088 = vadd.f32 %v2932, %v3087
      %v3089 = vpop.f32.mrb[0].mxu0
      %3090 = vmatprep.mubr.bf16.mxu0 0
      %3091 = vmatmul.mubr.bf16.gmra.mrb[0].mxu0 %v2971
      %v3092 = vpop.f32.mrb[0].mxu0
      %v3093 = vadd.f32 %v2932, %v3092
      %v3094 = vpop.f32.mrb[0].mxu0
      %v3095 = vpop.f32.mrb[0].mxu0
      %v3096 = vadd.f32 %v2932, %v3095
      %v3097 = vpop.f32.mrb[0].mxu0
      %3098 = vmatprep.mubr.bf16.mxu0 0
      %3099 = vmatmul.mubr.bf16.gmra.mrb[0].mxu0 %v2974
      %v3100 = vpop.f32.mrb[0].mxu0
      %v3101 = vadd.f32 %v2932, %v3100
      %v3102 = vpop.f32.mrb[0].mxu0
      %v3103 = vpop.f32.mrb[0].mxu0
      %v3104 = vadd.f32 %v2932, %v3103
      %v3105 = vpop.f32.mrb[0].mxu0
      %3106 = vmatprep.mubr.bf16.mxu0 0
      %3107 = vmatmul.mubr.bf16.gmra.mrb[0].mxu0 %v2977
      %v3108 = vpop.f32.mrb[0].mxu0
      %v3109 = vadd.f32 %v2932, %v3108
      %v3110 = vpop.f32.mrb[0].mxu0
      %v3111 = vpop.f32.mrb[0].mxu0
      %v3112 = vadd.f32 %v2932, %v3111
      %v3113 = vpop.f32.mrb[0].mxu0
      %3114 = vmatprep.mubr.bf16.mxu0 0
      %3115 = vmatmul.mubr.bf16.gmra.mrb[0].mxu0 %v2980
      %v3116 = vpop.f32.mrb[0].mxu0
      %v3117 = vadd.f32 %v2932, %v3116
      %v3118 = vpop.f32.mrb[0].mxu0
      %v3119 = vpop.f32.mrb[0].mxu0
      %v3120 = vadd.f32 %v2932, %v3119
      %v3121 = vpop.f32.mrb[0].mxu0
      %3122 = vmatprep.mubr.bf16.mxu0 0
      %3123 = vmatmul.mubr.bf16.gmra.mrb[0].mxu0 %v2983
      %v3124 = vpop.f32.mrb[0].mxu0
      %v3125 = vadd.f32 %v2932, %v3124
      %v3126 = vpop.f32.mrb[0].mxu0
      %v3127 = vpop.f32.mrb[0].mxu0
      %v3128 = vadd.f32 %v2932, %v3127
      %v3129 = vpop.f32.mrb[0].mxu0
      %3130 = vmatprep.mubr.bf16.mxu0 0
      %3131 = vmatmul.mubr.bf16.gmra.mrb[0].mxu0 %v2986
      %v3132 = vpop.f32.mrb[0].mxu0
      %v3133 = vadd.f32 %v2932, %v3132
      %v3134 = vpop.f32.mrb[0].mxu0
      %v3135 = vpop.f32.mrb[0].mxu0
      %v3136 = vadd.f32 %v2932, %v3135
      %v3137 = vpop.f32.mrb[0].mxu0
      %3138 = vmatprep.mubr.bf16.mxu0 0
      %3139 = vmatmul.mubr.bf16.gmra.mrb[0].mxu0 %v2989
      %v3140 = vpop.f32.mrb[0].mxu0
      %v3141 = vadd.f32 %v2932, %v3140
      %v3142 = vpop.f32.mrb[0].mxu0
      %v3143 = vpop.f32.mrb[0].mxu0
      %v3144 = vadd.f32 %v2932, %v3143
      %v3145 = vpop.f32.mrb[0].mxu0
      %3146 = vmatprep.mubr.bf16.mxu0 0
      %3147 = vmatmul.mubr.bf16.gmra.mrb[0].mxu0 %v2992
      %v3148 = vpop.f32.mrb[0].mxu0
      %v3149 = vadd.f32 %v2932, %v3148
      %v3150 = vpop.f32.mrb[0].mxu0
      %v3151 = vpop.f32.mrb[0].mxu0
      %v3152 = vadd.f32 %v2932, %v3151
      %v3153 = vpop.f32.mrb[0].mxu0
      %3154 = vdwg.mxu0
      %3155 = vst.msk [vmem:[%s372] sm:$0xff] %vm1782, %v3029
      %3156 = vst.msk [vmem:[%s372 + $0x8] sm:$0xff] %vm1782, %v3032
      %3157 = vst.msk [vmem:[%s372 + $0x10] sm:$0xff] %vm1782, %v3037
      %3158 = vst.msk [vmem:[%s372 + $0x18] sm:$0xff] %vm1782, %v3040
      %3159 = vst.msk [vmem:[%s372 + $0x20] sm:$0xff] %vm1782, %v3045
      %3160 = vst.msk [vmem:[%s372 + $0x28] sm:$0xff] %vm1782, %v3048
      %3161 = vst.msk [vmem:[%s372 + $0x30] sm:$0xff] %vm1782, %v3053
      %3162 = vst.msk [vmem:[%s372 + $0x38] sm:$0xff] %vm1782, %v3056
      %3163 = vst.msk [vmem:[%s372 + $0x40] sm:$0xff] %vm1782, %v3061
      %3164 = vst.msk [vmem:[%s372 + $0x48] sm:$0xff] %vm1782, %v3064
      %3165 = vst.msk [vmem:[%s372 + $0x50] sm:$0xff] %vm1782, %v3069
      %3166 = vst.msk [vmem:[%s372 + $0x58] sm:$0xff] %vm1782, %v3072
      %3167 = vst.msk [vmem:[%s372 + $0x60] sm:$0xff] %vm1782, %v3077
      %3168 = vst.msk [vmem:[%s372 + $0x68] sm:$0xff] %vm1782, %v3080
      %3169 = vst.msk [vmem:[%s372 + $0x70] sm:$0xff] %vm1782, %v3085
      %3170 = vst.msk [vmem:[%s372 + $0x78] sm:$0xff] %vm1782, %v3088
      %3171 = vst.msk [vmem:[%s372 + $0x80] sm:$0xff] %vm1782, %v3093
      %3172 = vst.msk [vmem:[%s372 + $0x88] sm:$0xff] %vm1782, %v3096
      %3173 = vst.msk [vmem:[%s372 + $0x90] sm:$0xff] %vm1782, %v3101
      %3174 = vst.msk [vmem:[%s372 + $0x98] sm:$0xff] %vm1782, %v3104
      %3175 = vst.msk [vmem:[%s372 + $0xa0] sm:$0xff] %vm1782, %v3109
      %3176 = vst.msk [vmem:[%s372 + $0xa8] sm:$0xff] %vm1782, %v3112
      %3177 = vst.msk [vmem:[%s372 + $0xb0] sm:$0xff] %vm1782, %v3117
      %3178 = vst.msk [vmem:[%s372 + $0xb8] sm:$0xff] %vm1782, %v3120
      %3179 = vst.msk [vmem:[%s372 + $0xc0] sm:$0xff] %vm1782, %v3125
      %3180 = vst.msk [vmem:[%s372 + $0xc8] sm:$0xff] %vm1782, %v3128
      %3181 = vst.msk [vmem:[%s372 + $0xd0] sm:$0xff] %vm1782, %v3133
      %3182 = vst.msk [vmem:[%s372 + $0xd8] sm:$0xff] %vm1782, %v3136
      %3183 = vst.msk [vmem:[%s372 + $0xe0] sm:$0xff] %vm1782, %v3141
      %3184 = vst.msk [vmem:[%s372 + $0xe8] sm:$0xff] %vm1782, %v3144
      %3185 = vst.msk [vmem:[%s372 + $0xf0] sm:$0xff] %vm1782, %v3149
      %3186 = vst.msk [vmem:[%s372 + $0xf8] sm:$0xff] %vm1782, %v3152
      %p3187 = scmp.lt.s32.totalorder %s22, 1
      %s3188 = scalar_select %p3187, %s22, 1
      %s3189 = smul.addr %s3188, 32
      %s3190 = smul.addr %s3189, 8
      %s3191 = scalar_lea.vmem %s9, %s3190
      %p3192 = scmp.lt.s32.totalorder %s22, 1
      %s3193 = scalar_select %p3192, %s22, 1
      %s3194 = smul.addr %s3193, 32
      %s3195 = smul.addr %s3194, 8
      %s3196 = scalar_lea.vmem %s10, %s3195
      // Predicated region
      $region57: #{ssdlite_forward.6} parent=55 // pred_check
        %p3197 = pneg %p234
      $region58: #{ssdlite_forward.6} parent=55 // pred_check_branch
        %3199 = sbr.rel (%p3197) target = $region60
      $region59: #{ssdlite_forward.6} parent=55 // pred_region
        _
      $region60: #{ssdlite_forward.6} parent=55 // pred_fallthru
        _
      // Predicated region
      $region61: #{ssdlite_forward.6} parent=55 // pred_check
        %p3200 = pneg %p260
      $region62: #{ssdlite_forward.6} parent=55 // pred_check_branch
        %3202 = sbr.rel (%p3200) target = $region64
      $region63: #{ssdlite_forward.6} parent=55 // pred_region
        _
      $region64: #{ssdlite_forward.6} parent=55 // pred_fallthru
        _
    $region56: #{ssdlite_forward.6} parent=5 // pred_fallthru
      _
    %p3203 = scmp.le.s32.totalorder 2, %s17
    // Predicated region
    $region65: #{ssdlite_forward.6} parent=5 // pred_check
      %p3204 = pneg %p3203
    $region66: #{ssdlite_forward.6} parent=5 // pred_check_branch
      %3206 = sbr.rel (%p3204) target = $region68
    $region67: #{ssdlite_forward.6} parent=5 // pred_region
      %s3207 = ssub.s32 %s17, 2
      // Predicated region
      $region69: #{ssdlite_forward.6} parent=67 // pred_check
        %p3208 = pneg %p240
      $region70: #{ssdlite_forward.6} parent=67 // pred_check_branch
        %3210 = sbr.rel (%p3208) target = $region72
      $region71: #{ssdlite_forward.6} parent=67 // pred_region
        %p3211 = scmp.lt.s32.totalorder %s23, 1
        %s3212 = scalar_select %p3211, %s23, 1
        %s3213 = smul.addr %s3212, 32
        %s3214 = smul.addr %s3213, 8
        %s3215 = scalar_lea.vmem %s9, %s3214
      $region72: #{ssdlite_forward.6} parent=67 // pred_fallthru
        _
      // Predicated region
      $region73: #{ssdlite_forward.6} parent=67 // pred_check
        %p3216 = pneg %p266
      $region74: #{ssdlite_forward.6} parent=67 // pred_check_branch
        %3218 = sbr.rel (%p3216) target = $region76
      $region75: #{ssdlite_forward.6} parent=67 // pred_region
        %p3219 = scmp.lt.s32.totalorder %s23, 1
        %s3220 = scalar_select %p3219, %s23, 1
        %s3221 = smul.addr %s3220, 32
        %s3222 = smul.addr %s3221, 8
        %s3223 = scalar_lea.vmem %s10, %s3222
      $region76: #{ssdlite_forward.6} parent=67 // pred_fallthru
        _
    $region68: #{ssdlite_forward.6} parent=5 // pred_fallthru
      _
  $region6: #{ssdlite_forward.6} parent=0 // loop_footer
    %s21 = sadd.s32 1, %s17
  $region7: #{ssdlite_forward.6} parent=0 // loop_footer_branch
    %16 = sbr.rel target = $region3
  $region8: #{ssdlite_forward.6} parent=0 // loop_exit
    _

</llo_original>
